<compile_context>
chip_gen: v5e
topology: v5e:2x2
jax: 0.10.0
libtpu: 0.0.40
codegen_flags: <defaults>
</compile_context>

<pallas_src>
import math

import jax
import jax.numpy as jnp
from jax.experimental import pallas as pl
from jax.experimental.pallas import tpu as pltpu

H = 32    # config['model']['hidden_size']
E = 32    # config['model']['txt_embedding_size']
T = 8     # config['dataset']['max_seq_len']
B = 2     # batch_size
NH = 2    # num_hist
LN_EPS = 1e-5


def ques_encoder_kernel(x_ref, mask_ref, pe_ref,
                        wih0_ref, whh0f_ref, whh0b_ref, b0_ref,
                        wih1_ref, whh1f_ref, whh1b_ref, b1_ref,
                        wlin_ref, blin_ref, gamma_ref, beta_ref,
                        out_ref,
                        scr0, scr1):
    n, seq, emb = x_ref.shape
    hid = whh0f_ref.shape[0]          # H
    g = whh0f_ref.shape[1]            # 4H fused gate width (i|f|g|o)

    mask = mask_ref[...]              # (n, T) float {0., 1.}
    mvalid = mask > 0.5               # hoisted compare (used by reverse hold)
    mask3 = mask[:, :, None]          # (n, T, 1) for bulk output masking

    def run_dir(xp_d, whh_ref, scr, lane_off, reverse):
        """One LSTM direction.  xp_d: (n, T, 4H) = x@W_ih + b (precomputed)."""
        whh = whh_ref[...]                                  # hoisted load
        h = jnp.zeros((n, hid), jnp.float32)
        c = jnp.zeros((n, hid), jnp.float32)
        times = range(seq - 1, -1, -1) if reverse else range(seq)
        for t in times:
            gates = xp_d[:, t, :] + jnp.dot(
                h, whh, preferred_element_type=jnp.float32)  # (n, 4H)
            # One EUP pass over the fused gate vector; slice lanes afterwards.
            sig = jax.nn.sigmoid(gates)
            i = sig[:, 0 * hid:1 * hid]
            f = sig[:, 1 * hid:2 * hid]
            o = sig[:, 3 * hid:4 * hid]
            gg = jnp.tanh(gates[:, 2 * hid:3 * hid])
            c_new = f * c + i * gg
            h_new = o * jnp.tanh(c_new)
            if reverse:
                # pack_padded_sequence: reverse pass starts at t = len-1 with
                # a zero state -> hold the (zero) state while t >= len.
                m_t = mvalid[:, t:t + 1]
                h = jnp.where(m_t, h_new, h)
                c = jnp.where(m_t, c_new, c)
            else:
                h, c = h_new, c_new
            scr[:, t, lane_off:lane_off + hid] = h
        # padded-position zeroing is applied in bulk when the scratch is read.

    def run_layer(xp, whh_f_ref, whh_b_ref, scr):
        """xp: (n, T, 8H) fused-gate pre-activations for both directions."""
        run_dir(xp[:, :, :g], whh_f_ref, scr, 0, reverse=False)
        run_dir(xp[:, :, g:], whh_b_ref, scr, hid, reverse=True)
        # pad_packed_sequence semantics: outputs past each length are zero.
        return scr[...] * mask3                              # (n, T, 2H)

    # ----- LSTM layer 0: bulk input projection (all timesteps, both dirs) ---
    x_flat = x_ref[...].reshape(n * seq, emb)
    xp0 = (jnp.dot(x_flat, wih0_ref[...], preferred_element_type=jnp.float32)
           + b0_ref[...]).reshape(n, seq, 2 * g)
    l0 = run_layer(xp0, whh0f_ref, whh0b_ref, scr0)          # (n, T, 2H)

    # ----- LSTM layer 1: input = packed [fwd0 | bwd0], same bulk trick ------
    xp1 = (jnp.dot(l0.reshape(n * seq, 2 * hid), wih1_ref[...],
                   preferred_element_type=jnp.float32)
           + b1_ref[...]).reshape(n, seq, 2 * g)
    l1 = run_layer(xp1, whh1f_ref, whh1b_ref, scr1)          # (n, T, 2H)

    # ----- Epilogue: Linear(2H->H) + positional embedding + LayerNorm,
    #       all timesteps at once, single bulk store. -----------------------
    y = (jnp.dot(l1.reshape(n * seq, 2 * hid), wlin_ref[...],
                 preferred_element_type=jnp.float32)
         + blin_ref[...]).reshape(n, seq, hid)
    y = y + pe_ref[...]                                      # (T, H) broadcast
    mu = jnp.mean(y, axis=-1, keepdims=True)
    var = jnp.mean((y - mu) ** 2, axis=-1, keepdims=True)
    y = (y - mu) * jax.lax.rsqrt(var + LN_EPS)
    out_ref[...] = y * gamma_ref[...] + beta_ref[...]


def ques_encoder_forward(ques, ques_len, params):
    """ques: (B, NH, T, E) float32, ques_len: (B, NH) int32."""
    bs, num_hist, seq, emb = ques.shape
    n = bs * num_hist
    x = ques.reshape(n, seq, emb).astype(jnp.float32)
    lens = ques_len.reshape(n)
    mask = jnp.arange(seq, dtype=jnp.int32)[None, :] < lens[:, None]   # (n, T)
    mask_f = mask.astype(jnp.float32)

    # Single program: the whole working set is a few KiB of VMEM.  For a real
    # batch (n >> 4) add a grid axis over n with
    # dimension_semantics=("parallel",) so v7x's two TensorCores split it.
    vmem = pl.BlockSpec(memory_space=pltpu.MemorySpace.VMEM)
    out = pl.pallas_call(
        ques_encoder_kernel,
        out_shape=jax.ShapeDtypeStruct((n, seq, H), jnp.float32),
        in_specs=[vmem] * 15,
        out_specs=vmem,
        scratch_shapes=[pltpu.VMEM((n, seq, 2 * H), jnp.float32)] * 2,
    )(x, mask_f, params['pe'],
      params['wih0'], params['whh0f'], params['whh0b'], params['b0'],
      params['wih1'], params['whh1f'], params['whh1b'], params['b1'],
      params['w_lin'], params['b_lin'], params['gamma'], params['beta'])

    # torch returns ques_mask.long() (int64); int32 here (JAX default ints).
    return out, mask.astype(jnp.int32)


def ques_encoder_reference(ques, ques_len, params):
    """Pure-JAX reference with identical semantics (for a sanity check)."""
    bs, num_hist, seq, emb = ques.shape
    n = bs * num_hist
    x = ques.reshape(n, seq, emb).astype(jnp.float32)
    lens = ques_len.reshape(n)
    mask = (jnp.arange(seq)[None, :] < lens[:, None]).astype(jnp.float32)
    g = 4 * H

    def x_dot(a, b):
        return jnp.dot(a, b, preferred_element_type=jnp.float32)

    def run_dir(xp_d, whh, reverse):
        h = jnp.zeros((n, H), jnp.float32)
        c = jnp.zeros((n, H), jnp.float32)
        outs = [None] * seq
        times = range(seq - 1, -1, -1) if reverse else range(seq)
        for t in times:
            gates = xp_d[:, t] + x_dot(h, whh)
            i = jax.nn.sigmoid(gates[:, :H])
            f = jax.nn.sigmoid(gates[:, H:2 * H])
            gg = jnp.tanh(gates[:, 2 * H:3 * H])
            o = jax.nn.sigmoid(gates[:, 3 * H:])
            c_new = f * c + i * gg
            h_new = o * jnp.tanh(c_new)
            if reverse:
                m = mask[:, t:t + 1]
                h = m * h_new + (1.0 - m) * h
                c = m * c_new + (1.0 - m) * c
            else:
                h, c = h_new, c_new
            outs[t] = h
        return jnp.stack(outs, axis=1)

    def run_layer(inp, wih, b, whhf, whhb):
        xp = jnp.einsum('ntd,dg->ntg', inp, wih) + b
        of = run_dir(xp[..., :g], whhf, False)
        ob = run_dir(xp[..., g:], whhb, True)
        return jnp.concatenate([of, ob], axis=-1) * mask[:, :, None]

    l0 = run_layer(x, params['wih0'], params['b0'],
                   params['whh0f'], params['whh0b'])
    l1 = run_layer(l0, params['wih1'], params['b1'],
                   params['whh1f'], params['whh1b'])
    y = jnp.einsum('ntd,dh->nth', l1, params['w_lin']) + params['b_lin']
    y = y + params['pe'][None]
    mu = y.mean(-1, keepdims=True)
    var = ((y - mu) ** 2).mean(-1, keepdims=True)
    y = (y - mu) * jax.lax.rsqrt(var + LN_EPS)
    return y * params['gamma'] + params['beta']


def init_params(key):
    """Deterministic synthetic parameters in the fused-gate layout.

    Gate order per direction is (i, f, g, o), matching torch.nn.LSTM.
    wih{L}: (Din, 8H) = [W_ih_fwd | W_ih_bwd] (transposed, gates fused)
    whh{L}{f,b}: (H, 4H)   b{L}: (1, 8H) = b_ih + b_hh, both directions.
    """
    k = 1.0 / math.sqrt(H)
    keys = iter(jax.random.split(key, 32))

    def u(shape):
        return jax.random.uniform(next(keys), shape, jnp.float32, -k, k)

    p = {}
    for layer, din in ((0, E), (1, 2 * H)):
        wih_dirs, b_dirs = [], []
        for d in ('f', 'b'):
            wih_dirs.append(u((din, 4 * H)))
            p[f'whh{layer}{d}'] = u((H, 4 * H))
            b_dirs.append(u((1, 4 * H)) + u((1, 4 * H)))   # b_ih + b_hh
        p[f'wih{layer}'] = jnp.concatenate(wih_dirs, axis=1)   # (din, 8H)
        p[f'b{layer}'] = jnp.concatenate(b_dirs, axis=1)       # (1, 8H)
    # ques_linear: nn.Linear(2H, H)
    p['w_lin'] = u((2 * H, H))
    p['b_lin'] = u((1, H))
    # nn.LayerNorm(H)
    p['gamma'] = jnp.ones((1, H), jnp.float32)
    p['beta'] = jnp.zeros((1, H), jnp.float32)
    # Sinusoidal PositionalEmbedding(H, max_seq_len)
    pos = jnp.arange(T, dtype=jnp.float32)[:, None]
    div = jnp.exp(jnp.arange(0, H, 2, dtype=jnp.float32)
                  * (-math.log(10000.0) / H))
    pe = jnp.zeros((T, H), jnp.float32)
    pe = pe.at[:, 0::2].set(jnp.sin(pos * div))
    pe = pe.at[:, 1::2].set(jnp.cos(pos * div))
    p['pe'] = pe
    return p


if __name__ == "__main__":
    key = jax.random.PRNGKey(0)
    kp, kq = jax.random.split(key)
    params = init_params(kp)

    ques = jax.random.normal(kq, (B, NH, T, E), dtype=jnp.float32)
    ques_len = jnp.array([[8, 5], [3, 6]], dtype=jnp.int32)

    out, mask = ques_encoder_forward(ques, ques_len, params)
    jax.block_until_ready((out, mask))

    assert out.shape == (B * NH, T, H) and out.dtype == jnp.float32
    assert mask.shape == (B * NH, T) and mask.dtype == jnp.int32

    # Sanity check vs a pure-JAX reference (loose tolerance: MXU f32 matmuls
    # may use a different pass count than the XLA reference dots).
    ref = ques_encoder_reference(ques, ques_len, params)
    err = float(jnp.max(jnp.abs(out - ref)))
    assert err < 3e-2, f"max abs error vs reference: {err}"

    print("KERNEL_OK")
</pallas_src>

<mosaic_0001>
module attributes {stable_mosaic.version = 11 : i64} {
  func.func @ques_encoder_kernel(%arg0: memref<4x8x32xf32, #tpu.memory_space<vmem>>, %arg1: memref<4x8xf32, #tpu.memory_space<vmem>>, %arg2: memref<8x32xf32, #tpu.memory_space<vmem>>, %arg3: memref<32x256xf32, #tpu.memory_space<vmem>>, %arg4: memref<32x128xf32, #tpu.memory_space<vmem>>, %arg5: memref<32x128xf32, #tpu.memory_space<vmem>>, %arg6: memref<1x256xf32, #tpu.memory_space<vmem>>, %arg7: memref<64x256xf32, #tpu.memory_space<vmem>>, %arg8: memref<32x128xf32, #tpu.memory_space<vmem>>, %arg9: memref<32x128xf32, #tpu.memory_space<vmem>>, %arg10: memref<1x256xf32, #tpu.memory_space<vmem>>, %arg11: memref<64x32xf32, #tpu.memory_space<vmem>>, %arg12: memref<1x32xf32, #tpu.memory_space<vmem>>, %arg13: memref<1x32xf32, #tpu.memory_space<vmem>>, %arg14: memref<1x32xf32, #tpu.memory_space<vmem>>, %arg15: memref<4x8x32xf32, #tpu.memory_space<vmem>>, %arg16: memref<4x8x64xf32, #tpu.memory_space<vmem>>, %arg17: memref<4x8x64xf32, #tpu.memory_space<vmem>>) attributes {dimension_semantics = [], scalar_prefetch = 0 : i64, scratch_operands = 2 : i64, tpu.core_type = #tpu.core_type<tc>} {
    %c0 = arith.constant 0 : index
    %c0_0 = arith.constant 0 : index
    %0 = vector.load %arg1[%c0, %c0_0] : memref<4x8xf32, #tpu.memory_space<vmem>>, vector<4x8xf32>
    %cst = arith.constant 5.000000e-01 : f32
    %1 = vector.broadcast %cst : f32 to vector<4x8xf32>
    %2 = arith.cmpf ogt, %0, %1 : vector<4x8xf32>
    %3 = vector.shape_cast %0 : vector<4x8xf32> to vector<4x8x1xf32>
    %c0_1 = arith.constant 0 : index
    %c0_2 = arith.constant 0 : index
    %c0_3 = arith.constant 0 : index
    %4 = vector.load %arg0[%c0_1, %c0_2, %c0_3] : memref<4x8x32xf32, #tpu.memory_space<vmem>>, vector<4x8x32xf32>
    %5 = vector.shape_cast %4 : vector<4x8x32xf32> to vector<32x32xf32>
    %c0_4 = arith.constant 0 : index
    %c0_5 = arith.constant 0 : index
    %6 = vector.load %arg3[%c0_4, %c0_5] : memref<32x256xf32, #tpu.memory_space<vmem>>, vector<32x256xf32>
    %cst_6 = arith.constant dense<0.000000e+00> : vector<32x256xf32>
    %7 = tpu.matmul %5, %6, %cst_6 {dimension_numbers = #tpu.dot_dimension_numbers<[1], [0], [0], [1], [0, 0, 1, 1], [], []>} : vector<32x32xf32>, vector<32x256xf32>, vector<32x256xf32> -> vector<32x256xf32>
    %c0_7 = arith.constant 0 : index
    %c0_8 = arith.constant 0 : index
    %8 = vector.load %arg6[%c0_7, %c0_8] : memref<1x256xf32, #tpu.memory_space<vmem>>, vector<1x256xf32>
    %9 = vector.broadcast %8 : vector<1x256xf32> to vector<32x256xf32>
    %10 = arith.addf %7, %9 : vector<32x256xf32>
    %11 = vector.shape_cast %10 : vector<32x256xf32> to vector<4x8x256xf32>
    %12 = vector.extract_strided_slice %11 {offsets = [0, 0, 0], sizes = [4, 8, 128], strides = [1, 1, 1]} : vector<4x8x256xf32> to vector<4x8x128xf32>
    %c0_9 = arith.constant 0 : index
    %c0_10 = arith.constant 0 : index
    %13 = vector.load %arg4[%c0_9, %c0_10] : memref<32x128xf32, #tpu.memory_space<vmem>>, vector<32x128xf32>
    %cst_11 = arith.constant 0.000000e+00 : f32
    %14 = vector.broadcast %cst_11 : f32 to vector<4x32xf32>
    %cst_12 = arith.constant 0.000000e+00 : f32
    %15 = vector.broadcast %cst_12 : f32 to vector<4x32xf32>
    %16 = vector.extract_strided_slice %12 {offsets = [0, 0, 0], sizes = [4, 1, 128], strides = [1, 1, 1]} : vector<4x8x128xf32> to vector<4x1x128xf32>
    %17 = vector.shape_cast %16 : vector<4x1x128xf32> to vector<4x128xf32>
    %cst_13 = arith.constant dense<0.000000e+00> : vector<4x128xf32>
    %18 = tpu.matmul %14, %13, %cst_13 {dimension_numbers = #tpu.dot_dimension_numbers<[1], [0], [0], [1], [0, 0, 1, 1], [], []>} : vector<4x32xf32>, vector<32x128xf32>, vector<4x128xf32> -> vector<4x128xf32>
    %19 = arith.addf %17, %18 : vector<4x128xf32>
    %20 = arith.negf %19 : vector<4x128xf32>
    %21 = math.exp %20 : vector<4x128xf32>
    %cst_14 = arith.constant 1.000000e+00 : f32
    %22 = vector.broadcast %cst_14 : f32 to vector<4x128xf32>
    %23 = arith.addf %22, %21 : vector<4x128xf32>
    %24 = arith.divf %22, %23 : vector<4x128xf32>
    %25 = vector.extract_strided_slice %24 {offsets = [0, 0], sizes = [4, 32], strides = [1, 1]} : vector<4x128xf32> to vector<4x32xf32>
    %26 = vector.extract_strided_slice %24 {offsets = [0, 32], sizes = [4, 32], strides = [1, 1]} : vector<4x128xf32> to vector<4x32xf32>
    %27 = vector.extract_strided_slice %24 {offsets = [0, 96], sizes = [4, 32], strides = [1, 1]} : vector<4x128xf32> to vector<4x32xf32>
    %28 = vector.extract_strided_slice %19 {offsets = [0, 64], sizes = [4, 32], strides = [1, 1]} : vector<4x128xf32> to vector<4x32xf32>
    %29 = math.tanh %28 : vector<4x32xf32>
    %30 = arith.mulf %26, %15 : vector<4x32xf32>
    %31 = arith.mulf %25, %29 : vector<4x32xf32>
    %32 = arith.addf %30, %31 : vector<4x32xf32>
    %33 = math.tanh %32 : vector<4x32xf32>
    %34 = arith.mulf %27, %33 : vector<4x32xf32>
    %c0_15 = arith.constant 0 : index
    %c0_16 = arith.constant 0 : index
    %c0_17 = arith.constant 0 : index
    %35 = vector.load %arg16[%c0_15, %c0_16, %c0_17] : memref<4x8x64xf32, #tpu.memory_space<vmem>>, vector<4x1x32xf32>
    %36 = vector.shape_cast %35 : vector<4x1x32xf32> to vector<4x32xf32>
    %37 = vector.shape_cast %34 : vector<4x32xf32> to vector<4x1x32xf32>
    tpu.vector_store %arg16[%c0_15, %c0_16, %c0_17], %37 {strides = array<i32>} : memref<4x8x64xf32, #tpu.memory_space<vmem>>, vector<4x1x32xf32>,
    %38 = vector.extract_strided_slice %12 {offsets = [0, 1, 0], sizes = [4, 1, 128], strides = [1, 1, 1]} : vector<4x8x128xf32> to vector<4x1x128xf32>
    %39 = vector.shape_cast %38 : vector<4x1x128xf32> to vector<4x128xf32>
    %cst_18 = arith.constant dense<0.000000e+00> : vector<4x128xf32>
    %40 = tpu.matmul %34, %13, %cst_18 {dimension_numbers = #tpu.dot_dimension_numbers<[1], [0], [0], [1], [0, 0, 1, 1], [], []>} : vector<4x32xf32>, vector<32x128xf32>, vector<4x128xf32> -> vector<4x128xf32>
    %41 = arith.addf %39, %40 : vector<4x128xf32>
    %42 = arith.negf %41 : vector<4x128xf32>
    %43 = math.exp %42 : vector<4x128xf32>
    %cst_19 = arith.constant 1.000000e+00 : f32
    %44 = vector.broadcast %cst_19 : f32 to vector<4x128xf32>
    %45 = arith.addf %44, %43 : vector<4x128xf32>
    %46 = arith.divf %44, %45 : vector<4x128xf32>
    %47 = vector.extract_strided_slice %46 {offsets = [0, 0], sizes = [4, 32], strides = [1, 1]} : vector<4x128xf32> to vector<4x32xf32>
    %48 = vector.extract_strided_slice %46 {offsets = [0, 32], sizes = [4, 32], strides = [1, 1]} : vector<4x128xf32> to vector<4x32xf32>
    %49 = vector.extract_strided_slice %46 {offsets = [0, 96], sizes = [4, 32], strides = [1, 1]} : vector<4x128xf32> to vector<4x32xf32>
    %50 = vector.extract_strided_slice %41 {offsets = [0, 64], sizes = [4, 32], strides = [1, 1]} : vector<4x128xf32> to vector<4x32xf32>
    %51 = math.tanh %50 : vector<4x32xf32>
    %52 = arith.mulf %48, %32 : vector<4x32xf32>
    %53 = arith.mulf %47, %51 : vector<4x32xf32>
    %54 = arith.addf %52, %53 : vector<4x32xf32>
    %55 = math.tanh %54 : vector<4x32xf32>
    %56 = arith.mulf %49, %55 : vector<4x32xf32>
    %c0_20 = arith.constant 0 : index
    %c1 = arith.constant 1 : index
    %c0_21 = arith.constant 0 : index
    %57 = vector.load %arg16[%c0_20, %c1, %c0_21] : memref<4x8x64xf32, #tpu.memory_space<vmem>>, vector<4x1x32xf32>
    %58 = vector.shape_cast %57 : vector<4x1x32xf32> to vector<4x32xf32>
    %59 = vector.shape_cast %56 : vector<4x32xf32> to vector<4x1x32xf32>
    tpu.vector_store %arg16[%c0_20, %c1, %c0_21], %59 {strides = array<i32>} : memref<4x8x64xf32, #tpu.memory_space<vmem>>, vector<4x1x32xf32>,
    %60 = vector.extract_strided_slice %12 {offsets = [0, 2, 0], sizes = [4, 1, 128], strides = [1, 1, 1]} : vector<4x8x128xf32> to vector<4x1x128xf32>
    %61 = vector.shape_cast %60 : vector<4x1x128xf32> to vector<4x128xf32>
    %cst_22 = arith.constant dense<0.000000e+00> : vector<4x128xf32>
    %62 = tpu.matmul %56, %13, %cst_22 {dimension_numbers = #tpu.dot_dimension_numbers<[1], [0], [0], [1], [0, 0, 1, 1], [], []>} : vector<4x32xf32>, vector<32x128xf32>, vector<4x128xf32> -> vector<4x128xf32>
    %63 = arith.addf %61, %62 : vector<4x128xf32>
    %64 = arith.negf %63 : vector<4x128xf32>
    %65 = math.exp %64 : vector<4x128xf32>
    %cst_23 = arith.constant 1.000000e+00 : f32
    %66 = vector.broadcast %cst_23 : f32 to vector<4x128xf32>
    %67 = arith.addf %66, %65 : vector<4x128xf32>
    %68 = arith.divf %66, %67 : vector<4x128xf32>
    %69 = vector.extract_strided_slice %68 {offsets = [0, 0], sizes = [4, 32], strides = [1, 1]} : vector<4x128xf32> to vector<4x32xf32>
    %70 = vector.extract_strided_slice %68 {offsets = [0, 32], sizes = [4, 32], strides = [1, 1]} : vector<4x128xf32> to vector<4x32xf32>
    %71 = vector.extract_strided_slice %68 {offsets = [0, 96], sizes = [4, 32], strides = [1, 1]} : vector<4x128xf32> to vector<4x32xf32>
    %72 = vector.extract_strided_slice %63 {offsets = [0, 64], sizes = [4, 32], strides = [1, 1]} : vector<4x128xf32> to vector<4x32xf32>
    %73 = math.tanh %72 : vector<4x32xf32>
    %74 = arith.mulf %70, %54 : vector<4x32xf32>
    %75 = arith.mulf %69, %73 : vector<4x32xf32>
    %76 = arith.addf %74, %75 : vector<4x32xf32>
    %77 = math.tanh %76 : vector<4x32xf32>
    %78 = arith.mulf %71, %77 : vector<4x32xf32>
    %c0_24 = arith.constant 0 : index
    %c2 = arith.constant 2 : index
    %c0_25 = arith.constant 0 : index
    %79 = vector.load %arg16[%c0_24, %c2, %c0_25] : memref<4x8x64xf32, #tpu.memory_space<vmem>>, vector<4x1x32xf32>
    %80 = vector.shape_cast %79 : vector<4x1x32xf32> to vector<4x32xf32>
    %81 = vector.shape_cast %78 : vector<4x32xf32> to vector<4x1x32xf32>
    tpu.vector_store %arg16[%c0_24, %c2, %c0_25], %81 {strides = array<i32>} : memref<4x8x64xf32, #tpu.memory_space<vmem>>, vector<4x1x32xf32>,
    %82 = vector.extract_strided_slice %12 {offsets = [0, 3, 0], sizes = [4, 1, 128], strides = [1, 1, 1]} : vector<4x8x128xf32> to vector<4x1x128xf32>
    %83 = vector.shape_cast %82 : vector<4x1x128xf32> to vector<4x128xf32>
    %cst_26 = arith.constant dense<0.000000e+00> : vector<4x128xf32>
    %84 = tpu.matmul %78, %13, %cst_26 {dimension_numbers = #tpu.dot_dimension_numbers<[1], [0], [0], [1], [0, 0, 1, 1], [], []>} : vector<4x32xf32>, vector<32x128xf32>, vector<4x128xf32> -> vector<4x128xf32>
    %85 = arith.addf %83, %84 : vector<4x128xf32>
    %86 = arith.negf %85 : vector<4x128xf32>
    %87 = math.exp %86 : vector<4x128xf32>
    %cst_27 = arith.constant 1.000000e+00 : f32
    %88 = vector.broadcast %cst_27 : f32 to vector<4x128xf32>
    %89 = arith.addf %88, %87 : vector<4x128xf32>
    %90 = arith.divf %88, %89 : vector<4x128xf32>
    %91 = vector.extract_strided_slice %90 {offsets = [0, 0], sizes = [4, 32], strides = [1, 1]} : vector<4x128xf32> to vector<4x32xf32>
    %92 = vector.extract_strided_slice %90 {offsets = [0, 32], sizes = [4, 32], strides = [1, 1]} : vector<4x128xf32> to vector<4x32xf32>
    %93 = vector.extract_strided_slice %90 {offsets = [0, 96], sizes = [4, 32], strides = [1, 1]} : vector<4x128xf32> to vector<4x32xf32>
    %94 = vector.extract_strided_slice %85 {offsets = [0, 64], sizes = [4, 32], strides = [1, 1]} : vector<4x128xf32> to vector<4x32xf32>
    %95 = math.tanh %94 : vector<4x32xf32>
    %96 = arith.mulf %92, %76 : vector<4x32xf32>
    %97 = arith.mulf %91, %95 : vector<4x32xf32>
    %98 = arith.addf %96, %97 : vector<4x32xf32>
    %99 = math.tanh %98 : vector<4x32xf32>
    %100 = arith.mulf %93, %99 : vector<4x32xf32>
    %c0_28 = arith.constant 0 : index
    %c3 = arith.constant 3 : index
    %c0_29 = arith.constant 0 : index
    %101 = vector.load %arg16[%c0_28, %c3, %c0_29] : memref<4x8x64xf32, #tpu.memory_space<vmem>>, vector<4x1x32xf32>
    %102 = vector.shape_cast %101 : vector<4x1x32xf32> to vector<4x32xf32>
    %103 = vector.shape_cast %100 : vector<4x32xf32> to vector<4x1x32xf32>
    tpu.vector_store %arg16[%c0_28, %c3, %c0_29], %103 {strides = array<i32>} : memref<4x8x64xf32, #tpu.memory_space<vmem>>, vector<4x1x32xf32>,
    %104 = vector.extract_strided_slice %12 {offsets = [0, 4, 0], sizes = [4, 1, 128], strides = [1, 1, 1]} : vector<4x8x128xf32> to vector<4x1x128xf32>
    %105 = vector.shape_cast %104 : vector<4x1x128xf32> to vector<4x128xf32>
    %cst_30 = arith.constant dense<0.000000e+00> : vector<4x128xf32>
    %106 = tpu.matmul %100, %13, %cst_30 {dimension_numbers = #tpu.dot_dimension_numbers<[1], [0], [0], [1], [0, 0, 1, 1], [], []>} : vector<4x32xf32>, vector<32x128xf32>, vector<4x128xf32> -> vector<4x128xf32>
    %107 = arith.addf %105, %106 : vector<4x128xf32>
    %108 = arith.negf %107 : vector<4x128xf32>
    %109 = math.exp %108 : vector<4x128xf32>
    %cst_31 = arith.constant 1.000000e+00 : f32
    %110 = vector.broadcast %cst_31 : f32 to vector<4x128xf32>
    %111 = arith.addf %110, %109 : vector<4x128xf32>
    %112 = arith.divf %110, %111 : vector<4x128xf32>
    %113 = vector.extract_strided_slice %112 {offsets = [0, 0], sizes = [4, 32], strides = [1, 1]} : vector<4x128xf32> to vector<4x32xf32>
    %114 = vector.extract_strided_slice %112 {offsets = [0, 32], sizes = [4, 32], strides = [1, 1]} : vector<4x128xf32> to vector<4x32xf32>
    %115 = vector.extract_strided_slice %112 {offsets = [0, 96], sizes = [4, 32], strides = [1, 1]} : vector<4x128xf32> to vector<4x32xf32>
    %116 = vector.extract_strided_slice %107 {offsets = [0, 64], sizes = [4, 32], strides = [1, 1]} : vector<4x128xf32> to vector<4x32xf32>
    %117 = math.tanh %116 : vector<4x32xf32>
    %118 = arith.mulf %114, %98 : vector<4x32xf32>
    %119 = arith.mulf %113, %117 : vector<4x32xf32>
    %120 = arith.addf %118, %119 : vector<4x32xf32>
    %121 = math.tanh %120 : vector<4x32xf32>
    %122 = arith.mulf %115, %121 : vector<4x32xf32>
    %c0_32 = arith.constant 0 : index
    %c4 = arith.constant 4 : index
    %c0_33 = arith.constant 0 : index
    %123 = vector.load %arg16[%c0_32, %c4, %c0_33] : memref<4x8x64xf32, #tpu.memory_space<vmem>>, vector<4x1x32xf32>
    %124 = vector.shape_cast %123 : vector<4x1x32xf32> to vector<4x32xf32>
    %125 = vector.shape_cast %122 : vector<4x32xf32> to vector<4x1x32xf32>
    tpu.vector_store %arg16[%c0_32, %c4, %c0_33], %125 {strides = array<i32>} : memref<4x8x64xf32, #tpu.memory_space<vmem>>, vector<4x1x32xf32>,
    %126 = vector.extract_strided_slice %12 {offsets = [0, 5, 0], sizes = [4, 1, 128], strides = [1, 1, 1]} : vector<4x8x128xf32> to vector<4x1x128xf32>
    %127 = vector.shape_cast %126 : vector<4x1x128xf32> to vector<4x128xf32>
    %cst_34 = arith.constant dense<0.000000e+00> : vector<4x128xf32>
    %128 = tpu.matmul %122, %13, %cst_34 {dimension_numbers = #tpu.dot_dimension_numbers<[1], [0], [0], [1], [0, 0, 1, 1], [], []>} : vector<4x32xf32>, vector<32x128xf32>, vector<4x128xf32> -> vector<4x128xf32>
    %129 = arith.addf %127, %128 : vector<4x128xf32>
    %130 = arith.negf %129 : vector<4x128xf32>
    %131 = math.exp %130 : vector<4x128xf32>
    %cst_35 = arith.constant 1.000000e+00 : f32
    %132 = vector.broadcast %cst_35 : f32 to vector<4x128xf32>
    %133 = arith.addf %132, %131 : vector<4x128xf32>
    %134 = arith.divf %132, %133 : vector<4x128xf32>
    %135 = vector.extract_strided_slice %134 {offsets = [0, 0], sizes = [4, 32], strides = [1, 1]} : vector<4x128xf32> to vector<4x32xf32>
    %136 = vector.extract_strided_slice %134 {offsets = [0, 32], sizes = [4, 32], strides = [1, 1]} : vector<4x128xf32> to vector<4x32xf32>
    %137 = vector.extract_strided_slice %134 {offsets = [0, 96], sizes = [4, 32], strides = [1, 1]} : vector<4x128xf32> to vector<4x32xf32>
    %138 = vector.extract_strided_slice %129 {offsets = [0, 64], sizes = [4, 32], strides = [1, 1]} : vector<4x128xf32> to vector<4x32xf32>
    %139 = math.tanh %138 : vector<4x32xf32>
    %140 = arith.mulf %136, %120 : vector<4x32xf32>
    %141 = arith.mulf %135, %139 : vector<4x32xf32>
    %142 = arith.addf %140, %141 : vector<4x32xf32>
    %143 = math.tanh %142 : vector<4x32xf32>
    %144 = arith.mulf %137, %143 : vector<4x32xf32>
    %c0_36 = arith.constant 0 : index
    %c5 = arith.constant 5 : index
    %c0_37 = arith.constant 0 : index
    %145 = vector.load %arg16[%c0_36, %c5, %c0_37] : memref<4x8x64xf32, #tpu.memory_space<vmem>>, vector<4x1x32xf32>
    %146 = vector.shape_cast %145 : vector<4x1x32xf32> to vector<4x32xf32>
    %147 = vector.shape_cast %144 : vector<4x32xf32> to vector<4x1x32xf32>
    tpu.vector_store %arg16[%c0_36, %c5, %c0_37], %147 {strides = array<i32>} : memref<4x8x64xf32, #tpu.memory_space<vmem>>, vector<4x1x32xf32>,
    %148 = vector.extract_strided_slice %12 {offsets = [0, 6, 0], sizes = [4, 1, 128], strides = [1, 1, 1]} : vector<4x8x128xf32> to vector<4x1x128xf32>
    %149 = vector.shape_cast %148 : vector<4x1x128xf32> to vector<4x128xf32>
    %cst_38 = arith.constant dense<0.000000e+00> : vector<4x128xf32>
    %150 = tpu.matmul %144, %13, %cst_38 {dimension_numbers = #tpu.dot_dimension_numbers<[1], [0], [0], [1], [0, 0, 1, 1], [], []>} : vector<4x32xf32>, vector<32x128xf32>, vector<4x128xf32> -> vector<4x128xf32>
    %151 = arith.addf %149, %150 : vector<4x128xf32>
    %152 = arith.negf %151 : vector<4x128xf32>
    %153 = math.exp %152 : vector<4x128xf32>
    %cst_39 = arith.constant 1.000000e+00 : f32
    %154 = vector.broadcast %cst_39 : f32 to vector<4x128xf32>
    %155 = arith.addf %154, %153 : vector<4x128xf32>
    %156 = arith.divf %154, %155 : vector<4x128xf32>
    %157 = vector.extract_strided_slice %156 {offsets = [0, 0], sizes = [4, 32], strides = [1, 1]} : vector<4x128xf32> to vector<4x32xf32>
    %158 = vector.extract_strided_slice %156 {offsets = [0, 32], sizes = [4, 32], strides = [1, 1]} : vector<4x128xf32> to vector<4x32xf32>
    %159 = vector.extract_strided_slice %156 {offsets = [0, 96], sizes = [4, 32], strides = [1, 1]} : vector<4x128xf32> to vector<4x32xf32>
    %160 = vector.extract_strided_slice %151 {offsets = [0, 64], sizes = [4, 32], strides = [1, 1]} : vector<4x128xf32> to vector<4x32xf32>
    %161 = math.tanh %160 : vector<4x32xf32>
    %162 = arith.mulf %158, %142 : vector<4x32xf32>
    %163 = arith.mulf %157, %161 : vector<4x32xf32>
    %164 = arith.addf %162, %163 : vector<4x32xf32>
    %165 = math.tanh %164 : vector<4x32xf32>
    %166 = arith.mulf %159, %165 : vector<4x32xf32>
    %c0_40 = arith.constant 0 : index
    %c6 = arith.constant 6 : index
    %c0_41 = arith.constant 0 : index
    %167 = vector.load %arg16[%c0_40, %c6, %c0_41] : memref<4x8x64xf32, #tpu.memory_space<vmem>>, vector<4x1x32xf32>
    %168 = vector.shape_cast %167 : vector<4x1x32xf32> to vector<4x32xf32>
    %169 = vector.shape_cast %166 : vector<4x32xf32> to vector<4x1x32xf32>
    tpu.vector_store %arg16[%c0_40, %c6, %c0_41], %169 {strides = array<i32>} : memref<4x8x64xf32, #tpu.memory_space<vmem>>, vector<4x1x32xf32>,
    %170 = vector.extract_strided_slice %12 {offsets = [0, 7, 0], sizes = [4, 1, 128], strides = [1, 1, 1]} : vector<4x8x128xf32> to vector<4x1x128xf32>
    %171 = vector.shape_cast %170 : vector<4x1x128xf32> to vector<4x128xf32>
    %cst_42 = arith.constant dense<0.000000e+00> : vector<4x128xf32>
    %172 = tpu.matmul %166, %13, %cst_42 {dimension_numbers = #tpu.dot_dimension_numbers<[1], [0], [0], [1], [0, 0, 1, 1], [], []>} : vector<4x32xf32>, vector<32x128xf32>, vector<4x128xf32> -> vector<4x128xf32>
    %173 = arith.addf %171, %172 : vector<4x128xf32>
    %174 = arith.negf %173 : vector<4x128xf32>
    %175 = math.exp %174 : vector<4x128xf32>
    %cst_43 = arith.constant 1.000000e+00 : f32
    %176 = vector.broadcast %cst_43 : f32 to vector<4x128xf32>
    %177 = arith.addf %176, %175 : vector<4x128xf32>
    %178 = arith.divf %176, %177 : vector<4x128xf32>
    %179 = vector.extract_strided_slice %178 {offsets = [0, 0], sizes = [4, 32], strides = [1, 1]} : vector<4x128xf32> to vector<4x32xf32>
    %180 = vector.extract_strided_slice %178 {offsets = [0, 32], sizes = [4, 32], strides = [1, 1]} : vector<4x128xf32> to vector<4x32xf32>
    %181 = vector.extract_strided_slice %178 {offsets = [0, 96], sizes = [4, 32], strides = [1, 1]} : vector<4x128xf32> to vector<4x32xf32>
    %182 = vector.extract_strided_slice %173 {offsets = [0, 64], sizes = [4, 32], strides = [1, 1]} : vector<4x128xf32> to vector<4x32xf32>
    %183 = math.tanh %182 : vector<4x32xf32>
    %184 = arith.mulf %180, %164 : vector<4x32xf32>
    %185 = arith.mulf %179, %183 : vector<4x32xf32>
    %186 = arith.addf %184, %185 : vector<4x32xf32>
    %187 = math.tanh %186 : vector<4x32xf32>
    %188 = arith.mulf %181, %187 : vector<4x32xf32>
    %c0_44 = arith.constant 0 : index
    %c7 = arith.constant 7 : index
    %c0_45 = arith.constant 0 : index
    %189 = vector.load %arg16[%c0_44, %c7, %c0_45] : memref<4x8x64xf32, #tpu.memory_space<vmem>>, vector<4x1x32xf32>
    %190 = vector.shape_cast %189 : vector<4x1x32xf32> to vector<4x32xf32>
    %191 = vector.shape_cast %188 : vector<4x32xf32> to vector<4x1x32xf32>
    tpu.vector_store %arg16[%c0_44, %c7, %c0_45], %191 {strides = array<i32>} : memref<4x8x64xf32, #tpu.memory_space<vmem>>, vector<4x1x32xf32>,
    %192 = vector.extract_strided_slice %11 {offsets = [0, 0, 128], sizes = [4, 8, 128], strides = [1, 1, 1]} : vector<4x8x256xf32> to vector<4x8x128xf32>
    %c0_46 = arith.constant 0 : index
    %c0_47 = arith.constant 0 : index
    %193 = vector.load %arg5[%c0_46, %c0_47] : memref<32x128xf32, #tpu.memory_space<vmem>>, vector<32x128xf32>
    %cst_48 = arith.constant 0.000000e+00 : f32
    %194 = vector.broadcast %cst_48 : f32 to vector<4x32xf32>
    %cst_49 = arith.constant 0.000000e+00 : f32
    %195 = vector.broadcast %cst_49 : f32 to vector<4x32xf32>
    %196 = vector.extract_strided_slice %192 {offsets = [0, 7, 0], sizes = [4, 1, 128], strides = [1, 1, 1]} : vector<4x8x128xf32> to vector<4x1x128xf32>
    %197 = vector.shape_cast %196 : vector<4x1x128xf32> to vector<4x128xf32>
    %cst_50 = arith.constant dense<0.000000e+00> : vector<4x128xf32>
    %198 = tpu.matmul %194, %193, %cst_50 {dimension_numbers = #tpu.dot_dimension_numbers<[1], [0], [0], [1], [0, 0, 1, 1], [], []>} : vector<4x32xf32>, vector<32x128xf32>, vector<4x128xf32> -> vector<4x128xf32>
    %199 = arith.addf %197, %198 : vector<4x128xf32>
    %200 = arith.negf %199 : vector<4x128xf32>
    %201 = math.exp %200 : vector<4x128xf32>
    %cst_51 = arith.constant 1.000000e+00 : f32
    %202 = vector.broadcast %cst_51 : f32 to vector<4x128xf32>
    %203 = arith.addf %202, %201 : vector<4x128xf32>
    %204 = arith.divf %202, %203 : vector<4x128xf32>
    %205 = vector.extract_strided_slice %204 {offsets = [0, 0], sizes = [4, 32], strides = [1, 1]} : vector<4x128xf32> to vector<4x32xf32>
    %206 = vector.extract_strided_slice %204 {offsets = [0, 32], sizes = [4, 32], strides = [1, 1]} : vector<4x128xf32> to vector<4x32xf32>
    %207 = vector.extract_strided_slice %204 {offsets = [0, 96], sizes = [4, 32], strides = [1, 1]} : vector<4x128xf32> to vector<4x32xf32>
    %208 = vector.extract_strided_slice %199 {offsets = [0, 64], sizes = [4, 32], strides = [1, 1]} : vector<4x128xf32> to vector<4x32xf32>
    %209 = math.tanh %208 : vector<4x32xf32>
    %210 = arith.mulf %206, %195 : vector<4x32xf32>
    %211 = arith.mulf %205, %209 : vector<4x32xf32>
    %212 = arith.addf %210, %211 : vector<4x32xf32>
    %213 = math.tanh %212 : vector<4x32xf32>
    %214 = arith.mulf %207, %213 : vector<4x32xf32>
    %215 = vector.extract_strided_slice %2 {offsets = [0, 7], sizes = [4, 1], strides = [1, 1]} : vector<4x8xi1> to vector<4x1xi1>
    %216 = vector.shape_cast %215 : vector<4x1xi1> to vector<4x1xi1>
    %217 = vector.broadcast %216 : vector<4x1xi1> to vector<4x32xi1>
    %218 = arith.select %217, %214, %194 : vector<4x32xi1>, vector<4x32xf32>
    %219 = vector.shape_cast %215 : vector<4x1xi1> to vector<4x1xi1>
    %220 = vector.broadcast %219 : vector<4x1xi1> to vector<4x32xi1>
    %221 = arith.select %220, %212, %195 : vector<4x32xi1>, vector<4x32xf32>
    %c0_52 = arith.constant 0 : index
    %c7_53 = arith.constant 7 : index
    %c32 = arith.constant 32 : index
    %222 = vector.load %arg16[%c0_52, %c7_53, %c32] : memref<4x8x64xf32, #tpu.memory_space<vmem>>, vector<4x1x32xf32>
    %223 = vector.shape_cast %222 : vector<4x1x32xf32> to vector<4x32xf32>
    %224 = vector.shape_cast %218 : vector<4x32xf32> to vector<4x1x32xf32>
    tpu.vector_store %arg16[%c0_52, %c7_53, %c32], %224 {strides = array<i32>} : memref<4x8x64xf32, #tpu.memory_space<vmem>>, vector<4x1x32xf32>,
    %225 = vector.extract_strided_slice %192 {offsets = [0, 6, 0], sizes = [4, 1, 128], strides = [1, 1, 1]} : vector<4x8x128xf32> to vector<4x1x128xf32>
    %226 = vector.shape_cast %225 : vector<4x1x128xf32> to vector<4x128xf32>
    %cst_54 = arith.constant dense<0.000000e+00> : vector<4x128xf32>
    %227 = tpu.matmul %218, %193, %cst_54 {dimension_numbers = #tpu.dot_dimension_numbers<[1], [0], [0], [1], [0, 0, 1, 1], [], []>} : vector<4x32xf32>, vector<32x128xf32>, vector<4x128xf32> -> vector<4x128xf32>
    %228 = arith.addf %226, %227 : vector<4x128xf32>
    %229 = arith.negf %228 : vector<4x128xf32>
    %230 = math.exp %229 : vector<4x128xf32>
    %cst_55 = arith.constant 1.000000e+00 : f32
    %231 = vector.broadcast %cst_55 : f32 to vector<4x128xf32>
    %232 = arith.addf %231, %230 : vector<4x128xf32>
    %233 = arith.divf %231, %232 : vector<4x128xf32>
    %234 = vector.extract_strided_slice %233 {offsets = [0, 0], sizes = [4, 32], strides = [1, 1]} : vector<4x128xf32> to vector<4x32xf32>
    %235 = vector.extract_strided_slice %233 {offsets = [0, 32], sizes = [4, 32], strides = [1, 1]} : vector<4x128xf32> to vector<4x32xf32>
    %236 = vector.extract_strided_slice %233 {offsets = [0, 96], sizes = [4, 32], strides = [1, 1]} : vector<4x128xf32> to vector<4x32xf32>
    %237 = vector.extract_strided_slice %228 {offsets = [0, 64], sizes = [4, 32], strides = [1, 1]} : vector<4x128xf32> to vector<4x32xf32>
    %238 = math.tanh %237 : vector<4x32xf32>
    %239 = arith.mulf %235, %221 : vector<4x32xf32>
    %240 = arith.mulf %234, %238 : vector<4x32xf32>
    %241 = arith.addf %239, %240 : vector<4x32xf32>
    %242 = math.tanh %241 : vector<4x32xf32>
    %243 = arith.mulf %236, %242 : vector<4x32xf32>
    %244 = vector.extract_strided_slice %2 {offsets = [0, 6], sizes = [4, 1], strides = [1, 1]} : vector<4x8xi1> to vector<4x1xi1>
    %245 = vector.shape_cast %244 : vector<4x1xi1> to vector<4x1xi1>
    %246 = vector.broadcast %245 : vector<4x1xi1> to vector<4x32xi1>
    %247 = arith.select %246, %243, %218 : vector<4x32xi1>, vector<4x32xf32>
    %248 = vector.shape_cast %244 : vector<4x1xi1> to vector<4x1xi1>
    %249 = vector.broadcast %248 : vector<4x1xi1> to vector<4x32xi1>
    %250 = arith.select %249, %241, %221 : vector<4x32xi1>, vector<4x32xf32>
    %c0_56 = arith.constant 0 : index
    %c6_57 = arith.constant 6 : index
    %c32_58 = arith.constant 32 : index
    %251 = vector.load %arg16[%c0_56, %c6_57, %c32_58] : memref<4x8x64xf32, #tpu.memory_space<vmem>>, vector<4x1x32xf32>
    %252 = vector.shape_cast %251 : vector<4x1x32xf32> to vector<4x32xf32>
    %253 = vector.shape_cast %247 : vector<4x32xf32> to vector<4x1x32xf32>
    tpu.vector_store %arg16[%c0_56, %c6_57, %c32_58], %253 {strides = array<i32>} : memref<4x8x64xf32, #tpu.memory_space<vmem>>, vector<4x1x32xf32>,
    %254 = vector.extract_strided_slice %192 {offsets = [0, 5, 0], sizes = [4, 1, 128], strides = [1, 1, 1]} : vector<4x8x128xf32> to vector<4x1x128xf32>
    %255 = vector.shape_cast %254 : vector<4x1x128xf32> to vector<4x128xf32>
    %cst_59 = arith.constant dense<0.000000e+00> : vector<4x128xf32>
    %256 = tpu.matmul %247, %193, %cst_59 {dimension_numbers = #tpu.dot_dimension_numbers<[1], [0], [0], [1], [0, 0, 1, 1], [], []>} : vector<4x32xf32>, vector<32x128xf32>, vector<4x128xf32> -> vector<4x128xf32>
    %257 = arith.addf %255, %256 : vector<4x128xf32>
    %258 = arith.negf %257 : vector<4x128xf32>
    %259 = math.exp %258 : vector<4x128xf32>
    %cst_60 = arith.constant 1.000000e+00 : f32
    %260 = vector.broadcast %cst_60 : f32 to vector<4x128xf32>
    %261 = arith.addf %260, %259 : vector<4x128xf32>
    %262 = arith.divf %260, %261 : vector<4x128xf32>
    %263 = vector.extract_strided_slice %262 {offsets = [0, 0], sizes = [4, 32], strides = [1, 1]} : vector<4x128xf32> to vector<4x32xf32>
    %264 = vector.extract_strided_slice %262 {offsets = [0, 32], sizes = [4, 32], strides = [1, 1]} : vector<4x128xf32> to vector<4x32xf32>
    %265 = vector.extract_strided_slice %262 {offsets = [0, 96], sizes = [4, 32], strides = [1, 1]} : vector<4x128xf32> to vector<4x32xf32>
    %266 = vector.extract_strided_slice %257 {offsets = [0, 64], sizes = [4, 32], strides = [1, 1]} : vector<4x128xf32> to vector<4x32xf32>
    %267 = math.tanh %266 : vector<4x32xf32>
    %268 = arith.mulf %264, %250 : vector<4x32xf32>
    %269 = arith.mulf %263, %267 : vector<4x32xf32>
    %270 = arith.addf %268, %269 : vector<4x32xf32>
    %271 = math.tanh %270 : vector<4x32xf32>
    %272 = arith.mulf %265, %271 : vector<4x32xf32>
    %273 = vector.extract_strided_slice %2 {offsets = [0, 5], sizes = [4, 1], strides = [1, 1]} : vector<4x8xi1> to vector<4x1xi1>
    %274 = vector.shape_cast %273 : vector<4x1xi1> to vector<4x1xi1>
    %275 = vector.broadcast %274 : vector<4x1xi1> to vector<4x32xi1>
    %276 = arith.select %275, %272, %247 : vector<4x32xi1>, vector<4x32xf32>
    %277 = vector.shape_cast %273 : vector<4x1xi1> to vector<4x1xi1>
    %278 = vector.broadcast %277 : vector<4x1xi1> to vector<4x32xi1>
    %279 = arith.select %278, %270, %250 : vector<4x32xi1>, vector<4x32xf32>
    %c0_61 = arith.constant 0 : index
    %c5_62 = arith.constant 5 : index
    %c32_63 = arith.constant 32 : index
    %280 = vector.load %arg16[%c0_61, %c5_62, %c32_63] : memref<4x8x64xf32, #tpu.memory_space<vmem>>, vector<4x1x32xf32>
    %281 = vector.shape_cast %280 : vector<4x1x32xf32> to vector<4x32xf32>
    %282 = vector.shape_cast %276 : vector<4x32xf32> to vector<4x1x32xf32>
    tpu.vector_store %arg16[%c0_61, %c5_62, %c32_63], %282 {strides = array<i32>} : memref<4x8x64xf32, #tpu.memory_space<vmem>>, vector<4x1x32xf32>,
    %283 = vector.extract_strided_slice %192 {offsets = [0, 4, 0], sizes = [4, 1, 128], strides = [1, 1, 1]} : vector<4x8x128xf32> to vector<4x1x128xf32>
    %284 = vector.shape_cast %283 : vector<4x1x128xf32> to vector<4x128xf32>
    %cst_64 = arith.constant dense<0.000000e+00> : vector<4x128xf32>
    %285 = tpu.matmul %276, %193, %cst_64 {dimension_numbers = #tpu.dot_dimension_numbers<[1], [0], [0], [1], [0, 0, 1, 1], [], []>} : vector<4x32xf32>, vector<32x128xf32>, vector<4x128xf32> -> vector<4x128xf32>
    %286 = arith.addf %284, %285 : vector<4x128xf32>
    %287 = arith.negf %286 : vector<4x128xf32>
    %288 = math.exp %287 : vector<4x128xf32>
    %cst_65 = arith.constant 1.000000e+00 : f32
    %289 = vector.broadcast %cst_65 : f32 to vector<4x128xf32>
    %290 = arith.addf %289, %288 : vector<4x128xf32>
    %291 = arith.divf %289, %290 : vector<4x128xf32>
    %292 = vector.extract_strided_slice %291 {offsets = [0, 0], sizes = [4, 32], strides = [1, 1]} : vector<4x128xf32> to vector<4x32xf32>
    %293 = vector.extract_strided_slice %291 {offsets = [0, 32], sizes = [4, 32], strides = [1, 1]} : vector<4x128xf32> to vector<4x32xf32>
    %294 = vector.extract_strided_slice %291 {offsets = [0, 96], sizes = [4, 32], strides = [1, 1]} : vector<4x128xf32> to vector<4x32xf32>
    %295 = vector.extract_strided_slice %286 {offsets = [0, 64], sizes = [4, 32], strides = [1, 1]} : vector<4x128xf32> to vector<4x32xf32>
    %296 = math.tanh %295 : vector<4x32xf32>
    %297 = arith.mulf %293, %279 : vector<4x32xf32>
    %298 = arith.mulf %292, %296 : vector<4x32xf32>
    %299 = arith.addf %297, %298 : vector<4x32xf32>
    %300 = math.tanh %299 : vector<4x32xf32>
    %301 = arith.mulf %294, %300 : vector<4x32xf32>
    %302 = vector.extract_strided_slice %2 {offsets = [0, 4], sizes = [4, 1], strides = [1, 1]} : vector<4x8xi1> to vector<4x1xi1>
    %303 = vector.shape_cast %302 : vector<4x1xi1> to vector<4x1xi1>
    %304 = vector.broadcast %303 : vector<4x1xi1> to vector<4x32xi1>
    %305 = arith.select %304, %301, %276 : vector<4x32xi1>, vector<4x32xf32>
    %306 = vector.shape_cast %302 : vector<4x1xi1> to vector<4x1xi1>
    %307 = vector.broadcast %306 : vector<4x1xi1> to vector<4x32xi1>
    %308 = arith.select %307, %299, %279 : vector<4x32xi1>, vector<4x32xf32>
    %c0_66 = arith.constant 0 : index
    %c4_67 = arith.constant 4 : index
    %c32_68 = arith.constant 32 : index
    %309 = vector.load %arg16[%c0_66, %c4_67, %c32_68] : memref<4x8x64xf32, #tpu.memory_space<vmem>>, vector<4x1x32xf32>
    %310 = vector.shape_cast %309 : vector<4x1x32xf32> to vector<4x32xf32>
    %311 = vector.shape_cast %305 : vector<4x32xf32> to vector<4x1x32xf32>
    tpu.vector_store %arg16[%c0_66, %c4_67, %c32_68], %311 {strides = array<i32>} : memref<4x8x64xf32, #tpu.memory_space<vmem>>, vector<4x1x32xf32>,
    %312 = vector.extract_strided_slice %192 {offsets = [0, 3, 0], sizes = [4, 1, 128], strides = [1, 1, 1]} : vector<4x8x128xf32> to vector<4x1x128xf32>
    %313 = vector.shape_cast %312 : vector<4x1x128xf32> to vector<4x128xf32>
    %cst_69 = arith.constant dense<0.000000e+00> : vector<4x128xf32>
    %314 = tpu.matmul %305, %193, %cst_69 {dimension_numbers = #tpu.dot_dimension_numbers<[1], [0], [0], [1], [0, 0, 1, 1], [], []>} : vector<4x32xf32>, vector<32x128xf32>, vector<4x128xf32> -> vector<4x128xf32>
    %315 = arith.addf %313, %314 : vector<4x128xf32>
    %316 = arith.negf %315 : vector<4x128xf32>
    %317 = math.exp %316 : vector<4x128xf32>
    %cst_70 = arith.constant 1.000000e+00 : f32
    %318 = vector.broadcast %cst_70 : f32 to vector<4x128xf32>
    %319 = arith.addf %318, %317 : vector<4x128xf32>
    %320 = arith.divf %318, %319 : vector<4x128xf32>
    %321 = vector.extract_strided_slice %320 {offsets = [0, 0], sizes = [4, 32], strides = [1, 1]} : vector<4x128xf32> to vector<4x32xf32>
    %322 = vector.extract_strided_slice %320 {offsets = [0, 32], sizes = [4, 32], strides = [1, 1]} : vector<4x128xf32> to vector<4x32xf32>
    %323 = vector.extract_strided_slice %320 {offsets = [0, 96], sizes = [4, 32], strides = [1, 1]} : vector<4x128xf32> to vector<4x32xf32>
    %324 = vector.extract_strided_slice %315 {offsets = [0, 64], sizes = [4, 32], strides = [1, 1]} : vector<4x128xf32> to vector<4x32xf32>
    %325 = math.tanh %324 : vector<4x32xf32>
    %326 = arith.mulf %322, %308 : vector<4x32xf32>
    %327 = arith.mulf %321, %325 : vector<4x32xf32>
    %328 = arith.addf %326, %327 : vector<4x32xf32>
    %329 = math.tanh %328 : vector<4x32xf32>
    %330 = arith.mulf %323, %329 : vector<4x32xf32>
    %331 = vector.extract_strided_slice %2 {offsets = [0, 3], sizes = [4, 1], strides = [1, 1]} : vector<4x8xi1> to vector<4x1xi1>
    %332 = vector.shape_cast %331 : vector<4x1xi1> to vector<4x1xi1>
    %333 = vector.broadcast %332 : vector<4x1xi1> to vector<4x32xi1>
    %334 = arith.select %333, %330, %305 : vector<4x32xi1>, vector<4x32xf32>
    %335 = vector.shape_cast %331 : vector<4x1xi1> to vector<4x1xi1>
    %336 = vector.broadcast %335 : vector<4x1xi1> to vector<4x32xi1>
    %337 = arith.select %336, %328, %308 : vector<4x32xi1>, vector<4x32xf32>
    %c0_71 = arith.constant 0 : index
    %c3_72 = arith.constant 3 : index
    %c32_73 = arith.constant 32 : index
    %338 = vector.load %arg16[%c0_71, %c3_72, %c32_73] : memref<4x8x64xf32, #tpu.memory_space<vmem>>, vector<4x1x32xf32>
    %339 = vector.shape_cast %338 : vector<4x1x32xf32> to vector<4x32xf32>
    %340 = vector.shape_cast %334 : vector<4x32xf32> to vector<4x1x32xf32>
    tpu.vector_store %arg16[%c0_71, %c3_72, %c32_73], %340 {strides = array<i32>} : memref<4x8x64xf32, #tpu.memory_space<vmem>>, vector<4x1x32xf32>,
    %341 = vector.extract_strided_slice %192 {offsets = [0, 2, 0], sizes = [4, 1, 128], strides = [1, 1, 1]} : vector<4x8x128xf32> to vector<4x1x128xf32>
    %342 = vector.shape_cast %341 : vector<4x1x128xf32> to vector<4x128xf32>
    %cst_74 = arith.constant dense<0.000000e+00> : vector<4x128xf32>
    %343 = tpu.matmul %334, %193, %cst_74 {dimension_numbers = #tpu.dot_dimension_numbers<[1], [0], [0], [1], [0, 0, 1, 1], [], []>} : vector<4x32xf32>, vector<32x128xf32>, vector<4x128xf32> -> vector<4x128xf32>
    %344 = arith.addf %342, %343 : vector<4x128xf32>
    %345 = arith.negf %344 : vector<4x128xf32>
    %346 = math.exp %345 : vector<4x128xf32>
    %cst_75 = arith.constant 1.000000e+00 : f32
    %347 = vector.broadcast %cst_75 : f32 to vector<4x128xf32>
    %348 = arith.addf %347, %346 : vector<4x128xf32>
    %349 = arith.divf %347, %348 : vector<4x128xf32>
    %350 = vector.extract_strided_slice %349 {offsets = [0, 0], sizes = [4, 32], strides = [1, 1]} : vector<4x128xf32> to vector<4x32xf32>
    %351 = vector.extract_strided_slice %349 {offsets = [0, 32], sizes = [4, 32], strides = [1, 1]} : vector<4x128xf32> to vector<4x32xf32>
    %352 = vector.extract_strided_slice %349 {offsets = [0, 96], sizes = [4, 32], strides = [1, 1]} : vector<4x128xf32> to vector<4x32xf32>
    %353 = vector.extract_strided_slice %344 {offsets = [0, 64], sizes = [4, 32], strides = [1, 1]} : vector<4x128xf32> to vector<4x32xf32>
    %354 = math.tanh %353 : vector<4x32xf32>
    %355 = arith.mulf %351, %337 : vector<4x32xf32>
    %356 = arith.mulf %350, %354 : vector<4x32xf32>
    %357 = arith.addf %355, %356 : vector<4x32xf32>
    %358 = math.tanh %357 : vector<4x32xf32>
    %359 = arith.mulf %352, %358 : vector<4x32xf32>
    %360 = vector.extract_strided_slice %2 {offsets = [0, 2], sizes = [4, 1], strides = [1, 1]} : vector<4x8xi1> to vector<4x1xi1>
    %361 = vector.shape_cast %360 : vector<4x1xi1> to vector<4x1xi1>
    %362 = vector.broadcast %361 : vector<4x1xi1> to vector<4x32xi1>
    %363 = arith.select %362, %359, %334 : vector<4x32xi1>, vector<4x32xf32>
    %364 = vector.shape_cast %360 : vector<4x1xi1> to vector<4x1xi1>
    %365 = vector.broadcast %364 : vector<4x1xi1> to vector<4x32xi1>
    %366 = arith.select %365, %357, %337 : vector<4x32xi1>, vector<4x32xf32>
    %c0_76 = arith.constant 0 : index
    %c2_77 = arith.constant 2 : index
    %c32_78 = arith.constant 32 : index
    %367 = vector.load %arg16[%c0_76, %c2_77, %c32_78] : memref<4x8x64xf32, #tpu.memory_space<vmem>>, vector<4x1x32xf32>
    %368 = vector.shape_cast %367 : vector<4x1x32xf32> to vector<4x32xf32>
    %369 = vector.shape_cast %363 : vector<4x32xf32> to vector<4x1x32xf32>
    tpu.vector_store %arg16[%c0_76, %c2_77, %c32_78], %369 {strides = array<i32>} : memref<4x8x64xf32, #tpu.memory_space<vmem>>, vector<4x1x32xf32>,
    %370 = vector.extract_strided_slice %192 {offsets = [0, 1, 0], sizes = [4, 1, 128], strides = [1, 1, 1]} : vector<4x8x128xf32> to vector<4x1x128xf32>
    %371 = vector.shape_cast %370 : vector<4x1x128xf32> to vector<4x128xf32>
    %cst_79 = arith.constant dense<0.000000e+00> : vector<4x128xf32>
    %372 = tpu.matmul %363, %193, %cst_79 {dimension_numbers = #tpu.dot_dimension_numbers<[1], [0], [0], [1], [0, 0, 1, 1], [], []>} : vector<4x32xf32>, vector<32x128xf32>, vector<4x128xf32> -> vector<4x128xf32>
    %373 = arith.addf %371, %372 : vector<4x128xf32>
    %374 = arith.negf %373 : vector<4x128xf32>
    %375 = math.exp %374 : vector<4x128xf32>
    %cst_80 = arith.constant 1.000000e+00 : f32
    %376 = vector.broadcast %cst_80 : f32 to vector<4x128xf32>
    %377 = arith.addf %376, %375 : vector<4x128xf32>
    %378 = arith.divf %376, %377 : vector<4x128xf32>
    %379 = vector.extract_strided_slice %378 {offsets = [0, 0], sizes = [4, 32], strides = [1, 1]} : vector<4x128xf32> to vector<4x32xf32>
    %380 = vector.extract_strided_slice %378 {offsets = [0, 32], sizes = [4, 32], strides = [1, 1]} : vector<4x128xf32> to vector<4x32xf32>
    %381 = vector.extract_strided_slice %378 {offsets = [0, 96], sizes = [4, 32], strides = [1, 1]} : vector<4x128xf32> to vector<4x32xf32>
    %382 = vector.extract_strided_slice %373 {offsets = [0, 64], sizes = [4, 32], strides = [1, 1]} : vector<4x128xf32> to vector<4x32xf32>
    %383 = math.tanh %382 : vector<4x32xf32>
    %384 = arith.mulf %380, %366 : vector<4x32xf32>
    %385 = arith.mulf %379, %383 : vector<4x32xf32>
    %386 = arith.addf %384, %385 : vector<4x32xf32>
    %387 = math.tanh %386 : vector<4x32xf32>
    %388 = arith.mulf %381, %387 : vector<4x32xf32>
    %389 = vector.extract_strided_slice %2 {offsets = [0, 1], sizes = [4, 1], strides = [1, 1]} : vector<4x8xi1> to vector<4x1xi1>
    %390 = vector.shape_cast %389 : vector<4x1xi1> to vector<4x1xi1>
    %391 = vector.broadcast %390 : vector<4x1xi1> to vector<4x32xi1>
    %392 = arith.select %391, %388, %363 : vector<4x32xi1>, vector<4x32xf32>
    %393 = vector.shape_cast %389 : vector<4x1xi1> to vector<4x1xi1>
    %394 = vector.broadcast %393 : vector<4x1xi1> to vector<4x32xi1>
    %395 = arith.select %394, %386, %366 : vector<4x32xi1>, vector<4x32xf32>
    %c0_81 = arith.constant 0 : index
    %c1_82 = arith.constant 1 : index
    %c32_83 = arith.constant 32 : index
    %396 = vector.load %arg16[%c0_81, %c1_82, %c32_83] : memref<4x8x64xf32, #tpu.memory_space<vmem>>, vector<4x1x32xf32>
    %397 = vector.shape_cast %396 : vector<4x1x32xf32> to vector<4x32xf32>
    %398 = vector.shape_cast %392 : vector<4x32xf32> to vector<4x1x32xf32>
    tpu.vector_store %arg16[%c0_81, %c1_82, %c32_83], %398 {strides = array<i32>} : memref<4x8x64xf32, #tpu.memory_space<vmem>>, vector<4x1x32xf32>,
    %399 = vector.extract_strided_slice %192 {offsets = [0, 0, 0], sizes = [4, 1, 128], strides = [1, 1, 1]} : vector<4x8x128xf32> to vector<4x1x128xf32>
    %400 = vector.shape_cast %399 : vector<4x1x128xf32> to vector<4x128xf32>
    %cst_84 = arith.constant dense<0.000000e+00> : vector<4x128xf32>
    %401 = tpu.matmul %392, %193, %cst_84 {dimension_numbers = #tpu.dot_dimension_numbers<[1], [0], [0], [1], [0, 0, 1, 1], [], []>} : vector<4x32xf32>, vector<32x128xf32>, vector<4x128xf32> -> vector<4x128xf32>
    %402 = arith.addf %400, %401 : vector<4x128xf32>
    %403 = arith.negf %402 : vector<4x128xf32>
    %404 = math.exp %403 : vector<4x128xf32>
    %cst_85 = arith.constant 1.000000e+00 : f32
    %405 = vector.broadcast %cst_85 : f32 to vector<4x128xf32>
    %406 = arith.addf %405, %404 : vector<4x128xf32>
    %407 = arith.divf %405, %406 : vector<4x128xf32>
    %408 = vector.extract_strided_slice %407 {offsets = [0, 0], sizes = [4, 32], strides = [1, 1]} : vector<4x128xf32> to vector<4x32xf32>
    %409 = vector.extract_strided_slice %407 {offsets = [0, 32], sizes = [4, 32], strides = [1, 1]} : vector<4x128xf32> to vector<4x32xf32>
    %410 = vector.extract_strided_slice %407 {offsets = [0, 96], sizes = [4, 32], strides = [1, 1]} : vector<4x128xf32> to vector<4x32xf32>
    %411 = vector.extract_strided_slice %402 {offsets = [0, 64], sizes = [4, 32], strides = [1, 1]} : vector<4x128xf32> to vector<4x32xf32>
    %412 = math.tanh %411 : vector<4x32xf32>
    %413 = arith.mulf %409, %395 : vector<4x32xf32>
    %414 = arith.mulf %408, %412 : vector<4x32xf32>
    %415 = arith.addf %413, %414 : vector<4x32xf32>
    %416 = math.tanh %415 : vector<4x32xf32>
    %417 = arith.mulf %410, %416 : vector<4x32xf32>
    %418 = vector.extract_strided_slice %2 {offsets = [0, 0], sizes = [4, 1], strides = [1, 1]} : vector<4x8xi1> to vector<4x1xi1>
    %419 = vector.shape_cast %418 : vector<4x1xi1> to vector<4x1xi1>
    %420 = vector.broadcast %419 : vector<4x1xi1> to vector<4x32xi1>
    %421 = arith.select %420, %417, %392 : vector<4x32xi1>, vector<4x32xf32>
    %c0_86 = arith.constant 0 : index
    %c0_87 = arith.constant 0 : index
    %c32_88 = arith.constant 32 : index
    %422 = vector.load %arg16[%c0_86, %c0_87, %c32_88] : memref<4x8x64xf32, #tpu.memory_space<vmem>>, vector<4x1x32xf32>
    %423 = vector.shape_cast %422 : vector<4x1x32xf32> to vector<4x32xf32>
    %424 = vector.shape_cast %421 : vector<4x32xf32> to vector<4x1x32xf32>
    tpu.vector_store %arg16[%c0_86, %c0_87, %c32_88], %424 {strides = array<i32>} : memref<4x8x64xf32, #tpu.memory_space<vmem>>, vector<4x1x32xf32>,
    %c0_89 = arith.constant 0 : index
    %c0_90 = arith.constant 0 : index
    %c0_91 = arith.constant 0 : index
    %425 = vector.load %arg16[%c0_89, %c0_90, %c0_91] : memref<4x8x64xf32, #tpu.memory_space<vmem>>, vector<4x8x64xf32>
    %426 = vector.broadcast %3 : vector<4x8x1xf32> to vector<4x8x64xf32>
    %427 = arith.mulf %425, %426 : vector<4x8x64xf32>
    %428 = vector.shape_cast %427 : vector<4x8x64xf32> to vector<32x64xf32>
    %c0_92 = arith.constant 0 : index
    %c0_93 = arith.constant 0 : index
    %429 = vector.load %arg7[%c0_92, %c0_93] : memref<64x256xf32, #tpu.memory_space<vmem>>, vector<64x256xf32>
    %cst_94 = arith.constant dense<0.000000e+00> : vector<32x256xf32>
    %430 = tpu.matmul %428, %429, %cst_94 {dimension_numbers = #tpu.dot_dimension_numbers<[1], [0], [0], [1], [0, 0, 1, 1], [], []>} : vector<32x64xf32>, vector<64x256xf32>, vector<32x256xf32> -> vector<32x256xf32>
    %c0_95 = arith.constant 0 : index
    %c0_96 = arith.constant 0 : index
    %431 = vector.load %arg10[%c0_95, %c0_96] : memref<1x256xf32, #tpu.memory_space<vmem>>, vector<1x256xf32>
    %432 = vector.broadcast %431 : vector<1x256xf32> to vector<32x256xf32>
    %433 = arith.addf %430, %432 : vector<32x256xf32>
    %434 = vector.shape_cast %433 : vector<32x256xf32> to vector<4x8x256xf32>
    %435 = vector.extract_strided_slice %434 {offsets = [0, 0, 0], sizes = [4, 8, 128], strides = [1, 1, 1]} : vector<4x8x256xf32> to vector<4x8x128xf32>
    %c0_97 = arith.constant 0 : index
    %c0_98 = arith.constant 0 : index
    %436 = vector.load %arg8[%c0_97, %c0_98] : memref<32x128xf32, #tpu.memory_space<vmem>>, vector<32x128xf32>
    %cst_99 = arith.constant 0.000000e+00 : f32
    %437 = vector.broadcast %cst_99 : f32 to vector<4x32xf32>
    %cst_100 = arith.constant 0.000000e+00 : f32
    %438 = vector.broadcast %cst_100 : f32 to vector<4x32xf32>
    %439 = vector.extract_strided_slice %435 {offsets = [0, 0, 0], sizes = [4, 1, 128], strides = [1, 1, 1]} : vector<4x8x128xf32> to vector<4x1x128xf32>
    %440 = vector.shape_cast %439 : vector<4x1x128xf32> to vector<4x128xf32>
    %cst_101 = arith.constant dense<0.000000e+00> : vector<4x128xf32>
    %441 = tpu.matmul %437, %436, %cst_101 {dimension_numbers = #tpu.dot_dimension_numbers<[1], [0], [0], [1], [0, 0, 1, 1], [], []>} : vector<4x32xf32>, vector<32x128xf32>, vector<4x128xf32> -> vector<4x128xf32>
    %442 = arith.addf %440, %441 : vector<4x128xf32>
    %443 = arith.negf %442 : vector<4x128xf32>
    %444 = math.exp %443 : vector<4x128xf32>
    %cst_102 = arith.constant 1.000000e+00 : f32
    %445 = vector.broadcast %cst_102 : f32 to vector<4x128xf32>
    %446 = arith.addf %445, %444 : vector<4x128xf32>
    %447 = arith.divf %445, %446 : vector<4x128xf32>
    %448 = vector.extract_strided_slice %447 {offsets = [0, 0], sizes = [4, 32], strides = [1, 1]} : vector<4x128xf32> to vector<4x32xf32>
    %449 = vector.extract_strided_slice %447 {offsets = [0, 32], sizes = [4, 32], strides = [1, 1]} : vector<4x128xf32> to vector<4x32xf32>
    %450 = vector.extract_strided_slice %447 {offsets = [0, 96], sizes = [4, 32], strides = [1, 1]} : vector<4x128xf32> to vector<4x32xf32>
    %451 = vector.extract_strided_slice %442 {offsets = [0, 64], sizes = [4, 32], strides = [1, 1]} : vector<4x128xf32> to vector<4x32xf32>
    %452 = math.tanh %451 : vector<4x32xf32>
    %453 = arith.mulf %449, %438 : vector<4x32xf32>
    %454 = arith.mulf %448, %452 : vector<4x32xf32>
    %455 = arith.addf %453, %454 : vector<4x32xf32>
    %456 = math.tanh %455 : vector<4x32xf32>
    %457 = arith.mulf %450, %456 : vector<4x32xf32>
    %c0_103 = arith.constant 0 : index
    %c0_104 = arith.constant 0 : index
    %c0_105 = arith.constant 0 : index
    %458 = vector.load %arg17[%c0_103, %c0_104, %c0_105] : memref<4x8x64xf32, #tpu.memory_space<vmem>>, vector<4x1x32xf32>
    %459 = vector.shape_cast %458 : vector<4x1x32xf32> to vector<4x32xf32>
    %460 = vector.shape_cast %457 : vector<4x32xf32> to vector<4x1x32xf32>
    tpu.vector_store %arg17[%c0_103, %c0_104, %c0_105], %460 {strides = array<i32>} : memref<4x8x64xf32, #tpu.memory_space<vmem>>, vector<4x1x32xf32>,
    %461 = vector.extract_strided_slice %435 {offsets = [0, 1, 0], sizes = [4, 1, 128], strides = [1, 1, 1]} : vector<4x8x128xf32> to vector<4x1x128xf32>
    %462 = vector.shape_cast %461 : vector<4x1x128xf32> to vector<4x128xf32>
    %cst_106 = arith.constant dense<0.000000e+00> : vector<4x128xf32>
    %463 = tpu.matmul %457, %436, %cst_106 {dimension_numbers = #tpu.dot_dimension_numbers<[1], [0], [0], [1], [0, 0, 1, 1], [], []>} : vector<4x32xf32>, vector<32x128xf32>, vector<4x128xf32> -> vector<4x128xf32>
    %464 = arith.addf %462, %463 : vector<4x128xf32>
    %465 = arith.negf %464 : vector<4x128xf32>
    %466 = math.exp %465 : vector<4x128xf32>
    %cst_107 = arith.constant 1.000000e+00 : f32
    %467 = vector.broadcast %cst_107 : f32 to vector<4x128xf32>
    %468 = arith.addf %467, %466 : vector<4x128xf32>
    %469 = arith.divf %467, %468 : vector<4x128xf32>
    %470 = vector.extract_strided_slice %469 {offsets = [0, 0], sizes = [4, 32], strides = [1, 1]} : vector<4x128xf32> to vector<4x32xf32>
    %471 = vector.extract_strided_slice %469 {offsets = [0, 32], sizes = [4, 32], strides = [1, 1]} : vector<4x128xf32> to vector<4x32xf32>
    %472 = vector.extract_strided_slice %469 {offsets = [0, 96], sizes = [4, 32], strides = [1, 1]} : vector<4x128xf32> to vector<4x32xf32>
    %473 = vector.extract_strided_slice %464 {offsets = [0, 64], sizes = [4, 32], strides = [1, 1]} : vector<4x128xf32> to vector<4x32xf32>
    %474 = math.tanh %473 : vector<4x32xf32>
    %475 = arith.mulf %471, %455 : vector<4x32xf32>
    %476 = arith.mulf %470, %474 : vector<4x32xf32>
    %477 = arith.addf %475, %476 : vector<4x32xf32>
    %478 = math.tanh %477 : vector<4x32xf32>
    %479 = arith.mulf %472, %478 : vector<4x32xf32>
    %c0_108 = arith.constant 0 : index
    %c1_109 = arith.constant 1 : index
    %c0_110 = arith.constant 0 : index
    %480 = vector.load %arg17[%c0_108, %c1_109, %c0_110] : memref<4x8x64xf32, #tpu.memory_space<vmem>>, vector<4x1x32xf32>
    %481 = vector.shape_cast %480 : vector<4x1x32xf32> to vector<4x32xf32>
    %482 = vector.shape_cast %479 : vector<4x32xf32> to vector<4x1x32xf32>
    tpu.vector_store %arg17[%c0_108, %c1_109, %c0_110], %482 {strides = array<i32>} : memref<4x8x64xf32, #tpu.memory_space<vmem>>, vector<4x1x32xf32>,
    %483 = vector.extract_strided_slice %435 {offsets = [0, 2, 0], sizes = [4, 1, 128], strides = [1, 1, 1]} : vector<4x8x128xf32> to vector<4x1x128xf32>
    %484 = vector.shape_cast %483 : vector<4x1x128xf32> to vector<4x128xf32>
    %cst_111 = arith.constant dense<0.000000e+00> : vector<4x128xf32>
    %485 = tpu.matmul %479, %436, %cst_111 {dimension_numbers = #tpu.dot_dimension_numbers<[1], [0], [0], [1], [0, 0, 1, 1], [], []>} : vector<4x32xf32>, vector<32x128xf32>, vector<4x128xf32> -> vector<4x128xf32>
    %486 = arith.addf %484, %485 : vector<4x128xf32>
    %487 = arith.negf %486 : vector<4x128xf32>
    %488 = math.exp %487 : vector<4x128xf32>
    %cst_112 = arith.constant 1.000000e+00 : f32
    %489 = vector.broadcast %cst_112 : f32 to vector<4x128xf32>
    %490 = arith.addf %489, %488 : vector<4x128xf32>
    %491 = arith.divf %489, %490 : vector<4x128xf32>
    %492 = vector.extract_strided_slice %491 {offsets = [0, 0], sizes = [4, 32], strides = [1, 1]} : vector<4x128xf32> to vector<4x32xf32>
    %493 = vector.extract_strided_slice %491 {offsets = [0, 32], sizes = [4, 32], strides = [1, 1]} : vector<4x128xf32> to vector<4x32xf32>
    %494 = vector.extract_strided_slice %491 {offsets = [0, 96], sizes = [4, 32], strides = [1, 1]} : vector<4x128xf32> to vector<4x32xf32>
    %495 = vector.extract_strided_slice %486 {offsets = [0, 64], sizes = [4, 32], strides = [1, 1]} : vector<4x128xf32> to vector<4x32xf32>
    %496 = math.tanh %495 : vector<4x32xf32>
    %497 = arith.mulf %493, %477 : vector<4x32xf32>
    %498 = arith.mulf %492, %496 : vector<4x32xf32>
    %499 = arith.addf %497, %498 : vector<4x32xf32>
    %500 = math.tanh %499 : vector<4x32xf32>
    %501 = arith.mulf %494, %500 : vector<4x32xf32>
    %c0_113 = arith.constant 0 : index
    %c2_114 = arith.constant 2 : index
    %c0_115 = arith.constant 0 : index
    %502 = vector.load %arg17[%c0_113, %c2_114, %c0_115] : memref<4x8x64xf32, #tpu.memory_space<vmem>>, vector<4x1x32xf32>
    %503 = vector.shape_cast %502 : vector<4x1x32xf32> to vector<4x32xf32>
    %504 = vector.shape_cast %501 : vector<4x32xf32> to vector<4x1x32xf32>
    tpu.vector_store %arg17[%c0_113, %c2_114, %c0_115], %504 {strides = array<i32>} : memref<4x8x64xf32, #tpu.memory_space<vmem>>, vector<4x1x32xf32>,
    %505 = vector.extract_strided_slice %435 {offsets = [0, 3, 0], sizes = [4, 1, 128], strides = [1, 1, 1]} : vector<4x8x128xf32> to vector<4x1x128xf32>
    %506 = vector.shape_cast %505 : vector<4x1x128xf32> to vector<4x128xf32>
    %cst_116 = arith.constant dense<0.000000e+00> : vector<4x128xf32>
    %507 = tpu.matmul %501, %436, %cst_116 {dimension_numbers = #tpu.dot_dimension_numbers<[1], [0], [0], [1], [0, 0, 1, 1], [], []>} : vector<4x32xf32>, vector<32x128xf32>, vector<4x128xf32> -> vector<4x128xf32>
    %508 = arith.addf %506, %507 : vector<4x128xf32>
    %509 = arith.negf %508 : vector<4x128xf32>
    %510 = math.exp %509 : vector<4x128xf32>
    %cst_117 = arith.constant 1.000000e+00 : f32
    %511 = vector.broadcast %cst_117 : f32 to vector<4x128xf32>
    %512 = arith.addf %511, %510 : vector<4x128xf32>
    %513 = arith.divf %511, %512 : vector<4x128xf32>
    %514 = vector.extract_strided_slice %513 {offsets = [0, 0], sizes = [4, 32], strides = [1, 1]} : vector<4x128xf32> to vector<4x32xf32>
    %515 = vector.extract_strided_slice %513 {offsets = [0, 32], sizes = [4, 32], strides = [1, 1]} : vector<4x128xf32> to vector<4x32xf32>
    %516 = vector.extract_strided_slice %513 {offsets = [0, 96], sizes = [4, 32], strides = [1, 1]} : vector<4x128xf32> to vector<4x32xf32>
    %517 = vector.extract_strided_slice %508 {offsets = [0, 64], sizes = [4, 32], strides = [1, 1]} : vector<4x128xf32> to vector<4x32xf32>
    %518 = math.tanh %517 : vector<4x32xf32>
    %519 = arith.mulf %515, %499 : vector<4x32xf32>
    %520 = arith.mulf %514, %518 : vector<4x32xf32>
    %521 = arith.addf %519, %520 : vector<4x32xf32>
    %522 = math.tanh %521 : vector<4x32xf32>
    %523 = arith.mulf %516, %522 : vector<4x32xf32>
    %c0_118 = arith.constant 0 : index
    %c3_119 = arith.constant 3 : index
    %c0_120 = arith.constant 0 : index
    %524 = vector.load %arg17[%c0_118, %c3_119, %c0_120] : memref<4x8x64xf32, #tpu.memory_space<vmem>>, vector<4x1x32xf32>
    %525 = vector.shape_cast %524 : vector<4x1x32xf32> to vector<4x32xf32>
    %526 = vector.shape_cast %523 : vector<4x32xf32> to vector<4x1x32xf32>
    tpu.vector_store %arg17[%c0_118, %c3_119, %c0_120], %526 {strides = array<i32>} : memref<4x8x64xf32, #tpu.memory_space<vmem>>, vector<4x1x32xf32>,
    %527 = vector.extract_strided_slice %435 {offsets = [0, 4, 0], sizes = [4, 1, 128], strides = [1, 1, 1]} : vector<4x8x128xf32> to vector<4x1x128xf32>
    %528 = vector.shape_cast %527 : vector<4x1x128xf32> to vector<4x128xf32>
    %cst_121 = arith.constant dense<0.000000e+00> : vector<4x128xf32>
    %529 = tpu.matmul %523, %436, %cst_121 {dimension_numbers = #tpu.dot_dimension_numbers<[1], [0], [0], [1], [0, 0, 1, 1], [], []>} : vector<4x32xf32>, vector<32x128xf32>, vector<4x128xf32> -> vector<4x128xf32>
    %530 = arith.addf %528, %529 : vector<4x128xf32>
    %531 = arith.negf %530 : vector<4x128xf32>
    %532 = math.exp %531 : vector<4x128xf32>
    %cst_122 = arith.constant 1.000000e+00 : f32
    %533 = vector.broadcast %cst_122 : f32 to vector<4x128xf32>
    %534 = arith.addf %533, %532 : vector<4x128xf32>
    %535 = arith.divf %533, %534 : vector<4x128xf32>
    %536 = vector.extract_strided_slice %535 {offsets = [0, 0], sizes = [4, 32], strides = [1, 1]} : vector<4x128xf32> to vector<4x32xf32>
    %537 = vector.extract_strided_slice %535 {offsets = [0, 32], sizes = [4, 32], strides = [1, 1]} : vector<4x128xf32> to vector<4x32xf32>
    %538 = vector.extract_strided_slice %535 {offsets = [0, 96], sizes = [4, 32], strides = [1, 1]} : vector<4x128xf32> to vector<4x32xf32>
    %539 = vector.extract_strided_slice %530 {offsets = [0, 64], sizes = [4, 32], strides = [1, 1]} : vector<4x128xf32> to vector<4x32xf32>
    %540 = math.tanh %539 : vector<4x32xf32>
    %541 = arith.mulf %537, %521 : vector<4x32xf32>
    %542 = arith.mulf %536, %540 : vector<4x32xf32>
    %543 = arith.addf %541, %542 : vector<4x32xf32>
    %544 = math.tanh %543 : vector<4x32xf32>
    %545 = arith.mulf %538, %544 : vector<4x32xf32>
    %c0_123 = arith.constant 0 : index
    %c4_124 = arith.constant 4 : index
    %c0_125 = arith.constant 0 : index
    %546 = vector.load %arg17[%c0_123, %c4_124, %c0_125] : memref<4x8x64xf32, #tpu.memory_space<vmem>>, vector<4x1x32xf32>
    %547 = vector.shape_cast %546 : vector<4x1x32xf32> to vector<4x32xf32>
    %548 = vector.shape_cast %545 : vector<4x32xf32> to vector<4x1x32xf32>
    tpu.vector_store %arg17[%c0_123, %c4_124, %c0_125], %548 {strides = array<i32>} : memref<4x8x64xf32, #tpu.memory_space<vmem>>, vector<4x1x32xf32>,
    %549 = vector.extract_strided_slice %435 {offsets = [0, 5, 0], sizes = [4, 1, 128], strides = [1, 1, 1]} : vector<4x8x128xf32> to vector<4x1x128xf32>
    %550 = vector.shape_cast %549 : vector<4x1x128xf32> to vector<4x128xf32>
    %cst_126 = arith.constant dense<0.000000e+00> : vector<4x128xf32>
    %551 = tpu.matmul %545, %436, %cst_126 {dimension_numbers = #tpu.dot_dimension_numbers<[1], [0], [0], [1], [0, 0, 1, 1], [], []>} : vector<4x32xf32>, vector<32x128xf32>, vector<4x128xf32> -> vector<4x128xf32>
    %552 = arith.addf %550, %551 : vector<4x128xf32>
    %553 = arith.negf %552 : vector<4x128xf32>
    %554 = math.exp %553 : vector<4x128xf32>
    %cst_127 = arith.constant 1.000000e+00 : f32
    %555 = vector.broadcast %cst_127 : f32 to vector<4x128xf32>
    %556 = arith.addf %555, %554 : vector<4x128xf32>
    %557 = arith.divf %555, %556 : vector<4x128xf32>
    %558 = vector.extract_strided_slice %557 {offsets = [0, 0], sizes = [4, 32], strides = [1, 1]} : vector<4x128xf32> to vector<4x32xf32>
    %559 = vector.extract_strided_slice %557 {offsets = [0, 32], sizes = [4, 32], strides = [1, 1]} : vector<4x128xf32> to vector<4x32xf32>
    %560 = vector.extract_strided_slice %557 {offsets = [0, 96], sizes = [4, 32], strides = [1, 1]} : vector<4x128xf32> to vector<4x32xf32>
    %561 = vector.extract_strided_slice %552 {offsets = [0, 64], sizes = [4, 32], strides = [1, 1]} : vector<4x128xf32> to vector<4x32xf32>
    %562 = math.tanh %561 : vector<4x32xf32>
    %563 = arith.mulf %559, %543 : vector<4x32xf32>
    %564 = arith.mulf %558, %562 : vector<4x32xf32>
    %565 = arith.addf %563, %564 : vector<4x32xf32>
    %566 = math.tanh %565 : vector<4x32xf32>
    %567 = arith.mulf %560, %566 : vector<4x32xf32>
    %c0_128 = arith.constant 0 : index
    %c5_129 = arith.constant 5 : index
    %c0_130 = arith.constant 0 : index
    %568 = vector.load %arg17[%c0_128, %c5_129, %c0_130] : memref<4x8x64xf32, #tpu.memory_space<vmem>>, vector<4x1x32xf32>
    %569 = vector.shape_cast %568 : vector<4x1x32xf32> to vector<4x32xf32>
    %570 = vector.shape_cast %567 : vector<4x32xf32> to vector<4x1x32xf32>
    tpu.vector_store %arg17[%c0_128, %c5_129, %c0_130], %570 {strides = array<i32>} : memref<4x8x64xf32, #tpu.memory_space<vmem>>, vector<4x1x32xf32>,
    %571 = vector.extract_strided_slice %435 {offsets = [0, 6, 0], sizes = [4, 1, 128], strides = [1, 1, 1]} : vector<4x8x128xf32> to vector<4x1x128xf32>
    %572 = vector.shape_cast %571 : vector<4x1x128xf32> to vector<4x128xf32>
    %cst_131 = arith.constant dense<0.000000e+00> : vector<4x128xf32>
    %573 = tpu.matmul %567, %436, %cst_131 {dimension_numbers = #tpu.dot_dimension_numbers<[1], [0], [0], [1], [0, 0, 1, 1], [], []>} : vector<4x32xf32>, vector<32x128xf32>, vector<4x128xf32> -> vector<4x128xf32>
    %574 = arith.addf %572, %573 : vector<4x128xf32>
    %575 = arith.negf %574 : vector<4x128xf32>
    %576 = math.exp %575 : vector<4x128xf32>
    %cst_132 = arith.constant 1.000000e+00 : f32
    %577 = vector.broadcast %cst_132 : f32 to vector<4x128xf32>
    %578 = arith.addf %577, %576 : vector<4x128xf32>
    %579 = arith.divf %577, %578 : vector<4x128xf32>
    %580 = vector.extract_strided_slice %579 {offsets = [0, 0], sizes = [4, 32], strides = [1, 1]} : vector<4x128xf32> to vector<4x32xf32>
    %581 = vector.extract_strided_slice %579 {offsets = [0, 32], sizes = [4, 32], strides = [1, 1]} : vector<4x128xf32> to vector<4x32xf32>
    %582 = vector.extract_strided_slice %579 {offsets = [0, 96], sizes = [4, 32], strides = [1, 1]} : vector<4x128xf32> to vector<4x32xf32>
    %583 = vector.extract_strided_slice %574 {offsets = [0, 64], sizes = [4, 32], strides = [1, 1]} : vector<4x128xf32> to vector<4x32xf32>
    %584 = math.tanh %583 : vector<4x32xf32>
    %585 = arith.mulf %581, %565 : vector<4x32xf32>
    %586 = arith.mulf %580, %584 : vector<4x32xf32>
    %587 = arith.addf %585, %586 : vector<4x32xf32>
    %588 = math.tanh %587 : vector<4x32xf32>
    %589 = arith.mulf %582, %588 : vector<4x32xf32>
    %c0_133 = arith.constant 0 : index
    %c6_134 = arith.constant 6 : index
    %c0_135 = arith.constant 0 : index
    %590 = vector.load %arg17[%c0_133, %c6_134, %c0_135] : memref<4x8x64xf32, #tpu.memory_space<vmem>>, vector<4x1x32xf32>
    %591 = vector.shape_cast %590 : vector<4x1x32xf32> to vector<4x32xf32>
    %592 = vector.shape_cast %589 : vector<4x32xf32> to vector<4x1x32xf32>
    tpu.vector_store %arg17[%c0_133, %c6_134, %c0_135], %592 {strides = array<i32>} : memref<4x8x64xf32, #tpu.memory_space<vmem>>, vector<4x1x32xf32>,
    %593 = vector.extract_strided_slice %435 {offsets = [0, 7, 0], sizes = [4, 1, 128], strides = [1, 1, 1]} : vector<4x8x128xf32> to vector<4x1x128xf32>
    %594 = vector.shape_cast %593 : vector<4x1x128xf32> to vector<4x128xf32>
    %cst_136 = arith.constant dense<0.000000e+00> : vector<4x128xf32>
    %595 = tpu.matmul %589, %436, %cst_136 {dimension_numbers = #tpu.dot_dimension_numbers<[1], [0], [0], [1], [0, 0, 1, 1], [], []>} : vector<4x32xf32>, vector<32x128xf32>, vector<4x128xf32> -> vector<4x128xf32>
    %596 = arith.addf %594, %595 : vector<4x128xf32>
    %597 = arith.negf %596 : vector<4x128xf32>
    %598 = math.exp %597 : vector<4x128xf32>
    %cst_137 = arith.constant 1.000000e+00 : f32
    %599 = vector.broadcast %cst_137 : f32 to vector<4x128xf32>
    %600 = arith.addf %599, %598 : vector<4x128xf32>
    %601 = arith.divf %599, %600 : vector<4x128xf32>
    %602 = vector.extract_strided_slice %601 {offsets = [0, 0], sizes = [4, 32], strides = [1, 1]} : vector<4x128xf32> to vector<4x32xf32>
    %603 = vector.extract_strided_slice %601 {offsets = [0, 32], sizes = [4, 32], strides = [1, 1]} : vector<4x128xf32> to vector<4x32xf32>
    %604 = vector.extract_strided_slice %601 {offsets = [0, 96], sizes = [4, 32], strides = [1, 1]} : vector<4x128xf32> to vector<4x32xf32>
    %605 = vector.extract_strided_slice %596 {offsets = [0, 64], sizes = [4, 32], strides = [1, 1]} : vector<4x128xf32> to vector<4x32xf32>
    %606 = math.tanh %605 : vector<4x32xf32>
    %607 = arith.mulf %603, %587 : vector<4x32xf32>
    %608 = arith.mulf %602, %606 : vector<4x32xf32>
    %609 = arith.addf %607, %608 : vector<4x32xf32>
    %610 = math.tanh %609 : vector<4x32xf32>
    %611 = arith.mulf %604, %610 : vector<4x32xf32>
    %c0_138 = arith.constant 0 : index
    %c7_139 = arith.constant 7 : index
    %c0_140 = arith.constant 0 : index
    %612 = vector.load %arg17[%c0_138, %c7_139, %c0_140] : memref<4x8x64xf32, #tpu.memory_space<vmem>>, vector<4x1x32xf32>
    %613 = vector.shape_cast %612 : vector<4x1x32xf32> to vector<4x32xf32>
    %614 = vector.shape_cast %611 : vector<4x32xf32> to vector<4x1x32xf32>
    tpu.vector_store %arg17[%c0_138, %c7_139, %c0_140], %614 {strides = array<i32>} : memref<4x8x64xf32, #tpu.memory_space<vmem>>, vector<4x1x32xf32>,
    %615 = vector.extract_strided_slice %434 {offsets = [0, 0, 128], sizes = [4, 8, 128], strides = [1, 1, 1]} : vector<4x8x256xf32> to vector<4x8x128xf32>
    %c0_141 = arith.constant 0 : index
    %c0_142 = arith.constant 0 : index
    %616 = vector.load %arg9[%c0_141, %c0_142] : memref<32x128xf32, #tpu.memory_space<vmem>>, vector<32x128xf32>
    %cst_143 = arith.constant 0.000000e+00 : f32
    %617 = vector.broadcast %cst_143 : f32 to vector<4x32xf32>
    %cst_144 = arith.constant 0.000000e+00 : f32
    %618 = vector.broadcast %cst_144 : f32 to vector<4x32xf32>
    %619 = vector.extract_strided_slice %615 {offsets = [0, 7, 0], sizes = [4, 1, 128], strides = [1, 1, 1]} : vector<4x8x128xf32> to vector<4x1x128xf32>
    %620 = vector.shape_cast %619 : vector<4x1x128xf32> to vector<4x128xf32>
    %cst_145 = arith.constant dense<0.000000e+00> : vector<4x128xf32>
    %621 = tpu.matmul %617, %616, %cst_145 {dimension_numbers = #tpu.dot_dimension_numbers<[1], [0], [0], [1], [0, 0, 1, 1], [], []>} : vector<4x32xf32>, vector<32x128xf32>, vector<4x128xf32> -> vector<4x128xf32>
    %622 = arith.addf %620, %621 : vector<4x128xf32>
    %623 = arith.negf %622 : vector<4x128xf32>
    %624 = math.exp %623 : vector<4x128xf32>
    %cst_146 = arith.constant 1.000000e+00 : f32
    %625 = vector.broadcast %cst_146 : f32 to vector<4x128xf32>
    %626 = arith.addf %625, %624 : vector<4x128xf32>
    %627 = arith.divf %625, %626 : vector<4x128xf32>
    %628 = vector.extract_strided_slice %627 {offsets = [0, 0], sizes = [4, 32], strides = [1, 1]} : vector<4x128xf32> to vector<4x32xf32>
    %629 = vector.extract_strided_slice %627 {offsets = [0, 32], sizes = [4, 32], strides = [1, 1]} : vector<4x128xf32> to vector<4x32xf32>
    %630 = vector.extract_strided_slice %627 {offsets = [0, 96], sizes = [4, 32], strides = [1, 1]} : vector<4x128xf32> to vector<4x32xf32>
    %631 = vector.extract_strided_slice %622 {offsets = [0, 64], sizes = [4, 32], strides = [1, 1]} : vector<4x128xf32> to vector<4x32xf32>
    %632 = math.tanh %631 : vector<4x32xf32>
    %633 = arith.mulf %629, %618 : vector<4x32xf32>
    %634 = arith.mulf %628, %632 : vector<4x32xf32>
    %635 = arith.addf %633, %634 : vector<4x32xf32>
    %636 = math.tanh %635 : vector<4x32xf32>
    %637 = arith.mulf %630, %636 : vector<4x32xf32>
    %638 = vector.extract_strided_slice %2 {offsets = [0, 7], sizes = [4, 1], strides = [1, 1]} : vector<4x8xi1> to vector<4x1xi1>
    %639 = vector.shape_cast %638 : vector<4x1xi1> to vector<4x1xi1>
    %640 = vector.broadcast %639 : vector<4x1xi1> to vector<4x32xi1>
    %641 = arith.select %640, %637, %617 : vector<4x32xi1>, vector<4x32xf32>
    %642 = vector.shape_cast %638 : vector<4x1xi1> to vector<4x1xi1>
    %643 = vector.broadcast %642 : vector<4x1xi1> to vector<4x32xi1>
    %644 = arith.select %643, %635, %618 : vector<4x32xi1>, vector<4x32xf32>
    %c0_147 = arith.constant 0 : index
    %c7_148 = arith.constant 7 : index
    %c32_149 = arith.constant 32 : index
    %645 = vector.load %arg17[%c0_147, %c7_148, %c32_149] : memref<4x8x64xf32, #tpu.memory_space<vmem>>, vector<4x1x32xf32>
    %646 = vector.shape_cast %645 : vector<4x1x32xf32> to vector<4x32xf32>
    %647 = vector.shape_cast %641 : vector<4x32xf32> to vector<4x1x32xf32>
    tpu.vector_store %arg17[%c0_147, %c7_148, %c32_149], %647 {strides = array<i32>} : memref<4x8x64xf32, #tpu.memory_space<vmem>>, vector<4x1x32xf32>,
    %648 = vector.extract_strided_slice %615 {offsets = [0, 6, 0], sizes = [4, 1, 128], strides = [1, 1, 1]} : vector<4x8x128xf32> to vector<4x1x128xf32>
    %649 = vector.shape_cast %648 : vector<4x1x128xf32> to vector<4x128xf32>
    %cst_150 = arith.constant dense<0.000000e+00> : vector<4x128xf32>
    %650 = tpu.matmul %641, %616, %cst_150 {dimension_numbers = #tpu.dot_dimension_numbers<[1], [0], [0], [1], [0, 0, 1, 1], [], []>} : vector<4x32xf32>, vector<32x128xf32>, vector<4x128xf32> -> vector<4x128xf32>
    %651 = arith.addf %649, %650 : vector<4x128xf32>
    %652 = arith.negf %651 : vector<4x128xf32>
    %653 = math.exp %652 : vector<4x128xf32>
    %cst_151 = arith.constant 1.000000e+00 : f32
    %654 = vector.broadcast %cst_151 : f32 to vector<4x128xf32>
    %655 = arith.addf %654, %653 : vector<4x128xf32>
    %656 = arith.divf %654, %655 : vector<4x128xf32>
    %657 = vector.extract_strided_slice %656 {offsets = [0, 0], sizes = [4, 32], strides = [1, 1]} : vector<4x128xf32> to vector<4x32xf32>
    %658 = vector.extract_strided_slice %656 {offsets = [0, 32], sizes = [4, 32], strides = [1, 1]} : vector<4x128xf32> to vector<4x32xf32>
    %659 = vector.extract_strided_slice %656 {offsets = [0, 96], sizes = [4, 32], strides = [1, 1]} : vector<4x128xf32> to vector<4x32xf32>
    %660 = vector.extract_strided_slice %651 {offsets = [0, 64], sizes = [4, 32], strides = [1, 1]} : vector<4x128xf32> to vector<4x32xf32>
    %661 = math.tanh %660 : vector<4x32xf32>
    %662 = arith.mulf %658, %644 : vector<4x32xf32>
    %663 = arith.mulf %657, %661 : vector<4x32xf32>
    %664 = arith.addf %662, %663 : vector<4x32xf32>
    %665 = math.tanh %664 : vector<4x32xf32>
    %666 = arith.mulf %659, %665 : vector<4x32xf32>
    %667 = vector.extract_strided_slice %2 {offsets = [0, 6], sizes = [4, 1], strides = [1, 1]} : vector<4x8xi1> to vector<4x1xi1>
    %668 = vector.shape_cast %667 : vector<4x1xi1> to vector<4x1xi1>
    %669 = vector.broadcast %668 : vector<4x1xi1> to vector<4x32xi1>
    %670 = arith.select %669, %666, %641 : vector<4x32xi1>, vector<4x32xf32>
    %671 = vector.shape_cast %667 : vector<4x1xi1> to vector<4x1xi1>
    %672 = vector.broadcast %671 : vector<4x1xi1> to vector<4x32xi1>
    %673 = arith.select %672, %664, %644 : vector<4x32xi1>, vector<4x32xf32>
    %c0_152 = arith.constant 0 : index
    %c6_153 = arith.constant 6 : index
    %c32_154 = arith.constant 32 : index
    %674 = vector.load %arg17[%c0_152, %c6_153, %c32_154] : memref<4x8x64xf32, #tpu.memory_space<vmem>>, vector<4x1x32xf32>
    %675 = vector.shape_cast %674 : vector<4x1x32xf32> to vector<4x32xf32>
    %676 = vector.shape_cast %670 : vector<4x32xf32> to vector<4x1x32xf32>
    tpu.vector_store %arg17[%c0_152, %c6_153, %c32_154], %676 {strides = array<i32>} : memref<4x8x64xf32, #tpu.memory_space<vmem>>, vector<4x1x32xf32>,
    %677 = vector.extract_strided_slice %615 {offsets = [0, 5, 0], sizes = [4, 1, 128], strides = [1, 1, 1]} : vector<4x8x128xf32> to vector<4x1x128xf32>
    %678 = vector.shape_cast %677 : vector<4x1x128xf32> to vector<4x128xf32>
    %cst_155 = arith.constant dense<0.000000e+00> : vector<4x128xf32>
    %679 = tpu.matmul %670, %616, %cst_155 {dimension_numbers = #tpu.dot_dimension_numbers<[1], [0], [0], [1], [0, 0, 1, 1], [], []>} : vector<4x32xf32>, vector<32x128xf32>, vector<4x128xf32> -> vector<4x128xf32>
    %680 = arith.addf %678, %679 : vector<4x128xf32>
    %681 = arith.negf %680 : vector<4x128xf32>
    %682 = math.exp %681 : vector<4x128xf32>
    %cst_156 = arith.constant 1.000000e+00 : f32
    %683 = vector.broadcast %cst_156 : f32 to vector<4x128xf32>
    %684 = arith.addf %683, %682 : vector<4x128xf32>
    %685 = arith.divf %683, %684 : vector<4x128xf32>
    %686 = vector.extract_strided_slice %685 {offsets = [0, 0], sizes = [4, 32], strides = [1, 1]} : vector<4x128xf32> to vector<4x32xf32>
    %687 = vector.extract_strided_slice %685 {offsets = [0, 32], sizes = [4, 32], strides = [1, 1]} : vector<4x128xf32> to vector<4x32xf32>
    %688 = vector.extract_strided_slice %685 {offsets = [0, 96], sizes = [4, 32], strides = [1, 1]} : vector<4x128xf32> to vector<4x32xf32>
    %689 = vector.extract_strided_slice %680 {offsets = [0, 64], sizes = [4, 32], strides = [1, 1]} : vector<4x128xf32> to vector<4x32xf32>
    %690 = math.tanh %689 : vector<4x32xf32>
    %691 = arith.mulf %687, %673 : vector<4x32xf32>
    %692 = arith.mulf %686, %690 : vector<4x32xf32>
    %693 = arith.addf %691, %692 : vector<4x32xf32>
    %694 = math.tanh %693 : vector<4x32xf32>
    %695 = arith.mulf %688, %694 : vector<4x32xf32>
    %696 = vector.extract_strided_slice %2 {offsets = [0, 5], sizes = [4, 1], strides = [1, 1]} : vector<4x8xi1> to vector<4x1xi1>
    %697 = vector.shape_cast %696 : vector<4x1xi1> to vector<4x1xi1>
    %698 = vector.broadcast %697 : vector<4x1xi1> to vector<4x32xi1>
    %699 = arith.select %698, %695, %670 : vector<4x32xi1>, vector<4x32xf32>
    %700 = vector.shape_cast %696 : vector<4x1xi1> to vector<4x1xi1>
    %701 = vector.broadcast %700 : vector<4x1xi1> to vector<4x32xi1>
    %702 = arith.select %701, %693, %673 : vector<4x32xi1>, vector<4x32xf32>
    %c0_157 = arith.constant 0 : index
    %c5_158 = arith.constant 5 : index
    %c32_159 = arith.constant 32 : index
    %703 = vector.load %arg17[%c0_157, %c5_158, %c32_159] : memref<4x8x64xf32, #tpu.memory_space<vmem>>, vector<4x1x32xf32>
    %704 = vector.shape_cast %703 : vector<4x1x32xf32> to vector<4x32xf32>
    %705 = vector.shape_cast %699 : vector<4x32xf32> to vector<4x1x32xf32>
    tpu.vector_store %arg17[%c0_157, %c5_158, %c32_159], %705 {strides = array<i32>} : memref<4x8x64xf32, #tpu.memory_space<vmem>>, vector<4x1x32xf32>,
    %706 = vector.extract_strided_slice %615 {offsets = [0, 4, 0], sizes = [4, 1, 128], strides = [1, 1, 1]} : vector<4x8x128xf32> to vector<4x1x128xf32>
    %707 = vector.shape_cast %706 : vector<4x1x128xf32> to vector<4x128xf32>
    %cst_160 = arith.constant dense<0.000000e+00> : vector<4x128xf32>
    %708 = tpu.matmul %699, %616, %cst_160 {dimension_numbers = #tpu.dot_dimension_numbers<[1], [0], [0], [1], [0, 0, 1, 1], [], []>} : vector<4x32xf32>, vector<32x128xf32>, vector<4x128xf32> -> vector<4x128xf32>
    %709 = arith.addf %707, %708 : vector<4x128xf32>
    %710 = arith.negf %709 : vector<4x128xf32>
    %711 = math.exp %710 : vector<4x128xf32>
    %cst_161 = arith.constant 1.000000e+00 : f32
    %712 = vector.broadcast %cst_161 : f32 to vector<4x128xf32>
    %713 = arith.addf %712, %711 : vector<4x128xf32>
    %714 = arith.divf %712, %713 : vector<4x128xf32>
    %715 = vector.extract_strided_slice %714 {offsets = [0, 0], sizes = [4, 32], strides = [1, 1]} : vector<4x128xf32> to vector<4x32xf32>
    %716 = vector.extract_strided_slice %714 {offsets = [0, 32], sizes = [4, 32], strides = [1, 1]} : vector<4x128xf32> to vector<4x32xf32>
    %717 = vector.extract_strided_slice %714 {offsets = [0, 96], sizes = [4, 32], strides = [1, 1]} : vector<4x128xf32> to vector<4x32xf32>
    %718 = vector.extract_strided_slice %709 {offsets = [0, 64], sizes = [4, 32], strides = [1, 1]} : vector<4x128xf32> to vector<4x32xf32>
    %719 = math.tanh %718 : vector<4x32xf32>
    %720 = arith.mulf %716, %702 : vector<4x32xf32>
    %721 = arith.mulf %715, %719 : vector<4x32xf32>
    %722 = arith.addf %720, %721 : vector<4x32xf32>
    %723 = math.tanh %722 : vector<4x32xf32>
    %724 = arith.mulf %717, %723 : vector<4x32xf32>
    %725 = vector.extract_strided_slice %2 {offsets = [0, 4], sizes = [4, 1], strides = [1, 1]} : vector<4x8xi1> to vector<4x1xi1>
    %726 = vector.shape_cast %725 : vector<4x1xi1> to vector<4x1xi1>
    %727 = vector.broadcast %726 : vector<4x1xi1> to vector<4x32xi1>
    %728 = arith.select %727, %724, %699 : vector<4x32xi1>, vector<4x32xf32>
    %729 = vector.shape_cast %725 : vector<4x1xi1> to vector<4x1xi1>
    %730 = vector.broadcast %729 : vector<4x1xi1> to vector<4x32xi1>
    %731 = arith.select %730, %722, %702 : vector<4x32xi1>, vector<4x32xf32>
    %c0_162 = arith.constant 0 : index
    %c4_163 = arith.constant 4 : index
    %c32_164 = arith.constant 32 : index
    %732 = vector.load %arg17[%c0_162, %c4_163, %c32_164] : memref<4x8x64xf32, #tpu.memory_space<vmem>>, vector<4x1x32xf32>
    %733 = vector.shape_cast %732 : vector<4x1x32xf32> to vector<4x32xf32>
    %734 = vector.shape_cast %728 : vector<4x32xf32> to vector<4x1x32xf32>
    tpu.vector_store %arg17[%c0_162, %c4_163, %c32_164], %734 {strides = array<i32>} : memref<4x8x64xf32, #tpu.memory_space<vmem>>, vector<4x1x32xf32>,
    %735 = vector.extract_strided_slice %615 {offsets = [0, 3, 0], sizes = [4, 1, 128], strides = [1, 1, 1]} : vector<4x8x128xf32> to vector<4x1x128xf32>
    %736 = vector.shape_cast %735 : vector<4x1x128xf32> to vector<4x128xf32>
    %cst_165 = arith.constant dense<0.000000e+00> : vector<4x128xf32>
    %737 = tpu.matmul %728, %616, %cst_165 {dimension_numbers = #tpu.dot_dimension_numbers<[1], [0], [0], [1], [0, 0, 1, 1], [], []>} : vector<4x32xf32>, vector<32x128xf32>, vector<4x128xf32> -> vector<4x128xf32>
    %738 = arith.addf %736, %737 : vector<4x128xf32>
    %739 = arith.negf %738 : vector<4x128xf32>
    %740 = math.exp %739 : vector<4x128xf32>
    %cst_166 = arith.constant 1.000000e+00 : f32
    %741 = vector.broadcast %cst_166 : f32 to vector<4x128xf32>
    %742 = arith.addf %741, %740 : vector<4x128xf32>
    %743 = arith.divf %741, %742 : vector<4x128xf32>
    %744 = vector.extract_strided_slice %743 {offsets = [0, 0], sizes = [4, 32], strides = [1, 1]} : vector<4x128xf32> to vector<4x32xf32>
    %745 = vector.extract_strided_slice %743 {offsets = [0, 32], sizes = [4, 32], strides = [1, 1]} : vector<4x128xf32> to vector<4x32xf32>
    %746 = vector.extract_strided_slice %743 {offsets = [0, 96], sizes = [4, 32], strides = [1, 1]} : vector<4x128xf32> to vector<4x32xf32>
    %747 = vector.extract_strided_slice %738 {offsets = [0, 64], sizes = [4, 32], strides = [1, 1]} : vector<4x128xf32> to vector<4x32xf32>
    %748 = math.tanh %747 : vector<4x32xf32>
    %749 = arith.mulf %745, %731 : vector<4x32xf32>
    %750 = arith.mulf %744, %748 : vector<4x32xf32>
    %751 = arith.addf %749, %750 : vector<4x32xf32>
    %752 = math.tanh %751 : vector<4x32xf32>
    %753 = arith.mulf %746, %752 : vector<4x32xf32>
    %754 = vector.extract_strided_slice %2 {offsets = [0, 3], sizes = [4, 1], strides = [1, 1]} : vector<4x8xi1> to vector<4x1xi1>
    %755 = vector.shape_cast %754 : vector<4x1xi1> to vector<4x1xi1>
    %756 = vector.broadcast %755 : vector<4x1xi1> to vector<4x32xi1>
    %757 = arith.select %756, %753, %728 : vector<4x32xi1>, vector<4x32xf32>
    %758 = vector.shape_cast %754 : vector<4x1xi1> to vector<4x1xi1>
    %759 = vector.broadcast %758 : vector<4x1xi1> to vector<4x32xi1>
    %760 = arith.select %759, %751, %731 : vector<4x32xi1>, vector<4x32xf32>
    %c0_167 = arith.constant 0 : index
    %c3_168 = arith.constant 3 : index
    %c32_169 = arith.constant 32 : index
    %761 = vector.load %arg17[%c0_167, %c3_168, %c32_169] : memref<4x8x64xf32, #tpu.memory_space<vmem>>, vector<4x1x32xf32>
    %762 = vector.shape_cast %761 : vector<4x1x32xf32> to vector<4x32xf32>
    %763 = vector.shape_cast %757 : vector<4x32xf32> to vector<4x1x32xf32>
    tpu.vector_store %arg17[%c0_167, %c3_168, %c32_169], %763 {strides = array<i32>} : memref<4x8x64xf32, #tpu.memory_space<vmem>>, vector<4x1x32xf32>,
    %764 = vector.extract_strided_slice %615 {offsets = [0, 2, 0], sizes = [4, 1, 128], strides = [1, 1, 1]} : vector<4x8x128xf32> to vector<4x1x128xf32>
    %765 = vector.shape_cast %764 : vector<4x1x128xf32> to vector<4x128xf32>
    %cst_170 = arith.constant dense<0.000000e+00> : vector<4x128xf32>
    %766 = tpu.matmul %757, %616, %cst_170 {dimension_numbers = #tpu.dot_dimension_numbers<[1], [0], [0], [1], [0, 0, 1, 1], [], []>} : vector<4x32xf32>, vector<32x128xf32>, vector<4x128xf32> -> vector<4x128xf32>
    %767 = arith.addf %765, %766 : vector<4x128xf32>
    %768 = arith.negf %767 : vector<4x128xf32>
    %769 = math.exp %768 : vector<4x128xf32>
    %cst_171 = arith.constant 1.000000e+00 : f32
    %770 = vector.broadcast %cst_171 : f32 to vector<4x128xf32>
    %771 = arith.addf %770, %769 : vector<4x128xf32>
    %772 = arith.divf %770, %771 : vector<4x128xf32>
    %773 = vector.extract_strided_slice %772 {offsets = [0, 0], sizes = [4, 32], strides = [1, 1]} : vector<4x128xf32> to vector<4x32xf32>
    %774 = vector.extract_strided_slice %772 {offsets = [0, 32], sizes = [4, 32], strides = [1, 1]} : vector<4x128xf32> to vector<4x32xf32>
    %775 = vector.extract_strided_slice %772 {offsets = [0, 96], sizes = [4, 32], strides = [1, 1]} : vector<4x128xf32> to vector<4x32xf32>
    %776 = vector.extract_strided_slice %767 {offsets = [0, 64], sizes = [4, 32], strides = [1, 1]} : vector<4x128xf32> to vector<4x32xf32>
    %777 = math.tanh %776 : vector<4x32xf32>
    %778 = arith.mulf %774, %760 : vector<4x32xf32>
    %779 = arith.mulf %773, %777 : vector<4x32xf32>
    %780 = arith.addf %778, %779 : vector<4x32xf32>
    %781 = math.tanh %780 : vector<4x32xf32>
    %782 = arith.mulf %775, %781 : vector<4x32xf32>
    %783 = vector.extract_strided_slice %2 {offsets = [0, 2], sizes = [4, 1], strides = [1, 1]} : vector<4x8xi1> to vector<4x1xi1>
    %784 = vector.shape_cast %783 : vector<4x1xi1> to vector<4x1xi1>
    %785 = vector.broadcast %784 : vector<4x1xi1> to vector<4x32xi1>
    %786 = arith.select %785, %782, %757 : vector<4x32xi1>, vector<4x32xf32>
    %787 = vector.shape_cast %783 : vector<4x1xi1> to vector<4x1xi1>
    %788 = vector.broadcast %787 : vector<4x1xi1> to vector<4x32xi1>
    %789 = arith.select %788, %780, %760 : vector<4x32xi1>, vector<4x32xf32>
    %c0_172 = arith.constant 0 : index
    %c2_173 = arith.constant 2 : index
    %c32_174 = arith.constant 32 : index
    %790 = vector.load %arg17[%c0_172, %c2_173, %c32_174] : memref<4x8x64xf32, #tpu.memory_space<vmem>>, vector<4x1x32xf32>
    %791 = vector.shape_cast %790 : vector<4x1x32xf32> to vector<4x32xf32>
    %792 = vector.shape_cast %786 : vector<4x32xf32> to vector<4x1x32xf32>
    tpu.vector_store %arg17[%c0_172, %c2_173, %c32_174], %792 {strides = array<i32>} : memref<4x8x64xf32, #tpu.memory_space<vmem>>, vector<4x1x32xf32>,
    %793 = vector.extract_strided_slice %615 {offsets = [0, 1, 0], sizes = [4, 1, 128], strides = [1, 1, 1]} : vector<4x8x128xf32> to vector<4x1x128xf32>
    %794 = vector.shape_cast %793 : vector<4x1x128xf32> to vector<4x128xf32>
    %cst_175 = arith.constant dense<0.000000e+00> : vector<4x128xf32>
    %795 = tpu.matmul %786, %616, %cst_175 {dimension_numbers = #tpu.dot_dimension_numbers<[1], [0], [0], [1], [0, 0, 1, 1], [], []>} : vector<4x32xf32>, vector<32x128xf32>, vector<4x128xf32> -> vector<4x128xf32>
    %796 = arith.addf %794, %795 : vector<4x128xf32>
    %797 = arith.negf %796 : vector<4x128xf32>
    %798 = math.exp %797 : vector<4x128xf32>
    %cst_176 = arith.constant 1.000000e+00 : f32
    %799 = vector.broadcast %cst_176 : f32 to vector<4x128xf32>
    %800 = arith.addf %799, %798 : vector<4x128xf32>
    %801 = arith.divf %799, %800 : vector<4x128xf32>
    %802 = vector.extract_strided_slice %801 {offsets = [0, 0], sizes = [4, 32], strides = [1, 1]} : vector<4x128xf32> to vector<4x32xf32>
    %803 = vector.extract_strided_slice %801 {offsets = [0, 32], sizes = [4, 32], strides = [1, 1]} : vector<4x128xf32> to vector<4x32xf32>
    %804 = vector.extract_strided_slice %801 {offsets = [0, 96], sizes = [4, 32], strides = [1, 1]} : vector<4x128xf32> to vector<4x32xf32>
    %805 = vector.extract_strided_slice %796 {offsets = [0, 64], sizes = [4, 32], strides = [1, 1]} : vector<4x128xf32> to vector<4x32xf32>
    %806 = math.tanh %805 : vector<4x32xf32>
    %807 = arith.mulf %803, %789 : vector<4x32xf32>
    %808 = arith.mulf %802, %806 : vector<4x32xf32>
    %809 = arith.addf %807, %808 : vector<4x32xf32>
    %810 = math.tanh %809 : vector<4x32xf32>
    %811 = arith.mulf %804, %810 : vector<4x32xf32>
    %812 = vector.extract_strided_slice %2 {offsets = [0, 1], sizes = [4, 1], strides = [1, 1]} : vector<4x8xi1> to vector<4x1xi1>
    %813 = vector.shape_cast %812 : vector<4x1xi1> to vector<4x1xi1>
    %814 = vector.broadcast %813 : vector<4x1xi1> to vector<4x32xi1>
    %815 = arith.select %814, %811, %786 : vector<4x32xi1>, vector<4x32xf32>
    %816 = vector.shape_cast %812 : vector<4x1xi1> to vector<4x1xi1>
    %817 = vector.broadcast %816 : vector<4x1xi1> to vector<4x32xi1>
    %818 = arith.select %817, %809, %789 : vector<4x32xi1>, vector<4x32xf32>
    %c0_177 = arith.constant 0 : index
    %c1_178 = arith.constant 1 : index
    %c32_179 = arith.constant 32 : index
    %819 = vector.load %arg17[%c0_177, %c1_178, %c32_179] : memref<4x8x64xf32, #tpu.memory_space<vmem>>, vector<4x1x32xf32>
    %820 = vector.shape_cast %819 : vector<4x1x32xf32> to vector<4x32xf32>
    %821 = vector.shape_cast %815 : vector<4x32xf32> to vector<4x1x32xf32>
    tpu.vector_store %arg17[%c0_177, %c1_178, %c32_179], %821 {strides = array<i32>} : memref<4x8x64xf32, #tpu.memory_space<vmem>>, vector<4x1x32xf32>,
    %822 = vector.extract_strided_slice %615 {offsets = [0, 0, 0], sizes = [4, 1, 128], strides = [1, 1, 1]} : vector<4x8x128xf32> to vector<4x1x128xf32>
    %823 = vector.shape_cast %822 : vector<4x1x128xf32> to vector<4x128xf32>
    %cst_180 = arith.constant dense<0.000000e+00> : vector<4x128xf32>
    %824 = tpu.matmul %815, %616, %cst_180 {dimension_numbers = #tpu.dot_dimension_numbers<[1], [0], [0], [1], [0, 0, 1, 1], [], []>} : vector<4x32xf32>, vector<32x128xf32>, vector<4x128xf32> -> vector<4x128xf32>
    %825 = arith.addf %823, %824 : vector<4x128xf32>
    %826 = arith.negf %825 : vector<4x128xf32>
    %827 = math.exp %826 : vector<4x128xf32>
    %cst_181 = arith.constant 1.000000e+00 : f32
    %828 = vector.broadcast %cst_181 : f32 to vector<4x128xf32>
    %829 = arith.addf %828, %827 : vector<4x128xf32>
    %830 = arith.divf %828, %829 : vector<4x128xf32>
    %831 = vector.extract_strided_slice %830 {offsets = [0, 0], sizes = [4, 32], strides = [1, 1]} : vector<4x128xf32> to vector<4x32xf32>
    %832 = vector.extract_strided_slice %830 {offsets = [0, 32], sizes = [4, 32], strides = [1, 1]} : vector<4x128xf32> to vector<4x32xf32>
    %833 = vector.extract_strided_slice %830 {offsets = [0, 96], sizes = [4, 32], strides = [1, 1]} : vector<4x128xf32> to vector<4x32xf32>
    %834 = vector.extract_strided_slice %825 {offsets = [0, 64], sizes = [4, 32], strides = [1, 1]} : vector<4x128xf32> to vector<4x32xf32>
    %835 = math.tanh %834 : vector<4x32xf32>
    %836 = arith.mulf %832, %818 : vector<4x32xf32>
    %837 = arith.mulf %831, %835 : vector<4x32xf32>
    %838 = arith.addf %836, %837 : vector<4x32xf32>
    %839 = math.tanh %838 : vector<4x32xf32>
    %840 = arith.mulf %833, %839 : vector<4x32xf32>
    %841 = vector.extract_strided_slice %2 {offsets = [0, 0], sizes = [4, 1], strides = [1, 1]} : vector<4x8xi1> to vector<4x1xi1>
    %842 = vector.shape_cast %841 : vector<4x1xi1> to vector<4x1xi1>
    %843 = vector.broadcast %842 : vector<4x1xi1> to vector<4x32xi1>
    %844 = arith.select %843, %840, %815 : vector<4x32xi1>, vector<4x32xf32>
    %c0_182 = arith.constant 0 : index
    %c0_183 = arith.constant 0 : index
    %c32_184 = arith.constant 32 : index
    %845 = vector.load %arg17[%c0_182, %c0_183, %c32_184] : memref<4x8x64xf32, #tpu.memory_space<vmem>>, vector<4x1x32xf32>
    %846 = vector.shape_cast %845 : vector<4x1x32xf32> to vector<4x32xf32>
    %847 = vector.shape_cast %844 : vector<4x32xf32> to vector<4x1x32xf32>
    tpu.vector_store %arg17[%c0_182, %c0_183, %c32_184], %847 {strides = array<i32>} : memref<4x8x64xf32, #tpu.memory_space<vmem>>, vector<4x1x32xf32>,
    %c0_185 = arith.constant 0 : index
    %c0_186 = arith.constant 0 : index
    %c0_187 = arith.constant 0 : index
    %848 = vector.load %arg17[%c0_185, %c0_186, %c0_187] : memref<4x8x64xf32, #tpu.memory_space<vmem>>, vector<4x8x64xf32>
    %849 = vector.broadcast %3 : vector<4x8x1xf32> to vector<4x8x64xf32>
    %850 = arith.mulf %848, %849 : vector<4x8x64xf32>
    %851 = vector.shape_cast %850 : vector<4x8x64xf32> to vector<32x64xf32>
    %c0_188 = arith.constant 0 : index
    %c0_189 = arith.constant 0 : index
    %852 = vector.load %arg11[%c0_188, %c0_189] : memref<64x32xf32, #tpu.memory_space<vmem>>, vector<64x32xf32>
    %cst_190 = arith.constant dense<0.000000e+00> : vector<32x32xf32>
    %853 = tpu.matmul %851, %852, %cst_190 {dimension_numbers = #tpu.dot_dimension_numbers<[1], [0], [0], [1], [0, 0, 1, 1], [], []>} : vector<32x64xf32>, vector<64x32xf32>, vector<32x32xf32> -> vector<32x32xf32>
    %c0_191 = arith.constant 0 : index
    %c0_192 = arith.constant 0 : index
    %854 = vector.load %arg12[%c0_191, %c0_192] : memref<1x32xf32, #tpu.memory_space<vmem>>, vector<1x32xf32>
    %855 = vector.broadcast %854 : vector<1x32xf32> to vector<32x32xf32>
    %856 = arith.addf %853, %855 : vector<32x32xf32>
    %857 = vector.shape_cast %856 : vector<32x32xf32> to vector<4x8x32xf32>
    %c0_193 = arith.constant 0 : index
    %c0_194 = arith.constant 0 : index
    %858 = vector.load %arg2[%c0_193, %c0_194] : memref<8x32xf32, #tpu.memory_space<vmem>>, vector<8x32xf32>
    %859 = vector.shape_cast %858 : vector<8x32xf32> to vector<1x8x32xf32>
    %860 = vector.broadcast %859 : vector<1x8x32xf32> to vector<4x8x32xf32>
    %861 = arith.addf %857, %860 : vector<4x8x32xf32>
    %cst_195 = arith.constant dense<0.000000e+00> : vector<4x8xf32>
    %862 = vector.multi_reduction <add>, %861, %cst_195 [2] : vector<4x8x32xf32> to vector<4x8xf32>
    %863 = vector.shape_cast %862 : vector<4x8xf32> to vector<4x8x1xf32>
    %cst_196 = arith.constant 3.200000e+01 : f32
    %864 = vector.broadcast %cst_196 : f32 to vector<4x8x1xf32>
    %865 = arith.divf %863, %864 : vector<4x8x1xf32>
    %866 = vector.broadcast %865 : vector<4x8x1xf32> to vector<4x8x32xf32>
    %867 = arith.subf %861, %866 : vector<4x8x32xf32>
    %868 = arith.mulf %867, %867 : vector<4x8x32xf32>
    %cst_197 = arith.constant dense<0.000000e+00> : vector<4x8xf32>
    %869 = vector.multi_reduction <add>, %868, %cst_197 [2] : vector<4x8x32xf32> to vector<4x8xf32>
    %870 = vector.shape_cast %869 : vector<4x8xf32> to vector<4x8x1xf32>
    %cst_198 = arith.constant 3.200000e+01 : f32
    %871 = vector.broadcast %cst_198 : f32 to vector<4x8x1xf32>
    %872 = arith.divf %870, %871 : vector<4x8x1xf32>
    %873 = vector.broadcast %865 : vector<4x8x1xf32> to vector<4x8x32xf32>
    %874 = arith.subf %861, %873 : vector<4x8x32xf32>
    %cst_199 = arith.constant 9.99999974E-6 : f32
    %875 = vector.broadcast %cst_199 : f32 to vector<4x8x1xf32>
    %876 = arith.addf %872, %875 : vector<4x8x1xf32>
    %877 = math.rsqrt %876 : vector<4x8x1xf32>
    %878 = vector.broadcast %877 : vector<4x8x1xf32> to vector<4x8x32xf32>
    %879 = arith.mulf %874, %878 : vector<4x8x32xf32>
    %c0_200 = arith.constant 0 : index
    %c0_201 = arith.constant 0 : index
    %880 = vector.load %arg13[%c0_200, %c0_201] : memref<1x32xf32, #tpu.memory_space<vmem>>, vector<1x32xf32>
    %881 = vector.shape_cast %880 : vector<1x32xf32> to vector<1x1x32xf32>
    %882 = vector.broadcast %881 : vector<1x1x32xf32> to vector<4x8x32xf32>
    %883 = arith.mulf %879, %882 : vector<4x8x32xf32>
    %c0_202 = arith.constant 0 : index
    %c0_203 = arith.constant 0 : index
    %884 = vector.load %arg14[%c0_202, %c0_203] : memref<1x32xf32, #tpu.memory_space<vmem>>, vector<1x32xf32>
    %885 = vector.shape_cast %884 : vector<1x32xf32> to vector<1x1x32xf32>
    %886 = vector.broadcast %885 : vector<1x1x32xf32> to vector<4x8x32xf32>
    %887 = arith.addf %883, %886 : vector<4x8x32xf32>
    %c0_204 = arith.constant 0 : index
    %c0_205 = arith.constant 0 : index
    %c0_206 = arith.constant 0 : index
    %888 = vector.load %arg15[%c0_204, %c0_205, %c0_206] : memref<4x8x32xf32, #tpu.memory_space<vmem>>, vector<4x8x32xf32>
    tpu.vector_store %arg15[%c0_204, %c0_205, %c0_206], %887 {strides = array<i32>} : memref<4x8x32xf32, #tpu.memory_space<vmem>>, vector<4x8x32xf32>,
    return
  }
}

</mosaic_0001>

<llo_original>
// kernel: tpu_custom_call.1
$region0: #{tpu_custom_call.1}
  #allocation0 [shape = 'u32[]', space=smem, size = 0x4, offset = 0x4, fixed_abs, tag = 'smem constant byte address 0x4 - core index']
  #allocation1 [shape = 'u32[72,128]{1,0:T(1,128)}', space=vmem, size = 0x9000, scoped, tag = 'internal scratch']
  #allocation2 [shape = 'f32[4,8,64]{2,1,0:T(8,128)}', space=vmem, size = 0x4000, scoped, tag = 'scratch operand']
  #allocation3 [shape = 'f32[4,8,64]{2,1,0:T(8,128)}', space=vmem, size = 0x4000, scoped, tag = 'scratch operand']
  %s0 = inlined_call_operand.vmem [shape: f32[4,8,32], index: 0, kind: input, shape index: {}]
  %s1 = inlined_call_operand.hbm [shape: f32[4,8], index: 1, kind: input, shape index: {}]
  %s2 = inlined_call_operand.hbm [shape: f32[8,32], index: 2, kind: input, shape index: {}]
  %s3 = inlined_call_operand.vmem [shape: f32[32,256], index: 3, kind: input, shape index: {}]
  %s4 = inlined_call_operand.hbm [shape: f32[32,128], index: 4, kind: input, shape index: {}]
  %s5 = inlined_call_operand.hbm [shape: f32[32,128], index: 5, kind: input, shape index: {}]
  %s6 = inlined_call_operand.vmem [shape: f32[1,256], index: 6, kind: input, shape index: {}]
  %s7 = inlined_call_operand.hbm [shape: f32[64,256], index: 7, kind: input, shape index: {}]
  %s8 = inlined_call_operand.hbm [shape: f32[32,128], index: 8, kind: input, shape index: {}]
  %s9 = inlined_call_operand.hbm [shape: f32[32,128], index: 9, kind: input, shape index: {}]
  %s10 = inlined_call_operand.vmem [shape: f32[1,256], index: 10, kind: input, shape index: {}]
  %s11 = inlined_call_operand.vmem [shape: f32[64,32], index: 11, kind: input, shape index: {}]
  %s12 = inlined_call_operand.vmem [shape: f32[1,32], index: 12, kind: input, shape index: {}]
  %s13 = inlined_call_operand.vmem [shape: f32[1,32], index: 13, kind: input, shape index: {}]
  %s14 = inlined_call_operand.vmem [shape: f32[1,32], index: 14, kind: input, shape index: {}]
  %s15 = inlined_call_operand.hbm [shape: f32[4,8,32], index: 15, kind: output, shape index: {}]
  %s16 = sld [smem:[#allocation0]]
  $region98: #{tpu_custom_call.1} parent=0
    _
  %s18 = ssub.s32 1, %s16
  %s19 = scalar_select 0, %s18, %s16
  $region1: #{tpu_custom_call.1} parent=0
    #allocation4 [shape = 'u8[2048]{0}', space=vmem, size = 0x800, scoped, tag = 'input window, operand 1, single buffered']
    #allocation5 [shape = 's32[1]{0}', space=sflag, size = 0x4, scoped, tag = 'scoped memory for tpu_custom_call.1']
    #allocation6 [shape = 's32[1]{0}', space=sflag, size = 0x4, scoped, tag = 'scoped memory for tpu_custom_call.1']
    #allocation7 [shape = 'u8[4096]{0}', space=vmem, size = 0x1000, scoped, tag = 'input window, operand 2, single buffered']
    #allocation8 [shape = 's32[1]{0}', space=sflag, size = 0x4, scoped, tag = 'scoped memory for tpu_custom_call.1']
    #allocation9 [shape = 'u8[16384]{0}', space=vmem, size = 0x4000, scoped, tag = 'input window, operand 4, single buffered']
    #allocation10 [shape = 'u8[16384]{0}', space=vmem, size = 0x4000, scoped, tag = 'input window, operand 5, single buffered']
    #allocation11 [shape = 's32[1]{0}', space=sflag, size = 0x4, scoped, tag = 'scoped memory for tpu_custom_call.1']
    #allocation12 [shape = 'u8[65536]{0}', space=vmem, size = 0x10000, scoped, tag = 'input window, operand 7, single buffered']
    #allocation13 [shape = 'u8[16384]{0}', space=vmem, size = 0x4000, scoped, tag = 'input window, operand 8, single buffered']
    #allocation14 [shape = 's32[1]{0}', space=sflag, size = 0x4, scoped, tag = 'scoped memory for tpu_custom_call.1']
    #allocation15 [shape = 'u8[16384]{0}', space=vmem, size = 0x4000, scoped, tag = 'input window, operand 9, single buffered']
    #allocation16 [shape = 'u8[16384]{0}', space=vmem, size = 0x4000, scoped, tag = 'output window, operand 0, single buffered']
    %20 = vsyncpa [#allocation5], 0
    %21 = vsyncpa [#allocation8], 0
    %22 = vsyncpa [#allocation11], 0
    %23 = vsyncpa [#allocation14], 0
    %24 = vsyncpa [#allocation6], 0
    // Predicated region
    $region2: #{tpu_custom_call.1} parent=1 // pred_check
      _
    $region3: #{tpu_custom_call.1} parent=1 // pred_check_branch
      %26 = sbr.rel (0) target = $region5
    $region4: #{tpu_custom_call.1} parent=1 // pred_region
      _
    $region5: #{tpu_custom_call.1} parent=1 // pred_fallthru
      _
    // Predicated region
    $region6: #{tpu_custom_call.1} parent=1 // pred_check
      _
    $region7: #{tpu_custom_call.1} parent=1 // pred_check_branch
      %28 = sbr.rel (0) target = $region9
    $region8: #{tpu_custom_call.1} parent=1 // pred_region
      %30 = vsyncadd [#allocation5], 0
      %s32 = sshll.u32 %s1, 4
      %s33 = int_to_ptr.hbm [resolvable:$true] %s32
      %s34 = sshll.u32 [#allocation4], 4
      %s35 = int_to_ptr.vmem [resolvable:$true] %s34
      %37 = dma.hbm_to_vmem [thread:$0]  %s33, 64, %s35, [#allocation5]
    $region9: #{tpu_custom_call.1} parent=1 // pred_fallthru
      _
    // Predicated region
    $region10: #{tpu_custom_call.1} parent=1 // pred_check
      _
    $region11: #{tpu_custom_call.1} parent=1 // pred_check_branch
      %39 = sbr.rel (0) target = $region13
    $region12: #{tpu_custom_call.1} parent=1 // pred_region
      %41 = vsyncadd [#allocation8], 0
      %s43 = sshll.u32 %s2, 4
      %s44 = int_to_ptr.hbm [resolvable:$true] %s43
      %s45 = sshll.u32 [#allocation7], 4
      %s46 = int_to_ptr.vmem [resolvable:$true] %s45
      %48 = dma.hbm_to_vmem [thread:$0]  %s44, 128, %s46, [#allocation8]
    $region13: #{tpu_custom_call.1} parent=1 // pred_fallthru
      _
    // Predicated region
    $region14: #{tpu_custom_call.1} parent=1 // pred_check
      _
    $region15: #{tpu_custom_call.1} parent=1 // pred_check_branch
      %50 = sbr.rel (0) target = $region17
    $region16: #{tpu_custom_call.1} parent=1 // pred_region
      _
    $region17: #{tpu_custom_call.1} parent=1 // pred_fallthru
      _
    // Predicated region
    $region18: #{tpu_custom_call.1} parent=1 // pred_check
      _
    $region19: #{tpu_custom_call.1} parent=1 // pred_check_branch
      %52 = sbr.rel (0) target = $region21
    $region20: #{tpu_custom_call.1} parent=1 // pred_region
      %54 = vsyncadd [#allocation8], 0
      %s55 = sshll.u32 %s4, 4
      %s56 = int_to_ptr.hbm [resolvable:$true] %s55
      %s57 = sshll.u32 [#allocation9], 4
      %s58 = int_to_ptr.vmem [resolvable:$true] %s57
      %63 = dma.hbm_to_vmem [thread:$0]  %s56, 512, %s58, [#allocation8], 128, 128, 8
    $region21: #{tpu_custom_call.1} parent=1 // pred_fallthru
      _
    // Predicated region
    $region22: #{tpu_custom_call.1} parent=1 // pred_check
      _
    $region23: #{tpu_custom_call.1} parent=1 // pred_check_branch
      %65 = sbr.rel (0) target = $region25
    $region24: #{tpu_custom_call.1} parent=1 // pred_region
      %67 = vsyncadd [#allocation11], 0
      %s68 = sshll.u32 %s5, 4
      %s69 = int_to_ptr.hbm [resolvable:$true] %s68
      %s70 = sshll.u32 [#allocation10], 4
      %s71 = int_to_ptr.vmem [resolvable:$true] %s70
      %76 = dma.hbm_to_vmem [thread:$0]  %s69, 512, %s71, [#allocation11], 128, 128, 8
    $region25: #{tpu_custom_call.1} parent=1 // pred_fallthru
      _
    // Predicated region
    $region26: #{tpu_custom_call.1} parent=1 // pred_check
      _
    $region27: #{tpu_custom_call.1} parent=1 // pred_check_branch
      %78 = sbr.rel (0) target = $region29
    $region28: #{tpu_custom_call.1} parent=1 // pred_region
      _
    $region29: #{tpu_custom_call.1} parent=1 // pred_fallthru
      _
    // Predicated region
    $region30: #{tpu_custom_call.1} parent=1 // pred_check
      _
    $region31: #{tpu_custom_call.1} parent=1 // pred_check_branch
      %80 = sbr.rel (0) target = $region33
    $region32: #{tpu_custom_call.1} parent=1 // pred_region
      %82 = vsyncadd [#allocation11], 0
      %s83 = sshll.u32 %s7, 4
      %s84 = int_to_ptr.hbm [resolvable:$true] %s83
      %s85 = sshll.u32 [#allocation12], 4
      %s86 = int_to_ptr.vmem [resolvable:$true] %s85
      %91 = dma.hbm_to_vmem [thread:$0]  %s84, 2048, %s86, [#allocation11], 256, 256, 16
    $region33: #{tpu_custom_call.1} parent=1 // pred_fallthru
      _
    // Predicated region
    $region34: #{tpu_custom_call.1} parent=1 // pred_check
      _
    $region35: #{tpu_custom_call.1} parent=1 // pred_check_branch
      %93 = sbr.rel (0) target = $region37
    $region36: #{tpu_custom_call.1} parent=1 // pred_region
      %95 = vsyncadd [#allocation14], 0
      %s96 = sshll.u32 %s8, 4
      %s97 = int_to_ptr.hbm [resolvable:$true] %s96
      %s98 = sshll.u32 [#allocation13], 4
      %s99 = int_to_ptr.vmem [resolvable:$true] %s98
      %104 = dma.hbm_to_vmem [thread:$0]  %s97, 512, %s99, [#allocation14], 128, 128, 8
    $region37: #{tpu_custom_call.1} parent=1 // pred_fallthru
      _
    // Predicated region
    $region38: #{tpu_custom_call.1} parent=1 // pred_check
      _
    $region39: #{tpu_custom_call.1} parent=1 // pred_check_branch
      %106 = sbr.rel (0) target = $region41
    $region40: #{tpu_custom_call.1} parent=1 // pred_region
      %108 = vsyncadd [#allocation14], 0
      %s109 = sshll.u32 %s9, 4
      %s110 = int_to_ptr.hbm [resolvable:$true] %s109
      %s111 = sshll.u32 [#allocation15], 4
      %s112 = int_to_ptr.vmem [resolvable:$true] %s111
      %117 = dma.hbm_to_vmem [thread:$0]  %s110, 512, %s112, [#allocation14], 128, 128, 8
    $region41: #{tpu_custom_call.1} parent=1 // pred_fallthru
      _
    // Predicated region
    $region42: #{tpu_custom_call.1} parent=1 // pred_check
      _
    $region43: #{tpu_custom_call.1} parent=1 // pred_check_branch
      %119 = sbr.rel (0) target = $region45
    $region44: #{tpu_custom_call.1} parent=1 // pred_region
      _
    $region45: #{tpu_custom_call.1} parent=1 // pred_fallthru
      _
    // Predicated region
    $region46: #{tpu_custom_call.1} parent=1 // pred_check
      _
    $region47: #{tpu_custom_call.1} parent=1 // pred_check_branch
      %121 = sbr.rel (0) target = $region49
    $region48: #{tpu_custom_call.1} parent=1 // pred_region
      _
    $region49: #{tpu_custom_call.1} parent=1 // pred_fallthru
      _
    // Predicated region
    $region50: #{tpu_custom_call.1} parent=1 // pred_check
      _
    $region51: #{tpu_custom_call.1} parent=1 // pred_check_branch
      %123 = sbr.rel (0) target = $region53
    $region52: #{tpu_custom_call.1} parent=1 // pred_region
      _
    $region53: #{tpu_custom_call.1} parent=1 // pred_fallthru
      _
    // Predicated region
    $region54: #{tpu_custom_call.1} parent=1 // pred_check
      _
    $region55: #{tpu_custom_call.1} parent=1 // pred_check_branch
      %125 = sbr.rel (0) target = $region57
    $region56: #{tpu_custom_call.1} parent=1 // pred_region
      _
    $region57: #{tpu_custom_call.1} parent=1 // pred_fallthru
      _
    // Predicated region
    $region58: #{tpu_custom_call.1} parent=1 // pred_check
      _
    $region59: #{tpu_custom_call.1} parent=1 // pred_check_branch
      %127 = sbr.rel (0) target = $region61
    $region60: #{tpu_custom_call.1} parent=1 // pred_region
      _
    $region61: #{tpu_custom_call.1} parent=1 // pred_fallthru
      _
    // Predicated region
    $region62: #{tpu_custom_call.1} parent=1 // pred_check
      _
    $region63: #{tpu_custom_call.1} parent=1 // pred_check_branch
      %129 = sbr.rel (0) target = $region65
    $region64: #{tpu_custom_call.1} parent=1 // pred_region
      %131 = dma.done [#allocation5], 64
    $region65: #{tpu_custom_call.1} parent=1 // pred_fallthru
      _
    // Predicated region
    $region66: #{tpu_custom_call.1} parent=1 // pred_check
      _
    $region67: #{tpu_custom_call.1} parent=1 // pred_check_branch
      %133 = sbr.rel (0) target = $region69
    $region68: #{tpu_custom_call.1} parent=1 // pred_region
      %135 = dma.done [#allocation8], 128
    $region69: #{tpu_custom_call.1} parent=1 // pred_fallthru
      _
    // Predicated region
    $region70: #{tpu_custom_call.1} parent=1 // pred_check
      _
    $region71: #{tpu_custom_call.1} parent=1 // pred_check_branch
      %137 = sbr.rel (0) target = $region73
    $region72: #{tpu_custom_call.1} parent=1 // pred_region
      %139 = dma.done [#allocation8], 512
    $region73: #{tpu_custom_call.1} parent=1 // pred_fallthru
      _
    // Predicated region
    $region74: #{tpu_custom_call.1} parent=1 // pred_check
      _
    $region75: #{tpu_custom_call.1} parent=1 // pred_check_branch
      %141 = sbr.rel (0) target = $region77
    $region76: #{tpu_custom_call.1} parent=1 // pred_region
      %143 = dma.done [#allocation11], 512
    $region77: #{tpu_custom_call.1} parent=1 // pred_fallthru
      _
    // Predicated region
    $region78: #{tpu_custom_call.1} parent=1 // pred_check
      _
    $region79: #{tpu_custom_call.1} parent=1 // pred_check_branch
      %145 = sbr.rel (0) target = $region81
    $region80: #{tpu_custom_call.1} parent=1 // pred_region
      %147 = dma.done [#allocation11], 2048
    $region81: #{tpu_custom_call.1} parent=1 // pred_fallthru
      _
    // Predicated region
    $region82: #{tpu_custom_call.1} parent=1 // pred_check
      _
    $region83: #{tpu_custom_call.1} parent=1 // pred_check_branch
      %149 = sbr.rel (0) target = $region85
    $region84: #{tpu_custom_call.1} parent=1 // pred_region
      %151 = dma.done [#allocation14], 512
    $region85: #{tpu_custom_call.1} parent=1 // pred_fallthru
      _
    // Predicated region
    $region86: #{tpu_custom_call.1} parent=1 // pred_check
      _
    $region87: #{tpu_custom_call.1} parent=1 // pred_check_branch
      %153 = sbr.rel (0) target = $region89
    $region88: #{tpu_custom_call.1} parent=1 // pred_region
      %155 = dma.done [#allocation14], 512
    $region89: #{tpu_custom_call.1} parent=1 // pred_fallthru
      _
    %v156 = vld [vmem:[#allocation4] sm:$0xf]
    %vm157 = vcmp.gt.f32.partialorder %v156, 0.5
    %v158 = vperm.slane %v156, 0
    %v159 = vlaneseq
    %v160 = vshrl.u32 %v159, 7
    %162 = vset.pattern.permute.xlu0 %v160
    %163 = vperm.xlu0 %162, %v158
    %v164 = vpop.permute.xlu0 %163
    %v165 = vperm.slane %v156, 1
    %v166 = vlaneseq
    %v167 = vshrl.u32 %v166, 7
    %169 = vset.pattern.permute.xlu0 %v167
    %170 = vperm.xlu0 %169, %v165
    %v171 = vpop.permute.xlu0 %170
    %v172 = vperm.slane %v156, 2
    %v173 = vlaneseq
    %v174 = vshrl.u32 %v173, 7
    %176 = vset.pattern.permute.xlu0 %v174
    %177 = vperm.xlu0 %176, %v172
    %v178 = vpop.permute.xlu0 %177
    %v179 = vperm.slane %v156, 3
    %v180 = vlaneseq
    %v181 = vshrl.u32 %v180, 7
    %183 = vset.pattern.permute.xlu0 %v181
    %184 = vperm.xlu0 %183, %v179
    %v185 = vpop.permute.xlu0 %184
    %v186 = vld [vmem:[%s0] sm:$0xff]
    %v187 = vld [vmem:[%s0 + $0x8] sm:$0xff]
    %v188 = vld [vmem:[%s0 + $0x10] sm:$0xff]
    %v189 = vld [vmem:[%s0 + $0x18] sm:$0xff]
    %v190 = vld [vmem:[%s3] sm:$0xff]
    %v191 = vld [vmem:[%s3 + $0x8] sm:$0xff]
    %v192 = vld [vmem:[%s3 + $0x10] sm:$0xff]
    %v193 = vld [vmem:[%s3 + $0x18] sm:$0xff]
    %v194 = vld [vmem:[%s3 + $0x20] sm:$0xff]
    %v195 = vld [vmem:[%s3 + $0x28] sm:$0xff]
    %v196 = vld [vmem:[%s3 + $0x30] sm:$0xff]
    %v197 = vld [vmem:[%s3 + $0x38] sm:$0xff]
    %v198 = vld [vmem:[%s6] sm:$0x3]
    %v200 = vperm.slane %v198, 0
    %v201 = vperm.slane %v198, 1
    %vm204 = vcmask 261120
    %v206 = vsel %vm204, %v186, 0
    %v209 = vsel %vm204, %v187, 0
    %v212 = vsel %vm204, %v188, 0
    %v215 = vsel %vm204, %v189, 0
    %217 = vmatpush.msra.mxu0 0.0
    %218 = vmatpush.msra.mxu0 0.0
    %219 = vmatpush.msra.mxu0 0.0
    %220 = vmatpush.msra.mxu0 0.0
    %221 = vmatpush.msra.mxu0 0.0
    %222 = vmatpush.msra.mxu0 0.0
    %223 = vmatpush.msra.mxu0 0.0
    %224 = vmatpush.msra.mxu0 0.0
    %225 = vmatpush.msra.mxu0 0.0
    %226 = vmatpush.msra.mxu0 0.0
    %227 = vmatpush.msra.mxu0 0.0
    %228 = vmatpush.msra.mxu0 0.0
    %229 = vmatpush.msra.mxu0 %v196
    %230 = vmatpush.msra.mxu0 %v194
    %231 = vmatpush.msra.mxu0 %v192
    %232 = vmatpush.msra.mxu0 %v190
    %233 = vmatmul.f32.gmra.mxu0 %v206
    %v234 = vpop.f32.mrf.mxu0
    %v235 = vadd.f32 %v200, %v234
    %236 = vmatmul.f32.gmra.mxu0 %v209
    %v237 = vpop.f32.mrf.mxu0
    %v238 = vadd.f32 %v200, %v237
    %239 = vmatmul.f32.gmra.mxu0 %v212
    %v240 = vpop.f32.mrf.mxu0
    %v241 = vadd.f32 %v200, %v240
    %242 = vmatmul.f32.gmra.mxu0 %v215
    %v243 = vpop.f32.mrf.mxu0
    %v244 = vadd.f32 %v200, %v243
    %245 = vdwg.mxu0
    %246 = vmatpush.msra.mxu0 0.0
    %247 = vmatpush.msra.mxu0 0.0
    %248 = vmatpush.msra.mxu0 0.0
    %249 = vmatpush.msra.mxu0 0.0
    %250 = vmatpush.msra.mxu0 0.0
    %251 = vmatpush.msra.mxu0 0.0
    %252 = vmatpush.msra.mxu0 0.0
    %253 = vmatpush.msra.mxu0 0.0
    %254 = vmatpush.msra.mxu0 0.0
    %255 = vmatpush.msra.mxu0 0.0
    %256 = vmatpush.msra.mxu0 0.0
    %257 = vmatpush.msra.mxu0 0.0
    %258 = vmatpush.msra.mxu0 %v197
    %259 = vmatpush.msra.mxu0 %v195
    %260 = vmatpush.msra.mxu0 %v193
    %261 = vmatpush.msra.mxu0 %v191
    %262 = vmatmul.f32.gmra.mxu0 %v206
    %v263 = vpop.f32.mrf.mxu0
    %v264 = vadd.f32 %v201, %v263
    %265 = vmatmul.f32.gmra.mxu0 %v209
    %v266 = vpop.f32.mrf.mxu0
    %v267 = vadd.f32 %v201, %v266
    %268 = vmatmul.f32.gmra.mxu0 %v212
    %v269 = vpop.f32.mrf.mxu0
    %v270 = vadd.f32 %v201, %v269
    %271 = vmatmul.f32.gmra.mxu0 %v215
    %v272 = vpop.f32.mrf.mxu0
    %v273 = vadd.f32 %v201, %v272
    %274 = vdwg.mxu0
    %v275 = vld [vmem:[#allocation9] sm:$0xff]
    %v276 = vld [vmem:[#allocation9 + $0x8] sm:$0xff]
    %v277 = vld [vmem:[#allocation9 + $0x10] sm:$0xff]
    %v278 = vld [vmem:[#allocation9 + $0x18] sm:$0xff]
    %v280 = vsel %vm204, 0.0, 0
    %282 = vmatpush.msra.mxu0 0.0
    %283 = vmatpush.msra.mxu0 0.0
    %284 = vmatpush.msra.mxu0 0.0
    %285 = vmatpush.msra.mxu0 0.0
    %286 = vmatpush.msra.mxu0 0.0
    %287 = vmatpush.msra.mxu0 0.0
    %288 = vmatpush.msra.mxu0 0.0
    %289 = vmatpush.msra.mxu0 0.0
    %290 = vmatpush.msra.mxu0 0.0
    %291 = vmatpush.msra.mxu0 0.0
    %292 = vmatpush.msra.mxu0 0.0
    %293 = vmatpush.msra.mxu0 0.0
    %294 = vmatpush.msra.mxu0 %v278
    %295 = vmatpush.msra.mxu0 %v277
    %296 = vmatpush.msra.mxu0 %v276
    %297 = vmatpush.msra.mxu0 %v275
    %298 = vmatmul.f32.gmra.mxu0 %v280
    %v299 = vpop.f32.mrf.mxu0
    %v300 = vadd.f32 0.0, %v299
    %301 = vdwg.mxu0
    %v303 = vrot.slane %v300, 1
    %v304 = vrot.slane %v300, 2
    %v305 = vrot.slane %v300, 3
    %v310 = vadd.f32 %v235, %v300
    %v311 = vadd.f32 %v238, %v303
    %v312 = vadd.f32 %v241, %v304
    %v313 = vadd.f32 %v244, %v305
    %v314 = vxor.u32 %v310, 2147483648
    %v315 = vxor.u32 %v311, 2147483648
    %v316 = vxor.u32 %v312, 2147483648
    %v317 = vxor.u32 %v313, 2147483648
    %v318 = vmul.f32 %v314, 1.442695
    %v319 = vpow.pop %v318
    %v320 = vmul.f32 %v315, 1.442695
    %v321 = vpow.pop %v320
    %v322 = vmul.f32 %v316, 1.442695
    %v323 = vpow.pop %v322
    %v324 = vmul.f32 %v317, 1.442695
    %v325 = vpow.pop %v324
    %v326 = vadd.f32 %v319, 1.0
    %v327 = vadd.f32 %v321, 1.0
    %v328 = vadd.f32 %v323, 1.0
    %v329 = vadd.f32 %v325, 1.0
    %v330 = vrcp.pop %v326
    %v331 = vmul.f32 %v326, %v330
    %v332 = vsub.f32 1.0, %v331
    %v333 = vmul.f32 %v330, %v332
    %v334 = vadd.f32 %v330, %v333
    %vm335 = vweird.f32 %v326
    %vm336 = vweird.f32 %v330
    %vm337 = vmor %vm335, %vm336
    %v338 = vsel %vm337, %v330, %v334
    %v339 = vand.u32 2147483647, %v326
    %vm340 = vcmp.eq.f32.partialorder %v339, 8.507059e+37
    %v341 = vand.u32 %v326, 2147483648
    %v342 = vor.u32 1.1754944e-38, %v341
    %v343 = vsel %vm340, %v342, %v338
    %v344 = vmul.f32 1.0, %v343
    %v345 = vrcp.pop %v327
    %v346 = vmul.f32 %v327, %v345
    %v347 = vsub.f32 1.0, %v346
    %v348 = vmul.f32 %v345, %v347
    %v349 = vadd.f32 %v345, %v348
    %vm350 = vweird.f32 %v327
    %vm351 = vweird.f32 %v345
    %vm352 = vmor %vm350, %vm351
    %v353 = vsel %vm352, %v345, %v349
    %v354 = vand.u32 2147483647, %v327
    %vm355 = vcmp.eq.f32.partialorder %v354, 8.507059e+37
    %v356 = vand.u32 %v327, 2147483648
    %v357 = vor.u32 1.1754944e-38, %v356
    %v358 = vsel %vm355, %v357, %v353
    %v359 = vmul.f32 1.0, %v358
    %v360 = vrcp.pop %v328
    %v361 = vmul.f32 %v328, %v360
    %v362 = vsub.f32 1.0, %v361
    %v363 = vmul.f32 %v360, %v362
    %v364 = vadd.f32 %v360, %v363
    %vm365 = vweird.f32 %v328
    %vm366 = vweird.f32 %v360
    %vm367 = vmor %vm365, %vm366
    %v368 = vsel %vm367, %v360, %v364
    %v369 = vand.u32 2147483647, %v328
    %vm370 = vcmp.eq.f32.partialorder %v369, 8.507059e+37
    %v371 = vand.u32 %v328, 2147483648
    %v372 = vor.u32 1.1754944e-38, %v371
    %v373 = vsel %vm370, %v372, %v368
    %v374 = vmul.f32 1.0, %v373
    %v375 = vrcp.pop %v329
    %v376 = vmul.f32 %v329, %v375
    %v377 = vsub.f32 1.0, %v376
    %v378 = vmul.f32 %v375, %v377
    %v379 = vadd.f32 %v375, %v378
    %vm380 = vweird.f32 %v329
    %vm381 = vweird.f32 %v375
    %vm382 = vmor %vm380, %vm381
    %v383 = vsel %vm382, %v375, %v379
    %v384 = vand.u32 2147483647, %v329
    %vm385 = vcmp.eq.f32.partialorder %v384, 8.507059e+37
    %v386 = vand.u32 %v329, 2147483648
    %v387 = vor.u32 1.1754944e-38, %v386
    %v388 = vsel %vm385, %v387, %v383
    %v389 = vmul.f32 1.0, %v388
    %v390 = vtanh.pop %v310
    %v391 = vtanh.pop %v311
    %v392 = vtanh.pop %v312
    %v393 = vtanh.pop %v313
    %v394 = vmul.f32 %v344, 0.0
    %v395 = vmul.f32 %v359, 0.0
    %v396 = vmul.f32 %v374, 0.0
    %v397 = vmul.f32 %v389, 0.0
    %402 = vrot.lane.b32.xlu0 %v390, 64
    %v403 = vpop.permute.xlu0 %402
    %404 = vrot.lane.b32.xlu0 %v391, 64
    %v405 = vpop.permute.xlu0 %404
    %406 = vrot.lane.b32.xlu0 %v392, 64
    %v407 = vpop.permute.xlu0 %406
    %408 = vrot.lane.b32.xlu0 %v393, 64
    %v409 = vpop.permute.xlu0 %408
    %v414 = vmul.f32 %v344, %v403
    %v415 = vmul.f32 %v359, %v405
    %v416 = vmul.f32 %v374, %v407
    %v417 = vmul.f32 %v389, %v409
    %422 = vrot.lane.b32.xlu0 %v414, 32
    %v423 = vpop.permute.xlu0 %422
    %424 = vrot.lane.b32.xlu0 %v415, 32
    %v425 = vpop.permute.xlu0 %424
    %426 = vrot.lane.b32.xlu0 %v416, 32
    %v427 = vpop.permute.xlu0 %426
    %428 = vrot.lane.b32.xlu0 %v417, 32
    %v429 = vpop.permute.xlu0 %428
    %v434 = vadd.f32 %v394, %v423
    %v435 = vadd.f32 %v395, %v425
    %v436 = vadd.f32 %v396, %v427
    %v437 = vadd.f32 %v397, %v429
    %v438 = vtanh.pop %v434
    %v439 = vtanh.pop %v435
    %v440 = vtanh.pop %v436
    %v441 = vtanh.pop %v437
    %446 = vrot.lane.b32.xlu0 %v438, 64
    %v447 = vpop.permute.xlu0 %446
    %448 = vrot.lane.b32.xlu0 %v439, 64
    %v449 = vpop.permute.xlu0 %448
    %450 = vrot.lane.b32.xlu0 %v440, 64
    %v451 = vpop.permute.xlu0 %450
    %452 = vrot.lane.b32.xlu0 %v441, 64
    %v453 = vpop.permute.xlu0 %452
    %v458 = vmul.f32 %v344, %v447
    %v459 = vmul.f32 %v359, %v449
    %v460 = vmul.f32 %v374, %v451
    %v461 = vmul.f32 %v389, %v453
    %466 = vrot.lane.b32.xlu0 %v458, 32
    %v467 = vpop.permute.xlu0 %466
    %468 = vrot.lane.b32.xlu0 %v459, 32
    %v469 = vpop.permute.xlu0 %468
    %470 = vrot.lane.b32.xlu0 %v460, 32
    %v471 = vpop.permute.xlu0 %470
    %472 = vrot.lane.b32.xlu0 %v461, 32
    %v473 = vpop.permute.xlu0 %472
    %vm478 = vcmask 253952
    %479 = vst.msk [vmem:[#allocation2] sm:$0x1] %vm478, %v467
    %480 = vst.msk [vmem:[#allocation2 + $0x8] sm:$0x1] %vm478, %v469
    %481 = vst.msk [vmem:[#allocation2 + $0x10] sm:$0x1] %vm478, %v471
    %482 = vst.msk [vmem:[#allocation2 + $0x18] sm:$0x1] %vm478, %v473
    %v483 = vrot.slane %v459, 7
    %vm484 = vcmask 1041409
    %v485 = vsel %vm484, %v483, %v458
    %v486 = vrot.slane %v460, 6
    %vm487 = vcmask 1042434
    %v488 = vsel %vm487, %v486, %v485
    %v489 = vrot.slane %v461, 5
    %vm490 = vcmask 1043459
    %v491 = vsel %vm490, %v489, %v488
    %492 = vrot.lane.b32.xlu0 %v491, 32
    %v493 = vpop.permute.xlu0 %492
    %v494 = vsel %vm204, %v493, 0
    %496 = vmatpush.msra.mxu0 0.0
    %497 = vmatpush.msra.mxu0 0.0
    %498 = vmatpush.msra.mxu0 0.0
    %499 = vmatpush.msra.mxu0 0.0
    %500 = vmatpush.msra.mxu0 0.0
    %501 = vmatpush.msra.mxu0 0.0
    %502 = vmatpush.msra.mxu0 0.0
    %503 = vmatpush.msra.mxu0 0.0
    %504 = vmatpush.msra.mxu0 0.0
    %505 = vmatpush.msra.mxu0 0.0
    %506 = vmatpush.msra.mxu0 0.0
    %507 = vmatpush.msra.mxu0 0.0
    %508 = vmatpush.msra.mxu0 %v278
    %509 = vmatpush.msra.mxu0 %v277
    %510 = vmatpush.msra.mxu0 %v276
    %511 = vmatpush.msra.mxu0 %v275
    %512 = vmatmul.f32.gmra.mxu0 %v494
    %v513 = vpop.f32.mrf.mxu0
    %v514 = vadd.f32 0.0, %v513
    %515 = vdwg.mxu0
    %v517 = vrot.slane %v514, 7
    %v518 = vrot.slane %v514, 1
    %v519 = vrot.slane %v514, 2
    %v524 = vadd.f32 %v235, %v517
    %v525 = vadd.f32 %v238, %v514
    %v526 = vadd.f32 %v241, %v518
    %v527 = vadd.f32 %v244, %v519
    %v528 = vxor.u32 %v524, 2147483648
    %v529 = vxor.u32 %v525, 2147483648
    %v530 = vxor.u32 %v526, 2147483648
    %v531 = vxor.u32 %v527, 2147483648
    %v532 = vmul.f32 %v528, 1.442695
    %v533 = vpow.pop %v532
    %v534 = vmul.f32 %v529, 1.442695
    %v535 = vpow.pop %v534
    %v536 = vmul.f32 %v530, 1.442695
    %v537 = vpow.pop %v536
    %v538 = vmul.f32 %v531, 1.442695
    %v539 = vpow.pop %v538
    %v540 = vadd.f32 %v533, 1.0
    %v541 = vadd.f32 %v535, 1.0
    %v542 = vadd.f32 %v537, 1.0
    %v543 = vadd.f32 %v539, 1.0
    %v544 = vrcp.pop %v540
    %v545 = vmul.f32 %v540, %v544
    %v546 = vsub.f32 1.0, %v545
    %v547 = vmul.f32 %v544, %v546
    %v548 = vadd.f32 %v544, %v547
    %vm549 = vweird.f32 %v540
    %vm550 = vweird.f32 %v544
    %vm551 = vmor %vm549, %vm550
    %v552 = vsel %vm551, %v544, %v548
    %v553 = vand.u32 2147483647, %v540
    %vm554 = vcmp.eq.f32.partialorder %v553, 8.507059e+37
    %v555 = vand.u32 %v540, 2147483648
    %v556 = vor.u32 1.1754944e-38, %v555
    %v557 = vsel %vm554, %v556, %v552
    %v558 = vmul.f32 1.0, %v557
    %v559 = vrcp.pop %v541
    %v560 = vmul.f32 %v541, %v559
    %v561 = vsub.f32 1.0, %v560
    %v562 = vmul.f32 %v559, %v561
    %v563 = vadd.f32 %v559, %v562
    %vm564 = vweird.f32 %v541
    %vm565 = vweird.f32 %v559
    %vm566 = vmor %vm564, %vm565
    %v567 = vsel %vm566, %v559, %v563
    %v568 = vand.u32 2147483647, %v541
    %vm569 = vcmp.eq.f32.partialorder %v568, 8.507059e+37
    %v570 = vand.u32 %v541, 2147483648
    %v571 = vor.u32 1.1754944e-38, %v570
    %v572 = vsel %vm569, %v571, %v567
    %v573 = vmul.f32 1.0, %v572
    %v574 = vrcp.pop %v542
    %v575 = vmul.f32 %v542, %v574
    %v576 = vsub.f32 1.0, %v575
    %v577 = vmul.f32 %v574, %v576
    %v578 = vadd.f32 %v574, %v577
    %vm579 = vweird.f32 %v542
    %vm580 = vweird.f32 %v574
    %vm581 = vmor %vm579, %vm580
    %v582 = vsel %vm581, %v574, %v578
    %v583 = vand.u32 2147483647, %v542
    %vm584 = vcmp.eq.f32.partialorder %v583, 8.507059e+37
    %v585 = vand.u32 %v542, 2147483648
    %v586 = vor.u32 1.1754944e-38, %v585
    %v587 = vsel %vm584, %v586, %v582
    %v588 = vmul.f32 1.0, %v587
    %v589 = vrcp.pop %v543
    %v590 = vmul.f32 %v543, %v589
    %v591 = vsub.f32 1.0, %v590
    %v592 = vmul.f32 %v589, %v591
    %v593 = vadd.f32 %v589, %v592
    %vm594 = vweird.f32 %v543
    %vm595 = vweird.f32 %v589
    %vm596 = vmor %vm594, %vm595
    %v597 = vsel %vm596, %v589, %v593
    %v598 = vand.u32 2147483647, %v543
    %vm599 = vcmp.eq.f32.partialorder %v598, 8.507059e+37
    %v600 = vand.u32 %v543, 2147483648
    %v601 = vor.u32 1.1754944e-38, %v600
    %v602 = vsel %vm599, %v601, %v597
    %v603 = vmul.f32 1.0, %v602
    %v604 = vtanh.pop %v524
    %v605 = vtanh.pop %v525
    %v606 = vtanh.pop %v526
    %v607 = vtanh.pop %v527
    %v612 = vrot.slane %v434, 7
    %v613 = vrot.slane %v435, 7
    %v614 = vrot.slane %v436, 7
    %v615 = vrot.slane %v437, 7
    %v620 = vmul.f32 %v558, %v612
    %v621 = vmul.f32 %v573, %v613
    %v622 = vmul.f32 %v588, %v614
    %v623 = vmul.f32 %v603, %v615
    %628 = vrot.lane.b32.xlu0 %v604, 64
    %v629 = vpop.permute.xlu0 %628
    %630 = vrot.lane.b32.xlu0 %v605, 64
    %v631 = vpop.permute.xlu0 %630
    %632 = vrot.lane.b32.xlu0 %v606, 64
    %v633 = vpop.permute.xlu0 %632
    %634 = vrot.lane.b32.xlu0 %v607, 64
    %v635 = vpop.permute.xlu0 %634
    %v640 = vmul.f32 %v558, %v629
    %v641 = vmul.f32 %v573, %v631
    %v642 = vmul.f32 %v588, %v633
    %v643 = vmul.f32 %v603, %v635
    %648 = vrot.lane.b32.xlu0 %v640, 32
    %v649 = vpop.permute.xlu0 %648
    %650 = vrot.lane.b32.xlu0 %v641, 32
    %v651 = vpop.permute.xlu0 %650
    %652 = vrot.lane.b32.xlu0 %v642, 32
    %v653 = vpop.permute.xlu0 %652
    %654 = vrot.lane.b32.xlu0 %v643, 32
    %v655 = vpop.permute.xlu0 %654
    %v660 = vadd.f32 %v620, %v649
    %v661 = vadd.f32 %v621, %v651
    %v662 = vadd.f32 %v622, %v653
    %v663 = vadd.f32 %v623, %v655
    %v664 = vtanh.pop %v660
    %v665 = vtanh.pop %v661
    %v666 = vtanh.pop %v662
    %v667 = vtanh.pop %v663
    %672 = vrot.lane.b32.xlu0 %v664, 64
    %v673 = vpop.permute.xlu0 %672
    %674 = vrot.lane.b32.xlu0 %v665, 64
    %v675 = vpop.permute.xlu0 %674
    %676 = vrot.lane.b32.xlu0 %v666, 64
    %v677 = vpop.permute.xlu0 %676
    %678 = vrot.lane.b32.xlu0 %v667, 64
    %v679 = vpop.permute.xlu0 %678
    %v684 = vmul.f32 %v558, %v673
    %v685 = vmul.f32 %v573, %v675
    %v686 = vmul.f32 %v588, %v677
    %v687 = vmul.f32 %v603, %v679
    %692 = vrot.lane.b32.xlu0 %v684, 32
    %v693 = vpop.permute.xlu0 %692
    %694 = vrot.lane.b32.xlu0 %v685, 32
    %v695 = vpop.permute.xlu0 %694
    %696 = vrot.lane.b32.xlu0 %v686, 32
    %v697 = vpop.permute.xlu0 %696
    %698 = vrot.lane.b32.xlu0 %v687, 32
    %v699 = vpop.permute.xlu0 %698
    %vm704 = vcmask 254977
    %705 = vst.msk [vmem:[#allocation2] sm:$0x2] %vm704, %v693
    %706 = vst.msk [vmem:[#allocation2 + $0x8] sm:$0x2] %vm704, %v695
    %707 = vst.msk [vmem:[#allocation2 + $0x10] sm:$0x2] %vm704, %v697
    %708 = vst.msk [vmem:[#allocation2 + $0x18] sm:$0x2] %vm704, %v699
    %v709 = vrot.slane %v684, 1
    %v710 = vsel %vm484, %v685, %v709
    %v711 = vrot.slane %v686, 7
    %v712 = vsel %vm487, %v711, %v710
    %v713 = vrot.slane %v687, 6
    %v714 = vsel %vm490, %v713, %v712
    %715 = vrot.lane.b32.xlu0 %v714, 32
    %v716 = vpop.permute.xlu0 %715
    %v717 = vsel %vm204, %v716, 0
    %719 = vmatpush.msra.mxu0 0.0
    %720 = vmatpush.msra.mxu0 0.0
    %721 = vmatpush.msra.mxu0 0.0
    %722 = vmatpush.msra.mxu0 0.0
    %723 = vmatpush.msra.mxu0 0.0
    %724 = vmatpush.msra.mxu0 0.0
    %725 = vmatpush.msra.mxu0 0.0
    %726 = vmatpush.msra.mxu0 0.0
    %727 = vmatpush.msra.mxu0 0.0
    %728 = vmatpush.msra.mxu0 0.0
    %729 = vmatpush.msra.mxu0 0.0
    %730 = vmatpush.msra.mxu0 0.0
    %731 = vmatpush.msra.mxu0 %v278
    %732 = vmatpush.msra.mxu0 %v277
    %733 = vmatpush.msra.mxu0 %v276
    %734 = vmatpush.msra.mxu0 %v275
    %735 = vmatmul.f32.gmra.mxu0 %v717
    %v736 = vpop.f32.mrf.mxu0
    %v737 = vadd.f32 0.0, %v736
    %738 = vdwg.mxu0
    %v740 = vrot.slane %v737, 6
    %v741 = vrot.slane %v737, 7
    %v742 = vrot.slane %v737, 1
    %v747 = vadd.f32 %v235, %v740
    %v748 = vadd.f32 %v238, %v741
    %v749 = vadd.f32 %v241, %v737
    %v750 = vadd.f32 %v244, %v742
    %v751 = vxor.u32 %v747, 2147483648
    %v752 = vxor.u32 %v748, 2147483648
    %v753 = vxor.u32 %v749, 2147483648
    %v754 = vxor.u32 %v750, 2147483648
    %v755 = vmul.f32 %v751, 1.442695
    %v756 = vpow.pop %v755
    %v757 = vmul.f32 %v752, 1.442695
    %v758 = vpow.pop %v757
    %v759 = vmul.f32 %v753, 1.442695
    %v760 = vpow.pop %v759
    %v761 = vmul.f32 %v754, 1.442695
    %v762 = vpow.pop %v761
    %v763 = vadd.f32 %v756, 1.0
    %v764 = vadd.f32 %v758, 1.0
    %v765 = vadd.f32 %v760, 1.0
    %v766 = vadd.f32 %v762, 1.0
    %v767 = vrcp.pop %v763
    %v768 = vmul.f32 %v763, %v767
    %v769 = vsub.f32 1.0, %v768
    %v770 = vmul.f32 %v767, %v769
    %v771 = vadd.f32 %v767, %v770
    %vm772 = vweird.f32 %v763
    %vm773 = vweird.f32 %v767
    %vm774 = vmor %vm772, %vm773
    %v775 = vsel %vm774, %v767, %v771
    %v776 = vand.u32 2147483647, %v763
    %vm777 = vcmp.eq.f32.partialorder %v776, 8.507059e+37
    %v778 = vand.u32 %v763, 2147483648
    %v779 = vor.u32 1.1754944e-38, %v778
    %v780 = vsel %vm777, %v779, %v775
    %v781 = vmul.f32 1.0, %v780
    %v782 = vrcp.pop %v764
    %v783 = vmul.f32 %v764, %v782
    %v784 = vsub.f32 1.0, %v783
    %v785 = vmul.f32 %v782, %v784
    %v786 = vadd.f32 %v782, %v785
    %vm787 = vweird.f32 %v764
    %vm788 = vweird.f32 %v782
    %vm789 = vmor %vm787, %vm788
    %v790 = vsel %vm789, %v782, %v786
    %v791 = vand.u32 2147483647, %v764
    %vm792 = vcmp.eq.f32.partialorder %v791, 8.507059e+37
    %v793 = vand.u32 %v764, 2147483648
    %v794 = vor.u32 1.1754944e-38, %v793
    %v795 = vsel %vm792, %v794, %v790
    %v796 = vmul.f32 1.0, %v795
    %v797 = vrcp.pop %v765
    %v798 = vmul.f32 %v765, %v797
    %v799 = vsub.f32 1.0, %v798
    %v800 = vmul.f32 %v797, %v799
    %v801 = vadd.f32 %v797, %v800
    %vm802 = vweird.f32 %v765
    %vm803 = vweird.f32 %v797
    %vm804 = vmor %vm802, %vm803
    %v805 = vsel %vm804, %v797, %v801
    %v806 = vand.u32 2147483647, %v765
    %vm807 = vcmp.eq.f32.partialorder %v806, 8.507059e+37
    %v808 = vand.u32 %v765, 2147483648
    %v809 = vor.u32 1.1754944e-38, %v808
    %v810 = vsel %vm807, %v809, %v805
    %v811 = vmul.f32 1.0, %v810
    %v812 = vrcp.pop %v766
    %v813 = vmul.f32 %v766, %v812
    %v814 = vsub.f32 1.0, %v813
    %v815 = vmul.f32 %v812, %v814
    %v816 = vadd.f32 %v812, %v815
    %vm817 = vweird.f32 %v766
    %vm818 = vweird.f32 %v812
    %vm819 = vmor %vm817, %vm818
    %v820 = vsel %vm819, %v812, %v816
    %v821 = vand.u32 2147483647, %v766
    %vm822 = vcmp.eq.f32.partialorder %v821, 8.507059e+37
    %v823 = vand.u32 %v766, 2147483648
    %v824 = vor.u32 1.1754944e-38, %v823
    %v825 = vsel %vm822, %v824, %v820
    %v826 = vmul.f32 1.0, %v825
    %v827 = vtanh.pop %v747
    %v828 = vtanh.pop %v748
    %v829 = vtanh.pop %v749
    %v830 = vtanh.pop %v750
    %v835 = vrot.slane %v660, 7
    %v836 = vrot.slane %v661, 7
    %v837 = vrot.slane %v662, 7
    %v838 = vrot.slane %v663, 7
    %v843 = vmul.f32 %v781, %v835
    %v844 = vmul.f32 %v796, %v836
    %v845 = vmul.f32 %v811, %v837
    %v846 = vmul.f32 %v826, %v838
    %851 = vrot.lane.b32.xlu0 %v827, 64
    %v852 = vpop.permute.xlu0 %851
    %853 = vrot.lane.b32.xlu0 %v828, 64
    %v854 = vpop.permute.xlu0 %853
    %855 = vrot.lane.b32.xlu0 %v829, 64
    %v856 = vpop.permute.xlu0 %855
    %857 = vrot.lane.b32.xlu0 %v830, 64
    %v858 = vpop.permute.xlu0 %857
    %v863 = vmul.f32 %v781, %v852
    %v864 = vmul.f32 %v796, %v854
    %v865 = vmul.f32 %v811, %v856
    %v866 = vmul.f32 %v826, %v858
    %871 = vrot.lane.b32.xlu0 %v863, 32
    %v872 = vpop.permute.xlu0 %871
    %873 = vrot.lane.b32.xlu0 %v864, 32
    %v874 = vpop.permute.xlu0 %873
    %875 = vrot.lane.b32.xlu0 %v865, 32
    %v876 = vpop.permute.xlu0 %875
    %877 = vrot.lane.b32.xlu0 %v866, 32
    %v878 = vpop.permute.xlu0 %877
    %v883 = vadd.f32 %v843, %v872
    %v884 = vadd.f32 %v844, %v874
    %v885 = vadd.f32 %v845, %v876
    %v886 = vadd.f32 %v846, %v878
    %v887 = vtanh.pop %v883
    %v888 = vtanh.pop %v884
    %v889 = vtanh.pop %v885
    %v890 = vtanh.pop %v886
    %895 = vrot.lane.b32.xlu0 %v887, 64
    %v896 = vpop.permute.xlu0 %895
    %897 = vrot.lane.b32.xlu0 %v888, 64
    %v898 = vpop.permute.xlu0 %897
    %899 = vrot.lane.b32.xlu0 %v889, 64
    %v900 = vpop.permute.xlu0 %899
    %901 = vrot.lane.b32.xlu0 %v890, 64
    %v902 = vpop.permute.xlu0 %901
    %v907 = vmul.f32 %v781, %v896
    %v908 = vmul.f32 %v796, %v898
    %v909 = vmul.f32 %v811, %v900
    %v910 = vmul.f32 %v826, %v902
    %915 = vrot.lane.b32.xlu0 %v907, 32
    %v916 = vpop.permute.xlu0 %915
    %917 = vrot.lane.b32.xlu0 %v908, 32
    %v918 = vpop.permute.xlu0 %917
    %919 = vrot.lane.b32.xlu0 %v909, 32
    %v920 = vpop.permute.xlu0 %919
    %921 = vrot.lane.b32.xlu0 %v910, 32
    %v922 = vpop.permute.xlu0 %921
    %vm927 = vcmask 256002
    %928 = vst.msk [vmem:[#allocation2] sm:$0x4] %vm927, %v916
    %929 = vst.msk [vmem:[#allocation2 + $0x8] sm:$0x4] %vm927, %v918
    %930 = vst.msk [vmem:[#allocation2 + $0x10] sm:$0x4] %vm927, %v920
    %931 = vst.msk [vmem:[#allocation2 + $0x18] sm:$0x4] %vm927, %v922
    %v932 = vrot.slane %v907, 2
    %v933 = vrot.slane %v908, 1
    %v934 = vsel %vm484, %v933, %v932
    %v935 = vsel %vm487, %v909, %v934
    %v936 = vrot.slane %v910, 7
    %v937 = vsel %vm490, %v936, %v935
    %938 = vrot.lane.b32.xlu0 %v937, 32
    %v939 = vpop.permute.xlu0 %938
    %v940 = vsel %vm204, %v939, 0
    %942 = vmatpush.msra.mxu0 0.0
    %943 = vmatpush.msra.mxu0 0.0
    %944 = vmatpush.msra.mxu0 0.0
    %945 = vmatpush.msra.mxu0 0.0
    %946 = vmatpush.msra.mxu0 0.0
    %947 = vmatpush.msra.mxu0 0.0
    %948 = vmatpush.msra.mxu0 0.0
    %949 = vmatpush.msra.mxu0 0.0
    %950 = vmatpush.msra.mxu0 0.0
    %951 = vmatpush.msra.mxu0 0.0
    %952 = vmatpush.msra.mxu0 0.0
    %953 = vmatpush.msra.mxu0 0.0
    %954 = vmatpush.msra.mxu0 %v278
    %955 = vmatpush.msra.mxu0 %v277
    %956 = vmatpush.msra.mxu0 %v276
    %957 = vmatpush.msra.mxu0 %v275
    %958 = vmatmul.f32.gmra.mxu0 %v940
    %v959 = vpop.f32.mrf.mxu0
    %v960 = vadd.f32 0.0, %v959
    %961 = vdwg.mxu0
    %v963 = vrot.slane %v960, 5
    %v964 = vrot.slane %v960, 6
    %v965 = vrot.slane %v960, 7
    %v970 = vadd.f32 %v235, %v963
    %v971 = vadd.f32 %v238, %v964
    %v972 = vadd.f32 %v241, %v965
    %v973 = vadd.f32 %v244, %v960
    %v974 = vxor.u32 %v970, 2147483648
    %v975 = vxor.u32 %v971, 2147483648
    %v976 = vxor.u32 %v972, 2147483648
    %v977 = vxor.u32 %v973, 2147483648
    %v978 = vmul.f32 %v974, 1.442695
    %v979 = vpow.pop %v978
    %v980 = vmul.f32 %v975, 1.442695
    %v981 = vpow.pop %v980
    %v982 = vmul.f32 %v976, 1.442695
    %v983 = vpow.pop %v982
    %v984 = vmul.f32 %v977, 1.442695
    %v985 = vpow.pop %v984
    %v986 = vadd.f32 %v979, 1.0
    %v987 = vadd.f32 %v981, 1.0
    %v988 = vadd.f32 %v983, 1.0
    %v989 = vadd.f32 %v985, 1.0
    %v990 = vrcp.pop %v986
    %v991 = vmul.f32 %v986, %v990
    %v992 = vsub.f32 1.0, %v991
    %v993 = vmul.f32 %v990, %v992
    %v994 = vadd.f32 %v990, %v993
    %vm995 = vweird.f32 %v986
    %vm996 = vweird.f32 %v990
    %vm997 = vmor %vm995, %vm996
    %v998 = vsel %vm997, %v990, %v994
    %v999 = vand.u32 2147483647, %v986
    %vm1000 = vcmp.eq.f32.partialorder %v999, 8.507059e+37
    %v1001 = vand.u32 %v986, 2147483648
    %v1002 = vor.u32 1.1754944e-38, %v1001
    %v1003 = vsel %vm1000, %v1002, %v998
    %v1004 = vmul.f32 1.0, %v1003
    %v1005 = vrcp.pop %v987
    %v1006 = vmul.f32 %v987, %v1005
    %v1007 = vsub.f32 1.0, %v1006
    %v1008 = vmul.f32 %v1005, %v1007
    %v1009 = vadd.f32 %v1005, %v1008
    %vm1010 = vweird.f32 %v987
    %vm1011 = vweird.f32 %v1005
    %vm1012 = vmor %vm1010, %vm1011
    %v1013 = vsel %vm1012, %v1005, %v1009
    %v1014 = vand.u32 2147483647, %v987
    %vm1015 = vcmp.eq.f32.partialorder %v1014, 8.507059e+37
    %v1016 = vand.u32 %v987, 2147483648
    %v1017 = vor.u32 1.1754944e-38, %v1016
    %v1018 = vsel %vm1015, %v1017, %v1013
    %v1019 = vmul.f32 1.0, %v1018
    %v1020 = vrcp.pop %v988
    %v1021 = vmul.f32 %v988, %v1020
    %v1022 = vsub.f32 1.0, %v1021
    %v1023 = vmul.f32 %v1020, %v1022
    %v1024 = vadd.f32 %v1020, %v1023
    %vm1025 = vweird.f32 %v988
    %vm1026 = vweird.f32 %v1020
    %vm1027 = vmor %vm1025, %vm1026
    %v1028 = vsel %vm1027, %v1020, %v1024
    %v1029 = vand.u32 2147483647, %v988
    %vm1030 = vcmp.eq.f32.partialorder %v1029, 8.507059e+37
    %v1031 = vand.u32 %v988, 2147483648
    %v1032 = vor.u32 1.1754944e-38, %v1031
    %v1033 = vsel %vm1030, %v1032, %v1028
    %v1034 = vmul.f32 1.0, %v1033
    %v1035 = vrcp.pop %v989
    %v1036 = vmul.f32 %v989, %v1035
    %v1037 = vsub.f32 1.0, %v1036
    %v1038 = vmul.f32 %v1035, %v1037
    %v1039 = vadd.f32 %v1035, %v1038
    %vm1040 = vweird.f32 %v989
    %vm1041 = vweird.f32 %v1035
    %vm1042 = vmor %vm1040, %vm1041
    %v1043 = vsel %vm1042, %v1035, %v1039
    %v1044 = vand.u32 2147483647, %v989
    %vm1045 = vcmp.eq.f32.partialorder %v1044, 8.507059e+37
    %v1046 = vand.u32 %v989, 2147483648
    %v1047 = vor.u32 1.1754944e-38, %v1046
    %v1048 = vsel %vm1045, %v1047, %v1043
    %v1049 = vmul.f32 1.0, %v1048
    %v1050 = vtanh.pop %v970
    %v1051 = vtanh.pop %v971
    %v1052 = vtanh.pop %v972
    %v1053 = vtanh.pop %v973
    %v1058 = vrot.slane %v883, 7
    %v1059 = vrot.slane %v884, 7
    %v1060 = vrot.slane %v885, 7
    %v1061 = vrot.slane %v886, 7
    %v1066 = vmul.f32 %v1004, %v1058
    %v1067 = vmul.f32 %v1019, %v1059
    %v1068 = vmul.f32 %v1034, %v1060
    %v1069 = vmul.f32 %v1049, %v1061
    %1074 = vrot.lane.b32.xlu0 %v1050, 64
    %v1075 = vpop.permute.xlu0 %1074
    %1076 = vrot.lane.b32.xlu0 %v1051, 64
    %v1077 = vpop.permute.xlu0 %1076
    %1078 = vrot.lane.b32.xlu0 %v1052, 64
    %v1079 = vpop.permute.xlu0 %1078
    %1080 = vrot.lane.b32.xlu0 %v1053, 64
    %v1081 = vpop.permute.xlu0 %1080
    %v1086 = vmul.f32 %v1004, %v1075
    %v1087 = vmul.f32 %v1019, %v1077
    %v1088 = vmul.f32 %v1034, %v1079
    %v1089 = vmul.f32 %v1049, %v1081
    %1094 = vrot.lane.b32.xlu0 %v1086, 32
    %v1095 = vpop.permute.xlu0 %1094
    %1096 = vrot.lane.b32.xlu0 %v1087, 32
    %v1097 = vpop.permute.xlu0 %1096
    %1098 = vrot.lane.b32.xlu0 %v1088, 32
    %v1099 = vpop.permute.xlu0 %1098
    %1100 = vrot.lane.b32.xlu0 %v1089, 32
    %v1101 = vpop.permute.xlu0 %1100
    %v1106 = vadd.f32 %v1066, %v1095
    %v1107 = vadd.f32 %v1067, %v1097
    %v1108 = vadd.f32 %v1068, %v1099
    %v1109 = vadd.f32 %v1069, %v1101
    %v1110 = vtanh.pop %v1106
    %v1111 = vtanh.pop %v1107
    %v1112 = vtanh.pop %v1108
    %v1113 = vtanh.pop %v1109
    %1118 = vrot.lane.b32.xlu0 %v1110, 64
    %v1119 = vpop.permute.xlu0 %1118
    %1120 = vrot.lane.b32.xlu0 %v1111, 64
    %v1121 = vpop.permute.xlu0 %1120
    %1122 = vrot.lane.b32.xlu0 %v1112, 64
    %v1123 = vpop.permute.xlu0 %1122
    %1124 = vrot.lane.b32.xlu0 %v1113, 64
    %v1125 = vpop.permute.xlu0 %1124
    %v1130 = vmul.f32 %v1004, %v1119
    %v1131 = vmul.f32 %v1019, %v1121
    %v1132 = vmul.f32 %v1034, %v1123
    %v1133 = vmul.f32 %v1049, %v1125
    %1138 = vrot.lane.b32.xlu0 %v1130, 32
    %v1139 = vpop.permute.xlu0 %1138
    %1140 = vrot.lane.b32.xlu0 %v1131, 32
    %v1141 = vpop.permute.xlu0 %1140
    %1142 = vrot.lane.b32.xlu0 %v1132, 32
    %v1143 = vpop.permute.xlu0 %1142
    %1144 = vrot.lane.b32.xlu0 %v1133, 32
    %v1145 = vpop.permute.xlu0 %1144
    %vm1150 = vcmask 257027
    %1151 = vst.msk [vmem:[#allocation2] sm:$0x8] %vm1150, %v1139
    %1152 = vst.msk [vmem:[#allocation2 + $0x8] sm:$0x8] %vm1150, %v1141
    %1153 = vst.msk [vmem:[#allocation2 + $0x10] sm:$0x8] %vm1150, %v1143
    %1154 = vst.msk [vmem:[#allocation2 + $0x18] sm:$0x8] %vm1150, %v1145
    %v1155 = vrot.slane %v1130, 3
    %v1156 = vrot.slane %v1131, 2
    %v1157 = vsel %vm484, %v1156, %v1155
    %v1158 = vrot.slane %v1132, 1
    %v1159 = vsel %vm487, %v1158, %v1157
    %v1160 = vsel %vm490, %v1133, %v1159
    %1161 = vrot.lane.b32.xlu0 %v1160, 32
    %v1162 = vpop.permute.xlu0 %1161
    %v1163 = vsel %vm204, %v1162, 0
    %1165 = vmatpush.msra.mxu0 0.0
    %1166 = vmatpush.msra.mxu0 0.0
    %1167 = vmatpush.msra.mxu0 0.0
    %1168 = vmatpush.msra.mxu0 0.0
    %1169 = vmatpush.msra.mxu0 0.0
    %1170 = vmatpush.msra.mxu0 0.0
    %1171 = vmatpush.msra.mxu0 0.0
    %1172 = vmatpush.msra.mxu0 0.0
    %1173 = vmatpush.msra.mxu0 0.0
    %1174 = vmatpush.msra.mxu0 0.0
    %1175 = vmatpush.msra.mxu0 0.0
    %1176 = vmatpush.msra.mxu0 0.0
    %1177 = vmatpush.msra.mxu0 %v278
    %1178 = vmatpush.msra.mxu0 %v277
    %1179 = vmatpush.msra.mxu0 %v276
    %1180 = vmatpush.msra.mxu0 %v275
    %1181 = vmatmul.f32.gmra.mxu0 %v1163
    %v1182 = vpop.f32.mrf.mxu0
    %v1183 = vadd.f32 0.0, %v1182
    %1184 = vdwg.mxu0
    %v1186 = vrot.slane %v1183, 4
    %v1187 = vrot.slane %v1183, 5
    %v1188 = vrot.slane %v1183, 6
    %v1189 = vrot.slane %v1183, 7
    %v1194 = vadd.f32 %v235, %v1186
    %v1195 = vadd.f32 %v238, %v1187
    %v1196 = vadd.f32 %v241, %v1188
    %v1197 = vadd.f32 %v244, %v1189
    %v1198 = vxor.u32 %v1194, 2147483648
    %v1199 = vxor.u32 %v1195, 2147483648
    %v1200 = vxor.u32 %v1196, 2147483648
    %v1201 = vxor.u32 %v1197, 2147483648
    %v1202 = vmul.f32 %v1198, 1.442695
    %v1203 = vpow.pop %v1202
    %v1204 = vmul.f32 %v1199, 1.442695
    %v1205 = vpow.pop %v1204
    %v1206 = vmul.f32 %v1200, 1.442695
    %v1207 = vpow.pop %v1206
    %v1208 = vmul.f32 %v1201, 1.442695
    %v1209 = vpow.pop %v1208
    %v1210 = vadd.f32 %v1203, 1.0
    %v1211 = vadd.f32 %v1205, 1.0
    %v1212 = vadd.f32 %v1207, 1.0
    %v1213 = vadd.f32 %v1209, 1.0
    %v1214 = vrcp.pop %v1210
    %v1215 = vmul.f32 %v1210, %v1214
    %v1216 = vsub.f32 1.0, %v1215
    %v1217 = vmul.f32 %v1214, %v1216
    %v1218 = vadd.f32 %v1214, %v1217
    %vm1219 = vweird.f32 %v1210
    %vm1220 = vweird.f32 %v1214
    %vm1221 = vmor %vm1219, %vm1220
    %v1222 = vsel %vm1221, %v1214, %v1218
    %v1223 = vand.u32 2147483647, %v1210
    %vm1224 = vcmp.eq.f32.partialorder %v1223, 8.507059e+37
    %v1225 = vand.u32 %v1210, 2147483648
    %v1226 = vor.u32 1.1754944e-38, %v1225
    %v1227 = vsel %vm1224, %v1226, %v1222
    %v1228 = vmul.f32 1.0, %v1227
    %v1229 = vrcp.pop %v1211
    %v1230 = vmul.f32 %v1211, %v1229
    %v1231 = vsub.f32 1.0, %v1230
    %v1232 = vmul.f32 %v1229, %v1231
    %v1233 = vadd.f32 %v1229, %v1232
    %vm1234 = vweird.f32 %v1211
    %vm1235 = vweird.f32 %v1229
    %vm1236 = vmor %vm1234, %vm1235
    %v1237 = vsel %vm1236, %v1229, %v1233
    %v1238 = vand.u32 2147483647, %v1211
    %vm1239 = vcmp.eq.f32.partialorder %v1238, 8.507059e+37
    %v1240 = vand.u32 %v1211, 2147483648
    %v1241 = vor.u32 1.1754944e-38, %v1240
    %v1242 = vsel %vm1239, %v1241, %v1237
    %v1243 = vmul.f32 1.0, %v1242
    %v1244 = vrcp.pop %v1212
    %v1245 = vmul.f32 %v1212, %v1244
    %v1246 = vsub.f32 1.0, %v1245
    %v1247 = vmul.f32 %v1244, %v1246
    %v1248 = vadd.f32 %v1244, %v1247
    %vm1249 = vweird.f32 %v1212
    %vm1250 = vweird.f32 %v1244
    %vm1251 = vmor %vm1249, %vm1250
    %v1252 = vsel %vm1251, %v1244, %v1248
    %v1253 = vand.u32 2147483647, %v1212
    %vm1254 = vcmp.eq.f32.partialorder %v1253, 8.507059e+37
    %v1255 = vand.u32 %v1212, 2147483648
    %v1256 = vor.u32 1.1754944e-38, %v1255
    %v1257 = vsel %vm1254, %v1256, %v1252
    %v1258 = vmul.f32 1.0, %v1257
    %v1259 = vrcp.pop %v1213
    %v1260 = vmul.f32 %v1213, %v1259
    %v1261 = vsub.f32 1.0, %v1260
    %v1262 = vmul.f32 %v1259, %v1261
    %v1263 = vadd.f32 %v1259, %v1262
    %vm1264 = vweird.f32 %v1213
    %vm1265 = vweird.f32 %v1259
    %vm1266 = vmor %vm1264, %vm1265
    %v1267 = vsel %vm1266, %v1259, %v1263
    %v1268 = vand.u32 2147483647, %v1213
    %vm1269 = vcmp.eq.f32.partialorder %v1268, 8.507059e+37
    %v1270 = vand.u32 %v1213, 2147483648
    %v1271 = vor.u32 1.1754944e-38, %v1270
    %v1272 = vsel %vm1269, %v1271, %v1267
    %v1273 = vmul.f32 1.0, %v1272
    %v1274 = vtanh.pop %v1194
    %v1275 = vtanh.pop %v1195
    %v1276 = vtanh.pop %v1196
    %v1277 = vtanh.pop %v1197
    %v1282 = vrot.slane %v1106, 7
    %v1283 = vrot.slane %v1107, 7
    %v1284 = vrot.slane %v1108, 7
    %v1285 = vrot.slane %v1109, 7
    %v1290 = vmul.f32 %v1228, %v1282
    %v1291 = vmul.f32 %v1243, %v1283
    %v1292 = vmul.f32 %v1258, %v1284
    %v1293 = vmul.f32 %v1273, %v1285
    %1298 = vrot.lane.b32.xlu0 %v1274, 64
    %v1299 = vpop.permute.xlu0 %1298
    %1300 = vrot.lane.b32.xlu0 %v1275, 64
    %v1301 = vpop.permute.xlu0 %1300
    %1302 = vrot.lane.b32.xlu0 %v1276, 64
    %v1303 = vpop.permute.xlu0 %1302
    %1304 = vrot.lane.b32.xlu0 %v1277, 64
    %v1305 = vpop.permute.xlu0 %1304
    %v1310 = vmul.f32 %v1228, %v1299
    %v1311 = vmul.f32 %v1243, %v1301
    %v1312 = vmul.f32 %v1258, %v1303
    %v1313 = vmul.f32 %v1273, %v1305
    %1318 = vrot.lane.b32.xlu0 %v1310, 32
    %v1319 = vpop.permute.xlu0 %1318
    %1320 = vrot.lane.b32.xlu0 %v1311, 32
    %v1321 = vpop.permute.xlu0 %1320
    %1322 = vrot.lane.b32.xlu0 %v1312, 32
    %v1323 = vpop.permute.xlu0 %1322
    %1324 = vrot.lane.b32.xlu0 %v1313, 32
    %v1325 = vpop.permute.xlu0 %1324
    %v1330 = vadd.f32 %v1290, %v1319
    %v1331 = vadd.f32 %v1291, %v1321
    %v1332 = vadd.f32 %v1292, %v1323
    %v1333 = vadd.f32 %v1293, %v1325
    %v1334 = vtanh.pop %v1330
    %v1335 = vtanh.pop %v1331
    %v1336 = vtanh.pop %v1332
    %v1337 = vtanh.pop %v1333
    %1342 = vrot.lane.b32.xlu0 %v1334, 64
    %v1343 = vpop.permute.xlu0 %1342
    %1344 = vrot.lane.b32.xlu0 %v1335, 64
    %v1345 = vpop.permute.xlu0 %1344
    %1346 = vrot.lane.b32.xlu0 %v1336, 64
    %v1347 = vpop.permute.xlu0 %1346
    %1348 = vrot.lane.b32.xlu0 %v1337, 64
    %v1349 = vpop.permute.xlu0 %1348
    %v1354 = vmul.f32 %v1228, %v1343
    %v1355 = vmul.f32 %v1243, %v1345
    %v1356 = vmul.f32 %v1258, %v1347
    %v1357 = vmul.f32 %v1273, %v1349
    %1362 = vrot.lane.b32.xlu0 %v1354, 32
    %v1363 = vpop.permute.xlu0 %1362
    %1364 = vrot.lane.b32.xlu0 %v1355, 32
    %v1365 = vpop.permute.xlu0 %1364
    %1366 = vrot.lane.b32.xlu0 %v1356, 32
    %v1367 = vpop.permute.xlu0 %1366
    %1368 = vrot.lane.b32.xlu0 %v1357, 32
    %v1369 = vpop.permute.xlu0 %1368
    %vm1374 = vcmask 258052
    %1375 = vst.msk [vmem:[#allocation2] sm:$0x10] %vm1374, %v1363
    %1376 = vst.msk [vmem:[#allocation2 + $0x8] sm:$0x10] %vm1374, %v1365
    %1377 = vst.msk [vmem:[#allocation2 + $0x10] sm:$0x10] %vm1374, %v1367
    %1378 = vst.msk [vmem:[#allocation2 + $0x18] sm:$0x10] %vm1374, %v1369
    %v1379 = vrot.slane %v1354, 4
    %v1380 = vrot.slane %v1355, 3
    %v1381 = vsel %vm484, %v1380, %v1379
    %v1382 = vrot.slane %v1356, 2
    %v1383 = vsel %vm487, %v1382, %v1381
    %v1384 = vrot.slane %v1357, 1
    %v1385 = vsel %vm490, %v1384, %v1383
    %1386 = vrot.lane.b32.xlu0 %v1385, 32
    %v1387 = vpop.permute.xlu0 %1386
    %v1388 = vsel %vm204, %v1387, 0
    %1390 = vmatpush.msra.mxu0 0.0
    %1391 = vmatpush.msra.mxu0 0.0
    %1392 = vmatpush.msra.mxu0 0.0
    %1393 = vmatpush.msra.mxu0 0.0
    %1394 = vmatpush.msra.mxu0 0.0
    %1395 = vmatpush.msra.mxu0 0.0
    %1396 = vmatpush.msra.mxu0 0.0
    %1397 = vmatpush.msra.mxu0 0.0
    %1398 = vmatpush.msra.mxu0 0.0
    %1399 = vmatpush.msra.mxu0 0.0
    %1400 = vmatpush.msra.mxu0 0.0
    %1401 = vmatpush.msra.mxu0 0.0
    %1402 = vmatpush.msra.mxu0 %v278
    %1403 = vmatpush.msra.mxu0 %v277
    %1404 = vmatpush.msra.mxu0 %v276
    %1405 = vmatpush.msra.mxu0 %v275
    %1406 = vmatmul.f32.gmra.mxu0 %v1388
    %v1407 = vpop.f32.mrf.mxu0
    %v1408 = vadd.f32 0.0, %v1407
    %1409 = vdwg.mxu0
    %v1411 = vrot.slane %v1408, 3
    %v1412 = vrot.slane %v1408, 4
    %v1413 = vrot.slane %v1408, 5
    %v1414 = vrot.slane %v1408, 6
    %v1419 = vadd.f32 %v235, %v1411
    %v1420 = vadd.f32 %v238, %v1412
    %v1421 = vadd.f32 %v241, %v1413
    %v1422 = vadd.f32 %v244, %v1414
    %v1423 = vxor.u32 %v1419, 2147483648
    %v1424 = vxor.u32 %v1420, 2147483648
    %v1425 = vxor.u32 %v1421, 2147483648
    %v1426 = vxor.u32 %v1422, 2147483648
    %v1427 = vmul.f32 %v1423, 1.442695
    %v1428 = vpow.pop %v1427
    %v1429 = vmul.f32 %v1424, 1.442695
    %v1430 = vpow.pop %v1429
    %v1431 = vmul.f32 %v1425, 1.442695
    %v1432 = vpow.pop %v1431
    %v1433 = vmul.f32 %v1426, 1.442695
    %v1434 = vpow.pop %v1433
    %v1435 = vadd.f32 %v1428, 1.0
    %v1436 = vadd.f32 %v1430, 1.0
    %v1437 = vadd.f32 %v1432, 1.0
    %v1438 = vadd.f32 %v1434, 1.0
    %v1439 = vrcp.pop %v1435
    %v1440 = vmul.f32 %v1435, %v1439
    %v1441 = vsub.f32 1.0, %v1440
    %v1442 = vmul.f32 %v1439, %v1441
    %v1443 = vadd.f32 %v1439, %v1442
    %vm1444 = vweird.f32 %v1435
    %vm1445 = vweird.f32 %v1439
    %vm1446 = vmor %vm1444, %vm1445
    %v1447 = vsel %vm1446, %v1439, %v1443
    %v1448 = vand.u32 2147483647, %v1435
    %vm1449 = vcmp.eq.f32.partialorder %v1448, 8.507059e+37
    %v1450 = vand.u32 %v1435, 2147483648
    %v1451 = vor.u32 1.1754944e-38, %v1450
    %v1452 = vsel %vm1449, %v1451, %v1447
    %v1453 = vmul.f32 1.0, %v1452
    %v1454 = vrcp.pop %v1436
    %v1455 = vmul.f32 %v1436, %v1454
    %v1456 = vsub.f32 1.0, %v1455
    %v1457 = vmul.f32 %v1454, %v1456
    %v1458 = vadd.f32 %v1454, %v1457
    %vm1459 = vweird.f32 %v1436
    %vm1460 = vweird.f32 %v1454
    %vm1461 = vmor %vm1459, %vm1460
    %v1462 = vsel %vm1461, %v1454, %v1458
    %v1463 = vand.u32 2147483647, %v1436
    %vm1464 = vcmp.eq.f32.partialorder %v1463, 8.507059e+37
    %v1465 = vand.u32 %v1436, 2147483648
    %v1466 = vor.u32 1.1754944e-38, %v1465
    %v1467 = vsel %vm1464, %v1466, %v1462
    %v1468 = vmul.f32 1.0, %v1467
    %v1469 = vrcp.pop %v1437
    %v1470 = vmul.f32 %v1437, %v1469
    %v1471 = vsub.f32 1.0, %v1470
    %v1472 = vmul.f32 %v1469, %v1471
    %v1473 = vadd.f32 %v1469, %v1472
    %vm1474 = vweird.f32 %v1437
    %vm1475 = vweird.f32 %v1469
    %vm1476 = vmor %vm1474, %vm1475
    %v1477 = vsel %vm1476, %v1469, %v1473
    %v1478 = vand.u32 2147483647, %v1437
    %vm1479 = vcmp.eq.f32.partialorder %v1478, 8.507059e+37
    %v1480 = vand.u32 %v1437, 2147483648
    %v1481 = vor.u32 1.1754944e-38, %v1480
    %v1482 = vsel %vm1479, %v1481, %v1477
    %v1483 = vmul.f32 1.0, %v1482
    %v1484 = vrcp.pop %v1438
    %v1485 = vmul.f32 %v1438, %v1484
    %v1486 = vsub.f32 1.0, %v1485
    %v1487 = vmul.f32 %v1484, %v1486
    %v1488 = vadd.f32 %v1484, %v1487
    %vm1489 = vweird.f32 %v1438
    %vm1490 = vweird.f32 %v1484
    %vm1491 = vmor %vm1489, %vm1490
    %v1492 = vsel %vm1491, %v1484, %v1488
    %v1493 = vand.u32 2147483647, %v1438
    %vm1494 = vcmp.eq.f32.partialorder %v1493, 8.507059e+37
    %v1495 = vand.u32 %v1438, 2147483648
    %v1496 = vor.u32 1.1754944e-38, %v1495
    %v1497 = vsel %vm1494, %v1496, %v1492
    %v1498 = vmul.f32 1.0, %v1497
    %v1499 = vtanh.pop %v1419
    %v1500 = vtanh.pop %v1420
    %v1501 = vtanh.pop %v1421
    %v1502 = vtanh.pop %v1422
    %v1507 = vrot.slane %v1330, 7
    %v1508 = vrot.slane %v1331, 7
    %v1509 = vrot.slane %v1332, 7
    %v1510 = vrot.slane %v1333, 7
    %v1515 = vmul.f32 %v1453, %v1507
    %v1516 = vmul.f32 %v1468, %v1508
    %v1517 = vmul.f32 %v1483, %v1509
    %v1518 = vmul.f32 %v1498, %v1510
    %1523 = vrot.lane.b32.xlu0 %v1499, 64
    %v1524 = vpop.permute.xlu0 %1523
    %1525 = vrot.lane.b32.xlu0 %v1500, 64
    %v1526 = vpop.permute.xlu0 %1525
    %1527 = vrot.lane.b32.xlu0 %v1501, 64
    %v1528 = vpop.permute.xlu0 %1527
    %1529 = vrot.lane.b32.xlu0 %v1502, 64
    %v1530 = vpop.permute.xlu0 %1529
    %v1535 = vmul.f32 %v1453, %v1524
    %v1536 = vmul.f32 %v1468, %v1526
    %v1537 = vmul.f32 %v1483, %v1528
    %v1538 = vmul.f32 %v1498, %v1530
    %1543 = vrot.lane.b32.xlu0 %v1535, 32
    %v1544 = vpop.permute.xlu0 %1543
    %1545 = vrot.lane.b32.xlu0 %v1536, 32
    %v1546 = vpop.permute.xlu0 %1545
    %1547 = vrot.lane.b32.xlu0 %v1537, 32
    %v1548 = vpop.permute.xlu0 %1547
    %1549 = vrot.lane.b32.xlu0 %v1538, 32
    %v1550 = vpop.permute.xlu0 %1549
    %v1555 = vadd.f32 %v1515, %v1544
    %v1556 = vadd.f32 %v1516, %v1546
    %v1557 = vadd.f32 %v1517, %v1548
    %v1558 = vadd.f32 %v1518, %v1550
    %v1559 = vtanh.pop %v1555
    %v1560 = vtanh.pop %v1556
    %v1561 = vtanh.pop %v1557
    %v1562 = vtanh.pop %v1558
    %1567 = vrot.lane.b32.xlu0 %v1559, 64
    %v1568 = vpop.permute.xlu0 %1567
    %1569 = vrot.lane.b32.xlu0 %v1560, 64
    %v1570 = vpop.permute.xlu0 %1569
    %1571 = vrot.lane.b32.xlu0 %v1561, 64
    %v1572 = vpop.permute.xlu0 %1571
    %1573 = vrot.lane.b32.xlu0 %v1562, 64
    %v1574 = vpop.permute.xlu0 %1573
    %v1579 = vmul.f32 %v1453, %v1568
    %v1580 = vmul.f32 %v1468, %v1570
    %v1581 = vmul.f32 %v1483, %v1572
    %v1582 = vmul.f32 %v1498, %v1574
    %1587 = vrot.lane.b32.xlu0 %v1579, 32
    %v1588 = vpop.permute.xlu0 %1587
    %1589 = vrot.lane.b32.xlu0 %v1580, 32
    %v1590 = vpop.permute.xlu0 %1589
    %1591 = vrot.lane.b32.xlu0 %v1581, 32
    %v1592 = vpop.permute.xlu0 %1591
    %1593 = vrot.lane.b32.xlu0 %v1582, 32
    %v1594 = vpop.permute.xlu0 %1593
    %vm1599 = vcmask 259077
    %1600 = vst.msk [vmem:[#allocation2] sm:$0x20] %vm1599, %v1588
    %1601 = vst.msk [vmem:[#allocation2 + $0x8] sm:$0x20] %vm1599, %v1590
    %1602 = vst.msk [vmem:[#allocation2 + $0x10] sm:$0x20] %vm1599, %v1592
    %1603 = vst.msk [vmem:[#allocation2 + $0x18] sm:$0x20] %vm1599, %v1594
    %v1604 = vrot.slane %v1579, 5
    %v1605 = vrot.slane %v1580, 4
    %v1606 = vsel %vm484, %v1605, %v1604
    %v1607 = vrot.slane %v1581, 3
    %v1608 = vsel %vm487, %v1607, %v1606
    %v1609 = vrot.slane %v1582, 2
    %v1610 = vsel %vm490, %v1609, %v1608
    %1611 = vrot.lane.b32.xlu0 %v1610, 32
    %v1612 = vpop.permute.xlu0 %1611
    %v1613 = vsel %vm204, %v1612, 0
    %1615 = vmatpush.msra.mxu0 0.0
    %1616 = vmatpush.msra.mxu0 0.0
    %1617 = vmatpush.msra.mxu0 0.0
    %1618 = vmatpush.msra.mxu0 0.0
    %1619 = vmatpush.msra.mxu0 0.0
    %1620 = vmatpush.msra.mxu0 0.0
    %1621 = vmatpush.msra.mxu0 0.0
    %1622 = vmatpush.msra.mxu0 0.0
    %1623 = vmatpush.msra.mxu0 0.0
    %1624 = vmatpush.msra.mxu0 0.0
    %1625 = vmatpush.msra.mxu0 0.0
    %1626 = vmatpush.msra.mxu0 0.0
    %1627 = vmatpush.msra.mxu0 %v278
    %1628 = vmatpush.msra.mxu0 %v277
    %1629 = vmatpush.msra.mxu0 %v276
    %1630 = vmatpush.msra.mxu0 %v275
    %1631 = vmatmul.f32.gmra.mxu0 %v1613
    %v1632 = vpop.f32.mrf.mxu0
    %v1633 = vadd.f32 0.0, %v1632
    %1634 = vdwg.mxu0
    %v1636 = vrot.slane %v1633, 2
    %v1637 = vrot.slane %v1633, 3
    %v1638 = vrot.slane %v1633, 4
    %v1639 = vrot.slane %v1633, 5
    %v1644 = vadd.f32 %v235, %v1636
    %v1645 = vadd.f32 %v238, %v1637
    %v1646 = vadd.f32 %v241, %v1638
    %v1647 = vadd.f32 %v244, %v1639
    %v1648 = vxor.u32 %v1644, 2147483648
    %v1649 = vxor.u32 %v1645, 2147483648
    %v1650 = vxor.u32 %v1646, 2147483648
    %v1651 = vxor.u32 %v1647, 2147483648
    %v1652 = vmul.f32 %v1648, 1.442695
    %v1653 = vpow.pop %v1652
    %v1654 = vmul.f32 %v1649, 1.442695
    %v1655 = vpow.pop %v1654
    %v1656 = vmul.f32 %v1650, 1.442695
    %v1657 = vpow.pop %v1656
    %v1658 = vmul.f32 %v1651, 1.442695
    %v1659 = vpow.pop %v1658
    %v1660 = vadd.f32 %v1653, 1.0
    %v1661 = vadd.f32 %v1655, 1.0
    %v1662 = vadd.f32 %v1657, 1.0
    %v1663 = vadd.f32 %v1659, 1.0
    %v1664 = vrcp.pop %v1660
    %v1665 = vmul.f32 %v1660, %v1664
    %v1666 = vsub.f32 1.0, %v1665
    %v1667 = vmul.f32 %v1664, %v1666
    %v1668 = vadd.f32 %v1664, %v1667
    %vm1669 = vweird.f32 %v1660
    %vm1670 = vweird.f32 %v1664
    %vm1671 = vmor %vm1669, %vm1670
    %v1672 = vsel %vm1671, %v1664, %v1668
    %v1673 = vand.u32 2147483647, %v1660
    %vm1674 = vcmp.eq.f32.partialorder %v1673, 8.507059e+37
    %v1675 = vand.u32 %v1660, 2147483648
    %v1676 = vor.u32 1.1754944e-38, %v1675
    %v1677 = vsel %vm1674, %v1676, %v1672
    %v1678 = vmul.f32 1.0, %v1677
    %v1679 = vrcp.pop %v1661
    %v1680 = vmul.f32 %v1661, %v1679
    %v1681 = vsub.f32 1.0, %v1680
    %v1682 = vmul.f32 %v1679, %v1681
    %v1683 = vadd.f32 %v1679, %v1682
    %vm1684 = vweird.f32 %v1661
    %vm1685 = vweird.f32 %v1679
    %vm1686 = vmor %vm1684, %vm1685
    %v1687 = vsel %vm1686, %v1679, %v1683
    %v1688 = vand.u32 2147483647, %v1661
    %vm1689 = vcmp.eq.f32.partialorder %v1688, 8.507059e+37
    %v1690 = vand.u32 %v1661, 2147483648
    %v1691 = vor.u32 1.1754944e-38, %v1690
    %v1692 = vsel %vm1689, %v1691, %v1687
    %v1693 = vmul.f32 1.0, %v1692
    %v1694 = vrcp.pop %v1662
    %v1695 = vmul.f32 %v1662, %v1694
    %v1696 = vsub.f32 1.0, %v1695
    %v1697 = vmul.f32 %v1694, %v1696
    %v1698 = vadd.f32 %v1694, %v1697
    %vm1699 = vweird.f32 %v1662
    %vm1700 = vweird.f32 %v1694
    %vm1701 = vmor %vm1699, %vm1700
    %v1702 = vsel %vm1701, %v1694, %v1698
    %v1703 = vand.u32 2147483647, %v1662
    %vm1704 = vcmp.eq.f32.partialorder %v1703, 8.507059e+37
    %v1705 = vand.u32 %v1662, 2147483648
    %v1706 = vor.u32 1.1754944e-38, %v1705
    %v1707 = vsel %vm1704, %v1706, %v1702
    %v1708 = vmul.f32 1.0, %v1707
    %v1709 = vrcp.pop %v1663
    %v1710 = vmul.f32 %v1663, %v1709
    %v1711 = vsub.f32 1.0, %v1710
    %v1712 = vmul.f32 %v1709, %v1711
    %v1713 = vadd.f32 %v1709, %v1712
    %vm1714 = vweird.f32 %v1663
    %vm1715 = vweird.f32 %v1709
    %vm1716 = vmor %vm1714, %vm1715
    %v1717 = vsel %vm1716, %v1709, %v1713
    %v1718 = vand.u32 2147483647, %v1663
    %vm1719 = vcmp.eq.f32.partialorder %v1718, 8.507059e+37
    %v1720 = vand.u32 %v1663, 2147483648
    %v1721 = vor.u32 1.1754944e-38, %v1720
    %v1722 = vsel %vm1719, %v1721, %v1717
    %v1723 = vmul.f32 1.0, %v1722
    %v1724 = vtanh.pop %v1644
    %v1725 = vtanh.pop %v1645
    %v1726 = vtanh.pop %v1646
    %v1727 = vtanh.pop %v1647
    %v1732 = vrot.slane %v1555, 7
    %v1733 = vrot.slane %v1556, 7
    %v1734 = vrot.slane %v1557, 7
    %v1735 = vrot.slane %v1558, 7
    %v1740 = vmul.f32 %v1678, %v1732
    %v1741 = vmul.f32 %v1693, %v1733
    %v1742 = vmul.f32 %v1708, %v1734
    %v1743 = vmul.f32 %v1723, %v1735
    %1748 = vrot.lane.b32.xlu0 %v1724, 64
    %v1749 = vpop.permute.xlu0 %1748
    %1750 = vrot.lane.b32.xlu0 %v1725, 64
    %v1751 = vpop.permute.xlu0 %1750
    %1752 = vrot.lane.b32.xlu0 %v1726, 64
    %v1753 = vpop.permute.xlu0 %1752
    %1754 = vrot.lane.b32.xlu0 %v1727, 64
    %v1755 = vpop.permute.xlu0 %1754
    %v1760 = vmul.f32 %v1678, %v1749
    %v1761 = vmul.f32 %v1693, %v1751
    %v1762 = vmul.f32 %v1708, %v1753
    %v1763 = vmul.f32 %v1723, %v1755
    %1768 = vrot.lane.b32.xlu0 %v1760, 32
    %v1769 = vpop.permute.xlu0 %1768
    %1770 = vrot.lane.b32.xlu0 %v1761, 32
    %v1771 = vpop.permute.xlu0 %1770
    %1772 = vrot.lane.b32.xlu0 %v1762, 32
    %v1773 = vpop.permute.xlu0 %1772
    %1774 = vrot.lane.b32.xlu0 %v1763, 32
    %v1775 = vpop.permute.xlu0 %1774
    %v1780 = vadd.f32 %v1740, %v1769
    %v1781 = vadd.f32 %v1741, %v1771
    %v1782 = vadd.f32 %v1742, %v1773
    %v1783 = vadd.f32 %v1743, %v1775
    %v1784 = vtanh.pop %v1780
    %v1785 = vtanh.pop %v1781
    %v1786 = vtanh.pop %v1782
    %v1787 = vtanh.pop %v1783
    %1792 = vrot.lane.b32.xlu0 %v1784, 64
    %v1793 = vpop.permute.xlu0 %1792
    %1794 = vrot.lane.b32.xlu0 %v1785, 64
    %v1795 = vpop.permute.xlu0 %1794
    %1796 = vrot.lane.b32.xlu0 %v1786, 64
    %v1797 = vpop.permute.xlu0 %1796
    %1798 = vrot.lane.b32.xlu0 %v1787, 64
    %v1799 = vpop.permute.xlu0 %1798
    %v1804 = vmul.f32 %v1678, %v1793
    %v1805 = vmul.f32 %v1693, %v1795
    %v1806 = vmul.f32 %v1708, %v1797
    %v1807 = vmul.f32 %v1723, %v1799
    %1812 = vrot.lane.b32.xlu0 %v1804, 32
    %v1813 = vpop.permute.xlu0 %1812
    %1814 = vrot.lane.b32.xlu0 %v1805, 32
    %v1815 = vpop.permute.xlu0 %1814
    %1816 = vrot.lane.b32.xlu0 %v1806, 32
    %v1817 = vpop.permute.xlu0 %1816
    %1818 = vrot.lane.b32.xlu0 %v1807, 32
    %v1819 = vpop.permute.xlu0 %1818
    %vm1824 = vcmask 260102
    %1825 = vst.msk [vmem:[#allocation2] sm:$0x40] %vm1824, %v1813
    %1826 = vst.msk [vmem:[#allocation2 + $0x8] sm:$0x40] %vm1824, %v1815
    %1827 = vst.msk [vmem:[#allocation2 + $0x10] sm:$0x40] %vm1824, %v1817
    %1828 = vst.msk [vmem:[#allocation2 + $0x18] sm:$0x40] %vm1824, %v1819
    %v1829 = vrot.slane %v1804, 6
    %v1830 = vrot.slane %v1805, 5
    %v1831 = vsel %vm484, %v1830, %v1829
    %v1832 = vrot.slane %v1806, 4
    %v1833 = vsel %vm487, %v1832, %v1831
    %v1834 = vrot.slane %v1807, 3
    %v1835 = vsel %vm490, %v1834, %v1833
    %1836 = vrot.lane.b32.xlu0 %v1835, 32
    %v1837 = vpop.permute.xlu0 %1836
    %v1838 = vsel %vm204, %v1837, 0
    %1840 = vmatpush.msra.mxu0 0.0
    %1841 = vmatpush.msra.mxu0 0.0
    %1842 = vmatpush.msra.mxu0 0.0
    %1843 = vmatpush.msra.mxu0 0.0
    %1844 = vmatpush.msra.mxu0 0.0
    %1845 = vmatpush.msra.mxu0 0.0
    %1846 = vmatpush.msra.mxu0 0.0
    %1847 = vmatpush.msra.mxu0 0.0
    %1848 = vmatpush.msra.mxu0 0.0
    %1849 = vmatpush.msra.mxu0 0.0
    %1850 = vmatpush.msra.mxu0 0.0
    %1851 = vmatpush.msra.mxu0 0.0
    %1852 = vmatpush.msra.mxu0 %v278
    %1853 = vmatpush.msra.mxu0 %v277
    %1854 = vmatpush.msra.mxu0 %v276
    %1855 = vmatpush.msra.mxu0 %v275
    %1856 = vmatmul.f32.gmra.mxu0 %v1838
    %v1857 = vpop.f32.mrf.mxu0
    %v1858 = vadd.f32 0.0, %v1857
    %1859 = vdwg.mxu0
    %v1861 = vrot.slane %v1858, 1
    %v1862 = vrot.slane %v1858, 2
    %v1863 = vrot.slane %v1858, 3
    %v1864 = vrot.slane %v1858, 4
    %v1869 = vadd.f32 %v235, %v1861
    %v1870 = vadd.f32 %v238, %v1862
    %v1871 = vadd.f32 %v241, %v1863
    %v1872 = vadd.f32 %v244, %v1864
    %v1873 = vxor.u32 %v1869, 2147483648
    %v1874 = vxor.u32 %v1870, 2147483648
    %v1875 = vxor.u32 %v1871, 2147483648
    %v1876 = vxor.u32 %v1872, 2147483648
    %v1877 = vmul.f32 %v1873, 1.442695
    %v1878 = vpow.pop %v1877
    %v1879 = vmul.f32 %v1874, 1.442695
    %v1880 = vpow.pop %v1879
    %v1881 = vmul.f32 %v1875, 1.442695
    %v1882 = vpow.pop %v1881
    %v1883 = vmul.f32 %v1876, 1.442695
    %v1884 = vpow.pop %v1883
    %v1885 = vadd.f32 %v1878, 1.0
    %v1886 = vadd.f32 %v1880, 1.0
    %v1887 = vadd.f32 %v1882, 1.0
    %v1888 = vadd.f32 %v1884, 1.0
    %v1889 = vrcp.pop %v1885
    %v1890 = vmul.f32 %v1885, %v1889
    %v1891 = vsub.f32 1.0, %v1890
    %v1892 = vmul.f32 %v1889, %v1891
    %v1893 = vadd.f32 %v1889, %v1892
    %vm1894 = vweird.f32 %v1885
    %vm1895 = vweird.f32 %v1889
    %vm1896 = vmor %vm1894, %vm1895
    %v1897 = vsel %vm1896, %v1889, %v1893
    %v1898 = vand.u32 2147483647, %v1885
    %vm1899 = vcmp.eq.f32.partialorder %v1898, 8.507059e+37
    %v1900 = vand.u32 %v1885, 2147483648
    %v1901 = vor.u32 1.1754944e-38, %v1900
    %v1902 = vsel %vm1899, %v1901, %v1897
    %v1903 = vmul.f32 1.0, %v1902
    %v1904 = vrcp.pop %v1886
    %v1905 = vmul.f32 %v1886, %v1904
    %v1906 = vsub.f32 1.0, %v1905
    %v1907 = vmul.f32 %v1904, %v1906
    %v1908 = vadd.f32 %v1904, %v1907
    %vm1909 = vweird.f32 %v1886
    %vm1910 = vweird.f32 %v1904
    %vm1911 = vmor %vm1909, %vm1910
    %v1912 = vsel %vm1911, %v1904, %v1908
    %v1913 = vand.u32 2147483647, %v1886
    %vm1914 = vcmp.eq.f32.partialorder %v1913, 8.507059e+37
    %v1915 = vand.u32 %v1886, 2147483648
    %v1916 = vor.u32 1.1754944e-38, %v1915
    %v1917 = vsel %vm1914, %v1916, %v1912
    %v1918 = vmul.f32 1.0, %v1917
    %v1919 = vrcp.pop %v1887
    %v1920 = vmul.f32 %v1887, %v1919
    %v1921 = vsub.f32 1.0, %v1920
    %v1922 = vmul.f32 %v1919, %v1921
    %v1923 = vadd.f32 %v1919, %v1922
    %vm1924 = vweird.f32 %v1887
    %vm1925 = vweird.f32 %v1919
    %vm1926 = vmor %vm1924, %vm1925
    %v1927 = vsel %vm1926, %v1919, %v1923
    %v1928 = vand.u32 2147483647, %v1887
    %vm1929 = vcmp.eq.f32.partialorder %v1928, 8.507059e+37
    %v1930 = vand.u32 %v1887, 2147483648
    %v1931 = vor.u32 1.1754944e-38, %v1930
    %v1932 = vsel %vm1929, %v1931, %v1927
    %v1933 = vmul.f32 1.0, %v1932
    %v1934 = vrcp.pop %v1888
    %v1935 = vmul.f32 %v1888, %v1934
    %v1936 = vsub.f32 1.0, %v1935
    %v1937 = vmul.f32 %v1934, %v1936
    %v1938 = vadd.f32 %v1934, %v1937
    %vm1939 = vweird.f32 %v1888
    %vm1940 = vweird.f32 %v1934
    %vm1941 = vmor %vm1939, %vm1940
    %v1942 = vsel %vm1941, %v1934, %v1938
    %v1943 = vand.u32 2147483647, %v1888
    %vm1944 = vcmp.eq.f32.partialorder %v1943, 8.507059e+37
    %v1945 = vand.u32 %v1888, 2147483648
    %v1946 = vor.u32 1.1754944e-38, %v1945
    %v1947 = vsel %vm1944, %v1946, %v1942
    %v1948 = vmul.f32 1.0, %v1947
    %v1949 = vtanh.pop %v1869
    %v1950 = vtanh.pop %v1870
    %v1951 = vtanh.pop %v1871
    %v1952 = vtanh.pop %v1872
    %v1957 = vrot.slane %v1780, 7
    %v1958 = vrot.slane %v1781, 7
    %v1959 = vrot.slane %v1782, 7
    %v1960 = vrot.slane %v1783, 7
    %v1965 = vmul.f32 %v1903, %v1957
    %v1966 = vmul.f32 %v1918, %v1958
    %v1967 = vmul.f32 %v1933, %v1959
    %v1968 = vmul.f32 %v1948, %v1960
    %1973 = vrot.lane.b32.xlu0 %v1949, 64
    %v1974 = vpop.permute.xlu0 %1973
    %1975 = vrot.lane.b32.xlu0 %v1950, 64
    %v1976 = vpop.permute.xlu0 %1975
    %1977 = vrot.lane.b32.xlu0 %v1951, 64
    %v1978 = vpop.permute.xlu0 %1977
    %1979 = vrot.lane.b32.xlu0 %v1952, 64
    %v1980 = vpop.permute.xlu0 %1979
    %v1985 = vmul.f32 %v1903, %v1974
    %v1986 = vmul.f32 %v1918, %v1976
    %v1987 = vmul.f32 %v1933, %v1978
    %v1988 = vmul.f32 %v1948, %v1980
    %1993 = vrot.lane.b32.xlu0 %v1985, 32
    %v1994 = vpop.permute.xlu0 %1993
    %1995 = vrot.lane.b32.xlu0 %v1986, 32
    %v1996 = vpop.permute.xlu0 %1995
    %1997 = vrot.lane.b32.xlu0 %v1987, 32
    %v1998 = vpop.permute.xlu0 %1997
    %1999 = vrot.lane.b32.xlu0 %v1988, 32
    %v2000 = vpop.permute.xlu0 %1999
    %v2005 = vadd.f32 %v1965, %v1994
    %v2006 = vadd.f32 %v1966, %v1996
    %v2007 = vadd.f32 %v1967, %v1998
    %v2008 = vadd.f32 %v1968, %v2000
    %v2009 = vtanh.pop %v2005
    %v2010 = vtanh.pop %v2006
    %v2011 = vtanh.pop %v2007
    %v2012 = vtanh.pop %v2008
    %2017 = vrot.lane.b32.xlu0 %v2009, 64
    %v2018 = vpop.permute.xlu0 %2017
    %2019 = vrot.lane.b32.xlu0 %v2010, 64
    %v2020 = vpop.permute.xlu0 %2019
    %2021 = vrot.lane.b32.xlu0 %v2011, 64
    %v2022 = vpop.permute.xlu0 %2021
    %2023 = vrot.lane.b32.xlu0 %v2012, 64
    %v2024 = vpop.permute.xlu0 %2023
    %v2029 = vmul.f32 %v1903, %v2018
    %v2030 = vmul.f32 %v1918, %v2020
    %v2031 = vmul.f32 %v1933, %v2022
    %v2032 = vmul.f32 %v1948, %v2024
    %2037 = vrot.lane.b32.xlu0 %v2029, 32
    %v2038 = vpop.permute.xlu0 %2037
    %2039 = vrot.lane.b32.xlu0 %v2030, 32
    %v2040 = vpop.permute.xlu0 %2039
    %2041 = vrot.lane.b32.xlu0 %v2031, 32
    %v2042 = vpop.permute.xlu0 %2041
    %2043 = vrot.lane.b32.xlu0 %v2032, 32
    %v2044 = vpop.permute.xlu0 %2043
    %vm2049 = vcmask 261127
    %2050 = vst.msk [vmem:[#allocation2] sm:$0x80] %vm2049, %v2038
    %2051 = vst.msk [vmem:[#allocation2 + $0x8] sm:$0x80] %vm2049, %v2040
    %2052 = vst.msk [vmem:[#allocation2 + $0x10] sm:$0x80] %vm2049, %v2042
    %2053 = vst.msk [vmem:[#allocation2 + $0x18] sm:$0x80] %vm2049, %v2044
    %v2054 = vld [vmem:[#allocation10] sm:$0xff]
    %v2055 = vld [vmem:[#allocation10 + $0x8] sm:$0xff]
    %v2056 = vld [vmem:[#allocation10 + $0x10] sm:$0xff]
    %v2057 = vld [vmem:[#allocation10 + $0x18] sm:$0xff]
    %2058 = vmatpush.msra.mxu0 0.0
    %2059 = vmatpush.msra.mxu0 0.0
    %2060 = vmatpush.msra.mxu0 0.0
    %2061 = vmatpush.msra.mxu0 0.0
    %2062 = vmatpush.msra.mxu0 0.0
    %2063 = vmatpush.msra.mxu0 0.0
    %2064 = vmatpush.msra.mxu0 0.0
    %2065 = vmatpush.msra.mxu0 0.0
    %2066 = vmatpush.msra.mxu0 0.0
    %2067 = vmatpush.msra.mxu0 0.0
    %2068 = vmatpush.msra.mxu0 0.0
    %2069 = vmatpush.msra.mxu0 0.0
    %2070 = vmatpush.msra.mxu0 %v2057
    %2071 = vmatpush.msra.mxu0 %v2056
    %2072 = vmatpush.msra.mxu0 %v2055
    %2073 = vmatpush.msra.mxu0 %v2054
    %2074 = vmatmul.f32.gmra.mxu0 %v280
    %v2075 = vpop.f32.mrf.mxu0
    %v2076 = vadd.f32 0.0, %v2075
    %2077 = vdwg.mxu0
    %v2079 = vrot.slane %v2076, 1
    %v2080 = vrot.slane %v2076, 2
    %v2081 = vrot.slane %v2076, 3
    %v2082 = vrot.slane %v2076, 4
    %v2087 = vadd.f32 %v264, %v2079
    %v2088 = vadd.f32 %v267, %v2080
    %v2089 = vadd.f32 %v270, %v2081
    %v2090 = vadd.f32 %v273, %v2082
    %v2091 = vxor.u32 %v2087, 2147483648
    %v2092 = vxor.u32 %v2088, 2147483648
    %v2093 = vxor.u32 %v2089, 2147483648
    %v2094 = vxor.u32 %v2090, 2147483648
    %v2095 = vmul.f32 %v2091, 1.442695
    %v2096 = vpow.pop %v2095
    %v2097 = vmul.f32 %v2092, 1.442695
    %v2098 = vpow.pop %v2097
    %v2099 = vmul.f32 %v2093, 1.442695
    %v2100 = vpow.pop %v2099
    %v2101 = vmul.f32 %v2094, 1.442695
    %v2102 = vpow.pop %v2101
    %v2103 = vadd.f32 %v2096, 1.0
    %v2104 = vadd.f32 %v2098, 1.0
    %v2105 = vadd.f32 %v2100, 1.0
    %v2106 = vadd.f32 %v2102, 1.0
    %v2107 = vrcp.pop %v2103
    %v2108 = vmul.f32 %v2103, %v2107
    %v2109 = vsub.f32 1.0, %v2108
    %v2110 = vmul.f32 %v2107, %v2109
    %v2111 = vadd.f32 %v2107, %v2110
    %vm2112 = vweird.f32 %v2103
    %vm2113 = vweird.f32 %v2107
    %vm2114 = vmor %vm2112, %vm2113
    %v2115 = vsel %vm2114, %v2107, %v2111
    %v2116 = vand.u32 2147483647, %v2103
    %vm2117 = vcmp.eq.f32.partialorder %v2116, 8.507059e+37
    %v2118 = vand.u32 %v2103, 2147483648
    %v2119 = vor.u32 1.1754944e-38, %v2118
    %v2120 = vsel %vm2117, %v2119, %v2115
    %v2121 = vmul.f32 1.0, %v2120
    %v2122 = vrcp.pop %v2104
    %v2123 = vmul.f32 %v2104, %v2122
    %v2124 = vsub.f32 1.0, %v2123
    %v2125 = vmul.f32 %v2122, %v2124
    %v2126 = vadd.f32 %v2122, %v2125
    %vm2127 = vweird.f32 %v2104
    %vm2128 = vweird.f32 %v2122
    %vm2129 = vmor %vm2127, %vm2128
    %v2130 = vsel %vm2129, %v2122, %v2126
    %v2131 = vand.u32 2147483647, %v2104
    %vm2132 = vcmp.eq.f32.partialorder %v2131, 8.507059e+37
    %v2133 = vand.u32 %v2104, 2147483648
    %v2134 = vor.u32 1.1754944e-38, %v2133
    %v2135 = vsel %vm2132, %v2134, %v2130
    %v2136 = vmul.f32 1.0, %v2135
    %v2137 = vrcp.pop %v2105
    %v2138 = vmul.f32 %v2105, %v2137
    %v2139 = vsub.f32 1.0, %v2138
    %v2140 = vmul.f32 %v2137, %v2139
    %v2141 = vadd.f32 %v2137, %v2140
    %vm2142 = vweird.f32 %v2105
    %vm2143 = vweird.f32 %v2137
    %vm2144 = vmor %vm2142, %vm2143
    %v2145 = vsel %vm2144, %v2137, %v2141
    %v2146 = vand.u32 2147483647, %v2105
    %vm2147 = vcmp.eq.f32.partialorder %v2146, 8.507059e+37
    %v2148 = vand.u32 %v2105, 2147483648
    %v2149 = vor.u32 1.1754944e-38, %v2148
    %v2150 = vsel %vm2147, %v2149, %v2145
    %v2151 = vmul.f32 1.0, %v2150
    %v2152 = vrcp.pop %v2106
    %v2153 = vmul.f32 %v2106, %v2152
    %v2154 = vsub.f32 1.0, %v2153
    %v2155 = vmul.f32 %v2152, %v2154
    %v2156 = vadd.f32 %v2152, %v2155
    %vm2157 = vweird.f32 %v2106
    %vm2158 = vweird.f32 %v2152
    %vm2159 = vmor %vm2157, %vm2158
    %v2160 = vsel %vm2159, %v2152, %v2156
    %v2161 = vand.u32 2147483647, %v2106
    %vm2162 = vcmp.eq.f32.partialorder %v2161, 8.507059e+37
    %v2163 = vand.u32 %v2106, 2147483648
    %v2164 = vor.u32 1.1754944e-38, %v2163
    %v2165 = vsel %vm2162, %v2164, %v2160
    %v2166 = vmul.f32 1.0, %v2165
    %v2167 = vtanh.pop %v2087
    %v2168 = vtanh.pop %v2088
    %v2169 = vtanh.pop %v2089
    %v2170 = vtanh.pop %v2090
    %v2171 = vmul.f32 %v2121, 0.0
    %v2172 = vmul.f32 %v2136, 0.0
    %v2173 = vmul.f32 %v2151, 0.0
    %v2174 = vmul.f32 %v2166, 0.0
    %2179 = vrot.lane.b32.xlu0 %v2167, 64
    %v2180 = vpop.permute.xlu0 %2179
    %2181 = vrot.lane.b32.xlu0 %v2168, 64
    %v2182 = vpop.permute.xlu0 %2181
    %2183 = vrot.lane.b32.xlu0 %v2169, 64
    %v2184 = vpop.permute.xlu0 %2183
    %2185 = vrot.lane.b32.xlu0 %v2170, 64
    %v2186 = vpop.permute.xlu0 %2185
    %v2191 = vmul.f32 %v2121, %v2180
    %v2192 = vmul.f32 %v2136, %v2182
    %v2193 = vmul.f32 %v2151, %v2184
    %v2194 = vmul.f32 %v2166, %v2186
    %2199 = vrot.lane.b32.xlu0 %v2191, 32
    %v2200 = vpop.permute.xlu0 %2199
    %2201 = vrot.lane.b32.xlu0 %v2192, 32
    %v2202 = vpop.permute.xlu0 %2201
    %2203 = vrot.lane.b32.xlu0 %v2193, 32
    %v2204 = vpop.permute.xlu0 %2203
    %2205 = vrot.lane.b32.xlu0 %v2194, 32
    %v2206 = vpop.permute.xlu0 %2205
    %v2211 = vadd.f32 %v2171, %v2200
    %v2212 = vadd.f32 %v2172, %v2202
    %v2213 = vadd.f32 %v2173, %v2204
    %v2214 = vadd.f32 %v2174, %v2206
    %v2215 = vtanh.pop %v2211
    %v2216 = vtanh.pop %v2212
    %v2217 = vtanh.pop %v2213
    %v2218 = vtanh.pop %v2214
    %2223 = vrot.lane.b32.xlu0 %v2215, 64
    %v2224 = vpop.permute.xlu0 %2223
    %2225 = vrot.lane.b32.xlu0 %v2216, 64
    %v2226 = vpop.permute.xlu0 %2225
    %2227 = vrot.lane.b32.xlu0 %v2217, 64
    %v2228 = vpop.permute.xlu0 %2227
    %2229 = vrot.lane.b32.xlu0 %v2218, 64
    %v2230 = vpop.permute.xlu0 %2229
    %v2235 = vmul.f32 %v2121, %v2224
    %v2236 = vmul.f32 %v2136, %v2226
    %v2237 = vmul.f32 %v2151, %v2228
    %v2238 = vmul.f32 %v2166, %v2230
    %v2239 = vsel %vm157, 1, 0
    %2240 = vset.pattern.permute.xlu0 7
    %2241 = vperm.xlu0 %2240, %v2239
    %v2242 = vpop.permute.xlu0 %2241
    %vm2243 = vcmp.eq.s32.totalorder %v2242, 1
    %v2248 = vrot.slane %v2235, 7
    %v2249 = vrot.slane %v2236, 6
    %v2250 = vsel %vm484, %v2249, %v2248
    %v2251 = vrot.slane %v2237, 5
    %v2252 = vsel %vm487, %v2251, %v2250
    %v2253 = vrot.slane %v2238, 4
    %v2254 = vsel %vm490, %v2253, %v2252
    %2255 = vrot.lane.b32.xlu0 %v2254, 32
    %v2256 = vpop.permute.xlu0 %2255
    %v2258 = vsel %vm2243, %v2256, 0.0
    %v2263 = vrot.slane %v2211, 7
    %v2264 = vrot.slane %v2212, 6
    %v2265 = vsel %vm484, %v2264, %v2263
    %v2266 = vrot.slane %v2213, 5
    %v2267 = vsel %vm487, %v2266, %v2265
    %v2268 = vrot.slane %v2214, 4
    %v2269 = vsel %vm490, %v2268, %v2267
    %2270 = vrot.lane.b32.xlu0 %v2269, 96
    %v2271 = vpop.permute.xlu0 %2270
    %v2273 = vsel %vm2243, %v2271, 0.0
    %v2275 = vrot.slane %v2258, 1
    %v2276 = vrot.slane %v2258, 2
    %v2277 = vrot.slane %v2258, 3
    %v2278 = vperm.slane %v2258, 0
    %v2279 = vperm.slane %v2275, 0
    %v2280 = vperm.slane %v2276, 0
    %v2281 = vperm.slane %v2277, 0
    %2282 = vrot.lane.b32.xlu0 %v2278, 32
    %v2283 = vpop.permute.xlu0 %2282
    %2284 = vrot.lane.b32.xlu0 %v2279, 32
    %v2285 = vpop.permute.xlu0 %2284
    %2286 = vrot.lane.b32.xlu0 %v2280, 32
    %v2287 = vpop.permute.xlu0 %2286
    %2288 = vrot.lane.b32.xlu0 %v2281, 32
    %v2289 = vpop.permute.xlu0 %2288
    %vm2294 = vcmask 516352
    %2295 = vst.msk [vmem:[#allocation2 + $0x7] sm:$0x1] %vm2294, %v2283
    %2296 = vst.msk [vmem:[#allocation2 + $0xf] sm:$0x1] %vm2294, %v2285
    %2297 = vst.msk [vmem:[#allocation2 + $0x17] sm:$0x1] %vm2294, %v2287
    %2298 = vst.msk [vmem:[#allocation2 + $0x1f] sm:$0x1] %vm2294, %v2289
    %v2299 = vsel %vm204, %v2258, 0
    %2301 = vmatpush.msra.mxu0 0.0
    %2302 = vmatpush.msra.mxu0 0.0
    %2303 = vmatpush.msra.mxu0 0.0
    %2304 = vmatpush.msra.mxu0 0.0
    %2305 = vmatpush.msra.mxu0 0.0
    %2306 = vmatpush.msra.mxu0 0.0
    %2307 = vmatpush.msra.mxu0 0.0
    %2308 = vmatpush.msra.mxu0 0.0
    %2309 = vmatpush.msra.mxu0 0.0
    %2310 = vmatpush.msra.mxu0 0.0
    %2311 = vmatpush.msra.mxu0 0.0
    %2312 = vmatpush.msra.mxu0 0.0
    %2313 = vmatpush.msra.mxu0 %v2057
    %2314 = vmatpush.msra.mxu0 %v2056
    %2315 = vmatpush.msra.mxu0 %v2055
    %2316 = vmatpush.msra.mxu0 %v2054
    %2317 = vmatmul.f32.gmra.mxu0 %v2299
    %v2318 = vpop.f32.mrf.mxu0
    %v2319 = vadd.f32 0.0, %v2318
    %2320 = vdwg.mxu0
    %v2322 = vrot.slane %v2319, 2
    %v2323 = vrot.slane %v2319, 3
    %v2324 = vrot.slane %v2319, 4
    %v2325 = vrot.slane %v2319, 5
    %v2330 = vadd.f32 %v264, %v2322
    %v2331 = vadd.f32 %v267, %v2323
    %v2332 = vadd.f32 %v270, %v2324
    %v2333 = vadd.f32 %v273, %v2325
    %v2334 = vxor.u32 %v2330, 2147483648
    %v2335 = vxor.u32 %v2331, 2147483648
    %v2336 = vxor.u32 %v2332, 2147483648
    %v2337 = vxor.u32 %v2333, 2147483648
    %v2338 = vmul.f32 %v2334, 1.442695
    %v2339 = vpow.pop %v2338
    %v2340 = vmul.f32 %v2335, 1.442695
    %v2341 = vpow.pop %v2340
    %v2342 = vmul.f32 %v2336, 1.442695
    %v2343 = vpow.pop %v2342
    %v2344 = vmul.f32 %v2337, 1.442695
    %v2345 = vpow.pop %v2344
    %v2346 = vadd.f32 %v2339, 1.0
    %v2347 = vadd.f32 %v2341, 1.0
    %v2348 = vadd.f32 %v2343, 1.0
    %v2349 = vadd.f32 %v2345, 1.0
    %v2350 = vrcp.pop %v2346
    %v2351 = vmul.f32 %v2346, %v2350
    %v2352 = vsub.f32 1.0, %v2351
    %v2353 = vmul.f32 %v2350, %v2352
    %v2354 = vadd.f32 %v2350, %v2353
    %vm2355 = vweird.f32 %v2346
    %vm2356 = vweird.f32 %v2350
    %vm2357 = vmor %vm2355, %vm2356
    %v2358 = vsel %vm2357, %v2350, %v2354
    %v2359 = vand.u32 2147483647, %v2346
    %vm2360 = vcmp.eq.f32.partialorder %v2359, 8.507059e+37
    %v2361 = vand.u32 %v2346, 2147483648
    %v2362 = vor.u32 1.1754944e-38, %v2361
    %v2363 = vsel %vm2360, %v2362, %v2358
    %v2364 = vmul.f32 1.0, %v2363
    %v2365 = vrcp.pop %v2347
    %v2366 = vmul.f32 %v2347, %v2365
    %v2367 = vsub.f32 1.0, %v2366
    %v2368 = vmul.f32 %v2365, %v2367
    %v2369 = vadd.f32 %v2365, %v2368
    %vm2370 = vweird.f32 %v2347
    %vm2371 = vweird.f32 %v2365
    %vm2372 = vmor %vm2370, %vm2371
    %v2373 = vsel %vm2372, %v2365, %v2369
    %v2374 = vand.u32 2147483647, %v2347
    %vm2375 = vcmp.eq.f32.partialorder %v2374, 8.507059e+37
    %v2376 = vand.u32 %v2347, 2147483648
    %v2377 = vor.u32 1.1754944e-38, %v2376
    %v2378 = vsel %vm2375, %v2377, %v2373
    %v2379 = vmul.f32 1.0, %v2378
    %v2380 = vrcp.pop %v2348
    %v2381 = vmul.f32 %v2348, %v2380
    %v2382 = vsub.f32 1.0, %v2381
    %v2383 = vmul.f32 %v2380, %v2382
    %v2384 = vadd.f32 %v2380, %v2383
    %vm2385 = vweird.f32 %v2348
    %vm2386 = vweird.f32 %v2380
    %vm2387 = vmor %vm2385, %vm2386
    %v2388 = vsel %vm2387, %v2380, %v2384
    %v2389 = vand.u32 2147483647, %v2348
    %vm2390 = vcmp.eq.f32.partialorder %v2389, 8.507059e+37
    %v2391 = vand.u32 %v2348, 2147483648
    %v2392 = vor.u32 1.1754944e-38, %v2391
    %v2393 = vsel %vm2390, %v2392, %v2388
    %v2394 = vmul.f32 1.0, %v2393
    %v2395 = vrcp.pop %v2349
    %v2396 = vmul.f32 %v2349, %v2395
    %v2397 = vsub.f32 1.0, %v2396
    %v2398 = vmul.f32 %v2395, %v2397
    %v2399 = vadd.f32 %v2395, %v2398
    %vm2400 = vweird.f32 %v2349
    %vm2401 = vweird.f32 %v2395
    %vm2402 = vmor %vm2400, %vm2401
    %v2403 = vsel %vm2402, %v2395, %v2399
    %v2404 = vand.u32 2147483647, %v2349
    %vm2405 = vcmp.eq.f32.partialorder %v2404, 8.507059e+37
    %v2406 = vand.u32 %v2349, 2147483648
    %v2407 = vor.u32 1.1754944e-38, %v2406
    %v2408 = vsel %vm2405, %v2407, %v2403
    %v2409 = vmul.f32 1.0, %v2408
    %v2410 = vtanh.pop %v2330
    %v2411 = vtanh.pop %v2331
    %v2412 = vtanh.pop %v2332
    %v2413 = vtanh.pop %v2333
    %v2415 = vrot.slane %v2273, 2
    %v2416 = vrot.slane %v2273, 3
    %v2417 = vrot.slane %v2273, 4
    %v2418 = vrot.slane %v2273, 5
    %2419 = vrot.lane.b32.xlu0 %v2415, 32
    %v2420 = vpop.permute.xlu0 %2419
    %2421 = vrot.lane.b32.xlu0 %v2416, 32
    %v2422 = vpop.permute.xlu0 %2421
    %2423 = vrot.lane.b32.xlu0 %v2417, 32
    %v2424 = vpop.permute.xlu0 %2423
    %2425 = vrot.lane.b32.xlu0 %v2418, 32
    %v2426 = vpop.permute.xlu0 %2425
    %v2431 = vmul.f32 %v2364, %v2420
    %v2432 = vmul.f32 %v2379, %v2422
    %v2433 = vmul.f32 %v2394, %v2424
    %v2434 = vmul.f32 %v2409, %v2426
    %2439 = vrot.lane.b32.xlu0 %v2410, 64
    %v2440 = vpop.permute.xlu0 %2439
    %2441 = vrot.lane.b32.xlu0 %v2411, 64
    %v2442 = vpop.permute.xlu0 %2441
    %2443 = vrot.lane.b32.xlu0 %v2412, 64
    %v2444 = vpop.permute.xlu0 %2443
    %2445 = vrot.lane.b32.xlu0 %v2413, 64
    %v2446 = vpop.permute.xlu0 %2445
    %v2451 = vmul.f32 %v2364, %v2440
    %v2452 = vmul.f32 %v2379, %v2442
    %v2453 = vmul.f32 %v2394, %v2444
    %v2454 = vmul.f32 %v2409, %v2446
    %2459 = vrot.lane.b32.xlu0 %v2451, 32
    %v2460 = vpop.permute.xlu0 %2459
    %2461 = vrot.lane.b32.xlu0 %v2452, 32
    %v2462 = vpop.permute.xlu0 %2461
    %2463 = vrot.lane.b32.xlu0 %v2453, 32
    %v2464 = vpop.permute.xlu0 %2463
    %2465 = vrot.lane.b32.xlu0 %v2454, 32
    %v2466 = vpop.permute.xlu0 %2465
    %v2471 = vadd.f32 %v2431, %v2460
    %v2472 = vadd.f32 %v2432, %v2462
    %v2473 = vadd.f32 %v2433, %v2464
    %v2474 = vadd.f32 %v2434, %v2466
    %v2475 = vtanh.pop %v2471
    %v2476 = vtanh.pop %v2472
    %v2477 = vtanh.pop %v2473
    %v2478 = vtanh.pop %v2474
    %2483 = vrot.lane.b32.xlu0 %v2475, 64
    %v2484 = vpop.permute.xlu0 %2483
    %2485 = vrot.lane.b32.xlu0 %v2476, 64
    %v2486 = vpop.permute.xlu0 %2485
    %2487 = vrot.lane.b32.xlu0 %v2477, 64
    %v2488 = vpop.permute.xlu0 %2487
    %2489 = vrot.lane.b32.xlu0 %v2478, 64
    %v2490 = vpop.permute.xlu0 %2489
    %v2495 = vmul.f32 %v2364, %v2484
    %v2496 = vmul.f32 %v2379, %v2486
    %v2497 = vmul.f32 %v2394, %v2488
    %v2498 = vmul.f32 %v2409, %v2490
    %2499 = vset.pattern.permute.xlu0 6
    %2500 = vperm.xlu0 %2499, %v2239
    %v2501 = vpop.permute.xlu0 %2500
    %vm2502 = vcmp.eq.s32.totalorder %v2501, 1
    %v2507 = vrot.slane %v2495, 6
    %v2508 = vrot.slane %v2496, 5
    %v2509 = vsel %vm484, %v2508, %v2507
    %v2510 = vrot.slane %v2497, 4
    %v2511 = vsel %vm487, %v2510, %v2509
    %v2512 = vrot.slane %v2498, 3
    %v2513 = vsel %vm490, %v2512, %v2511
    %2514 = vrot.lane.b32.xlu0 %v2513, 32
    %v2515 = vpop.permute.xlu0 %2514
    %v2517 = vsel %vm2502, %v2515, %v2258
    %v2522 = vrot.slane %v2471, 6
    %v2523 = vrot.slane %v2472, 5
    %v2524 = vsel %vm484, %v2523, %v2522
    %v2525 = vrot.slane %v2473, 4
    %v2526 = vsel %vm487, %v2525, %v2524
    %v2527 = vrot.slane %v2474, 3
    %v2528 = vsel %vm490, %v2527, %v2526
    %2529 = vrot.lane.b32.xlu0 %v2528, 96
    %v2530 = vpop.permute.xlu0 %2529
    %v2532 = vsel %vm2502, %v2530, %v2273
    %v2534 = vrot.slane %v2517, 1
    %v2535 = vrot.slane %v2517, 2
    %v2536 = vrot.slane %v2517, 3
    %v2537 = vperm.slane %v2517, 0
    %v2538 = vperm.slane %v2534, 0
    %v2539 = vperm.slane %v2535, 0
    %v2540 = vperm.slane %v2536, 0
    %2541 = vrot.lane.b32.xlu0 %v2537, 32
    %v2542 = vpop.permute.xlu0 %2541
    %2543 = vrot.lane.b32.xlu0 %v2538, 32
    %v2544 = vpop.permute.xlu0 %2543
    %2545 = vrot.lane.b32.xlu0 %v2539, 32
    %v2546 = vpop.permute.xlu0 %2545
    %2547 = vrot.lane.b32.xlu0 %v2540, 32
    %v2548 = vpop.permute.xlu0 %2547
    %2553 = vst.msk [vmem:[#allocation2 + $0x6] sm:$0x1] %vm2294, %v2542
    %2554 = vst.msk [vmem:[#allocation2 + $0xe] sm:$0x1] %vm2294, %v2544
    %2555 = vst.msk [vmem:[#allocation2 + $0x16] sm:$0x1] %vm2294, %v2546
    %2556 = vst.msk [vmem:[#allocation2 + $0x1e] sm:$0x1] %vm2294, %v2548
    %v2557 = vsel %vm204, %v2517, 0
    %2559 = vmatpush.msra.mxu0 0.0
    %2560 = vmatpush.msra.mxu0 0.0
    %2561 = vmatpush.msra.mxu0 0.0
    %2562 = vmatpush.msra.mxu0 0.0
    %2563 = vmatpush.msra.mxu0 0.0
    %2564 = vmatpush.msra.mxu0 0.0
    %2565 = vmatpush.msra.mxu0 0.0
    %2566 = vmatpush.msra.mxu0 0.0
    %2567 = vmatpush.msra.mxu0 0.0
    %2568 = vmatpush.msra.mxu0 0.0
    %2569 = vmatpush.msra.mxu0 0.0
    %2570 = vmatpush.msra.mxu0 0.0
    %2571 = vmatpush.msra.mxu0 %v2057
    %2572 = vmatpush.msra.mxu0 %v2056
    %2573 = vmatpush.msra.mxu0 %v2055
    %2574 = vmatpush.msra.mxu0 %v2054
    %2575 = vmatmul.f32.gmra.mxu0 %v2557
    %v2576 = vpop.f32.mrf.mxu0
    %v2577 = vadd.f32 0.0, %v2576
    %2578 = vdwg.mxu0
    %v2580 = vrot.slane %v2577, 3
    %v2581 = vrot.slane %v2577, 4
    %v2582 = vrot.slane %v2577, 5
    %v2583 = vrot.slane %v2577, 6
    %v2588 = vadd.f32 %v264, %v2580
    %v2589 = vadd.f32 %v267, %v2581
    %v2590 = vadd.f32 %v270, %v2582
    %v2591 = vadd.f32 %v273, %v2583
    %v2592 = vxor.u32 %v2588, 2147483648
    %v2593 = vxor.u32 %v2589, 2147483648
    %v2594 = vxor.u32 %v2590, 2147483648
    %v2595 = vxor.u32 %v2591, 2147483648
    %v2596 = vmul.f32 %v2592, 1.442695
    %v2597 = vpow.pop %v2596
    %v2598 = vmul.f32 %v2593, 1.442695
    %v2599 = vpow.pop %v2598
    %v2600 = vmul.f32 %v2594, 1.442695
    %v2601 = vpow.pop %v2600
    %v2602 = vmul.f32 %v2595, 1.442695
    %v2603 = vpow.pop %v2602
    %v2604 = vadd.f32 %v2597, 1.0
    %v2605 = vadd.f32 %v2599, 1.0
    %v2606 = vadd.f32 %v2601, 1.0
    %v2607 = vadd.f32 %v2603, 1.0
    %v2608 = vrcp.pop %v2604
    %v2609 = vmul.f32 %v2604, %v2608
    %v2610 = vsub.f32 1.0, %v2609
    %v2611 = vmul.f32 %v2608, %v2610
    %v2612 = vadd.f32 %v2608, %v2611
    %vm2613 = vweird.f32 %v2604
    %vm2614 = vweird.f32 %v2608
    %vm2615 = vmor %vm2613, %vm2614
    %v2616 = vsel %vm2615, %v2608, %v2612
    %v2617 = vand.u32 2147483647, %v2604
    %vm2618 = vcmp.eq.f32.partialorder %v2617, 8.507059e+37
    %v2619 = vand.u32 %v2604, 2147483648
    %v2620 = vor.u32 1.1754944e-38, %v2619
    %v2621 = vsel %vm2618, %v2620, %v2616
    %v2622 = vmul.f32 1.0, %v2621
    %v2623 = vrcp.pop %v2605
    %v2624 = vmul.f32 %v2605, %v2623
    %v2625 = vsub.f32 1.0, %v2624
    %v2626 = vmul.f32 %v2623, %v2625
    %v2627 = vadd.f32 %v2623, %v2626
    %vm2628 = vweird.f32 %v2605
    %vm2629 = vweird.f32 %v2623
    %vm2630 = vmor %vm2628, %vm2629
    %v2631 = vsel %vm2630, %v2623, %v2627
    %v2632 = vand.u32 2147483647, %v2605
    %vm2633 = vcmp.eq.f32.partialorder %v2632, 8.507059e+37
    %v2634 = vand.u32 %v2605, 2147483648
    %v2635 = vor.u32 1.1754944e-38, %v2634
    %v2636 = vsel %vm2633, %v2635, %v2631
    %v2637 = vmul.f32 1.0, %v2636
    %v2638 = vrcp.pop %v2606
    %v2639 = vmul.f32 %v2606, %v2638
    %v2640 = vsub.f32 1.0, %v2639
    %v2641 = vmul.f32 %v2638, %v2640
    %v2642 = vadd.f32 %v2638, %v2641
    %vm2643 = vweird.f32 %v2606
    %vm2644 = vweird.f32 %v2638
    %vm2645 = vmor %vm2643, %vm2644
    %v2646 = vsel %vm2645, %v2638, %v2642
    %v2647 = vand.u32 2147483647, %v2606
    %vm2648 = vcmp.eq.f32.partialorder %v2647, 8.507059e+37
    %v2649 = vand.u32 %v2606, 2147483648
    %v2650 = vor.u32 1.1754944e-38, %v2649
    %v2651 = vsel %vm2648, %v2650, %v2646
    %v2652 = vmul.f32 1.0, %v2651
    %v2653 = vrcp.pop %v2607
    %v2654 = vmul.f32 %v2607, %v2653
    %v2655 = vsub.f32 1.0, %v2654
    %v2656 = vmul.f32 %v2653, %v2655
    %v2657 = vadd.f32 %v2653, %v2656
    %vm2658 = vweird.f32 %v2607
    %vm2659 = vweird.f32 %v2653
    %vm2660 = vmor %vm2658, %vm2659
    %v2661 = vsel %vm2660, %v2653, %v2657
    %v2662 = vand.u32 2147483647, %v2607
    %vm2663 = vcmp.eq.f32.partialorder %v2662, 8.507059e+37
    %v2664 = vand.u32 %v2607, 2147483648
    %v2665 = vor.u32 1.1754944e-38, %v2664
    %v2666 = vsel %vm2663, %v2665, %v2661
    %v2667 = vmul.f32 1.0, %v2666
    %v2668 = vtanh.pop %v2588
    %v2669 = vtanh.pop %v2589
    %v2670 = vtanh.pop %v2590
    %v2671 = vtanh.pop %v2591
    %v2673 = vrot.slane %v2532, 3
    %v2674 = vrot.slane %v2532, 4
    %v2675 = vrot.slane %v2532, 5
    %v2676 = vrot.slane %v2532, 6
    %2677 = vrot.lane.b32.xlu0 %v2673, 32
    %v2678 = vpop.permute.xlu0 %2677
    %2679 = vrot.lane.b32.xlu0 %v2674, 32
    %v2680 = vpop.permute.xlu0 %2679
    %2681 = vrot.lane.b32.xlu0 %v2675, 32
    %v2682 = vpop.permute.xlu0 %2681
    %2683 = vrot.lane.b32.xlu0 %v2676, 32
    %v2684 = vpop.permute.xlu0 %2683
    %v2689 = vmul.f32 %v2622, %v2678
    %v2690 = vmul.f32 %v2637, %v2680
    %v2691 = vmul.f32 %v2652, %v2682
    %v2692 = vmul.f32 %v2667, %v2684
    %2697 = vrot.lane.b32.xlu0 %v2668, 64
    %v2698 = vpop.permute.xlu0 %2697
    %2699 = vrot.lane.b32.xlu0 %v2669, 64
    %v2700 = vpop.permute.xlu0 %2699
    %2701 = vrot.lane.b32.xlu0 %v2670, 64
    %v2702 = vpop.permute.xlu0 %2701
    %2703 = vrot.lane.b32.xlu0 %v2671, 64
    %v2704 = vpop.permute.xlu0 %2703
    %v2709 = vmul.f32 %v2622, %v2698
    %v2710 = vmul.f32 %v2637, %v2700
    %v2711 = vmul.f32 %v2652, %v2702
    %v2712 = vmul.f32 %v2667, %v2704
    %2717 = vrot.lane.b32.xlu0 %v2709, 32
    %v2718 = vpop.permute.xlu0 %2717
    %2719 = vrot.lane.b32.xlu0 %v2710, 32
    %v2720 = vpop.permute.xlu0 %2719
    %2721 = vrot.lane.b32.xlu0 %v2711, 32
    %v2722 = vpop.permute.xlu0 %2721
    %2723 = vrot.lane.b32.xlu0 %v2712, 32
    %v2724 = vpop.permute.xlu0 %2723
    %v2729 = vadd.f32 %v2689, %v2718
    %v2730 = vadd.f32 %v2690, %v2720
    %v2731 = vadd.f32 %v2691, %v2722
    %v2732 = vadd.f32 %v2692, %v2724
    %v2733 = vtanh.pop %v2729
    %v2734 = vtanh.pop %v2730
    %v2735 = vtanh.pop %v2731
    %v2736 = vtanh.pop %v2732
    %2741 = vrot.lane.b32.xlu0 %v2733, 64
    %v2742 = vpop.permute.xlu0 %2741
    %2743 = vrot.lane.b32.xlu0 %v2734, 64
    %v2744 = vpop.permute.xlu0 %2743
    %2745 = vrot.lane.b32.xlu0 %v2735, 64
    %v2746 = vpop.permute.xlu0 %2745
    %2747 = vrot.lane.b32.xlu0 %v2736, 64
    %v2748 = vpop.permute.xlu0 %2747
    %v2753 = vmul.f32 %v2622, %v2742
    %v2754 = vmul.f32 %v2637, %v2744
    %v2755 = vmul.f32 %v2652, %v2746
    %v2756 = vmul.f32 %v2667, %v2748
    %2757 = vset.pattern.permute.xlu0 5
    %2758 = vperm.xlu0 %2757, %v2239
    %v2759 = vpop.permute.xlu0 %2758
    %vm2760 = vcmp.eq.s32.totalorder %v2759, 1
    %v2765 = vrot.slane %v2753, 5
    %v2766 = vrot.slane %v2754, 4
    %v2767 = vsel %vm484, %v2766, %v2765
    %v2768 = vrot.slane %v2755, 3
    %v2769 = vsel %vm487, %v2768, %v2767
    %v2770 = vrot.slane %v2756, 2
    %v2771 = vsel %vm490, %v2770, %v2769
    %2772 = vrot.lane.b32.xlu0 %v2771, 32
    %v2773 = vpop.permute.xlu0 %2772
    %v2775 = vsel %vm2760, %v2773, %v2517
    %v2780 = vrot.slane %v2729, 5
    %v2781 = vrot.slane %v2730, 4
    %v2782 = vsel %vm484, %v2781, %v2780
    %v2783 = vrot.slane %v2731, 3
    %v2784 = vsel %vm487, %v2783, %v2782
    %v2785 = vrot.slane %v2732, 2
    %v2786 = vsel %vm490, %v2785, %v2784
    %2787 = vrot.lane.b32.xlu0 %v2786, 96
    %v2788 = vpop.permute.xlu0 %2787
    %v2790 = vsel %vm2760, %v2788, %v2532
    %v2792 = vrot.slane %v2775, 1
    %v2793 = vrot.slane %v2775, 2
    %v2794 = vrot.slane %v2775, 3
    %v2795 = vperm.slane %v2775, 0
    %v2796 = vperm.slane %v2792, 0
    %v2797 = vperm.slane %v2793, 0
    %v2798 = vperm.slane %v2794, 0
    %2799 = vrot.lane.b32.xlu0 %v2795, 32
    %v2800 = vpop.permute.xlu0 %2799
    %2801 = vrot.lane.b32.xlu0 %v2796, 32
    %v2802 = vpop.permute.xlu0 %2801
    %2803 = vrot.lane.b32.xlu0 %v2797, 32
    %v2804 = vpop.permute.xlu0 %2803
    %2805 = vrot.lane.b32.xlu0 %v2798, 32
    %v2806 = vpop.permute.xlu0 %2805
    %2811 = vst.msk [vmem:[#allocation2 + $0x5] sm:$0x1] %vm2294, %v2800
    %2812 = vst.msk [vmem:[#allocation2 + $0xd] sm:$0x1] %vm2294, %v2802
    %2813 = vst.msk [vmem:[#allocation2 + $0x15] sm:$0x1] %vm2294, %v2804
    %2814 = vst.msk [vmem:[#allocation2 + $0x1d] sm:$0x1] %vm2294, %v2806
    %v2815 = vsel %vm204, %v2775, 0
    %2817 = vmatpush.msra.mxu0 0.0
    %2818 = vmatpush.msra.mxu0 0.0
    %2819 = vmatpush.msra.mxu0 0.0
    %2820 = vmatpush.msra.mxu0 0.0
    %2821 = vmatpush.msra.mxu0 0.0
    %2822 = vmatpush.msra.mxu0 0.0
    %2823 = vmatpush.msra.mxu0 0.0
    %2824 = vmatpush.msra.mxu0 0.0
    %2825 = vmatpush.msra.mxu0 0.0
    %2826 = vmatpush.msra.mxu0 0.0
    %2827 = vmatpush.msra.mxu0 0.0
    %2828 = vmatpush.msra.mxu0 0.0
    %2829 = vmatpush.msra.mxu0 %v2057
    %2830 = vmatpush.msra.mxu0 %v2056
    %2831 = vmatpush.msra.mxu0 %v2055
    %2832 = vmatpush.msra.mxu0 %v2054
    %2833 = vmatmul.f32.gmra.mxu0 %v2815
    %v2834 = vpop.f32.mrf.mxu0
    %v2835 = vadd.f32 0.0, %v2834
    %2836 = vdwg.mxu0
    %v2838 = vrot.slane %v2835, 4
    %v2839 = vrot.slane %v2835, 5
    %v2840 = vrot.slane %v2835, 6
    %v2841 = vrot.slane %v2835, 7
    %v2846 = vadd.f32 %v264, %v2838
    %v2847 = vadd.f32 %v267, %v2839
    %v2848 = vadd.f32 %v270, %v2840
    %v2849 = vadd.f32 %v273, %v2841
    %v2850 = vxor.u32 %v2846, 2147483648
    %v2851 = vxor.u32 %v2847, 2147483648
    %v2852 = vxor.u32 %v2848, 2147483648
    %v2853 = vxor.u32 %v2849, 2147483648
    %v2854 = vmul.f32 %v2850, 1.442695
    %v2855 = vpow.pop %v2854
    %v2856 = vmul.f32 %v2851, 1.442695
    %v2857 = vpow.pop %v2856
    %v2858 = vmul.f32 %v2852, 1.442695
    %v2859 = vpow.pop %v2858
    %v2860 = vmul.f32 %v2853, 1.442695
    %v2861 = vpow.pop %v2860
    %v2862 = vadd.f32 %v2855, 1.0
    %v2863 = vadd.f32 %v2857, 1.0
    %v2864 = vadd.f32 %v2859, 1.0
    %v2865 = vadd.f32 %v2861, 1.0
    %v2866 = vrcp.pop %v2862
    %v2867 = vmul.f32 %v2862, %v2866
    %v2868 = vsub.f32 1.0, %v2867
    %v2869 = vmul.f32 %v2866, %v2868
    %v2870 = vadd.f32 %v2866, %v2869
    %vm2871 = vweird.f32 %v2862
    %vm2872 = vweird.f32 %v2866
    %vm2873 = vmor %vm2871, %vm2872
    %v2874 = vsel %vm2873, %v2866, %v2870
    %v2875 = vand.u32 2147483647, %v2862
    %vm2876 = vcmp.eq.f32.partialorder %v2875, 8.507059e+37
    %v2877 = vand.u32 %v2862, 2147483648
    %v2878 = vor.u32 1.1754944e-38, %v2877
    %v2879 = vsel %vm2876, %v2878, %v2874
    %v2880 = vmul.f32 1.0, %v2879
    %v2881 = vrcp.pop %v2863
    %v2882 = vmul.f32 %v2863, %v2881
    %v2883 = vsub.f32 1.0, %v2882
    %v2884 = vmul.f32 %v2881, %v2883
    %v2885 = vadd.f32 %v2881, %v2884
    %vm2886 = vweird.f32 %v2863
    %vm2887 = vweird.f32 %v2881
    %vm2888 = vmor %vm2886, %vm2887
    %v2889 = vsel %vm2888, %v2881, %v2885
    %v2890 = vand.u32 2147483647, %v2863
    %vm2891 = vcmp.eq.f32.partialorder %v2890, 8.507059e+37
    %v2892 = vand.u32 %v2863, 2147483648
    %v2893 = vor.u32 1.1754944e-38, %v2892
    %v2894 = vsel %vm2891, %v2893, %v2889
    %v2895 = vmul.f32 1.0, %v2894
    %v2896 = vrcp.pop %v2864
    %v2897 = vmul.f32 %v2864, %v2896
    %v2898 = vsub.f32 1.0, %v2897
    %v2899 = vmul.f32 %v2896, %v2898
    %v2900 = vadd.f32 %v2896, %v2899
    %vm2901 = vweird.f32 %v2864
    %vm2902 = vweird.f32 %v2896
    %vm2903 = vmor %vm2901, %vm2902
    %v2904 = vsel %vm2903, %v2896, %v2900
    %v2905 = vand.u32 2147483647, %v2864
    %vm2906 = vcmp.eq.f32.partialorder %v2905, 8.507059e+37
    %v2907 = vand.u32 %v2864, 2147483648
    %v2908 = vor.u32 1.1754944e-38, %v2907
    %v2909 = vsel %vm2906, %v2908, %v2904
    %v2910 = vmul.f32 1.0, %v2909
    %v2911 = vrcp.pop %v2865
    %v2912 = vmul.f32 %v2865, %v2911
    %v2913 = vsub.f32 1.0, %v2912
    %v2914 = vmul.f32 %v2911, %v2913
    %v2915 = vadd.f32 %v2911, %v2914
    %vm2916 = vweird.f32 %v2865
    %vm2917 = vweird.f32 %v2911
    %vm2918 = vmor %vm2916, %vm2917
    %v2919 = vsel %vm2918, %v2911, %v2915
    %v2920 = vand.u32 2147483647, %v2865
    %vm2921 = vcmp.eq.f32.partialorder %v2920, 8.507059e+37
    %v2922 = vand.u32 %v2865, 2147483648
    %v2923 = vor.u32 1.1754944e-38, %v2922
    %v2924 = vsel %vm2921, %v2923, %v2919
    %v2925 = vmul.f32 1.0, %v2924
    %v2926 = vtanh.pop %v2846
    %v2927 = vtanh.pop %v2847
    %v2928 = vtanh.pop %v2848
    %v2929 = vtanh.pop %v2849
    %v2931 = vrot.slane %v2790, 4
    %v2932 = vrot.slane %v2790, 5
    %v2933 = vrot.slane %v2790, 6
    %v2934 = vrot.slane %v2790, 7
    %2935 = vrot.lane.b32.xlu0 %v2931, 32
    %v2936 = vpop.permute.xlu0 %2935
    %2937 = vrot.lane.b32.xlu0 %v2932, 32
    %v2938 = vpop.permute.xlu0 %2937
    %2939 = vrot.lane.b32.xlu0 %v2933, 32
    %v2940 = vpop.permute.xlu0 %2939
    %2941 = vrot.lane.b32.xlu0 %v2934, 32
    %v2942 = vpop.permute.xlu0 %2941
    %v2947 = vmul.f32 %v2880, %v2936
    %v2948 = vmul.f32 %v2895, %v2938
    %v2949 = vmul.f32 %v2910, %v2940
    %v2950 = vmul.f32 %v2925, %v2942
    %2955 = vrot.lane.b32.xlu0 %v2926, 64
    %v2956 = vpop.permute.xlu0 %2955
    %2957 = vrot.lane.b32.xlu0 %v2927, 64
    %v2958 = vpop.permute.xlu0 %2957
    %2959 = vrot.lane.b32.xlu0 %v2928, 64
    %v2960 = vpop.permute.xlu0 %2959
    %2961 = vrot.lane.b32.xlu0 %v2929, 64
    %v2962 = vpop.permute.xlu0 %2961
    %v2967 = vmul.f32 %v2880, %v2956
    %v2968 = vmul.f32 %v2895, %v2958
    %v2969 = vmul.f32 %v2910, %v2960
    %v2970 = vmul.f32 %v2925, %v2962
    %2975 = vrot.lane.b32.xlu0 %v2967, 32
    %v2976 = vpop.permute.xlu0 %2975
    %2977 = vrot.lane.b32.xlu0 %v2968, 32
    %v2978 = vpop.permute.xlu0 %2977
    %2979 = vrot.lane.b32.xlu0 %v2969, 32
    %v2980 = vpop.permute.xlu0 %2979
    %2981 = vrot.lane.b32.xlu0 %v2970, 32
    %v2982 = vpop.permute.xlu0 %2981
    %v2987 = vadd.f32 %v2947, %v2976
    %v2988 = vadd.f32 %v2948, %v2978
    %v2989 = vadd.f32 %v2949, %v2980
    %v2990 = vadd.f32 %v2950, %v2982
    %v2991 = vtanh.pop %v2987
    %v2992 = vtanh.pop %v2988
    %v2993 = vtanh.pop %v2989
    %v2994 = vtanh.pop %v2990
    %2999 = vrot.lane.b32.xlu0 %v2991, 64
    %v3000 = vpop.permute.xlu0 %2999
    %3001 = vrot.lane.b32.xlu0 %v2992, 64
    %v3002 = vpop.permute.xlu0 %3001
    %3003 = vrot.lane.b32.xlu0 %v2993, 64
    %v3004 = vpop.permute.xlu0 %3003
    %3005 = vrot.lane.b32.xlu0 %v2994, 64
    %v3006 = vpop.permute.xlu0 %3005
    %v3011 = vmul.f32 %v2880, %v3000
    %v3012 = vmul.f32 %v2895, %v3002
    %v3013 = vmul.f32 %v2910, %v3004
    %v3014 = vmul.f32 %v2925, %v3006
    %3015 = vset.pattern.permute.xlu0 4
    %3016 = vperm.xlu0 %3015, %v2239
    %v3017 = vpop.permute.xlu0 %3016
    %vm3018 = vcmp.eq.s32.totalorder %v3017, 1
    %v3023 = vrot.slane %v3011, 4
    %v3024 = vrot.slane %v3012, 3
    %v3025 = vsel %vm484, %v3024, %v3023
    %v3026 = vrot.slane %v3013, 2
    %v3027 = vsel %vm487, %v3026, %v3025
    %v3028 = vrot.slane %v3014, 1
    %v3029 = vsel %vm490, %v3028, %v3027
    %3030 = vrot.lane.b32.xlu0 %v3029, 32
    %v3031 = vpop.permute.xlu0 %3030
    %v3033 = vsel %vm3018, %v3031, %v2775
    %v3038 = vrot.slane %v2987, 4
    %v3039 = vrot.slane %v2988, 3
    %v3040 = vsel %vm484, %v3039, %v3038
    %v3041 = vrot.slane %v2989, 2
    %v3042 = vsel %vm487, %v3041, %v3040
    %v3043 = vrot.slane %v2990, 1
    %v3044 = vsel %vm490, %v3043, %v3042
    %3045 = vrot.lane.b32.xlu0 %v3044, 96
    %v3046 = vpop.permute.xlu0 %3045
    %v3048 = vsel %vm3018, %v3046, %v2790
    %v3050 = vrot.slane %v3033, 1
    %v3051 = vrot.slane %v3033, 2
    %v3052 = vrot.slane %v3033, 3
    %v3053 = vperm.slane %v3033, 0
    %v3054 = vperm.slane %v3050, 0
    %v3055 = vperm.slane %v3051, 0
    %v3056 = vperm.slane %v3052, 0
    %3057 = vrot.lane.b32.xlu0 %v3053, 32
    %v3058 = vpop.permute.xlu0 %3057
    %3059 = vrot.lane.b32.xlu0 %v3054, 32
    %v3060 = vpop.permute.xlu0 %3059
    %3061 = vrot.lane.b32.xlu0 %v3055, 32
    %v3062 = vpop.permute.xlu0 %3061
    %3063 = vrot.lane.b32.xlu0 %v3056, 32
    %v3064 = vpop.permute.xlu0 %3063
    %3069 = vst.msk [vmem:[#allocation2 + $0x4] sm:$0x1] %vm2294, %v3058
    %3070 = vst.msk [vmem:[#allocation2 + $0xc] sm:$0x1] %vm2294, %v3060
    %3071 = vst.msk [vmem:[#allocation2 + $0x14] sm:$0x1] %vm2294, %v3062
    %3072 = vst.msk [vmem:[#allocation2 + $0x1c] sm:$0x1] %vm2294, %v3064
    %v3073 = vsel %vm204, %v3033, 0
    %3075 = vmatpush.msra.mxu0 0.0
    %3076 = vmatpush.msra.mxu0 0.0
    %3077 = vmatpush.msra.mxu0 0.0
    %3078 = vmatpush.msra.mxu0 0.0
    %3079 = vmatpush.msra.mxu0 0.0
    %3080 = vmatpush.msra.mxu0 0.0
    %3081 = vmatpush.msra.mxu0 0.0
    %3082 = vmatpush.msra.mxu0 0.0
    %3083 = vmatpush.msra.mxu0 0.0
    %3084 = vmatpush.msra.mxu0 0.0
    %3085 = vmatpush.msra.mxu0 0.0
    %3086 = vmatpush.msra.mxu0 0.0
    %3087 = vmatpush.msra.mxu0 %v2057
    %3088 = vmatpush.msra.mxu0 %v2056
    %3089 = vmatpush.msra.mxu0 %v2055
    %3090 = vmatpush.msra.mxu0 %v2054
    %3091 = vmatmul.f32.gmra.mxu0 %v3073
    %v3092 = vpop.f32.mrf.mxu0
    %v3093 = vadd.f32 0.0, %v3092
    %3094 = vdwg.mxu0
    %v3096 = vrot.slane %v3093, 5
    %v3097 = vrot.slane %v3093, 6
    %v3098 = vrot.slane %v3093, 7
    %v3103 = vadd.f32 %v264, %v3096
    %v3104 = vadd.f32 %v267, %v3097
    %v3105 = vadd.f32 %v270, %v3098
    %v3106 = vadd.f32 %v273, %v3093
    %v3107 = vxor.u32 %v3103, 2147483648
    %v3108 = vxor.u32 %v3104, 2147483648
    %v3109 = vxor.u32 %v3105, 2147483648
    %v3110 = vxor.u32 %v3106, 2147483648
    %v3111 = vmul.f32 %v3107, 1.442695
    %v3112 = vpow.pop %v3111
    %v3113 = vmul.f32 %v3108, 1.442695
    %v3114 = vpow.pop %v3113
    %v3115 = vmul.f32 %v3109, 1.442695
    %v3116 = vpow.pop %v3115
    %v3117 = vmul.f32 %v3110, 1.442695
    %v3118 = vpow.pop %v3117
    %v3119 = vadd.f32 %v3112, 1.0
    %v3120 = vadd.f32 %v3114, 1.0
    %v3121 = vadd.f32 %v3116, 1.0
    %v3122 = vadd.f32 %v3118, 1.0
    %v3123 = vrcp.pop %v3119
    %v3124 = vmul.f32 %v3119, %v3123
    %v3125 = vsub.f32 1.0, %v3124
    %v3126 = vmul.f32 %v3123, %v3125
    %v3127 = vadd.f32 %v3123, %v3126
    %vm3128 = vweird.f32 %v3119
    %vm3129 = vweird.f32 %v3123
    %vm3130 = vmor %vm3128, %vm3129
    %v3131 = vsel %vm3130, %v3123, %v3127
    %v3132 = vand.u32 2147483647, %v3119
    %vm3133 = vcmp.eq.f32.partialorder %v3132, 8.507059e+37
    %v3134 = vand.u32 %v3119, 2147483648
    %v3135 = vor.u32 1.1754944e-38, %v3134
    %v3136 = vsel %vm3133, %v3135, %v3131
    %v3137 = vmul.f32 1.0, %v3136
    %v3138 = vrcp.pop %v3120
    %v3139 = vmul.f32 %v3120, %v3138
    %v3140 = vsub.f32 1.0, %v3139
    %v3141 = vmul.f32 %v3138, %v3140
    %v3142 = vadd.f32 %v3138, %v3141
    %vm3143 = vweird.f32 %v3120
    %vm3144 = vweird.f32 %v3138
    %vm3145 = vmor %vm3143, %vm3144
    %v3146 = vsel %vm3145, %v3138, %v3142
    %v3147 = vand.u32 2147483647, %v3120
    %vm3148 = vcmp.eq.f32.partialorder %v3147, 8.507059e+37
    %v3149 = vand.u32 %v3120, 2147483648
    %v3150 = vor.u32 1.1754944e-38, %v3149
    %v3151 = vsel %vm3148, %v3150, %v3146
    %v3152 = vmul.f32 1.0, %v3151
    %v3153 = vrcp.pop %v3121
    %v3154 = vmul.f32 %v3121, %v3153
    %v3155 = vsub.f32 1.0, %v3154
    %v3156 = vmul.f32 %v3153, %v3155
    %v3157 = vadd.f32 %v3153, %v3156
    %vm3158 = vweird.f32 %v3121
    %vm3159 = vweird.f32 %v3153
    %vm3160 = vmor %vm3158, %vm3159
    %v3161 = vsel %vm3160, %v3153, %v3157
    %v3162 = vand.u32 2147483647, %v3121
    %vm3163 = vcmp.eq.f32.partialorder %v3162, 8.507059e+37
    %v3164 = vand.u32 %v3121, 2147483648
    %v3165 = vor.u32 1.1754944e-38, %v3164
    %v3166 = vsel %vm3163, %v3165, %v3161
    %v3167 = vmul.f32 1.0, %v3166
    %v3168 = vrcp.pop %v3122
    %v3169 = vmul.f32 %v3122, %v3168
    %v3170 = vsub.f32 1.0, %v3169
    %v3171 = vmul.f32 %v3168, %v3170
    %v3172 = vadd.f32 %v3168, %v3171
    %vm3173 = vweird.f32 %v3122
    %vm3174 = vweird.f32 %v3168
    %vm3175 = vmor %vm3173, %vm3174
    %v3176 = vsel %vm3175, %v3168, %v3172
    %v3177 = vand.u32 2147483647, %v3122
    %vm3178 = vcmp.eq.f32.partialorder %v3177, 8.507059e+37
    %v3179 = vand.u32 %v3122, 2147483648
    %v3180 = vor.u32 1.1754944e-38, %v3179
    %v3181 = vsel %vm3178, %v3180, %v3176
    %v3182 = vmul.f32 1.0, %v3181
    %v3183 = vtanh.pop %v3103
    %v3184 = vtanh.pop %v3104
    %v3185 = vtanh.pop %v3105
    %v3186 = vtanh.pop %v3106
    %v3188 = vrot.slane %v3048, 5
    %v3189 = vrot.slane %v3048, 6
    %v3190 = vrot.slane %v3048, 7
    %3191 = vrot.lane.b32.xlu0 %v3188, 32
    %v3192 = vpop.permute.xlu0 %3191
    %3193 = vrot.lane.b32.xlu0 %v3189, 32
    %v3194 = vpop.permute.xlu0 %3193
    %3195 = vrot.lane.b32.xlu0 %v3190, 32
    %v3196 = vpop.permute.xlu0 %3195
    %3197 = vrot.lane.b32.xlu0 %v3048, 32
    %v3198 = vpop.permute.xlu0 %3197
    %v3203 = vmul.f32 %v3137, %v3192
    %v3204 = vmul.f32 %v3152, %v3194
    %v3205 = vmul.f32 %v3167, %v3196
    %v3206 = vmul.f32 %v3182, %v3198
    %3211 = vrot.lane.b32.xlu0 %v3183, 64
    %v3212 = vpop.permute.xlu0 %3211
    %3213 = vrot.lane.b32.xlu0 %v3184, 64
    %v3214 = vpop.permute.xlu0 %3213
    %3215 = vrot.lane.b32.xlu0 %v3185, 64
    %v3216 = vpop.permute.xlu0 %3215
    %3217 = vrot.lane.b32.xlu0 %v3186, 64
    %v3218 = vpop.permute.xlu0 %3217
    %v3223 = vmul.f32 %v3137, %v3212
    %v3224 = vmul.f32 %v3152, %v3214
    %v3225 = vmul.f32 %v3167, %v3216
    %v3226 = vmul.f32 %v3182, %v3218
    %3231 = vrot.lane.b32.xlu0 %v3223, 32
    %v3232 = vpop.permute.xlu0 %3231
    %3233 = vrot.lane.b32.xlu0 %v3224, 32
    %v3234 = vpop.permute.xlu0 %3233
    %3235 = vrot.lane.b32.xlu0 %v3225, 32
    %v3236 = vpop.permute.xlu0 %3235
    %3237 = vrot.lane.b32.xlu0 %v3226, 32
    %v3238 = vpop.permute.xlu0 %3237
    %v3243 = vadd.f32 %v3203, %v3232
    %v3244 = vadd.f32 %v3204, %v3234
    %v3245 = vadd.f32 %v3205, %v3236
    %v3246 = vadd.f32 %v3206, %v3238
    %v3247 = vtanh.pop %v3243
    %v3248 = vtanh.pop %v3244
    %v3249 = vtanh.pop %v3245
    %v3250 = vtanh.pop %v3246
    %3255 = vrot.lane.b32.xlu0 %v3247, 64
    %v3256 = vpop.permute.xlu0 %3255
    %3257 = vrot.lane.b32.xlu0 %v3248, 64
    %v3258 = vpop.permute.xlu0 %3257
    %3259 = vrot.lane.b32.xlu0 %v3249, 64
    %v3260 = vpop.permute.xlu0 %3259
    %3261 = vrot.lane.b32.xlu0 %v3250, 64
    %v3262 = vpop.permute.xlu0 %3261
    %v3267 = vmul.f32 %v3137, %v3256
    %v3268 = vmul.f32 %v3152, %v3258
    %v3269 = vmul.f32 %v3167, %v3260
    %v3270 = vmul.f32 %v3182, %v3262
    %3271 = vset.pattern.permute.xlu0 3
    %3272 = vperm.xlu0 %3271, %v2239
    %v3273 = vpop.permute.xlu0 %3272
    %vm3274 = vcmp.eq.s32.totalorder %v3273, 1
    %v3279 = vrot.slane %v3267, 3
    %v3280 = vrot.slane %v3268, 2
    %v3281 = vsel %vm484, %v3280, %v3279
    %v3282 = vrot.slane %v3269, 1
    %v3283 = vsel %vm487, %v3282, %v3281
    %v3284 = vsel %vm490, %v3270, %v3283
    %3285 = vrot.lane.b32.xlu0 %v3284, 32
    %v3286 = vpop.permute.xlu0 %3285
    %v3288 = vsel %vm3274, %v3286, %v3033
    %v3293 = vrot.slane %v3243, 3
    %v3294 = vrot.slane %v3244, 2
    %v3295 = vsel %vm484, %v3294, %v3293
    %v3296 = vrot.slane %v3245, 1
    %v3297 = vsel %vm487, %v3296, %v3295
    %v3298 = vsel %vm490, %v3246, %v3297
    %3299 = vrot.lane.b32.xlu0 %v3298, 96
    %v3300 = vpop.permute.xlu0 %3299
    %v3302 = vsel %vm3274, %v3300, %v3048
    %v3304 = vrot.slane %v3288, 1
    %v3305 = vrot.slane %v3288, 2
    %v3306 = vrot.slane %v3288, 3
    %v3307 = vperm.slane %v3288, 0
    %v3308 = vperm.slane %v3304, 0
    %v3309 = vperm.slane %v3305, 0
    %v3310 = vperm.slane %v3306, 0
    %3311 = vrot.lane.b32.xlu0 %v3307, 32
    %v3312 = vpop.permute.xlu0 %3311
    %3313 = vrot.lane.b32.xlu0 %v3308, 32
    %v3314 = vpop.permute.xlu0 %3313
    %3315 = vrot.lane.b32.xlu0 %v3309, 32
    %v3316 = vpop.permute.xlu0 %3315
    %3317 = vrot.lane.b32.xlu0 %v3310, 32
    %v3318 = vpop.permute.xlu0 %3317
    %3323 = vst.msk [vmem:[#allocation2 + $0x3] sm:$0x1] %vm2294, %v3312
    %3324 = vst.msk [vmem:[#allocation2 + $0xb] sm:$0x1] %vm2294, %v3314
    %3325 = vst.msk [vmem:[#allocation2 + $0x13] sm:$0x1] %vm2294, %v3316
    %3326 = vst.msk [vmem:[#allocation2 + $0x1b] sm:$0x1] %vm2294, %v3318
    %v3327 = vsel %vm204, %v3288, 0
    %3329 = vmatpush.msra.mxu0 0.0
    %3330 = vmatpush.msra.mxu0 0.0
    %3331 = vmatpush.msra.mxu0 0.0
    %3332 = vmatpush.msra.mxu0 0.0
    %3333 = vmatpush.msra.mxu0 0.0
    %3334 = vmatpush.msra.mxu0 0.0
    %3335 = vmatpush.msra.mxu0 0.0
    %3336 = vmatpush.msra.mxu0 0.0
    %3337 = vmatpush.msra.mxu0 0.0
    %3338 = vmatpush.msra.mxu0 0.0
    %3339 = vmatpush.msra.mxu0 0.0
    %3340 = vmatpush.msra.mxu0 0.0
    %3341 = vmatpush.msra.mxu0 %v2057
    %3342 = vmatpush.msra.mxu0 %v2056
    %3343 = vmatpush.msra.mxu0 %v2055
    %3344 = vmatpush.msra.mxu0 %v2054
    %3345 = vmatmul.f32.gmra.mxu0 %v3327
    %v3346 = vpop.f32.mrf.mxu0
    %v3347 = vadd.f32 0.0, %v3346
    %3348 = vdwg.mxu0
    %v3350 = vrot.slane %v3347, 6
    %v3351 = vrot.slane %v3347, 7
    %v3352 = vrot.slane %v3347, 1
    %v3357 = vadd.f32 %v264, %v3350
    %v3358 = vadd.f32 %v267, %v3351
    %v3359 = vadd.f32 %v270, %v3347
    %v3360 = vadd.f32 %v273, %v3352
    %v3361 = vxor.u32 %v3357, 2147483648
    %v3362 = vxor.u32 %v3358, 2147483648
    %v3363 = vxor.u32 %v3359, 2147483648
    %v3364 = vxor.u32 %v3360, 2147483648
    %v3365 = vmul.f32 %v3361, 1.442695
    %v3366 = vpow.pop %v3365
    %v3367 = vmul.f32 %v3362, 1.442695
    %v3368 = vpow.pop %v3367
    %v3369 = vmul.f32 %v3363, 1.442695
    %v3370 = vpow.pop %v3369
    %v3371 = vmul.f32 %v3364, 1.442695
    %v3372 = vpow.pop %v3371
    %v3373 = vadd.f32 %v3366, 1.0
    %v3374 = vadd.f32 %v3368, 1.0
    %v3375 = vadd.f32 %v3370, 1.0
    %v3376 = vadd.f32 %v3372, 1.0
    %v3377 = vrcp.pop %v3373
    %v3378 = vmul.f32 %v3373, %v3377
    %v3379 = vsub.f32 1.0, %v3378
    %v3380 = vmul.f32 %v3377, %v3379
    %v3381 = vadd.f32 %v3377, %v3380
    %vm3382 = vweird.f32 %v3373
    %vm3383 = vweird.f32 %v3377
    %vm3384 = vmor %vm3382, %vm3383
    %v3385 = vsel %vm3384, %v3377, %v3381
    %v3386 = vand.u32 2147483647, %v3373
    %vm3387 = vcmp.eq.f32.partialorder %v3386, 8.507059e+37
    %v3388 = vand.u32 %v3373, 2147483648
    %v3389 = vor.u32 1.1754944e-38, %v3388
    %v3390 = vsel %vm3387, %v3389, %v3385
    %v3391 = vmul.f32 1.0, %v3390
    %v3392 = vrcp.pop %v3374
    %v3393 = vmul.f32 %v3374, %v3392
    %v3394 = vsub.f32 1.0, %v3393
    %v3395 = vmul.f32 %v3392, %v3394
    %v3396 = vadd.f32 %v3392, %v3395
    %vm3397 = vweird.f32 %v3374
    %vm3398 = vweird.f32 %v3392
    %vm3399 = vmor %vm3397, %vm3398
    %v3400 = vsel %vm3399, %v3392, %v3396
    %v3401 = vand.u32 2147483647, %v3374
    %vm3402 = vcmp.eq.f32.partialorder %v3401, 8.507059e+37
    %v3403 = vand.u32 %v3374, 2147483648
    %v3404 = vor.u32 1.1754944e-38, %v3403
    %v3405 = vsel %vm3402, %v3404, %v3400
    %v3406 = vmul.f32 1.0, %v3405
    %v3407 = vrcp.pop %v3375
    %v3408 = vmul.f32 %v3375, %v3407
    %v3409 = vsub.f32 1.0, %v3408
    %v3410 = vmul.f32 %v3407, %v3409
    %v3411 = vadd.f32 %v3407, %v3410
    %vm3412 = vweird.f32 %v3375
    %vm3413 = vweird.f32 %v3407
    %vm3414 = vmor %vm3412, %vm3413
    %v3415 = vsel %vm3414, %v3407, %v3411
    %v3416 = vand.u32 2147483647, %v3375
    %vm3417 = vcmp.eq.f32.partialorder %v3416, 8.507059e+37
    %v3418 = vand.u32 %v3375, 2147483648
    %v3419 = vor.u32 1.1754944e-38, %v3418
    %v3420 = vsel %vm3417, %v3419, %v3415
    %v3421 = vmul.f32 1.0, %v3420
    %v3422 = vrcp.pop %v3376
    %v3423 = vmul.f32 %v3376, %v3422
    %v3424 = vsub.f32 1.0, %v3423
    %v3425 = vmul.f32 %v3422, %v3424
    %v3426 = vadd.f32 %v3422, %v3425
    %vm3427 = vweird.f32 %v3376
    %vm3428 = vweird.f32 %v3422
    %vm3429 = vmor %vm3427, %vm3428
    %v3430 = vsel %vm3429, %v3422, %v3426
    %v3431 = vand.u32 2147483647, %v3376
    %vm3432 = vcmp.eq.f32.partialorder %v3431, 8.507059e+37
    %v3433 = vand.u32 %v3376, 2147483648
    %v3434 = vor.u32 1.1754944e-38, %v3433
    %v3435 = vsel %vm3432, %v3434, %v3430
    %v3436 = vmul.f32 1.0, %v3435
    %v3437 = vtanh.pop %v3357
    %v3438 = vtanh.pop %v3358
    %v3439 = vtanh.pop %v3359
    %v3440 = vtanh.pop %v3360
    %v3442 = vrot.slane %v3302, 6
    %v3443 = vrot.slane %v3302, 7
    %v3444 = vrot.slane %v3302, 1
    %3445 = vrot.lane.b32.xlu0 %v3442, 32
    %v3446 = vpop.permute.xlu0 %3445
    %3447 = vrot.lane.b32.xlu0 %v3443, 32
    %v3448 = vpop.permute.xlu0 %3447
    %3449 = vrot.lane.b32.xlu0 %v3302, 32
    %v3450 = vpop.permute.xlu0 %3449
    %3451 = vrot.lane.b32.xlu0 %v3444, 32
    %v3452 = vpop.permute.xlu0 %3451
    %v3457 = vmul.f32 %v3391, %v3446
    %v3458 = vmul.f32 %v3406, %v3448
    %v3459 = vmul.f32 %v3421, %v3450
    %v3460 = vmul.f32 %v3436, %v3452
    %3465 = vrot.lane.b32.xlu0 %v3437, 64
    %v3466 = vpop.permute.xlu0 %3465
    %3467 = vrot.lane.b32.xlu0 %v3438, 64
    %v3468 = vpop.permute.xlu0 %3467
    %3469 = vrot.lane.b32.xlu0 %v3439, 64
    %v3470 = vpop.permute.xlu0 %3469
    %3471 = vrot.lane.b32.xlu0 %v3440, 64
    %v3472 = vpop.permute.xlu0 %3471
    %v3477 = vmul.f32 %v3391, %v3466
    %v3478 = vmul.f32 %v3406, %v3468
    %v3479 = vmul.f32 %v3421, %v3470
    %v3480 = vmul.f32 %v3436, %v3472
    %3485 = vrot.lane.b32.xlu0 %v3477, 32
    %v3486 = vpop.permute.xlu0 %3485
    %3487 = vrot.lane.b32.xlu0 %v3478, 32
    %v3488 = vpop.permute.xlu0 %3487
    %3489 = vrot.lane.b32.xlu0 %v3479, 32
    %v3490 = vpop.permute.xlu0 %3489
    %3491 = vrot.lane.b32.xlu0 %v3480, 32
    %v3492 = vpop.permute.xlu0 %3491
    %v3497 = vadd.f32 %v3457, %v3486
    %v3498 = vadd.f32 %v3458, %v3488
    %v3499 = vadd.f32 %v3459, %v3490
    %v3500 = vadd.f32 %v3460, %v3492
    %v3501 = vtanh.pop %v3497
    %v3502 = vtanh.pop %v3498
    %v3503 = vtanh.pop %v3499
    %v3504 = vtanh.pop %v3500
    %3509 = vrot.lane.b32.xlu0 %v3501, 64
    %v3510 = vpop.permute.xlu0 %3509
    %3511 = vrot.lane.b32.xlu0 %v3502, 64
    %v3512 = vpop.permute.xlu0 %3511
    %3513 = vrot.lane.b32.xlu0 %v3503, 64
    %v3514 = vpop.permute.xlu0 %3513
    %3515 = vrot.lane.b32.xlu0 %v3504, 64
    %v3516 = vpop.permute.xlu0 %3515
    %v3521 = vmul.f32 %v3391, %v3510
    %v3522 = vmul.f32 %v3406, %v3512
    %v3523 = vmul.f32 %v3421, %v3514
    %v3524 = vmul.f32 %v3436, %v3516
    %3525 = vset.pattern.permute.xlu0 2
    %3526 = vperm.xlu0 %3525, %v2239
    %v3527 = vpop.permute.xlu0 %3526
    %vm3528 = vcmp.eq.s32.totalorder %v3527, 1
    %v3533 = vrot.slane %v3521, 2
    %v3534 = vrot.slane %v3522, 1
    %v3535 = vsel %vm484, %v3534, %v3533
    %v3536 = vsel %vm487, %v3523, %v3535
    %v3537 = vrot.slane %v3524, 7
    %v3538 = vsel %vm490, %v3537, %v3536
    %3539 = vrot.lane.b32.xlu0 %v3538, 32
    %v3540 = vpop.permute.xlu0 %3539
    %v3542 = vsel %vm3528, %v3540, %v3288
    %v3547 = vrot.slane %v3497, 2
    %v3548 = vrot.slane %v3498, 1
    %v3549 = vsel %vm484, %v3548, %v3547
    %v3550 = vsel %vm487, %v3499, %v3549
    %v3551 = vrot.slane %v3500, 7
    %v3552 = vsel %vm490, %v3551, %v3550
    %3553 = vrot.lane.b32.xlu0 %v3552, 96
    %v3554 = vpop.permute.xlu0 %3553
    %v3556 = vsel %vm3528, %v3554, %v3302
    %v3558 = vrot.slane %v3542, 1
    %v3559 = vrot.slane %v3542, 2
    %v3560 = vrot.slane %v3542, 3
    %v3561 = vperm.slane %v3542, 0
    %v3562 = vperm.slane %v3558, 0
    %v3563 = vperm.slane %v3559, 0
    %v3564 = vperm.slane %v3560, 0
    %3565 = vrot.lane.b32.xlu0 %v3561, 32
    %v3566 = vpop.permute.xlu0 %3565
    %3567 = vrot.lane.b32.xlu0 %v3562, 32
    %v3568 = vpop.permute.xlu0 %3567
    %3569 = vrot.lane.b32.xlu0 %v3563, 32
    %v3570 = vpop.permute.xlu0 %3569
    %3571 = vrot.lane.b32.xlu0 %v3564, 32
    %v3572 = vpop.permute.xlu0 %3571
    %3577 = vst.msk [vmem:[#allocation2 + $0x2] sm:$0x1] %vm2294, %v3566
    %3578 = vst.msk [vmem:[#allocation2 + $0xa] sm:$0x1] %vm2294, %v3568
    %3579 = vst.msk [vmem:[#allocation2 + $0x12] sm:$0x1] %vm2294, %v3570
    %3580 = vst.msk [vmem:[#allocation2 + $0x1a] sm:$0x1] %vm2294, %v3572
    %v3581 = vsel %vm204, %v3542, 0
    %3583 = vmatpush.msra.mxu0 0.0
    %3584 = vmatpush.msra.mxu0 0.0
    %3585 = vmatpush.msra.mxu0 0.0
    %3586 = vmatpush.msra.mxu0 0.0
    %3587 = vmatpush.msra.mxu0 0.0
    %3588 = vmatpush.msra.mxu0 0.0
    %3589 = vmatpush.msra.mxu0 0.0
    %3590 = vmatpush.msra.mxu0 0.0
    %3591 = vmatpush.msra.mxu0 0.0
    %3592 = vmatpush.msra.mxu0 0.0
    %3593 = vmatpush.msra.mxu0 0.0
    %3594 = vmatpush.msra.mxu0 0.0
    %3595 = vmatpush.msra.mxu0 %v2057
    %3596 = vmatpush.msra.mxu0 %v2056
    %3597 = vmatpush.msra.mxu0 %v2055
    %3598 = vmatpush.msra.mxu0 %v2054
    %3599 = vmatmul.f32.gmra.mxu0 %v3581
    %v3600 = vpop.f32.mrf.mxu0
    %v3601 = vadd.f32 0.0, %v3600
    %3602 = vdwg.mxu0
    %v3604 = vrot.slane %v3601, 7
    %v3605 = vrot.slane %v3601, 1
    %v3606 = vrot.slane %v3601, 2
    %v3611 = vadd.f32 %v264, %v3604
    %v3612 = vadd.f32 %v267, %v3601
    %v3613 = vadd.f32 %v270, %v3605
    %v3614 = vadd.f32 %v273, %v3606
    %v3615 = vxor.u32 %v3611, 2147483648
    %v3616 = vxor.u32 %v3612, 2147483648
    %v3617 = vxor.u32 %v3613, 2147483648
    %v3618 = vxor.u32 %v3614, 2147483648
    %v3619 = vmul.f32 %v3615, 1.442695
    %v3620 = vpow.pop %v3619
    %v3621 = vmul.f32 %v3616, 1.442695
    %v3622 = vpow.pop %v3621
    %v3623 = vmul.f32 %v3617, 1.442695
    %v3624 = vpow.pop %v3623
    %v3625 = vmul.f32 %v3618, 1.442695
    %v3626 = vpow.pop %v3625
    %v3627 = vadd.f32 %v3620, 1.0
    %v3628 = vadd.f32 %v3622, 1.0
    %v3629 = vadd.f32 %v3624, 1.0
    %v3630 = vadd.f32 %v3626, 1.0
    %v3631 = vrcp.pop %v3627
    %v3632 = vmul.f32 %v3627, %v3631
    %v3633 = vsub.f32 1.0, %v3632
    %v3634 = vmul.f32 %v3631, %v3633
    %v3635 = vadd.f32 %v3631, %v3634
    %vm3636 = vweird.f32 %v3627
    %vm3637 = vweird.f32 %v3631
    %vm3638 = vmor %vm3636, %vm3637
    %v3639 = vsel %vm3638, %v3631, %v3635
    %v3640 = vand.u32 2147483647, %v3627
    %vm3641 = vcmp.eq.f32.partialorder %v3640, 8.507059e+37
    %v3642 = vand.u32 %v3627, 2147483648
    %v3643 = vor.u32 1.1754944e-38, %v3642
    %v3644 = vsel %vm3641, %v3643, %v3639
    %v3645 = vmul.f32 1.0, %v3644
    %v3646 = vrcp.pop %v3628
    %v3647 = vmul.f32 %v3628, %v3646
    %v3648 = vsub.f32 1.0, %v3647
    %v3649 = vmul.f32 %v3646, %v3648
    %v3650 = vadd.f32 %v3646, %v3649
    %vm3651 = vweird.f32 %v3628
    %vm3652 = vweird.f32 %v3646
    %vm3653 = vmor %vm3651, %vm3652
    %v3654 = vsel %vm3653, %v3646, %v3650
    %v3655 = vand.u32 2147483647, %v3628
    %vm3656 = vcmp.eq.f32.partialorder %v3655, 8.507059e+37
    %v3657 = vand.u32 %v3628, 2147483648
    %v3658 = vor.u32 1.1754944e-38, %v3657
    %v3659 = vsel %vm3656, %v3658, %v3654
    %v3660 = vmul.f32 1.0, %v3659
    %v3661 = vrcp.pop %v3629
    %v3662 = vmul.f32 %v3629, %v3661
    %v3663 = vsub.f32 1.0, %v3662
    %v3664 = vmul.f32 %v3661, %v3663
    %v3665 = vadd.f32 %v3661, %v3664
    %vm3666 = vweird.f32 %v3629
    %vm3667 = vweird.f32 %v3661
    %vm3668 = vmor %vm3666, %vm3667
    %v3669 = vsel %vm3668, %v3661, %v3665
    %v3670 = vand.u32 2147483647, %v3629
    %vm3671 = vcmp.eq.f32.partialorder %v3670, 8.507059e+37
    %v3672 = vand.u32 %v3629, 2147483648
    %v3673 = vor.u32 1.1754944e-38, %v3672
    %v3674 = vsel %vm3671, %v3673, %v3669
    %v3675 = vmul.f32 1.0, %v3674
    %v3676 = vrcp.pop %v3630
    %v3677 = vmul.f32 %v3630, %v3676
    %v3678 = vsub.f32 1.0, %v3677
    %v3679 = vmul.f32 %v3676, %v3678
    %v3680 = vadd.f32 %v3676, %v3679
    %vm3681 = vweird.f32 %v3630
    %vm3682 = vweird.f32 %v3676
    %vm3683 = vmor %vm3681, %vm3682
    %v3684 = vsel %vm3683, %v3676, %v3680
    %v3685 = vand.u32 2147483647, %v3630
    %vm3686 = vcmp.eq.f32.partialorder %v3685, 8.507059e+37
    %v3687 = vand.u32 %v3630, 2147483648
    %v3688 = vor.u32 1.1754944e-38, %v3687
    %v3689 = vsel %vm3686, %v3688, %v3684
    %v3690 = vmul.f32 1.0, %v3689
    %v3691 = vtanh.pop %v3611
    %v3692 = vtanh.pop %v3612
    %v3693 = vtanh.pop %v3613
    %v3694 = vtanh.pop %v3614
    %v3696 = vrot.slane %v3556, 7
    %v3697 = vrot.slane %v3556, 1
    %v3698 = vrot.slane %v3556, 2
    %3699 = vrot.lane.b32.xlu0 %v3696, 32
    %v3700 = vpop.permute.xlu0 %3699
    %3701 = vrot.lane.b32.xlu0 %v3556, 32
    %v3702 = vpop.permute.xlu0 %3701
    %3703 = vrot.lane.b32.xlu0 %v3697, 32
    %v3704 = vpop.permute.xlu0 %3703
    %3705 = vrot.lane.b32.xlu0 %v3698, 32
    %v3706 = vpop.permute.xlu0 %3705
    %v3711 = vmul.f32 %v3645, %v3700
    %v3712 = vmul.f32 %v3660, %v3702
    %v3713 = vmul.f32 %v3675, %v3704
    %v3714 = vmul.f32 %v3690, %v3706
    %3719 = vrot.lane.b32.xlu0 %v3691, 64
    %v3720 = vpop.permute.xlu0 %3719
    %3721 = vrot.lane.b32.xlu0 %v3692, 64
    %v3722 = vpop.permute.xlu0 %3721
    %3723 = vrot.lane.b32.xlu0 %v3693, 64
    %v3724 = vpop.permute.xlu0 %3723
    %3725 = vrot.lane.b32.xlu0 %v3694, 64
    %v3726 = vpop.permute.xlu0 %3725
    %v3731 = vmul.f32 %v3645, %v3720
    %v3732 = vmul.f32 %v3660, %v3722
    %v3733 = vmul.f32 %v3675, %v3724
    %v3734 = vmul.f32 %v3690, %v3726
    %3739 = vrot.lane.b32.xlu0 %v3731, 32
    %v3740 = vpop.permute.xlu0 %3739
    %3741 = vrot.lane.b32.xlu0 %v3732, 32
    %v3742 = vpop.permute.xlu0 %3741
    %3743 = vrot.lane.b32.xlu0 %v3733, 32
    %v3744 = vpop.permute.xlu0 %3743
    %3745 = vrot.lane.b32.xlu0 %v3734, 32
    %v3746 = vpop.permute.xlu0 %3745
    %v3751 = vadd.f32 %v3711, %v3740
    %v3752 = vadd.f32 %v3712, %v3742
    %v3753 = vadd.f32 %v3713, %v3744
    %v3754 = vadd.f32 %v3714, %v3746
    %v3755 = vtanh.pop %v3751
    %v3756 = vtanh.pop %v3752
    %v3757 = vtanh.pop %v3753
    %v3758 = vtanh.pop %v3754
    %3763 = vrot.lane.b32.xlu0 %v3755, 64
    %v3764 = vpop.permute.xlu0 %3763
    %3765 = vrot.lane.b32.xlu0 %v3756, 64
    %v3766 = vpop.permute.xlu0 %3765
    %3767 = vrot.lane.b32.xlu0 %v3757, 64
    %v3768 = vpop.permute.xlu0 %3767
    %3769 = vrot.lane.b32.xlu0 %v3758, 64
    %v3770 = vpop.permute.xlu0 %3769
    %v3775 = vmul.f32 %v3645, %v3764
    %v3776 = vmul.f32 %v3660, %v3766
    %v3777 = vmul.f32 %v3675, %v3768
    %v3778 = vmul.f32 %v3690, %v3770
    %3779 = vset.pattern.permute.xlu0 1
    %3780 = vperm.xlu0 %3779, %v2239
    %v3781 = vpop.permute.xlu0 %3780
    %vm3782 = vcmp.eq.s32.totalorder %v3781, 1
    %v3787 = vrot.slane %v3775, 1
    %v3788 = vsel %vm484, %v3776, %v3787
    %v3789 = vrot.slane %v3777, 7
    %v3790 = vsel %vm487, %v3789, %v3788
    %v3791 = vrot.slane %v3778, 6
    %v3792 = vsel %vm490, %v3791, %v3790
    %3793 = vrot.lane.b32.xlu0 %v3792, 32
    %v3794 = vpop.permute.xlu0 %3793
    %v3796 = vsel %vm3782, %v3794, %v3542
    %v3801 = vrot.slane %v3751, 1
    %v3802 = vsel %vm484, %v3752, %v3801
    %v3803 = vrot.slane %v3753, 7
    %v3804 = vsel %vm487, %v3803, %v3802
    %v3805 = vrot.slane %v3754, 6
    %v3806 = vsel %vm490, %v3805, %v3804
    %3807 = vrot.lane.b32.xlu0 %v3806, 96
    %v3808 = vpop.permute.xlu0 %3807
    %v3810 = vsel %vm3782, %v3808, %v3556
    %v3812 = vrot.slane %v3796, 1
    %v3813 = vrot.slane %v3796, 2
    %v3814 = vrot.slane %v3796, 3
    %v3815 = vperm.slane %v3796, 0
    %v3816 = vperm.slane %v3812, 0
    %v3817 = vperm.slane %v3813, 0
    %v3818 = vperm.slane %v3814, 0
    %3819 = vrot.lane.b32.xlu0 %v3815, 32
    %v3820 = vpop.permute.xlu0 %3819
    %3821 = vrot.lane.b32.xlu0 %v3816, 32
    %v3822 = vpop.permute.xlu0 %3821
    %3823 = vrot.lane.b32.xlu0 %v3817, 32
    %v3824 = vpop.permute.xlu0 %3823
    %3825 = vrot.lane.b32.xlu0 %v3818, 32
    %v3826 = vpop.permute.xlu0 %3825
    %3831 = vst.msk [vmem:[#allocation2 + $0x1] sm:$0x1] %vm2294, %v3820
    %3832 = vst.msk [vmem:[#allocation2 + $0x9] sm:$0x1] %vm2294, %v3822
    %3833 = vst.msk [vmem:[#allocation2 + $0x11] sm:$0x1] %vm2294, %v3824
    %3834 = vst.msk [vmem:[#allocation2 + $0x19] sm:$0x1] %vm2294, %v3826
    %v3835 = vsel %vm204, %v3796, 0
    %3837 = vmatpush.msra.mxu0 0.0
    %3838 = vmatpush.msra.mxu0 0.0
    %3839 = vmatpush.msra.mxu0 0.0
    %3840 = vmatpush.msra.mxu0 0.0
    %3841 = vmatpush.msra.mxu0 0.0
    %3842 = vmatpush.msra.mxu0 0.0
    %3843 = vmatpush.msra.mxu0 0.0
    %3844 = vmatpush.msra.mxu0 0.0
    %3845 = vmatpush.msra.mxu0 0.0
    %3846 = vmatpush.msra.mxu0 0.0
    %3847 = vmatpush.msra.mxu0 0.0
    %3848 = vmatpush.msra.mxu0 0.0
    %3849 = vmatpush.msra.mxu0 %v2057
    %3850 = vmatpush.msra.mxu0 %v2056
    %3851 = vmatpush.msra.mxu0 %v2055
    %3852 = vmatpush.msra.mxu0 %v2054
    %3853 = vmatmul.f32.gmra.mxu0 %v3835
    %v3854 = vpop.f32.mrf.mxu0
    %v3855 = vadd.f32 0.0, %v3854
    %3856 = vdwg.mxu0
    %v3858 = vrot.slane %v3855, 1
    %v3859 = vrot.slane %v3855, 2
    %v3860 = vrot.slane %v3855, 3
    %v3865 = vadd.f32 %v264, %v3855
    %v3866 = vadd.f32 %v267, %v3858
    %v3867 = vadd.f32 %v270, %v3859
    %v3868 = vadd.f32 %v273, %v3860
    %v3869 = vxor.u32 %v3865, 2147483648
    %v3870 = vxor.u32 %v3866, 2147483648
    %v3871 = vxor.u32 %v3867, 2147483648
    %v3872 = vxor.u32 %v3868, 2147483648
    %v3873 = vmul.f32 %v3869, 1.442695
    %v3874 = vpow.pop %v3873
    %v3875 = vmul.f32 %v3870, 1.442695
    %v3876 = vpow.pop %v3875
    %v3877 = vmul.f32 %v3871, 1.442695
    %v3878 = vpow.pop %v3877
    %v3879 = vmul.f32 %v3872, 1.442695
    %v3880 = vpow.pop %v3879
    %v3881 = vadd.f32 %v3874, 1.0
    %v3882 = vadd.f32 %v3876, 1.0
    %v3883 = vadd.f32 %v3878, 1.0
    %v3884 = vadd.f32 %v3880, 1.0
    %v3885 = vrcp.pop %v3881
    %v3886 = vmul.f32 %v3881, %v3885
    %v3887 = vsub.f32 1.0, %v3886
    %v3888 = vmul.f32 %v3885, %v3887
    %v3889 = vadd.f32 %v3885, %v3888
    %vm3890 = vweird.f32 %v3881
    %vm3891 = vweird.f32 %v3885
    %vm3892 = vmor %vm3890, %vm3891
    %v3893 = vsel %vm3892, %v3885, %v3889
    %v3894 = vand.u32 2147483647, %v3881
    %vm3895 = vcmp.eq.f32.partialorder %v3894, 8.507059e+37
    %v3896 = vand.u32 %v3881, 2147483648
    %v3897 = vor.u32 1.1754944e-38, %v3896
    %v3898 = vsel %vm3895, %v3897, %v3893
    %v3899 = vmul.f32 1.0, %v3898
    %v3900 = vrcp.pop %v3882
    %v3901 = vmul.f32 %v3882, %v3900
    %v3902 = vsub.f32 1.0, %v3901
    %v3903 = vmul.f32 %v3900, %v3902
    %v3904 = vadd.f32 %v3900, %v3903
    %vm3905 = vweird.f32 %v3882
    %vm3906 = vweird.f32 %v3900
    %vm3907 = vmor %vm3905, %vm3906
    %v3908 = vsel %vm3907, %v3900, %v3904
    %v3909 = vand.u32 2147483647, %v3882
    %vm3910 = vcmp.eq.f32.partialorder %v3909, 8.507059e+37
    %v3911 = vand.u32 %v3882, 2147483648
    %v3912 = vor.u32 1.1754944e-38, %v3911
    %v3913 = vsel %vm3910, %v3912, %v3908
    %v3914 = vmul.f32 1.0, %v3913
    %v3915 = vrcp.pop %v3883
    %v3916 = vmul.f32 %v3883, %v3915
    %v3917 = vsub.f32 1.0, %v3916
    %v3918 = vmul.f32 %v3915, %v3917
    %v3919 = vadd.f32 %v3915, %v3918
    %vm3920 = vweird.f32 %v3883
    %vm3921 = vweird.f32 %v3915
    %vm3922 = vmor %vm3920, %vm3921
    %v3923 = vsel %vm3922, %v3915, %v3919
    %v3924 = vand.u32 2147483647, %v3883
    %vm3925 = vcmp.eq.f32.partialorder %v3924, 8.507059e+37
    %v3926 = vand.u32 %v3883, 2147483648
    %v3927 = vor.u32 1.1754944e-38, %v3926
    %v3928 = vsel %vm3925, %v3927, %v3923
    %v3929 = vmul.f32 1.0, %v3928
    %v3930 = vrcp.pop %v3884
    %v3931 = vmul.f32 %v3884, %v3930
    %v3932 = vsub.f32 1.0, %v3931
    %v3933 = vmul.f32 %v3930, %v3932
    %v3934 = vadd.f32 %v3930, %v3933
    %vm3935 = vweird.f32 %v3884
    %vm3936 = vweird.f32 %v3930
    %vm3937 = vmor %vm3935, %vm3936
    %v3938 = vsel %vm3937, %v3930, %v3934
    %v3939 = vand.u32 2147483647, %v3884
    %vm3940 = vcmp.eq.f32.partialorder %v3939, 8.507059e+37
    %v3941 = vand.u32 %v3884, 2147483648
    %v3942 = vor.u32 1.1754944e-38, %v3941
    %v3943 = vsel %vm3940, %v3942, %v3938
    %v3944 = vmul.f32 1.0, %v3943
    %v3945 = vtanh.pop %v3865
    %v3946 = vtanh.pop %v3866
    %v3947 = vtanh.pop %v3867
    %v3948 = vtanh.pop %v3868
    %v3950 = vrot.slane %v3810, 1
    %v3951 = vrot.slane %v3810, 2
    %v3952 = vrot.slane %v3810, 3
    %3953 = vrot.lane.b32.xlu0 %v3810, 32
    %v3954 = vpop.permute.xlu0 %3953
    %3955 = vrot.lane.b32.xlu0 %v3950, 32
    %v3956 = vpop.permute.xlu0 %3955
    %3957 = vrot.lane.b32.xlu0 %v3951, 32
    %v3958 = vpop.permute.xlu0 %3957
    %3959 = vrot.lane.b32.xlu0 %v3952, 32
    %v3960 = vpop.permute.xlu0 %3959
    %v3965 = vmul.f32 %v3899, %v3954
    %v3966 = vmul.f32 %v3914, %v3956
    %v3967 = vmul.f32 %v3929, %v3958
    %v3968 = vmul.f32 %v3944, %v3960
    %3973 = vrot.lane.b32.xlu0 %v3945, 64
    %v3974 = vpop.permute.xlu0 %3973
    %3975 = vrot.lane.b32.xlu0 %v3946, 64
    %v3976 = vpop.permute.xlu0 %3975
    %3977 = vrot.lane.b32.xlu0 %v3947, 64
    %v3978 = vpop.permute.xlu0 %3977
    %3979 = vrot.lane.b32.xlu0 %v3948, 64
    %v3980 = vpop.permute.xlu0 %3979
    %v3985 = vmul.f32 %v3899, %v3974
    %v3986 = vmul.f32 %v3914, %v3976
    %v3987 = vmul.f32 %v3929, %v3978
    %v3988 = vmul.f32 %v3944, %v3980
    %3993 = vrot.lane.b32.xlu0 %v3985, 32
    %v3994 = vpop.permute.xlu0 %3993
    %3995 = vrot.lane.b32.xlu0 %v3986, 32
    %v3996 = vpop.permute.xlu0 %3995
    %3997 = vrot.lane.b32.xlu0 %v3987, 32
    %v3998 = vpop.permute.xlu0 %3997
    %3999 = vrot.lane.b32.xlu0 %v3988, 32
    %v4000 = vpop.permute.xlu0 %3999
    %v4005 = vadd.f32 %v3965, %v3994
    %v4006 = vadd.f32 %v3966, %v3996
    %v4007 = vadd.f32 %v3967, %v3998
    %v4008 = vadd.f32 %v3968, %v4000
    %v4009 = vtanh.pop %v4005
    %v4010 = vtanh.pop %v4006
    %v4011 = vtanh.pop %v4007
    %v4012 = vtanh.pop %v4008
    %4017 = vrot.lane.b32.xlu0 %v4009, 64
    %v4018 = vpop.permute.xlu0 %4017
    %4019 = vrot.lane.b32.xlu0 %v4010, 64
    %v4020 = vpop.permute.xlu0 %4019
    %4021 = vrot.lane.b32.xlu0 %v4011, 64
    %v4022 = vpop.permute.xlu0 %4021
    %4023 = vrot.lane.b32.xlu0 %v4012, 64
    %v4024 = vpop.permute.xlu0 %4023
    %v4029 = vmul.f32 %v3899, %v4018
    %v4030 = vmul.f32 %v3914, %v4020
    %v4031 = vmul.f32 %v3929, %v4022
    %v4032 = vmul.f32 %v3944, %v4024
    %4033 = vset.pattern.permute.xlu0 0
    %4034 = vperm.xlu0 %4033, %v2239
    %v4035 = vpop.permute.xlu0 %4034
    %vm4036 = vcmp.eq.s32.totalorder %v4035, 1
    %v4041 = vrot.slane %v4030, 7
    %v4042 = vsel %vm484, %v4041, %v4029
    %v4043 = vrot.slane %v4031, 6
    %v4044 = vsel %vm487, %v4043, %v4042
    %v4045 = vrot.slane %v4032, 5
    %v4046 = vsel %vm490, %v4045, %v4044
    %4047 = vrot.lane.b32.xlu0 %v4046, 32
    %v4048 = vpop.permute.xlu0 %4047
    %v4050 = vsel %vm4036, %v4048, %v3796
    %v4052 = vrot.slane %v4050, 1
    %v4053 = vrot.slane %v4050, 2
    %v4054 = vrot.slane %v4050, 3
    %v4055 = vperm.slane %v4050, 0
    %v4056 = vperm.slane %v4052, 0
    %v4057 = vperm.slane %v4053, 0
    %v4058 = vperm.slane %v4054, 0
    %4059 = vrot.lane.b32.xlu0 %v4055, 32
    %v4060 = vpop.permute.xlu0 %4059
    %4061 = vrot.lane.b32.xlu0 %v4056, 32
    %v4062 = vpop.permute.xlu0 %4061
    %4063 = vrot.lane.b32.xlu0 %v4057, 32
    %v4064 = vpop.permute.xlu0 %4063
    %4065 = vrot.lane.b32.xlu0 %v4058, 32
    %v4066 = vpop.permute.xlu0 %4065
    %4071 = vst.msk [vmem:[#allocation2] sm:$0x1] %vm2294, %v4060
    %4072 = vst.msk [vmem:[#allocation2 + $0x8] sm:$0x1] %vm2294, %v4062
    %4073 = vst.msk [vmem:[#allocation2 + $0x10] sm:$0x1] %vm2294, %v4064
    %4074 = vst.msk [vmem:[#allocation2 + $0x18] sm:$0x1] %vm2294, %v4066
    %v4075 = vld [vmem:[#allocation2] sm:$0xff]
    %v4076 = vld [vmem:[#allocation2 + $0x8] sm:$0xff]
    %v4077 = vld [vmem:[#allocation2 + $0x10] sm:$0xff]
    %v4078 = vld [vmem:[#allocation2 + $0x18] sm:$0xff]
    %v4079 = vmul.f32 %v4075, %v164
    %v4080 = vmul.f32 %v4076, %v171
    %v4081 = vmul.f32 %v4077, %v178
    %v4082 = vmul.f32 %v4078, %v185
    %v4083 = vld [vmem:[#allocation12] sm:$0xff]
    %v4084 = vld [vmem:[#allocation12 + $0x8] sm:$0xff]
    %v4085 = vld [vmem:[#allocation12 + $0x10] sm:$0xff]
    %v4086 = vld [vmem:[#allocation12 + $0x18] sm:$0xff]
    %v4087 = vld [vmem:[#allocation12 + $0x20] sm:$0xff]
    %v4088 = vld [vmem:[#allocation12 + $0x28] sm:$0xff]
    %v4089 = vld [vmem:[#allocation12 + $0x30] sm:$0xff]
    %v4090 = vld [vmem:[#allocation12 + $0x38] sm:$0xff]
    %v4091 = vld [vmem:[#allocation12 + $0x40] sm:$0xff]
    %v4092 = vld [vmem:[#allocation12 + $0x48] sm:$0xff]
    %v4093 = vld [vmem:[#allocation12 + $0x50] sm:$0xff]
    %v4094 = vld [vmem:[#allocation12 + $0x58] sm:$0xff]
    %v4095 = vld [vmem:[#allocation12 + $0x60] sm:$0xff]
    %v4096 = vld [vmem:[#allocation12 + $0x68] sm:$0xff]
    %v4097 = vld [vmem:[#allocation12 + $0x70] sm:$0xff]
    %v4098 = vld [vmem:[#allocation12 + $0x78] sm:$0xff]
    %v4099 = vld [vmem:[%s10] sm:$0x3]
    %v4101 = vperm.slane %v4099, 0
    %v4102 = vperm.slane %v4099, 1
    %vm4105 = vcmask 523264
    %v4107 = vsel %vm4105, %v4079, 0
    %v4110 = vsel %vm4105, %v4080, 0
    %v4113 = vsel %vm4105, %v4081, 0
    %v4116 = vsel %vm4105, %v4082, 0
    %4118 = vmatpush.msra.mxu0 0.0
    %4119 = vmatpush.msra.mxu0 0.0
    %4120 = vmatpush.msra.mxu0 0.0
    %4121 = vmatpush.msra.mxu0 0.0
    %4122 = vmatpush.msra.mxu0 0.0
    %4123 = vmatpush.msra.mxu0 0.0
    %4124 = vmatpush.msra.mxu0 0.0
    %4125 = vmatpush.msra.mxu0 0.0
    %4126 = vmatpush.msra.mxu0 %v4097
    %4127 = vmatpush.msra.mxu0 %v4095
    %4128 = vmatpush.msra.mxu0 %v4093
    %4129 = vmatpush.msra.mxu0 %v4091
    %4130 = vmatpush.msra.mxu0 %v4089
    %4131 = vmatpush.msra.mxu0 %v4087
    %4132 = vmatpush.msra.mxu0 %v4085
    %4133 = vmatpush.msra.mxu0 %v4083
    %4134 = vmatmul.f32.gmra.mxu0 %v4107
    %v4135 = vpop.f32.mrf.mxu0
    %v4136 = vadd.f32 %v4101, %v4135
    %4137 = vmatmul.f32.gmra.mxu0 %v4110
    %v4138 = vpop.f32.mrf.mxu0
    %v4139 = vadd.f32 %v4101, %v4138
    %4140 = vmatmul.f32.gmra.mxu0 %v4113
    %v4141 = vpop.f32.mrf.mxu0
    %v4142 = vadd.f32 %v4101, %v4141
    %4143 = vmatmul.f32.gmra.mxu0 %v4116
    %v4144 = vpop.f32.mrf.mxu0
    %v4145 = vadd.f32 %v4101, %v4144
    %4146 = vdwg.mxu0
    %4147 = vmatpush.msra.mxu0 0.0
    %4148 = vmatpush.msra.mxu0 0.0
    %4149 = vmatpush.msra.mxu0 0.0
    %4150 = vmatpush.msra.mxu0 0.0
    %4151 = vmatpush.msra.mxu0 0.0
    %4152 = vmatpush.msra.mxu0 0.0
    %4153 = vmatpush.msra.mxu0 0.0
    %4154 = vmatpush.msra.mxu0 0.0
    %4155 = vmatpush.msra.mxu0 %v4098
    %4156 = vmatpush.msra.mxu0 %v4096
    %4157 = vmatpush.msra.mxu0 %v4094
    %4158 = vmatpush.msra.mxu0 %v4092
    %4159 = vmatpush.msra.mxu0 %v4090
    %4160 = vmatpush.msra.mxu0 %v4088
    %4161 = vmatpush.msra.mxu0 %v4086
    %4162 = vmatpush.msra.mxu0 %v4084
    %4163 = vmatmul.f32.gmra.mxu0 %v4107
    %v4164 = vpop.f32.mrf.mxu0
    %v4165 = vadd.f32 %v4102, %v4164
    %4166 = vmatmul.f32.gmra.mxu0 %v4110
    %v4167 = vpop.f32.mrf.mxu0
    %v4168 = vadd.f32 %v4102, %v4167
    %4169 = vmatmul.f32.gmra.mxu0 %v4113
    %v4170 = vpop.f32.mrf.mxu0
    %v4171 = vadd.f32 %v4102, %v4170
    %4172 = vmatmul.f32.gmra.mxu0 %v4116
    %v4173 = vpop.f32.mrf.mxu0
    %v4174 = vadd.f32 %v4102, %v4173
    %4175 = vdwg.mxu0
    %v4176 = vld [vmem:[#allocation13] sm:$0xff]
    %v4177 = vld [vmem:[#allocation13 + $0x8] sm:$0xff]
    %v4178 = vld [vmem:[#allocation13 + $0x10] sm:$0xff]
    %v4179 = vld [vmem:[#allocation13 + $0x18] sm:$0xff]
    %4180 = vmatpush.msra.mxu0 0.0
    %4181 = vmatpush.msra.mxu0 0.0
    %4182 = vmatpush.msra.mxu0 0.0
    %4183 = vmatpush.msra.mxu0 0.0
    %4184 = vmatpush.msra.mxu0 0.0
    %4185 = vmatpush.msra.mxu0 0.0
    %4186 = vmatpush.msra.mxu0 0.0
    %4187 = vmatpush.msra.mxu0 0.0
    %4188 = vmatpush.msra.mxu0 0.0
    %4189 = vmatpush.msra.mxu0 0.0
    %4190 = vmatpush.msra.mxu0 0.0
    %4191 = vmatpush.msra.mxu0 0.0
    %4192 = vmatpush.msra.mxu0 %v4179
    %4193 = vmatpush.msra.mxu0 %v4178
    %4194 = vmatpush.msra.mxu0 %v4177
    %4195 = vmatpush.msra.mxu0 %v4176
    %4196 = vmatmul.f32.gmra.mxu0 %v280
    %v4197 = vpop.f32.mrf.mxu0
    %v4198 = vadd.f32 0.0, %v4197
    %4199 = vdwg.mxu0
    %v4201 = vrot.slane %v4198, 1
    %v4202 = vrot.slane %v4198, 2
    %v4203 = vrot.slane %v4198, 3
    %v4208 = vadd.f32 %v4136, %v4198
    %v4209 = vadd.f32 %v4139, %v4201
    %v4210 = vadd.f32 %v4142, %v4202
    %v4211 = vadd.f32 %v4145, %v4203
    %v4212 = vxor.u32 %v4208, 2147483648
    %v4213 = vxor.u32 %v4209, 2147483648
    %v4214 = vxor.u32 %v4210, 2147483648
    %v4215 = vxor.u32 %v4211, 2147483648
    %v4216 = vmul.f32 %v4212, 1.442695
    %v4217 = vpow.pop %v4216
    %v4218 = vmul.f32 %v4213, 1.442695
    %v4219 = vpow.pop %v4218
    %v4220 = vmul.f32 %v4214, 1.442695
    %v4221 = vpow.pop %v4220
    %v4222 = vmul.f32 %v4215, 1.442695
    %v4223 = vpow.pop %v4222
    %v4224 = vadd.f32 %v4217, 1.0
    %v4225 = vadd.f32 %v4219, 1.0
    %v4226 = vadd.f32 %v4221, 1.0
    %v4227 = vadd.f32 %v4223, 1.0
    %v4228 = vrcp.pop %v4224
    %v4229 = vmul.f32 %v4224, %v4228
    %v4230 = vsub.f32 1.0, %v4229
    %v4231 = vmul.f32 %v4228, %v4230
    %v4232 = vadd.f32 %v4228, %v4231
    %vm4233 = vweird.f32 %v4224
    %vm4234 = vweird.f32 %v4228
    %vm4235 = vmor %vm4233, %vm4234
    %v4236 = vsel %vm4235, %v4228, %v4232
    %v4237 = vand.u32 2147483647, %v4224
    %vm4238 = vcmp.eq.f32.partialorder %v4237, 8.507059e+37
    %v4239 = vand.u32 %v4224, 2147483648
    %v4240 = vor.u32 1.1754944e-38, %v4239
    %v4241 = vsel %vm4238, %v4240, %v4236
    %v4242 = vmul.f32 1.0, %v4241
    %v4243 = vrcp.pop %v4225
    %v4244 = vmul.f32 %v4225, %v4243
    %v4245 = vsub.f32 1.0, %v4244
    %v4246 = vmul.f32 %v4243, %v4245
    %v4247 = vadd.f32 %v4243, %v4246
    %vm4248 = vweird.f32 %v4225
    %vm4249 = vweird.f32 %v4243
    %vm4250 = vmor %vm4248, %vm4249
    %v4251 = vsel %vm4250, %v4243, %v4247
    %v4252 = vand.u32 2147483647, %v4225
    %vm4253 = vcmp.eq.f32.partialorder %v4252, 8.507059e+37
    %v4254 = vand.u32 %v4225, 2147483648
    %v4255 = vor.u32 1.1754944e-38, %v4254
    %v4256 = vsel %vm4253, %v4255, %v4251
    %v4257 = vmul.f32 1.0, %v4256
    %v4258 = vrcp.pop %v4226
    %v4259 = vmul.f32 %v4226, %v4258
    %v4260 = vsub.f32 1.0, %v4259
    %v4261 = vmul.f32 %v4258, %v4260
    %v4262 = vadd.f32 %v4258, %v4261
    %vm4263 = vweird.f32 %v4226
    %vm4264 = vweird.f32 %v4258
    %vm4265 = vmor %vm4263, %vm4264
    %v4266 = vsel %vm4265, %v4258, %v4262
    %v4267 = vand.u32 2147483647, %v4226
    %vm4268 = vcmp.eq.f32.partialorder %v4267, 8.507059e+37
    %v4269 = vand.u32 %v4226, 2147483648
    %v4270 = vor.u32 1.1754944e-38, %v4269
    %v4271 = vsel %vm4268, %v4270, %v4266
    %v4272 = vmul.f32 1.0, %v4271
    %v4273 = vrcp.pop %v4227
    %v4274 = vmul.f32 %v4227, %v4273
    %v4275 = vsub.f32 1.0, %v4274
    %v4276 = vmul.f32 %v4273, %v4275
    %v4277 = vadd.f32 %v4273, %v4276
    %vm4278 = vweird.f32 %v4227
    %vm4279 = vweird.f32 %v4273
    %vm4280 = vmor %vm4278, %vm4279
    %v4281 = vsel %vm4280, %v4273, %v4277
    %v4282 = vand.u32 2147483647, %v4227
    %vm4283 = vcmp.eq.f32.partialorder %v4282, 8.507059e+37
    %v4284 = vand.u32 %v4227, 2147483648
    %v4285 = vor.u32 1.1754944e-38, %v4284
    %v4286 = vsel %vm4283, %v4285, %v4281
    %v4287 = vmul.f32 1.0, %v4286
    %v4288 = vtanh.pop %v4208
    %v4289 = vtanh.pop %v4209
    %v4290 = vtanh.pop %v4210
    %v4291 = vtanh.pop %v4211
    %v4292 = vmul.f32 %v4242, 0.0
    %v4293 = vmul.f32 %v4257, 0.0
    %v4294 = vmul.f32 %v4272, 0.0
    %v4295 = vmul.f32 %v4287, 0.0
    %4300 = vrot.lane.b32.xlu0 %v4288, 64
    %v4301 = vpop.permute.xlu0 %4300
    %4302 = vrot.lane.b32.xlu0 %v4289, 64
    %v4303 = vpop.permute.xlu0 %4302
    %4304 = vrot.lane.b32.xlu0 %v4290, 64
    %v4305 = vpop.permute.xlu0 %4304
    %4306 = vrot.lane.b32.xlu0 %v4291, 64
    %v4307 = vpop.permute.xlu0 %4306
    %v4312 = vmul.f32 %v4242, %v4301
    %v4313 = vmul.f32 %v4257, %v4303
    %v4314 = vmul.f32 %v4272, %v4305
    %v4315 = vmul.f32 %v4287, %v4307
    %4320 = vrot.lane.b32.xlu0 %v4312, 32
    %v4321 = vpop.permute.xlu0 %4320
    %4322 = vrot.lane.b32.xlu0 %v4313, 32
    %v4323 = vpop.permute.xlu0 %4322
    %4324 = vrot.lane.b32.xlu0 %v4314, 32
    %v4325 = vpop.permute.xlu0 %4324
    %4326 = vrot.lane.b32.xlu0 %v4315, 32
    %v4327 = vpop.permute.xlu0 %4326
    %v4332 = vadd.f32 %v4292, %v4321
    %v4333 = vadd.f32 %v4293, %v4323
    %v4334 = vadd.f32 %v4294, %v4325
    %v4335 = vadd.f32 %v4295, %v4327
    %v4336 = vtanh.pop %v4332
    %v4337 = vtanh.pop %v4333
    %v4338 = vtanh.pop %v4334
    %v4339 = vtanh.pop %v4335
    %4344 = vrot.lane.b32.xlu0 %v4336, 64
    %v4345 = vpop.permute.xlu0 %4344
    %4346 = vrot.lane.b32.xlu0 %v4337, 64
    %v4347 = vpop.permute.xlu0 %4346
    %4348 = vrot.lane.b32.xlu0 %v4338, 64
    %v4349 = vpop.permute.xlu0 %4348
    %4350 = vrot.lane.b32.xlu0 %v4339, 64
    %v4351 = vpop.permute.xlu0 %4350
    %v4356 = vmul.f32 %v4242, %v4345
    %v4357 = vmul.f32 %v4257, %v4347
    %v4358 = vmul.f32 %v4272, %v4349
    %v4359 = vmul.f32 %v4287, %v4351
    %4364 = vrot.lane.b32.xlu0 %v4356, 32
    %v4365 = vpop.permute.xlu0 %4364
    %4366 = vrot.lane.b32.xlu0 %v4357, 32
    %v4367 = vpop.permute.xlu0 %4366
    %4368 = vrot.lane.b32.xlu0 %v4358, 32
    %v4369 = vpop.permute.xlu0 %4368
    %4370 = vrot.lane.b32.xlu0 %v4359, 32
    %v4371 = vpop.permute.xlu0 %4370
    %4376 = vst.msk [vmem:[#allocation3] sm:$0x1] %vm478, %v4365
    %4377 = vst.msk [vmem:[#allocation3 + $0x8] sm:$0x1] %vm478, %v4367
    %4378 = vst.msk [vmem:[#allocation3 + $0x10] sm:$0x1] %vm478, %v4369
    %4379 = vst.msk [vmem:[#allocation3 + $0x18] sm:$0x1] %vm478, %v4371
    %v4380 = vrot.slane %v4357, 7
    %v4381 = vsel %vm484, %v4380, %v4356
    %v4382 = vrot.slane %v4358, 6
    %v4383 = vsel %vm487, %v4382, %v4381
    %v4384 = vrot.slane %v4359, 5
    %v4385 = vsel %vm490, %v4384, %v4383
    %4386 = vrot.lane.b32.xlu0 %v4385, 32
    %v4387 = vpop.permute.xlu0 %4386
    %v4388 = vsel %vm204, %v4387, 0
    %4390 = vmatpush.msra.mxu0 0.0
    %4391 = vmatpush.msra.mxu0 0.0
    %4392 = vmatpush.msra.mxu0 0.0
    %4393 = vmatpush.msra.mxu0 0.0
    %4394 = vmatpush.msra.mxu0 0.0
    %4395 = vmatpush.msra.mxu0 0.0
    %4396 = vmatpush.msra.mxu0 0.0
    %4397 = vmatpush.msra.mxu0 0.0
    %4398 = vmatpush.msra.mxu0 0.0
    %4399 = vmatpush.msra.mxu0 0.0
    %4400 = vmatpush.msra.mxu0 0.0
    %4401 = vmatpush.msra.mxu0 0.0
    %4402 = vmatpush.msra.mxu0 %v4179
    %4403 = vmatpush.msra.mxu0 %v4178
    %4404 = vmatpush.msra.mxu0 %v4177
    %4405 = vmatpush.msra.mxu0 %v4176
    %4406 = vmatmul.f32.gmra.mxu0 %v4388
    %v4407 = vpop.f32.mrf.mxu0
    %v4408 = vadd.f32 0.0, %v4407
    %4409 = vdwg.mxu0
    %v4411 = vrot.slane %v4408, 7
    %v4412 = vrot.slane %v4408, 1
    %v4413 = vrot.slane %v4408, 2
    %v4418 = vadd.f32 %v4136, %v4411
    %v4419 = vadd.f32 %v4139, %v4408
    %v4420 = vadd.f32 %v4142, %v4412
    %v4421 = vadd.f32 %v4145, %v4413
    %v4422 = vxor.u32 %v4418, 2147483648
    %v4423 = vxor.u32 %v4419, 2147483648
    %v4424 = vxor.u32 %v4420, 2147483648
    %v4425 = vxor.u32 %v4421, 2147483648
    %v4426 = vmul.f32 %v4422, 1.442695
    %v4427 = vpow.pop %v4426
    %v4428 = vmul.f32 %v4423, 1.442695
    %v4429 = vpow.pop %v4428
    %v4430 = vmul.f32 %v4424, 1.442695
    %v4431 = vpow.pop %v4430
    %v4432 = vmul.f32 %v4425, 1.442695
    %v4433 = vpow.pop %v4432
    %v4434 = vadd.f32 %v4427, 1.0
    %v4435 = vadd.f32 %v4429, 1.0
    %v4436 = vadd.f32 %v4431, 1.0
    %v4437 = vadd.f32 %v4433, 1.0
    %v4438 = vrcp.pop %v4434
    %v4439 = vmul.f32 %v4434, %v4438
    %v4440 = vsub.f32 1.0, %v4439
    %v4441 = vmul.f32 %v4438, %v4440
    %v4442 = vadd.f32 %v4438, %v4441
    %vm4443 = vweird.f32 %v4434
    %vm4444 = vweird.f32 %v4438
    %vm4445 = vmor %vm4443, %vm4444
    %v4446 = vsel %vm4445, %v4438, %v4442
    %v4447 = vand.u32 2147483647, %v4434
    %vm4448 = vcmp.eq.f32.partialorder %v4447, 8.507059e+37
    %v4449 = vand.u32 %v4434, 2147483648
    %v4450 = vor.u32 1.1754944e-38, %v4449
    %v4451 = vsel %vm4448, %v4450, %v4446
    %v4452 = vmul.f32 1.0, %v4451
    %v4453 = vrcp.pop %v4435
    %v4454 = vmul.f32 %v4435, %v4453
    %v4455 = vsub.f32 1.0, %v4454
    %v4456 = vmul.f32 %v4453, %v4455
    %v4457 = vadd.f32 %v4453, %v4456
    %vm4458 = vweird.f32 %v4435
    %vm4459 = vweird.f32 %v4453
    %vm4460 = vmor %vm4458, %vm4459
    %v4461 = vsel %vm4460, %v4453, %v4457
    %v4462 = vand.u32 2147483647, %v4435
    %vm4463 = vcmp.eq.f32.partialorder %v4462, 8.507059e+37
    %v4464 = vand.u32 %v4435, 2147483648
    %v4465 = vor.u32 1.1754944e-38, %v4464
    %v4466 = vsel %vm4463, %v4465, %v4461
    %v4467 = vmul.f32 1.0, %v4466
    %v4468 = vrcp.pop %v4436
    %v4469 = vmul.f32 %v4436, %v4468
    %v4470 = vsub.f32 1.0, %v4469
    %v4471 = vmul.f32 %v4468, %v4470
    %v4472 = vadd.f32 %v4468, %v4471
    %vm4473 = vweird.f32 %v4436
    %vm4474 = vweird.f32 %v4468
    %vm4475 = vmor %vm4473, %vm4474
    %v4476 = vsel %vm4475, %v4468, %v4472
    %v4477 = vand.u32 2147483647, %v4436
    %vm4478 = vcmp.eq.f32.partialorder %v4477, 8.507059e+37
    %v4479 = vand.u32 %v4436, 2147483648
    %v4480 = vor.u32 1.1754944e-38, %v4479
    %v4481 = vsel %vm4478, %v4480, %v4476
    %v4482 = vmul.f32 1.0, %v4481
    %v4483 = vrcp.pop %v4437
    %v4484 = vmul.f32 %v4437, %v4483
    %v4485 = vsub.f32 1.0, %v4484
    %v4486 = vmul.f32 %v4483, %v4485
    %v4487 = vadd.f32 %v4483, %v4486
    %vm4488 = vweird.f32 %v4437
    %vm4489 = vweird.f32 %v4483
    %vm4490 = vmor %vm4488, %vm4489
    %v4491 = vsel %vm4490, %v4483, %v4487
    %v4492 = vand.u32 2147483647, %v4437
    %vm4493 = vcmp.eq.f32.partialorder %v4492, 8.507059e+37
    %v4494 = vand.u32 %v4437, 2147483648
    %v4495 = vor.u32 1.1754944e-38, %v4494
    %v4496 = vsel %vm4493, %v4495, %v4491
    %v4497 = vmul.f32 1.0, %v4496
    %v4498 = vtanh.pop %v4418
    %v4499 = vtanh.pop %v4419
    %v4500 = vtanh.pop %v4420
    %v4501 = vtanh.pop %v4421
    %v4506 = vrot.slane %v4332, 7
    %v4507 = vrot.slane %v4333, 7
    %v4508 = vrot.slane %v4334, 7
    %v4509 = vrot.slane %v4335, 7
    %v4514 = vmul.f32 %v4452, %v4506
    %v4515 = vmul.f32 %v4467, %v4507
    %v4516 = vmul.f32 %v4482, %v4508
    %v4517 = vmul.f32 %v4497, %v4509
    %4522 = vrot.lane.b32.xlu0 %v4498, 64
    %v4523 = vpop.permute.xlu0 %4522
    %4524 = vrot.lane.b32.xlu0 %v4499, 64
    %v4525 = vpop.permute.xlu0 %4524
    %4526 = vrot.lane.b32.xlu0 %v4500, 64
    %v4527 = vpop.permute.xlu0 %4526
    %4528 = vrot.lane.b32.xlu0 %v4501, 64
    %v4529 = vpop.permute.xlu0 %4528
    %v4534 = vmul.f32 %v4452, %v4523
    %v4535 = vmul.f32 %v4467, %v4525
    %v4536 = vmul.f32 %v4482, %v4527
    %v4537 = vmul.f32 %v4497, %v4529
    %4542 = vrot.lane.b32.xlu0 %v4534, 32
    %v4543 = vpop.permute.xlu0 %4542
    %4544 = vrot.lane.b32.xlu0 %v4535, 32
    %v4545 = vpop.permute.xlu0 %4544
    %4546 = vrot.lane.b32.xlu0 %v4536, 32
    %v4547 = vpop.permute.xlu0 %4546
    %4548 = vrot.lane.b32.xlu0 %v4537, 32
    %v4549 = vpop.permute.xlu0 %4548
    %v4554 = vadd.f32 %v4514, %v4543
    %v4555 = vadd.f32 %v4515, %v4545
    %v4556 = vadd.f32 %v4516, %v4547
    %v4557 = vadd.f32 %v4517, %v4549
    %v4558 = vtanh.pop %v4554
    %v4559 = vtanh.pop %v4555
    %v4560 = vtanh.pop %v4556
    %v4561 = vtanh.pop %v4557
    %4566 = vrot.lane.b32.xlu0 %v4558, 64
    %v4567 = vpop.permute.xlu0 %4566
    %4568 = vrot.lane.b32.xlu0 %v4559, 64
    %v4569 = vpop.permute.xlu0 %4568
    %4570 = vrot.lane.b32.xlu0 %v4560, 64
    %v4571 = vpop.permute.xlu0 %4570
    %4572 = vrot.lane.b32.xlu0 %v4561, 64
    %v4573 = vpop.permute.xlu0 %4572
    %v4578 = vmul.f32 %v4452, %v4567
    %v4579 = vmul.f32 %v4467, %v4569
    %v4580 = vmul.f32 %v4482, %v4571
    %v4581 = vmul.f32 %v4497, %v4573
    %4586 = vrot.lane.b32.xlu0 %v4578, 32
    %v4587 = vpop.permute.xlu0 %4586
    %4588 = vrot.lane.b32.xlu0 %v4579, 32
    %v4589 = vpop.permute.xlu0 %4588
    %4590 = vrot.lane.b32.xlu0 %v4580, 32
    %v4591 = vpop.permute.xlu0 %4590
    %4592 = vrot.lane.b32.xlu0 %v4581, 32
    %v4593 = vpop.permute.xlu0 %4592
    %4598 = vst.msk [vmem:[#allocation3] sm:$0x2] %vm704, %v4587
    %4599 = vst.msk [vmem:[#allocation3 + $0x8] sm:$0x2] %vm704, %v4589
    %4600 = vst.msk [vmem:[#allocation3 + $0x10] sm:$0x2] %vm704, %v4591
    %4601 = vst.msk [vmem:[#allocation3 + $0x18] sm:$0x2] %vm704, %v4593
    %v4602 = vrot.slane %v4578, 1
    %v4603 = vsel %vm484, %v4579, %v4602
    %v4604 = vrot.slane %v4580, 7
    %v4605 = vsel %vm487, %v4604, %v4603
    %v4606 = vrot.slane %v4581, 6
    %v4607 = vsel %vm490, %v4606, %v4605
    %4608 = vrot.lane.b32.xlu0 %v4607, 32
    %v4609 = vpop.permute.xlu0 %4608
    %v4610 = vsel %vm204, %v4609, 0
    %4612 = vmatpush.msra.mxu0 0.0
    %4613 = vmatpush.msra.mxu0 0.0
    %4614 = vmatpush.msra.mxu0 0.0
    %4615 = vmatpush.msra.mxu0 0.0
    %4616 = vmatpush.msra.mxu0 0.0
    %4617 = vmatpush.msra.mxu0 0.0
    %4618 = vmatpush.msra.mxu0 0.0
    %4619 = vmatpush.msra.mxu0 0.0
    %4620 = vmatpush.msra.mxu0 0.0
    %4621 = vmatpush.msra.mxu0 0.0
    %4622 = vmatpush.msra.mxu0 0.0
    %4623 = vmatpush.msra.mxu0 0.0
    %4624 = vmatpush.msra.mxu0 %v4179
    %4625 = vmatpush.msra.mxu0 %v4178
    %4626 = vmatpush.msra.mxu0 %v4177
    %4627 = vmatpush.msra.mxu0 %v4176
    %4628 = vmatmul.f32.gmra.mxu0 %v4610
    %v4629 = vpop.f32.mrf.mxu0
    %v4630 = vadd.f32 0.0, %v4629
    %4631 = vdwg.mxu0
    %v4633 = vrot.slane %v4630, 6
    %v4634 = vrot.slane %v4630, 7
    %v4635 = vrot.slane %v4630, 1
    %v4640 = vadd.f32 %v4136, %v4633
    %v4641 = vadd.f32 %v4139, %v4634
    %v4642 = vadd.f32 %v4142, %v4630
    %v4643 = vadd.f32 %v4145, %v4635
    %v4644 = vxor.u32 %v4640, 2147483648
    %v4645 = vxor.u32 %v4641, 2147483648
    %v4646 = vxor.u32 %v4642, 2147483648
    %v4647 = vxor.u32 %v4643, 2147483648
    %v4648 = vmul.f32 %v4644, 1.442695
    %v4649 = vpow.pop %v4648
    %v4650 = vmul.f32 %v4645, 1.442695
    %v4651 = vpow.pop %v4650
    %v4652 = vmul.f32 %v4646, 1.442695
    %v4653 = vpow.pop %v4652
    %v4654 = vmul.f32 %v4647, 1.442695
    %v4655 = vpow.pop %v4654
    %v4656 = vadd.f32 %v4649, 1.0
    %v4657 = vadd.f32 %v4651, 1.0
    %v4658 = vadd.f32 %v4653, 1.0
    %v4659 = vadd.f32 %v4655, 1.0
    %v4660 = vrcp.pop %v4656
    %v4661 = vmul.f32 %v4656, %v4660
    %v4662 = vsub.f32 1.0, %v4661
    %v4663 = vmul.f32 %v4660, %v4662
    %v4664 = vadd.f32 %v4660, %v4663
    %vm4665 = vweird.f32 %v4656
    %vm4666 = vweird.f32 %v4660
    %vm4667 = vmor %vm4665, %vm4666
    %v4668 = vsel %vm4667, %v4660, %v4664
    %v4669 = vand.u32 2147483647, %v4656
    %vm4670 = vcmp.eq.f32.partialorder %v4669, 8.507059e+37
    %v4671 = vand.u32 %v4656, 2147483648
    %v4672 = vor.u32 1.1754944e-38, %v4671
    %v4673 = vsel %vm4670, %v4672, %v4668
    %v4674 = vmul.f32 1.0, %v4673
    %v4675 = vrcp.pop %v4657
    %v4676 = vmul.f32 %v4657, %v4675
    %v4677 = vsub.f32 1.0, %v4676
    %v4678 = vmul.f32 %v4675, %v4677
    %v4679 = vadd.f32 %v4675, %v4678
    %vm4680 = vweird.f32 %v4657
    %vm4681 = vweird.f32 %v4675
    %vm4682 = vmor %vm4680, %vm4681
    %v4683 = vsel %vm4682, %v4675, %v4679
    %v4684 = vand.u32 2147483647, %v4657
    %vm4685 = vcmp.eq.f32.partialorder %v4684, 8.507059e+37
    %v4686 = vand.u32 %v4657, 2147483648
    %v4687 = vor.u32 1.1754944e-38, %v4686
    %v4688 = vsel %vm4685, %v4687, %v4683
    %v4689 = vmul.f32 1.0, %v4688
    %v4690 = vrcp.pop %v4658
    %v4691 = vmul.f32 %v4658, %v4690
    %v4692 = vsub.f32 1.0, %v4691
    %v4693 = vmul.f32 %v4690, %v4692
    %v4694 = vadd.f32 %v4690, %v4693
    %vm4695 = vweird.f32 %v4658
    %vm4696 = vweird.f32 %v4690
    %vm4697 = vmor %vm4695, %vm4696
    %v4698 = vsel %vm4697, %v4690, %v4694
    %v4699 = vand.u32 2147483647, %v4658
    %vm4700 = vcmp.eq.f32.partialorder %v4699, 8.507059e+37
    %v4701 = vand.u32 %v4658, 2147483648
    %v4702 = vor.u32 1.1754944e-38, %v4701
    %v4703 = vsel %vm4700, %v4702, %v4698
    %v4704 = vmul.f32 1.0, %v4703
    %v4705 = vrcp.pop %v4659
    %v4706 = vmul.f32 %v4659, %v4705
    %v4707 = vsub.f32 1.0, %v4706
    %v4708 = vmul.f32 %v4705, %v4707
    %v4709 = vadd.f32 %v4705, %v4708
    %vm4710 = vweird.f32 %v4659
    %vm4711 = vweird.f32 %v4705
    %vm4712 = vmor %vm4710, %vm4711
    %v4713 = vsel %vm4712, %v4705, %v4709
    %v4714 = vand.u32 2147483647, %v4659
    %vm4715 = vcmp.eq.f32.partialorder %v4714, 8.507059e+37
    %v4716 = vand.u32 %v4659, 2147483648
    %v4717 = vor.u32 1.1754944e-38, %v4716
    %v4718 = vsel %vm4715, %v4717, %v4713
    %v4719 = vmul.f32 1.0, %v4718
    %v4720 = vtanh.pop %v4640
    %v4721 = vtanh.pop %v4641
    %v4722 = vtanh.pop %v4642
    %v4723 = vtanh.pop %v4643
    %v4728 = vrot.slane %v4554, 7
    %v4729 = vrot.slane %v4555, 7
    %v4730 = vrot.slane %v4556, 7
    %v4731 = vrot.slane %v4557, 7
    %v4736 = vmul.f32 %v4674, %v4728
    %v4737 = vmul.f32 %v4689, %v4729
    %v4738 = vmul.f32 %v4704, %v4730
    %v4739 = vmul.f32 %v4719, %v4731
    %4744 = vrot.lane.b32.xlu0 %v4720, 64
    %v4745 = vpop.permute.xlu0 %4744
    %4746 = vrot.lane.b32.xlu0 %v4721, 64
    %v4747 = vpop.permute.xlu0 %4746
    %4748 = vrot.lane.b32.xlu0 %v4722, 64
    %v4749 = vpop.permute.xlu0 %4748
    %4750 = vrot.lane.b32.xlu0 %v4723, 64
    %v4751 = vpop.permute.xlu0 %4750
    %v4756 = vmul.f32 %v4674, %v4745
    %v4757 = vmul.f32 %v4689, %v4747
    %v4758 = vmul.f32 %v4704, %v4749
    %v4759 = vmul.f32 %v4719, %v4751
    %4764 = vrot.lane.b32.xlu0 %v4756, 32
    %v4765 = vpop.permute.xlu0 %4764
    %4766 = vrot.lane.b32.xlu0 %v4757, 32
    %v4767 = vpop.permute.xlu0 %4766
    %4768 = vrot.lane.b32.xlu0 %v4758, 32
    %v4769 = vpop.permute.xlu0 %4768
    %4770 = vrot.lane.b32.xlu0 %v4759, 32
    %v4771 = vpop.permute.xlu0 %4770
    %v4776 = vadd.f32 %v4736, %v4765
    %v4777 = vadd.f32 %v4737, %v4767
    %v4778 = vadd.f32 %v4738, %v4769
    %v4779 = vadd.f32 %v4739, %v4771
    %v4780 = vtanh.pop %v4776
    %v4781 = vtanh.pop %v4777
    %v4782 = vtanh.pop %v4778
    %v4783 = vtanh.pop %v4779
    %4788 = vrot.lane.b32.xlu0 %v4780, 64
    %v4789 = vpop.permute.xlu0 %4788
    %4790 = vrot.lane.b32.xlu0 %v4781, 64
    %v4791 = vpop.permute.xlu0 %4790
    %4792 = vrot.lane.b32.xlu0 %v4782, 64
    %v4793 = vpop.permute.xlu0 %4792
    %4794 = vrot.lane.b32.xlu0 %v4783, 64
    %v4795 = vpop.permute.xlu0 %4794
    %v4800 = vmul.f32 %v4674, %v4789
    %v4801 = vmul.f32 %v4689, %v4791
    %v4802 = vmul.f32 %v4704, %v4793
    %v4803 = vmul.f32 %v4719, %v4795
    %4808 = vrot.lane.b32.xlu0 %v4800, 32
    %v4809 = vpop.permute.xlu0 %4808
    %4810 = vrot.lane.b32.xlu0 %v4801, 32
    %v4811 = vpop.permute.xlu0 %4810
    %4812 = vrot.lane.b32.xlu0 %v4802, 32
    %v4813 = vpop.permute.xlu0 %4812
    %4814 = vrot.lane.b32.xlu0 %v4803, 32
    %v4815 = vpop.permute.xlu0 %4814
    %4820 = vst.msk [vmem:[#allocation3] sm:$0x4] %vm927, %v4809
    %4821 = vst.msk [vmem:[#allocation3 + $0x8] sm:$0x4] %vm927, %v4811
    %4822 = vst.msk [vmem:[#allocation3 + $0x10] sm:$0x4] %vm927, %v4813
    %4823 = vst.msk [vmem:[#allocation3 + $0x18] sm:$0x4] %vm927, %v4815
    %v4824 = vrot.slane %v4800, 2
    %v4825 = vrot.slane %v4801, 1
    %v4826 = vsel %vm484, %v4825, %v4824
    %v4827 = vsel %vm487, %v4802, %v4826
    %v4828 = vrot.slane %v4803, 7
    %v4829 = vsel %vm490, %v4828, %v4827
    %4830 = vrot.lane.b32.xlu0 %v4829, 32
    %v4831 = vpop.permute.xlu0 %4830
    %v4832 = vsel %vm204, %v4831, 0
    %4834 = vmatpush.msra.mxu0 0.0
    %4835 = vmatpush.msra.mxu0 0.0
    %4836 = vmatpush.msra.mxu0 0.0
    %4837 = vmatpush.msra.mxu0 0.0
    %4838 = vmatpush.msra.mxu0 0.0
    %4839 = vmatpush.msra.mxu0 0.0
    %4840 = vmatpush.msra.mxu0 0.0
    %4841 = vmatpush.msra.mxu0 0.0
    %4842 = vmatpush.msra.mxu0 0.0
    %4843 = vmatpush.msra.mxu0 0.0
    %4844 = vmatpush.msra.mxu0 0.0
    %4845 = vmatpush.msra.mxu0 0.0
    %4846 = vmatpush.msra.mxu0 %v4179
    %4847 = vmatpush.msra.mxu0 %v4178
    %4848 = vmatpush.msra.mxu0 %v4177
    %4849 = vmatpush.msra.mxu0 %v4176
    %4850 = vmatmul.f32.gmra.mxu0 %v4832
    %v4851 = vpop.f32.mrf.mxu0
    %v4852 = vadd.f32 0.0, %v4851
    %4853 = vdwg.mxu0
    %v4855 = vrot.slane %v4852, 5
    %v4856 = vrot.slane %v4852, 6
    %v4857 = vrot.slane %v4852, 7
    %v4862 = vadd.f32 %v4136, %v4855
    %v4863 = vadd.f32 %v4139, %v4856
    %v4864 = vadd.f32 %v4142, %v4857
    %v4865 = vadd.f32 %v4145, %v4852
    %v4866 = vxor.u32 %v4862, 2147483648
    %v4867 = vxor.u32 %v4863, 2147483648
    %v4868 = vxor.u32 %v4864, 2147483648
    %v4869 = vxor.u32 %v4865, 2147483648
    %v4870 = vmul.f32 %v4866, 1.442695
    %v4871 = vpow.pop %v4870
    %v4872 = vmul.f32 %v4867, 1.442695
    %v4873 = vpow.pop %v4872
    %v4874 = vmul.f32 %v4868, 1.442695
    %v4875 = vpow.pop %v4874
    %v4876 = vmul.f32 %v4869, 1.442695
    %v4877 = vpow.pop %v4876
    %v4878 = vadd.f32 %v4871, 1.0
    %v4879 = vadd.f32 %v4873, 1.0
    %v4880 = vadd.f32 %v4875, 1.0
    %v4881 = vadd.f32 %v4877, 1.0
    %v4882 = vrcp.pop %v4878
    %v4883 = vmul.f32 %v4878, %v4882
    %v4884 = vsub.f32 1.0, %v4883
    %v4885 = vmul.f32 %v4882, %v4884
    %v4886 = vadd.f32 %v4882, %v4885
    %vm4887 = vweird.f32 %v4878
    %vm4888 = vweird.f32 %v4882
    %vm4889 = vmor %vm4887, %vm4888
    %v4890 = vsel %vm4889, %v4882, %v4886
    %v4891 = vand.u32 2147483647, %v4878
    %vm4892 = vcmp.eq.f32.partialorder %v4891, 8.507059e+37
    %v4893 = vand.u32 %v4878, 2147483648
    %v4894 = vor.u32 1.1754944e-38, %v4893
    %v4895 = vsel %vm4892, %v4894, %v4890
    %v4896 = vmul.f32 1.0, %v4895
    %v4897 = vrcp.pop %v4879
    %v4898 = vmul.f32 %v4879, %v4897
    %v4899 = vsub.f32 1.0, %v4898
    %v4900 = vmul.f32 %v4897, %v4899
    %v4901 = vadd.f32 %v4897, %v4900
    %vm4902 = vweird.f32 %v4879
    %vm4903 = vweird.f32 %v4897
    %vm4904 = vmor %vm4902, %vm4903
    %v4905 = vsel %vm4904, %v4897, %v4901
    %v4906 = vand.u32 2147483647, %v4879
    %vm4907 = vcmp.eq.f32.partialorder %v4906, 8.507059e+37
    %v4908 = vand.u32 %v4879, 2147483648
    %v4909 = vor.u32 1.1754944e-38, %v4908
    %v4910 = vsel %vm4907, %v4909, %v4905
    %v4911 = vmul.f32 1.0, %v4910
    %v4912 = vrcp.pop %v4880
    %v4913 = vmul.f32 %v4880, %v4912
    %v4914 = vsub.f32 1.0, %v4913
    %v4915 = vmul.f32 %v4912, %v4914
    %v4916 = vadd.f32 %v4912, %v4915
    %vm4917 = vweird.f32 %v4880
    %vm4918 = vweird.f32 %v4912
    %vm4919 = vmor %vm4917, %vm4918
    %v4920 = vsel %vm4919, %v4912, %v4916
    %v4921 = vand.u32 2147483647, %v4880
    %vm4922 = vcmp.eq.f32.partialorder %v4921, 8.507059e+37
    %v4923 = vand.u32 %v4880, 2147483648
    %v4924 = vor.u32 1.1754944e-38, %v4923
    %v4925 = vsel %vm4922, %v4924, %v4920
    %v4926 = vmul.f32 1.0, %v4925
    %v4927 = vrcp.pop %v4881
    %v4928 = vmul.f32 %v4881, %v4927
    %v4929 = vsub.f32 1.0, %v4928
    %v4930 = vmul.f32 %v4927, %v4929
    %v4931 = vadd.f32 %v4927, %v4930
    %vm4932 = vweird.f32 %v4881
    %vm4933 = vweird.f32 %v4927
    %vm4934 = vmor %vm4932, %vm4933
    %v4935 = vsel %vm4934, %v4927, %v4931
    %v4936 = vand.u32 2147483647, %v4881
    %vm4937 = vcmp.eq.f32.partialorder %v4936, 8.507059e+37
    %v4938 = vand.u32 %v4881, 2147483648
    %v4939 = vor.u32 1.1754944e-38, %v4938
    %v4940 = vsel %vm4937, %v4939, %v4935
    %v4941 = vmul.f32 1.0, %v4940
    %v4942 = vtanh.pop %v4862
    %v4943 = vtanh.pop %v4863
    %v4944 = vtanh.pop %v4864
    %v4945 = vtanh.pop %v4865
    %v4950 = vrot.slane %v4776, 7
    %v4951 = vrot.slane %v4777, 7
    %v4952 = vrot.slane %v4778, 7
    %v4953 = vrot.slane %v4779, 7
    %v4958 = vmul.f32 %v4896, %v4950
    %v4959 = vmul.f32 %v4911, %v4951
    %v4960 = vmul.f32 %v4926, %v4952
    %v4961 = vmul.f32 %v4941, %v4953
    %4966 = vrot.lane.b32.xlu0 %v4942, 64
    %v4967 = vpop.permute.xlu0 %4966
    %4968 = vrot.lane.b32.xlu0 %v4943, 64
    %v4969 = vpop.permute.xlu0 %4968
    %4970 = vrot.lane.b32.xlu0 %v4944, 64
    %v4971 = vpop.permute.xlu0 %4970
    %4972 = vrot.lane.b32.xlu0 %v4945, 64
    %v4973 = vpop.permute.xlu0 %4972
    %v4978 = vmul.f32 %v4896, %v4967
    %v4979 = vmul.f32 %v4911, %v4969
    %v4980 = vmul.f32 %v4926, %v4971
    %v4981 = vmul.f32 %v4941, %v4973
    %4986 = vrot.lane.b32.xlu0 %v4978, 32
    %v4987 = vpop.permute.xlu0 %4986
    %4988 = vrot.lane.b32.xlu0 %v4979, 32
    %v4989 = vpop.permute.xlu0 %4988
    %4990 = vrot.lane.b32.xlu0 %v4980, 32
    %v4991 = vpop.permute.xlu0 %4990
    %4992 = vrot.lane.b32.xlu0 %v4981, 32
    %v4993 = vpop.permute.xlu0 %4992
    %v4998 = vadd.f32 %v4958, %v4987
    %v4999 = vadd.f32 %v4959, %v4989
    %v5000 = vadd.f32 %v4960, %v4991
    %v5001 = vadd.f32 %v4961, %v4993
    %v5002 = vtanh.pop %v4998
    %v5003 = vtanh.pop %v4999
    %v5004 = vtanh.pop %v5000
    %v5005 = vtanh.pop %v5001
    %5010 = vrot.lane.b32.xlu0 %v5002, 64
    %v5011 = vpop.permute.xlu0 %5010
    %5012 = vrot.lane.b32.xlu0 %v5003, 64
    %v5013 = vpop.permute.xlu0 %5012
    %5014 = vrot.lane.b32.xlu0 %v5004, 64
    %v5015 = vpop.permute.xlu0 %5014
    %5016 = vrot.lane.b32.xlu0 %v5005, 64
    %v5017 = vpop.permute.xlu0 %5016
    %v5022 = vmul.f32 %v4896, %v5011
    %v5023 = vmul.f32 %v4911, %v5013
    %v5024 = vmul.f32 %v4926, %v5015
    %v5025 = vmul.f32 %v4941, %v5017
    %5030 = vrot.lane.b32.xlu0 %v5022, 32
    %v5031 = vpop.permute.xlu0 %5030
    %5032 = vrot.lane.b32.xlu0 %v5023, 32
    %v5033 = vpop.permute.xlu0 %5032
    %5034 = vrot.lane.b32.xlu0 %v5024, 32
    %v5035 = vpop.permute.xlu0 %5034
    %5036 = vrot.lane.b32.xlu0 %v5025, 32
    %v5037 = vpop.permute.xlu0 %5036
    %5042 = vst.msk [vmem:[#allocation3] sm:$0x8] %vm1150, %v5031
    %5043 = vst.msk [vmem:[#allocation3 + $0x8] sm:$0x8] %vm1150, %v5033
    %5044 = vst.msk [vmem:[#allocation3 + $0x10] sm:$0x8] %vm1150, %v5035
    %5045 = vst.msk [vmem:[#allocation3 + $0x18] sm:$0x8] %vm1150, %v5037
    %v5046 = vrot.slane %v5022, 3
    %v5047 = vrot.slane %v5023, 2
    %v5048 = vsel %vm484, %v5047, %v5046
    %v5049 = vrot.slane %v5024, 1
    %v5050 = vsel %vm487, %v5049, %v5048
    %v5051 = vsel %vm490, %v5025, %v5050
    %5052 = vrot.lane.b32.xlu0 %v5051, 32
    %v5053 = vpop.permute.xlu0 %5052
    %v5054 = vsel %vm204, %v5053, 0
    %5056 = vmatpush.msra.mxu0 0.0
    %5057 = vmatpush.msra.mxu0 0.0
    %5058 = vmatpush.msra.mxu0 0.0
    %5059 = vmatpush.msra.mxu0 0.0
    %5060 = vmatpush.msra.mxu0 0.0
    %5061 = vmatpush.msra.mxu0 0.0
    %5062 = vmatpush.msra.mxu0 0.0
    %5063 = vmatpush.msra.mxu0 0.0
    %5064 = vmatpush.msra.mxu0 0.0
    %5065 = vmatpush.msra.mxu0 0.0
    %5066 = vmatpush.msra.mxu0 0.0
    %5067 = vmatpush.msra.mxu0 0.0
    %5068 = vmatpush.msra.mxu0 %v4179
    %5069 = vmatpush.msra.mxu0 %v4178
    %5070 = vmatpush.msra.mxu0 %v4177
    %5071 = vmatpush.msra.mxu0 %v4176
    %5072 = vmatmul.f32.gmra.mxu0 %v5054
    %v5073 = vpop.f32.mrf.mxu0
    %v5074 = vadd.f32 0.0, %v5073
    %5075 = vdwg.mxu0
    %v5077 = vrot.slane %v5074, 4
    %v5078 = vrot.slane %v5074, 5
    %v5079 = vrot.slane %v5074, 6
    %v5080 = vrot.slane %v5074, 7
    %v5085 = vadd.f32 %v4136, %v5077
    %v5086 = vadd.f32 %v4139, %v5078
    %v5087 = vadd.f32 %v4142, %v5079
    %v5088 = vadd.f32 %v4145, %v5080
    %v5089 = vxor.u32 %v5085, 2147483648
    %v5090 = vxor.u32 %v5086, 2147483648
    %v5091 = vxor.u32 %v5087, 2147483648
    %v5092 = vxor.u32 %v5088, 2147483648
    %v5093 = vmul.f32 %v5089, 1.442695
    %v5094 = vpow.pop %v5093
    %v5095 = vmul.f32 %v5090, 1.442695
    %v5096 = vpow.pop %v5095
    %v5097 = vmul.f32 %v5091, 1.442695
    %v5098 = vpow.pop %v5097
    %v5099 = vmul.f32 %v5092, 1.442695
    %v5100 = vpow.pop %v5099
    %v5101 = vadd.f32 %v5094, 1.0
    %v5102 = vadd.f32 %v5096, 1.0
    %v5103 = vadd.f32 %v5098, 1.0
    %v5104 = vadd.f32 %v5100, 1.0
    %v5105 = vrcp.pop %v5101
    %v5106 = vmul.f32 %v5101, %v5105
    %v5107 = vsub.f32 1.0, %v5106
    %v5108 = vmul.f32 %v5105, %v5107
    %v5109 = vadd.f32 %v5105, %v5108
    %vm5110 = vweird.f32 %v5101
    %vm5111 = vweird.f32 %v5105
    %vm5112 = vmor %vm5110, %vm5111
    %v5113 = vsel %vm5112, %v5105, %v5109
    %v5114 = vand.u32 2147483647, %v5101
    %vm5115 = vcmp.eq.f32.partialorder %v5114, 8.507059e+37
    %v5116 = vand.u32 %v5101, 2147483648
    %v5117 = vor.u32 1.1754944e-38, %v5116
    %v5118 = vsel %vm5115, %v5117, %v5113
    %v5119 = vmul.f32 1.0, %v5118
    %v5120 = vrcp.pop %v5102
    %v5121 = vmul.f32 %v5102, %v5120
    %v5122 = vsub.f32 1.0, %v5121
    %v5123 = vmul.f32 %v5120, %v5122
    %v5124 = vadd.f32 %v5120, %v5123
    %vm5125 = vweird.f32 %v5102
    %vm5126 = vweird.f32 %v5120
    %vm5127 = vmor %vm5125, %vm5126
    %v5128 = vsel %vm5127, %v5120, %v5124
    %v5129 = vand.u32 2147483647, %v5102
    %vm5130 = vcmp.eq.f32.partialorder %v5129, 8.507059e+37
    %v5131 = vand.u32 %v5102, 2147483648
    %v5132 = vor.u32 1.1754944e-38, %v5131
    %v5133 = vsel %vm5130, %v5132, %v5128
    %v5134 = vmul.f32 1.0, %v5133
    %v5135 = vrcp.pop %v5103
    %v5136 = vmul.f32 %v5103, %v5135
    %v5137 = vsub.f32 1.0, %v5136
    %v5138 = vmul.f32 %v5135, %v5137
    %v5139 = vadd.f32 %v5135, %v5138
    %vm5140 = vweird.f32 %v5103
    %vm5141 = vweird.f32 %v5135
    %vm5142 = vmor %vm5140, %vm5141
    %v5143 = vsel %vm5142, %v5135, %v5139
    %v5144 = vand.u32 2147483647, %v5103
    %vm5145 = vcmp.eq.f32.partialorder %v5144, 8.507059e+37
    %v5146 = vand.u32 %v5103, 2147483648
    %v5147 = vor.u32 1.1754944e-38, %v5146
    %v5148 = vsel %vm5145, %v5147, %v5143
    %v5149 = vmul.f32 1.0, %v5148
    %v5150 = vrcp.pop %v5104
    %v5151 = vmul.f32 %v5104, %v5150
    %v5152 = vsub.f32 1.0, %v5151
    %v5153 = vmul.f32 %v5150, %v5152
    %v5154 = vadd.f32 %v5150, %v5153
    %vm5155 = vweird.f32 %v5104
    %vm5156 = vweird.f32 %v5150
    %vm5157 = vmor %vm5155, %vm5156
    %v5158 = vsel %vm5157, %v5150, %v5154
    %v5159 = vand.u32 2147483647, %v5104
    %vm5160 = vcmp.eq.f32.partialorder %v5159, 8.507059e+37
    %v5161 = vand.u32 %v5104, 2147483648
    %v5162 = vor.u32 1.1754944e-38, %v5161
    %v5163 = vsel %vm5160, %v5162, %v5158
    %v5164 = vmul.f32 1.0, %v5163
    %v5165 = vtanh.pop %v5085
    %v5166 = vtanh.pop %v5086
    %v5167 = vtanh.pop %v5087
    %v5168 = vtanh.pop %v5088
    %v5173 = vrot.slane %v4998, 7
    %v5174 = vrot.slane %v4999, 7
    %v5175 = vrot.slane %v5000, 7
    %v5176 = vrot.slane %v5001, 7
    %v5181 = vmul.f32 %v5119, %v5173
    %v5182 = vmul.f32 %v5134, %v5174
    %v5183 = vmul.f32 %v5149, %v5175
    %v5184 = vmul.f32 %v5164, %v5176
    %5189 = vrot.lane.b32.xlu0 %v5165, 64
    %v5190 = vpop.permute.xlu0 %5189
    %5191 = vrot.lane.b32.xlu0 %v5166, 64
    %v5192 = vpop.permute.xlu0 %5191
    %5193 = vrot.lane.b32.xlu0 %v5167, 64
    %v5194 = vpop.permute.xlu0 %5193
    %5195 = vrot.lane.b32.xlu0 %v5168, 64
    %v5196 = vpop.permute.xlu0 %5195
    %v5201 = vmul.f32 %v5119, %v5190
    %v5202 = vmul.f32 %v5134, %v5192
    %v5203 = vmul.f32 %v5149, %v5194
    %v5204 = vmul.f32 %v5164, %v5196
    %5209 = vrot.lane.b32.xlu0 %v5201, 32
    %v5210 = vpop.permute.xlu0 %5209
    %5211 = vrot.lane.b32.xlu0 %v5202, 32
    %v5212 = vpop.permute.xlu0 %5211
    %5213 = vrot.lane.b32.xlu0 %v5203, 32
    %v5214 = vpop.permute.xlu0 %5213
    %5215 = vrot.lane.b32.xlu0 %v5204, 32
    %v5216 = vpop.permute.xlu0 %5215
    %v5221 = vadd.f32 %v5181, %v5210
    %v5222 = vadd.f32 %v5182, %v5212
    %v5223 = vadd.f32 %v5183, %v5214
    %v5224 = vadd.f32 %v5184, %v5216
    %v5225 = vtanh.pop %v5221
    %v5226 = vtanh.pop %v5222
    %v5227 = vtanh.pop %v5223
    %v5228 = vtanh.pop %v5224
    %5233 = vrot.lane.b32.xlu0 %v5225, 64
    %v5234 = vpop.permute.xlu0 %5233
    %5235 = vrot.lane.b32.xlu0 %v5226, 64
    %v5236 = vpop.permute.xlu0 %5235
    %5237 = vrot.lane.b32.xlu0 %v5227, 64
    %v5238 = vpop.permute.xlu0 %5237
    %5239 = vrot.lane.b32.xlu0 %v5228, 64
    %v5240 = vpop.permute.xlu0 %5239
    %v5245 = vmul.f32 %v5119, %v5234
    %v5246 = vmul.f32 %v5134, %v5236
    %v5247 = vmul.f32 %v5149, %v5238
    %v5248 = vmul.f32 %v5164, %v5240
    %5253 = vrot.lane.b32.xlu0 %v5245, 32
    %v5254 = vpop.permute.xlu0 %5253
    %5255 = vrot.lane.b32.xlu0 %v5246, 32
    %v5256 = vpop.permute.xlu0 %5255
    %5257 = vrot.lane.b32.xlu0 %v5247, 32
    %v5258 = vpop.permute.xlu0 %5257
    %5259 = vrot.lane.b32.xlu0 %v5248, 32
    %v5260 = vpop.permute.xlu0 %5259
    %5265 = vst.msk [vmem:[#allocation3] sm:$0x10] %vm1374, %v5254
    %5266 = vst.msk [vmem:[#allocation3 + $0x8] sm:$0x10] %vm1374, %v5256
    %5267 = vst.msk [vmem:[#allocation3 + $0x10] sm:$0x10] %vm1374, %v5258
    %5268 = vst.msk [vmem:[#allocation3 + $0x18] sm:$0x10] %vm1374, %v5260
    %v5269 = vrot.slane %v5245, 4
    %v5270 = vrot.slane %v5246, 3
    %v5271 = vsel %vm484, %v5270, %v5269
    %v5272 = vrot.slane %v5247, 2
    %v5273 = vsel %vm487, %v5272, %v5271
    %v5274 = vrot.slane %v5248, 1
    %v5275 = vsel %vm490, %v5274, %v5273
    %5276 = vrot.lane.b32.xlu0 %v5275, 32
    %v5277 = vpop.permute.xlu0 %5276
    %v5278 = vsel %vm204, %v5277, 0
    %5280 = vmatpush.msra.mxu0 0.0
    %5281 = vmatpush.msra.mxu0 0.0
    %5282 = vmatpush.msra.mxu0 0.0
    %5283 = vmatpush.msra.mxu0 0.0
    %5284 = vmatpush.msra.mxu0 0.0
    %5285 = vmatpush.msra.mxu0 0.0
    %5286 = vmatpush.msra.mxu0 0.0
    %5287 = vmatpush.msra.mxu0 0.0
    %5288 = vmatpush.msra.mxu0 0.0
    %5289 = vmatpush.msra.mxu0 0.0
    %5290 = vmatpush.msra.mxu0 0.0
    %5291 = vmatpush.msra.mxu0 0.0
    %5292 = vmatpush.msra.mxu0 %v4179
    %5293 = vmatpush.msra.mxu0 %v4178
    %5294 = vmatpush.msra.mxu0 %v4177
    %5295 = vmatpush.msra.mxu0 %v4176
    %5296 = vmatmul.f32.gmra.mxu0 %v5278
    %v5297 = vpop.f32.mrf.mxu0
    %v5298 = vadd.f32 0.0, %v5297
    %5299 = vdwg.mxu0
    %v5301 = vrot.slane %v5298, 3
    %v5302 = vrot.slane %v5298, 4
    %v5303 = vrot.slane %v5298, 5
    %v5304 = vrot.slane %v5298, 6
    %v5309 = vadd.f32 %v4136, %v5301
    %v5310 = vadd.f32 %v4139, %v5302
    %v5311 = vadd.f32 %v4142, %v5303
    %v5312 = vadd.f32 %v4145, %v5304
    %v5313 = vxor.u32 %v5309, 2147483648
    %v5314 = vxor.u32 %v5310, 2147483648
    %v5315 = vxor.u32 %v5311, 2147483648
    %v5316 = vxor.u32 %v5312, 2147483648
    %v5317 = vmul.f32 %v5313, 1.442695
    %v5318 = vpow.pop %v5317
    %v5319 = vmul.f32 %v5314, 1.442695
    %v5320 = vpow.pop %v5319
    %v5321 = vmul.f32 %v5315, 1.442695
    %v5322 = vpow.pop %v5321
    %v5323 = vmul.f32 %v5316, 1.442695
    %v5324 = vpow.pop %v5323
    %v5325 = vadd.f32 %v5318, 1.0
    %v5326 = vadd.f32 %v5320, 1.0
    %v5327 = vadd.f32 %v5322, 1.0
    %v5328 = vadd.f32 %v5324, 1.0
    %v5329 = vrcp.pop %v5325
    %v5330 = vmul.f32 %v5325, %v5329
    %v5331 = vsub.f32 1.0, %v5330
    %v5332 = vmul.f32 %v5329, %v5331
    %v5333 = vadd.f32 %v5329, %v5332
    %vm5334 = vweird.f32 %v5325
    %vm5335 = vweird.f32 %v5329
    %vm5336 = vmor %vm5334, %vm5335
    %v5337 = vsel %vm5336, %v5329, %v5333
    %v5338 = vand.u32 2147483647, %v5325
    %vm5339 = vcmp.eq.f32.partialorder %v5338, 8.507059e+37
    %v5340 = vand.u32 %v5325, 2147483648
    %v5341 = vor.u32 1.1754944e-38, %v5340
    %v5342 = vsel %vm5339, %v5341, %v5337
    %v5343 = vmul.f32 1.0, %v5342
    %v5344 = vrcp.pop %v5326
    %v5345 = vmul.f32 %v5326, %v5344
    %v5346 = vsub.f32 1.0, %v5345
    %v5347 = vmul.f32 %v5344, %v5346
    %v5348 = vadd.f32 %v5344, %v5347
    %vm5349 = vweird.f32 %v5326
    %vm5350 = vweird.f32 %v5344
    %vm5351 = vmor %vm5349, %vm5350
    %v5352 = vsel %vm5351, %v5344, %v5348
    %v5353 = vand.u32 2147483647, %v5326
    %vm5354 = vcmp.eq.f32.partialorder %v5353, 8.507059e+37
    %v5355 = vand.u32 %v5326, 2147483648
    %v5356 = vor.u32 1.1754944e-38, %v5355
    %v5357 = vsel %vm5354, %v5356, %v5352
    %v5358 = vmul.f32 1.0, %v5357
    %v5359 = vrcp.pop %v5327
    %v5360 = vmul.f32 %v5327, %v5359
    %v5361 = vsub.f32 1.0, %v5360
    %v5362 = vmul.f32 %v5359, %v5361
    %v5363 = vadd.f32 %v5359, %v5362
    %vm5364 = vweird.f32 %v5327
    %vm5365 = vweird.f32 %v5359
    %vm5366 = vmor %vm5364, %vm5365
    %v5367 = vsel %vm5366, %v5359, %v5363
    %v5368 = vand.u32 2147483647, %v5327
    %vm5369 = vcmp.eq.f32.partialorder %v5368, 8.507059e+37
    %v5370 = vand.u32 %v5327, 2147483648
    %v5371 = vor.u32 1.1754944e-38, %v5370
    %v5372 = vsel %vm5369, %v5371, %v5367
    %v5373 = vmul.f32 1.0, %v5372
    %v5374 = vrcp.pop %v5328
    %v5375 = vmul.f32 %v5328, %v5374
    %v5376 = vsub.f32 1.0, %v5375
    %v5377 = vmul.f32 %v5374, %v5376
    %v5378 = vadd.f32 %v5374, %v5377
    %vm5379 = vweird.f32 %v5328
    %vm5380 = vweird.f32 %v5374
    %vm5381 = vmor %vm5379, %vm5380
    %v5382 = vsel %vm5381, %v5374, %v5378
    %v5383 = vand.u32 2147483647, %v5328
    %vm5384 = vcmp.eq.f32.partialorder %v5383, 8.507059e+37
    %v5385 = vand.u32 %v5328, 2147483648
    %v5386 = vor.u32 1.1754944e-38, %v5385
    %v5387 = vsel %vm5384, %v5386, %v5382
    %v5388 = vmul.f32 1.0, %v5387
    %v5389 = vtanh.pop %v5309
    %v5390 = vtanh.pop %v5310
    %v5391 = vtanh.pop %v5311
    %v5392 = vtanh.pop %v5312
    %v5397 = vrot.slane %v5221, 7
    %v5398 = vrot.slane %v5222, 7
    %v5399 = vrot.slane %v5223, 7
    %v5400 = vrot.slane %v5224, 7
    %v5405 = vmul.f32 %v5343, %v5397
    %v5406 = vmul.f32 %v5358, %v5398
    %v5407 = vmul.f32 %v5373, %v5399
    %v5408 = vmul.f32 %v5388, %v5400
    %5413 = vrot.lane.b32.xlu0 %v5389, 64
    %v5414 = vpop.permute.xlu0 %5413
    %5415 = vrot.lane.b32.xlu0 %v5390, 64
    %v5416 = vpop.permute.xlu0 %5415
    %5417 = vrot.lane.b32.xlu0 %v5391, 64
    %v5418 = vpop.permute.xlu0 %5417
    %5419 = vrot.lane.b32.xlu0 %v5392, 64
    %v5420 = vpop.permute.xlu0 %5419
    %v5425 = vmul.f32 %v5343, %v5414
    %v5426 = vmul.f32 %v5358, %v5416
    %v5427 = vmul.f32 %v5373, %v5418
    %v5428 = vmul.f32 %v5388, %v5420
    %5433 = vrot.lane.b32.xlu0 %v5425, 32
    %v5434 = vpop.permute.xlu0 %5433
    %5435 = vrot.lane.b32.xlu0 %v5426, 32
    %v5436 = vpop.permute.xlu0 %5435
    %5437 = vrot.lane.b32.xlu0 %v5427, 32
    %v5438 = vpop.permute.xlu0 %5437
    %5439 = vrot.lane.b32.xlu0 %v5428, 32
    %v5440 = vpop.permute.xlu0 %5439
    %v5445 = vadd.f32 %v5405, %v5434
    %v5446 = vadd.f32 %v5406, %v5436
    %v5447 = vadd.f32 %v5407, %v5438
    %v5448 = vadd.f32 %v5408, %v5440
    %v5449 = vtanh.pop %v5445
    %v5450 = vtanh.pop %v5446
    %v5451 = vtanh.pop %v5447
    %v5452 = vtanh.pop %v5448
    %5457 = vrot.lane.b32.xlu0 %v5449, 64
    %v5458 = vpop.permute.xlu0 %5457
    %5459 = vrot.lane.b32.xlu0 %v5450, 64
    %v5460 = vpop.permute.xlu0 %5459
    %5461 = vrot.lane.b32.xlu0 %v5451, 64
    %v5462 = vpop.permute.xlu0 %5461
    %5463 = vrot.lane.b32.xlu0 %v5452, 64
    %v5464 = vpop.permute.xlu0 %5463
    %v5469 = vmul.f32 %v5343, %v5458
    %v5470 = vmul.f32 %v5358, %v5460
    %v5471 = vmul.f32 %v5373, %v5462
    %v5472 = vmul.f32 %v5388, %v5464
    %5477 = vrot.lane.b32.xlu0 %v5469, 32
    %v5478 = vpop.permute.xlu0 %5477
    %5479 = vrot.lane.b32.xlu0 %v5470, 32
    %v5480 = vpop.permute.xlu0 %5479
    %5481 = vrot.lane.b32.xlu0 %v5471, 32
    %v5482 = vpop.permute.xlu0 %5481
    %5483 = vrot.lane.b32.xlu0 %v5472, 32
    %v5484 = vpop.permute.xlu0 %5483
    %5489 = vst.msk [vmem:[#allocation3] sm:$0x20] %vm1599, %v5478
    %5490 = vst.msk [vmem:[#allocation3 + $0x8] sm:$0x20] %vm1599, %v5480
    %5491 = vst.msk [vmem:[#allocation3 + $0x10] sm:$0x20] %vm1599, %v5482
    %5492 = vst.msk [vmem:[#allocation3 + $0x18] sm:$0x20] %vm1599, %v5484
    %v5493 = vrot.slane %v5469, 5
    %v5494 = vrot.slane %v5470, 4
    %v5495 = vsel %vm484, %v5494, %v5493
    %v5496 = vrot.slane %v5471, 3
    %v5497 = vsel %vm487, %v5496, %v5495
    %v5498 = vrot.slane %v5472, 2
    %v5499 = vsel %vm490, %v5498, %v5497
    %5500 = vrot.lane.b32.xlu0 %v5499, 32
    %v5501 = vpop.permute.xlu0 %5500
    %v5502 = vsel %vm204, %v5501, 0
    %5504 = vmatpush.msra.mxu0 0.0
    %5505 = vmatpush.msra.mxu0 0.0
    %5506 = vmatpush.msra.mxu0 0.0
    %5507 = vmatpush.msra.mxu0 0.0
    %5508 = vmatpush.msra.mxu0 0.0
    %5509 = vmatpush.msra.mxu0 0.0
    %5510 = vmatpush.msra.mxu0 0.0
    %5511 = vmatpush.msra.mxu0 0.0
    %5512 = vmatpush.msra.mxu0 0.0
    %5513 = vmatpush.msra.mxu0 0.0
    %5514 = vmatpush.msra.mxu0 0.0
    %5515 = vmatpush.msra.mxu0 0.0
    %5516 = vmatpush.msra.mxu0 %v4179
    %5517 = vmatpush.msra.mxu0 %v4178
    %5518 = vmatpush.msra.mxu0 %v4177
    %5519 = vmatpush.msra.mxu0 %v4176
    %5520 = vmatmul.f32.gmra.mxu0 %v5502
    %v5521 = vpop.f32.mrf.mxu0
    %v5522 = vadd.f32 0.0, %v5521
    %5523 = vdwg.mxu0
    %v5525 = vrot.slane %v5522, 2
    %v5526 = vrot.slane %v5522, 3
    %v5527 = vrot.slane %v5522, 4
    %v5528 = vrot.slane %v5522, 5
    %v5533 = vadd.f32 %v4136, %v5525
    %v5534 = vadd.f32 %v4139, %v5526
    %v5535 = vadd.f32 %v4142, %v5527
    %v5536 = vadd.f32 %v4145, %v5528
    %v5537 = vxor.u32 %v5533, 2147483648
    %v5538 = vxor.u32 %v5534, 2147483648
    %v5539 = vxor.u32 %v5535, 2147483648
    %v5540 = vxor.u32 %v5536, 2147483648
    %v5541 = vmul.f32 %v5537, 1.442695
    %v5542 = vpow.pop %v5541
    %v5543 = vmul.f32 %v5538, 1.442695
    %v5544 = vpow.pop %v5543
    %v5545 = vmul.f32 %v5539, 1.442695
    %v5546 = vpow.pop %v5545
    %v5547 = vmul.f32 %v5540, 1.442695
    %v5548 = vpow.pop %v5547
    %v5549 = vadd.f32 %v5542, 1.0
    %v5550 = vadd.f32 %v5544, 1.0
    %v5551 = vadd.f32 %v5546, 1.0
    %v5552 = vadd.f32 %v5548, 1.0
    %v5553 = vrcp.pop %v5549
    %v5554 = vmul.f32 %v5549, %v5553
    %v5555 = vsub.f32 1.0, %v5554
    %v5556 = vmul.f32 %v5553, %v5555
    %v5557 = vadd.f32 %v5553, %v5556
    %vm5558 = vweird.f32 %v5549
    %vm5559 = vweird.f32 %v5553
    %vm5560 = vmor %vm5558, %vm5559
    %v5561 = vsel %vm5560, %v5553, %v5557
    %v5562 = vand.u32 2147483647, %v5549
    %vm5563 = vcmp.eq.f32.partialorder %v5562, 8.507059e+37
    %v5564 = vand.u32 %v5549, 2147483648
    %v5565 = vor.u32 1.1754944e-38, %v5564
    %v5566 = vsel %vm5563, %v5565, %v5561
    %v5567 = vmul.f32 1.0, %v5566
    %v5568 = vrcp.pop %v5550
    %v5569 = vmul.f32 %v5550, %v5568
    %v5570 = vsub.f32 1.0, %v5569
    %v5571 = vmul.f32 %v5568, %v5570
    %v5572 = vadd.f32 %v5568, %v5571
    %vm5573 = vweird.f32 %v5550
    %vm5574 = vweird.f32 %v5568
    %vm5575 = vmor %vm5573, %vm5574
    %v5576 = vsel %vm5575, %v5568, %v5572
    %v5577 = vand.u32 2147483647, %v5550
    %vm5578 = vcmp.eq.f32.partialorder %v5577, 8.507059e+37
    %v5579 = vand.u32 %v5550, 2147483648
    %v5580 = vor.u32 1.1754944e-38, %v5579
    %v5581 = vsel %vm5578, %v5580, %v5576
    %v5582 = vmul.f32 1.0, %v5581
    %v5583 = vrcp.pop %v5551
    %v5584 = vmul.f32 %v5551, %v5583
    %v5585 = vsub.f32 1.0, %v5584
    %v5586 = vmul.f32 %v5583, %v5585
    %v5587 = vadd.f32 %v5583, %v5586
    %vm5588 = vweird.f32 %v5551
    %vm5589 = vweird.f32 %v5583
    %vm5590 = vmor %vm5588, %vm5589
    %v5591 = vsel %vm5590, %v5583, %v5587
    %v5592 = vand.u32 2147483647, %v5551
    %vm5593 = vcmp.eq.f32.partialorder %v5592, 8.507059e+37
    %v5594 = vand.u32 %v5551, 2147483648
    %v5595 = vor.u32 1.1754944e-38, %v5594
    %v5596 = vsel %vm5593, %v5595, %v5591
    %v5597 = vmul.f32 1.0, %v5596
    %v5598 = vrcp.pop %v5552
    %v5599 = vmul.f32 %v5552, %v5598
    %v5600 = vsub.f32 1.0, %v5599
    %v5601 = vmul.f32 %v5598, %v5600
    %v5602 = vadd.f32 %v5598, %v5601
    %vm5603 = vweird.f32 %v5552
    %vm5604 = vweird.f32 %v5598
    %vm5605 = vmor %vm5603, %vm5604
    %v5606 = vsel %vm5605, %v5598, %v5602
    %v5607 = vand.u32 2147483647, %v5552
    %vm5608 = vcmp.eq.f32.partialorder %v5607, 8.507059e+37
    %v5609 = vand.u32 %v5552, 2147483648
    %v5610 = vor.u32 1.1754944e-38, %v5609
    %v5611 = vsel %vm5608, %v5610, %v5606
    %v5612 = vmul.f32 1.0, %v5611
    %v5613 = vtanh.pop %v5533
    %v5614 = vtanh.pop %v5534
    %v5615 = vtanh.pop %v5535
    %v5616 = vtanh.pop %v5536
    %v5621 = vrot.slane %v5445, 7
    %v5622 = vrot.slane %v5446, 7
    %v5623 = vrot.slane %v5447, 7
    %v5624 = vrot.slane %v5448, 7
    %v5629 = vmul.f32 %v5567, %v5621
    %v5630 = vmul.f32 %v5582, %v5622
    %v5631 = vmul.f32 %v5597, %v5623
    %v5632 = vmul.f32 %v5612, %v5624
    %5637 = vrot.lane.b32.xlu0 %v5613, 64
    %v5638 = vpop.permute.xlu0 %5637
    %5639 = vrot.lane.b32.xlu0 %v5614, 64
    %v5640 = vpop.permute.xlu0 %5639
    %5641 = vrot.lane.b32.xlu0 %v5615, 64
    %v5642 = vpop.permute.xlu0 %5641
    %5643 = vrot.lane.b32.xlu0 %v5616, 64
    %v5644 = vpop.permute.xlu0 %5643
    %v5649 = vmul.f32 %v5567, %v5638
    %v5650 = vmul.f32 %v5582, %v5640
    %v5651 = vmul.f32 %v5597, %v5642
    %v5652 = vmul.f32 %v5612, %v5644
    %5657 = vrot.lane.b32.xlu0 %v5649, 32
    %v5658 = vpop.permute.xlu0 %5657
    %5659 = vrot.lane.b32.xlu0 %v5650, 32
    %v5660 = vpop.permute.xlu0 %5659
    %5661 = vrot.lane.b32.xlu0 %v5651, 32
    %v5662 = vpop.permute.xlu0 %5661
    %5663 = vrot.lane.b32.xlu0 %v5652, 32
    %v5664 = vpop.permute.xlu0 %5663
    %v5669 = vadd.f32 %v5629, %v5658
    %v5670 = vadd.f32 %v5630, %v5660
    %v5671 = vadd.f32 %v5631, %v5662
    %v5672 = vadd.f32 %v5632, %v5664
    %v5673 = vtanh.pop %v5669
    %v5674 = vtanh.pop %v5670
    %v5675 = vtanh.pop %v5671
    %v5676 = vtanh.pop %v5672
    %5681 = vrot.lane.b32.xlu0 %v5673, 64
    %v5682 = vpop.permute.xlu0 %5681
    %5683 = vrot.lane.b32.xlu0 %v5674, 64
    %v5684 = vpop.permute.xlu0 %5683
    %5685 = vrot.lane.b32.xlu0 %v5675, 64
    %v5686 = vpop.permute.xlu0 %5685
    %5687 = vrot.lane.b32.xlu0 %v5676, 64
    %v5688 = vpop.permute.xlu0 %5687
    %v5693 = vmul.f32 %v5567, %v5682
    %v5694 = vmul.f32 %v5582, %v5684
    %v5695 = vmul.f32 %v5597, %v5686
    %v5696 = vmul.f32 %v5612, %v5688
    %5701 = vrot.lane.b32.xlu0 %v5693, 32
    %v5702 = vpop.permute.xlu0 %5701
    %5703 = vrot.lane.b32.xlu0 %v5694, 32
    %v5704 = vpop.permute.xlu0 %5703
    %5705 = vrot.lane.b32.xlu0 %v5695, 32
    %v5706 = vpop.permute.xlu0 %5705
    %5707 = vrot.lane.b32.xlu0 %v5696, 32
    %v5708 = vpop.permute.xlu0 %5707
    %5713 = vst.msk [vmem:[#allocation3] sm:$0x40] %vm1824, %v5702
    %5714 = vst.msk [vmem:[#allocation3 + $0x8] sm:$0x40] %vm1824, %v5704
    %5715 = vst.msk [vmem:[#allocation3 + $0x10] sm:$0x40] %vm1824, %v5706
    %5716 = vst.msk [vmem:[#allocation3 + $0x18] sm:$0x40] %vm1824, %v5708
    %v5717 = vrot.slane %v5693, 6
    %v5718 = vrot.slane %v5694, 5
    %v5719 = vsel %vm484, %v5718, %v5717
    %v5720 = vrot.slane %v5695, 4
    %v5721 = vsel %vm487, %v5720, %v5719
    %v5722 = vrot.slane %v5696, 3
    %v5723 = vsel %vm490, %v5722, %v5721
    %5724 = vrot.lane.b32.xlu0 %v5723, 32
    %v5725 = vpop.permute.xlu0 %5724
    %v5726 = vsel %vm204, %v5725, 0
    %5728 = vmatpush.msra.mxu0 0.0
    %5729 = vmatpush.msra.mxu0 0.0
    %5730 = vmatpush.msra.mxu0 0.0
    %5731 = vmatpush.msra.mxu0 0.0
    %5732 = vmatpush.msra.mxu0 0.0
    %5733 = vmatpush.msra.mxu0 0.0
    %5734 = vmatpush.msra.mxu0 0.0
    %5735 = vmatpush.msra.mxu0 0.0
    %5736 = vmatpush.msra.mxu0 0.0
    %5737 = vmatpush.msra.mxu0 0.0
    %5738 = vmatpush.msra.mxu0 0.0
    %5739 = vmatpush.msra.mxu0 0.0
    %5740 = vmatpush.msra.mxu0 %v4179
    %5741 = vmatpush.msra.mxu0 %v4178
    %5742 = vmatpush.msra.mxu0 %v4177
    %5743 = vmatpush.msra.mxu0 %v4176
    %5744 = vmatmul.f32.gmra.mxu0 %v5726
    %v5745 = vpop.f32.mrf.mxu0
    %v5746 = vadd.f32 0.0, %v5745
    %5747 = vdwg.mxu0
    %v5749 = vrot.slane %v5746, 1
    %v5750 = vrot.slane %v5746, 2
    %v5751 = vrot.slane %v5746, 3
    %v5752 = vrot.slane %v5746, 4
    %v5757 = vadd.f32 %v4136, %v5749
    %v5758 = vadd.f32 %v4139, %v5750
    %v5759 = vadd.f32 %v4142, %v5751
    %v5760 = vadd.f32 %v4145, %v5752
    %v5761 = vxor.u32 %v5757, 2147483648
    %v5762 = vxor.u32 %v5758, 2147483648
    %v5763 = vxor.u32 %v5759, 2147483648
    %v5764 = vxor.u32 %v5760, 2147483648
    %v5765 = vmul.f32 %v5761, 1.442695
    %v5766 = vpow.pop %v5765
    %v5767 = vmul.f32 %v5762, 1.442695
    %v5768 = vpow.pop %v5767
    %v5769 = vmul.f32 %v5763, 1.442695
    %v5770 = vpow.pop %v5769
    %v5771 = vmul.f32 %v5764, 1.442695
    %v5772 = vpow.pop %v5771
    %v5773 = vadd.f32 %v5766, 1.0
    %v5774 = vadd.f32 %v5768, 1.0
    %v5775 = vadd.f32 %v5770, 1.0
    %v5776 = vadd.f32 %v5772, 1.0
    %v5777 = vrcp.pop %v5773
    %v5778 = vmul.f32 %v5773, %v5777
    %v5779 = vsub.f32 1.0, %v5778
    %v5780 = vmul.f32 %v5777, %v5779
    %v5781 = vadd.f32 %v5777, %v5780
    %vm5782 = vweird.f32 %v5773
    %vm5783 = vweird.f32 %v5777
    %vm5784 = vmor %vm5782, %vm5783
    %v5785 = vsel %vm5784, %v5777, %v5781
    %v5786 = vand.u32 2147483647, %v5773
    %vm5787 = vcmp.eq.f32.partialorder %v5786, 8.507059e+37
    %v5788 = vand.u32 %v5773, 2147483648
    %v5789 = vor.u32 1.1754944e-38, %v5788
    %v5790 = vsel %vm5787, %v5789, %v5785
    %v5791 = vmul.f32 1.0, %v5790
    %v5792 = vrcp.pop %v5774
    %v5793 = vmul.f32 %v5774, %v5792
    %v5794 = vsub.f32 1.0, %v5793
    %v5795 = vmul.f32 %v5792, %v5794
    %v5796 = vadd.f32 %v5792, %v5795
    %vm5797 = vweird.f32 %v5774
    %vm5798 = vweird.f32 %v5792
    %vm5799 = vmor %vm5797, %vm5798
    %v5800 = vsel %vm5799, %v5792, %v5796
    %v5801 = vand.u32 2147483647, %v5774
    %vm5802 = vcmp.eq.f32.partialorder %v5801, 8.507059e+37
    %v5803 = vand.u32 %v5774, 2147483648
    %v5804 = vor.u32 1.1754944e-38, %v5803
    %v5805 = vsel %vm5802, %v5804, %v5800
    %v5806 = vmul.f32 1.0, %v5805
    %v5807 = vrcp.pop %v5775
    %v5808 = vmul.f32 %v5775, %v5807
    %v5809 = vsub.f32 1.0, %v5808
    %v5810 = vmul.f32 %v5807, %v5809
    %v5811 = vadd.f32 %v5807, %v5810
    %vm5812 = vweird.f32 %v5775
    %vm5813 = vweird.f32 %v5807
    %vm5814 = vmor %vm5812, %vm5813
    %v5815 = vsel %vm5814, %v5807, %v5811
    %v5816 = vand.u32 2147483647, %v5775
    %vm5817 = vcmp.eq.f32.partialorder %v5816, 8.507059e+37
    %v5818 = vand.u32 %v5775, 2147483648
    %v5819 = vor.u32 1.1754944e-38, %v5818
    %v5820 = vsel %vm5817, %v5819, %v5815
    %v5821 = vmul.f32 1.0, %v5820
    %v5822 = vrcp.pop %v5776
    %v5823 = vmul.f32 %v5776, %v5822
    %v5824 = vsub.f32 1.0, %v5823
    %v5825 = vmul.f32 %v5822, %v5824
    %v5826 = vadd.f32 %v5822, %v5825
    %vm5827 = vweird.f32 %v5776
    %vm5828 = vweird.f32 %v5822
    %vm5829 = vmor %vm5827, %vm5828
    %v5830 = vsel %vm5829, %v5822, %v5826
    %v5831 = vand.u32 2147483647, %v5776
    %vm5832 = vcmp.eq.f32.partialorder %v5831, 8.507059e+37
    %v5833 = vand.u32 %v5776, 2147483648
    %v5834 = vor.u32 1.1754944e-38, %v5833
    %v5835 = vsel %vm5832, %v5834, %v5830
    %v5836 = vmul.f32 1.0, %v5835
    %v5837 = vtanh.pop %v5757
    %v5838 = vtanh.pop %v5758
    %v5839 = vtanh.pop %v5759
    %v5840 = vtanh.pop %v5760
    %v5845 = vrot.slane %v5669, 7
    %v5846 = vrot.slane %v5670, 7
    %v5847 = vrot.slane %v5671, 7
    %v5848 = vrot.slane %v5672, 7
    %v5853 = vmul.f32 %v5791, %v5845
    %v5854 = vmul.f32 %v5806, %v5846
    %v5855 = vmul.f32 %v5821, %v5847
    %v5856 = vmul.f32 %v5836, %v5848
    %5861 = vrot.lane.b32.xlu0 %v5837, 64
    %v5862 = vpop.permute.xlu0 %5861
    %5863 = vrot.lane.b32.xlu0 %v5838, 64
    %v5864 = vpop.permute.xlu0 %5863
    %5865 = vrot.lane.b32.xlu0 %v5839, 64
    %v5866 = vpop.permute.xlu0 %5865
    %5867 = vrot.lane.b32.xlu0 %v5840, 64
    %v5868 = vpop.permute.xlu0 %5867
    %v5873 = vmul.f32 %v5791, %v5862
    %v5874 = vmul.f32 %v5806, %v5864
    %v5875 = vmul.f32 %v5821, %v5866
    %v5876 = vmul.f32 %v5836, %v5868
    %5881 = vrot.lane.b32.xlu0 %v5873, 32
    %v5882 = vpop.permute.xlu0 %5881
    %5883 = vrot.lane.b32.xlu0 %v5874, 32
    %v5884 = vpop.permute.xlu0 %5883
    %5885 = vrot.lane.b32.xlu0 %v5875, 32
    %v5886 = vpop.permute.xlu0 %5885
    %5887 = vrot.lane.b32.xlu0 %v5876, 32
    %v5888 = vpop.permute.xlu0 %5887
    %v5893 = vadd.f32 %v5853, %v5882
    %v5894 = vadd.f32 %v5854, %v5884
    %v5895 = vadd.f32 %v5855, %v5886
    %v5896 = vadd.f32 %v5856, %v5888
    %v5897 = vtanh.pop %v5893
    %v5898 = vtanh.pop %v5894
    %v5899 = vtanh.pop %v5895
    %v5900 = vtanh.pop %v5896
    %5905 = vrot.lane.b32.xlu0 %v5897, 64
    %v5906 = vpop.permute.xlu0 %5905
    %5907 = vrot.lane.b32.xlu0 %v5898, 64
    %v5908 = vpop.permute.xlu0 %5907
    %5909 = vrot.lane.b32.xlu0 %v5899, 64
    %v5910 = vpop.permute.xlu0 %5909
    %5911 = vrot.lane.b32.xlu0 %v5900, 64
    %v5912 = vpop.permute.xlu0 %5911
    %v5917 = vmul.f32 %v5791, %v5906
    %v5918 = vmul.f32 %v5806, %v5908
    %v5919 = vmul.f32 %v5821, %v5910
    %v5920 = vmul.f32 %v5836, %v5912
    %5925 = vrot.lane.b32.xlu0 %v5917, 32
    %v5926 = vpop.permute.xlu0 %5925
    %5927 = vrot.lane.b32.xlu0 %v5918, 32
    %v5928 = vpop.permute.xlu0 %5927
    %5929 = vrot.lane.b32.xlu0 %v5919, 32
    %v5930 = vpop.permute.xlu0 %5929
    %5931 = vrot.lane.b32.xlu0 %v5920, 32
    %v5932 = vpop.permute.xlu0 %5931
    %5937 = vst.msk [vmem:[#allocation3] sm:$0x80] %vm2049, %v5926
    %5938 = vst.msk [vmem:[#allocation3 + $0x8] sm:$0x80] %vm2049, %v5928
    %5939 = vst.msk [vmem:[#allocation3 + $0x10] sm:$0x80] %vm2049, %v5930
    %5940 = vst.msk [vmem:[#allocation3 + $0x18] sm:$0x80] %vm2049, %v5932
    %v5941 = vld [vmem:[#allocation15] sm:$0xff]
    %v5942 = vld [vmem:[#allocation15 + $0x8] sm:$0xff]
    %v5943 = vld [vmem:[#allocation15 + $0x10] sm:$0xff]
    %v5944 = vld [vmem:[#allocation15 + $0x18] sm:$0xff]
    %5945 = vmatpush.msra.mxu0 0.0
    %5946 = vmatpush.msra.mxu0 0.0
    %5947 = vmatpush.msra.mxu0 0.0
    %5948 = vmatpush.msra.mxu0 0.0
    %5949 = vmatpush.msra.mxu0 0.0
    %5950 = vmatpush.msra.mxu0 0.0
    %5951 = vmatpush.msra.mxu0 0.0
    %5952 = vmatpush.msra.mxu0 0.0
    %5953 = vmatpush.msra.mxu0 0.0
    %5954 = vmatpush.msra.mxu0 0.0
    %5955 = vmatpush.msra.mxu0 0.0
    %5956 = vmatpush.msra.mxu0 0.0
    %5957 = vmatpush.msra.mxu0 %v5944
    %5958 = vmatpush.msra.mxu0 %v5943
    %5959 = vmatpush.msra.mxu0 %v5942
    %5960 = vmatpush.msra.mxu0 %v5941
    %5961 = vmatmul.f32.gmra.mxu0 %v280
    %v5962 = vpop.f32.mrf.mxu0
    %v5963 = vadd.f32 0.0, %v5962
    %5964 = vdwg.mxu0
    %v5966 = vrot.slane %v5963, 1
    %v5967 = vrot.slane %v5963, 2
    %v5968 = vrot.slane %v5963, 3
    %v5969 = vrot.slane %v5963, 4
    %v5974 = vadd.f32 %v4165, %v5966
    %v5975 = vadd.f32 %v4168, %v5967
    %v5976 = vadd.f32 %v4171, %v5968
    %v5977 = vadd.f32 %v4174, %v5969
    %v5978 = vxor.u32 %v5974, 2147483648
    %v5979 = vxor.u32 %v5975, 2147483648
    %v5980 = vxor.u32 %v5976, 2147483648
    %v5981 = vxor.u32 %v5977, 2147483648
    %v5982 = vmul.f32 %v5978, 1.442695
    %v5983 = vpow.pop %v5982
    %v5984 = vmul.f32 %v5979, 1.442695
    %v5985 = vpow.pop %v5984
    %v5986 = vmul.f32 %v5980, 1.442695
    %v5987 = vpow.pop %v5986
    %v5988 = vmul.f32 %v5981, 1.442695
    %v5989 = vpow.pop %v5988
    %v5990 = vadd.f32 %v5983, 1.0
    %v5991 = vadd.f32 %v5985, 1.0
    %v5992 = vadd.f32 %v5987, 1.0
    %v5993 = vadd.f32 %v5989, 1.0
    %v5994 = vrcp.pop %v5990
    %v5995 = vmul.f32 %v5990, %v5994
    %v5996 = vsub.f32 1.0, %v5995
    %v5997 = vmul.f32 %v5994, %v5996
    %v5998 = vadd.f32 %v5994, %v5997
    %vm5999 = vweird.f32 %v5990
    %vm6000 = vweird.f32 %v5994
    %vm6001 = vmor %vm5999, %vm6000
    %v6002 = vsel %vm6001, %v5994, %v5998
    %v6003 = vand.u32 2147483647, %v5990
    %vm6004 = vcmp.eq.f32.partialorder %v6003, 8.507059e+37
    %v6005 = vand.u32 %v5990, 2147483648
    %v6006 = vor.u32 1.1754944e-38, %v6005
    %v6007 = vsel %vm6004, %v6006, %v6002
    %v6008 = vmul.f32 1.0, %v6007
    %v6009 = vrcp.pop %v5991
    %v6010 = vmul.f32 %v5991, %v6009
    %v6011 = vsub.f32 1.0, %v6010
    %v6012 = vmul.f32 %v6009, %v6011
    %v6013 = vadd.f32 %v6009, %v6012
    %vm6014 = vweird.f32 %v5991
    %vm6015 = vweird.f32 %v6009
    %vm6016 = vmor %vm6014, %vm6015
    %v6017 = vsel %vm6016, %v6009, %v6013
    %v6018 = vand.u32 2147483647, %v5991
    %vm6019 = vcmp.eq.f32.partialorder %v6018, 8.507059e+37
    %v6020 = vand.u32 %v5991, 2147483648
    %v6021 = vor.u32 1.1754944e-38, %v6020
    %v6022 = vsel %vm6019, %v6021, %v6017
    %v6023 = vmul.f32 1.0, %v6022
    %v6024 = vrcp.pop %v5992
    %v6025 = vmul.f32 %v5992, %v6024
    %v6026 = vsub.f32 1.0, %v6025
    %v6027 = vmul.f32 %v6024, %v6026
    %v6028 = vadd.f32 %v6024, %v6027
    %vm6029 = vweird.f32 %v5992
    %vm6030 = vweird.f32 %v6024
    %vm6031 = vmor %vm6029, %vm6030
    %v6032 = vsel %vm6031, %v6024, %v6028
    %v6033 = vand.u32 2147483647, %v5992
    %vm6034 = vcmp.eq.f32.partialorder %v6033, 8.507059e+37
    %v6035 = vand.u32 %v5992, 2147483648
    %v6036 = vor.u32 1.1754944e-38, %v6035
    %v6037 = vsel %vm6034, %v6036, %v6032
    %v6038 = vmul.f32 1.0, %v6037
    %v6039 = vrcp.pop %v5993
    %v6040 = vmul.f32 %v5993, %v6039
    %v6041 = vsub.f32 1.0, %v6040
    %v6042 = vmul.f32 %v6039, %v6041
    %v6043 = vadd.f32 %v6039, %v6042
    %vm6044 = vweird.f32 %v5993
    %vm6045 = vweird.f32 %v6039
    %vm6046 = vmor %vm6044, %vm6045
    %v6047 = vsel %vm6046, %v6039, %v6043
    %v6048 = vand.u32 2147483647, %v5993
    %vm6049 = vcmp.eq.f32.partialorder %v6048, 8.507059e+37
    %v6050 = vand.u32 %v5993, 2147483648
    %v6051 = vor.u32 1.1754944e-38, %v6050
    %v6052 = vsel %vm6049, %v6051, %v6047
    %v6053 = vmul.f32 1.0, %v6052
    %v6054 = vtanh.pop %v5974
    %v6055 = vtanh.pop %v5975
    %v6056 = vtanh.pop %v5976
    %v6057 = vtanh.pop %v5977
    %v6058 = vmul.f32 %v6008, 0.0
    %v6059 = vmul.f32 %v6023, 0.0
    %v6060 = vmul.f32 %v6038, 0.0
    %v6061 = vmul.f32 %v6053, 0.0
    %6066 = vrot.lane.b32.xlu0 %v6054, 64
    %v6067 = vpop.permute.xlu0 %6066
    %6068 = vrot.lane.b32.xlu0 %v6055, 64
    %v6069 = vpop.permute.xlu0 %6068
    %6070 = vrot.lane.b32.xlu0 %v6056, 64
    %v6071 = vpop.permute.xlu0 %6070
    %6072 = vrot.lane.b32.xlu0 %v6057, 64
    %v6073 = vpop.permute.xlu0 %6072
    %v6078 = vmul.f32 %v6008, %v6067
    %v6079 = vmul.f32 %v6023, %v6069
    %v6080 = vmul.f32 %v6038, %v6071
    %v6081 = vmul.f32 %v6053, %v6073
    %6086 = vrot.lane.b32.xlu0 %v6078, 32
    %v6087 = vpop.permute.xlu0 %6086
    %6088 = vrot.lane.b32.xlu0 %v6079, 32
    %v6089 = vpop.permute.xlu0 %6088
    %6090 = vrot.lane.b32.xlu0 %v6080, 32
    %v6091 = vpop.permute.xlu0 %6090
    %6092 = vrot.lane.b32.xlu0 %v6081, 32
    %v6093 = vpop.permute.xlu0 %6092
    %v6098 = vadd.f32 %v6058, %v6087
    %v6099 = vadd.f32 %v6059, %v6089
    %v6100 = vadd.f32 %v6060, %v6091
    %v6101 = vadd.f32 %v6061, %v6093
    %v6102 = vtanh.pop %v6098
    %v6103 = vtanh.pop %v6099
    %v6104 = vtanh.pop %v6100
    %v6105 = vtanh.pop %v6101
    %6110 = vrot.lane.b32.xlu0 %v6102, 64
    %v6111 = vpop.permute.xlu0 %6110
    %6112 = vrot.lane.b32.xlu0 %v6103, 64
    %v6113 = vpop.permute.xlu0 %6112
    %6114 = vrot.lane.b32.xlu0 %v6104, 64
    %v6115 = vpop.permute.xlu0 %6114
    %6116 = vrot.lane.b32.xlu0 %v6105, 64
    %v6117 = vpop.permute.xlu0 %6116
    %v6122 = vmul.f32 %v6008, %v6111
    %v6123 = vmul.f32 %v6023, %v6113
    %v6124 = vmul.f32 %v6038, %v6115
    %v6125 = vmul.f32 %v6053, %v6117
    %v6130 = vrot.slane %v6122, 7
    %v6131 = vrot.slane %v6123, 6
    %v6132 = vsel %vm484, %v6131, %v6130
    %v6133 = vrot.slane %v6124, 5
    %v6134 = vsel %vm487, %v6133, %v6132
    %v6135 = vrot.slane %v6125, 4
    %v6136 = vsel %vm490, %v6135, %v6134
    %6137 = vrot.lane.b32.xlu0 %v6136, 32
    %v6138 = vpop.permute.xlu0 %6137
    %v6140 = vsel %vm2243, %v6138, 0.0
    %v6145 = vrot.slane %v6098, 7
    %v6146 = vrot.slane %v6099, 6
    %v6147 = vsel %vm484, %v6146, %v6145
    %v6148 = vrot.slane %v6100, 5
    %v6149 = vsel %vm487, %v6148, %v6147
    %v6150 = vrot.slane %v6101, 4
    %v6151 = vsel %vm490, %v6150, %v6149
    %6152 = vrot.lane.b32.xlu0 %v6151, 96
    %v6153 = vpop.permute.xlu0 %6152
    %v6155 = vsel %vm2243, %v6153, 0.0
    %v6157 = vrot.slane %v6140, 1
    %v6158 = vrot.slane %v6140, 2
    %v6159 = vrot.slane %v6140, 3
    %v6160 = vperm.slane %v6140, 0
    %v6161 = vperm.slane %v6157, 0
    %v6162 = vperm.slane %v6158, 0
    %v6163 = vperm.slane %v6159, 0
    %6164 = vrot.lane.b32.xlu0 %v6160, 32
    %v6165 = vpop.permute.xlu0 %6164
    %6166 = vrot.lane.b32.xlu0 %v6161, 32
    %v6167 = vpop.permute.xlu0 %6166
    %6168 = vrot.lane.b32.xlu0 %v6162, 32
    %v6169 = vpop.permute.xlu0 %6168
    %6170 = vrot.lane.b32.xlu0 %v6163, 32
    %v6171 = vpop.permute.xlu0 %6170
    %6176 = vst.msk [vmem:[#allocation3 + $0x7] sm:$0x1] %vm2294, %v6165
    %6177 = vst.msk [vmem:[#allocation3 + $0xf] sm:$0x1] %vm2294, %v6167
    %6178 = vst.msk [vmem:[#allocation3 + $0x17] sm:$0x1] %vm2294, %v6169
    %6179 = vst.msk [vmem:[#allocation3 + $0x1f] sm:$0x1] %vm2294, %v6171
    %v6180 = vsel %vm204, %v6140, 0
    %6182 = vmatpush.msra.mxu0 0.0
    %6183 = vmatpush.msra.mxu0 0.0
    %6184 = vmatpush.msra.mxu0 0.0
    %6185 = vmatpush.msra.mxu0 0.0
    %6186 = vmatpush.msra.mxu0 0.0
    %6187 = vmatpush.msra.mxu0 0.0
    %6188 = vmatpush.msra.mxu0 0.0
    %6189 = vmatpush.msra.mxu0 0.0
    %6190 = vmatpush.msra.mxu0 0.0
    %6191 = vmatpush.msra.mxu0 0.0
    %6192 = vmatpush.msra.mxu0 0.0
    %6193 = vmatpush.msra.mxu0 0.0
    %6194 = vmatpush.msra.mxu0 %v5944
    %6195 = vmatpush.msra.mxu0 %v5943
    %6196 = vmatpush.msra.mxu0 %v5942
    %6197 = vmatpush.msra.mxu0 %v5941
    %6198 = vmatmul.f32.gmra.mxu0 %v6180
    %v6199 = vpop.f32.mrf.mxu0
    %v6200 = vadd.f32 0.0, %v6199
    %6201 = vdwg.mxu0
    %v6203 = vrot.slane %v6200, 2
    %v6204 = vrot.slane %v6200, 3
    %v6205 = vrot.slane %v6200, 4
    %v6206 = vrot.slane %v6200, 5
    %v6211 = vadd.f32 %v4165, %v6203
    %v6212 = vadd.f32 %v4168, %v6204
    %v6213 = vadd.f32 %v4171, %v6205
    %v6214 = vadd.f32 %v4174, %v6206
    %v6215 = vxor.u32 %v6211, 2147483648
    %v6216 = vxor.u32 %v6212, 2147483648
    %v6217 = vxor.u32 %v6213, 2147483648
    %v6218 = vxor.u32 %v6214, 2147483648
    %v6219 = vmul.f32 %v6215, 1.442695
    %v6220 = vpow.pop %v6219
    %v6221 = vmul.f32 %v6216, 1.442695
    %v6222 = vpow.pop %v6221
    %v6223 = vmul.f32 %v6217, 1.442695
    %v6224 = vpow.pop %v6223
    %v6225 = vmul.f32 %v6218, 1.442695
    %v6226 = vpow.pop %v6225
    %v6227 = vadd.f32 %v6220, 1.0
    %v6228 = vadd.f32 %v6222, 1.0
    %v6229 = vadd.f32 %v6224, 1.0
    %v6230 = vadd.f32 %v6226, 1.0
    %v6231 = vrcp.pop %v6227
    %v6232 = vmul.f32 %v6227, %v6231
    %v6233 = vsub.f32 1.0, %v6232
    %v6234 = vmul.f32 %v6231, %v6233
    %v6235 = vadd.f32 %v6231, %v6234
    %vm6236 = vweird.f32 %v6227
    %vm6237 = vweird.f32 %v6231
    %vm6238 = vmor %vm6236, %vm6237
    %v6239 = vsel %vm6238, %v6231, %v6235
    %v6240 = vand.u32 2147483647, %v6227
    %vm6241 = vcmp.eq.f32.partialorder %v6240, 8.507059e+37
    %v6242 = vand.u32 %v6227, 2147483648
    %v6243 = vor.u32 1.1754944e-38, %v6242
    %v6244 = vsel %vm6241, %v6243, %v6239
    %v6245 = vmul.f32 1.0, %v6244
    %v6246 = vrcp.pop %v6228
    %v6247 = vmul.f32 %v6228, %v6246
    %v6248 = vsub.f32 1.0, %v6247
    %v6249 = vmul.f32 %v6246, %v6248
    %v6250 = vadd.f32 %v6246, %v6249
    %vm6251 = vweird.f32 %v6228
    %vm6252 = vweird.f32 %v6246
    %vm6253 = vmor %vm6251, %vm6252
    %v6254 = vsel %vm6253, %v6246, %v6250
    %v6255 = vand.u32 2147483647, %v6228
    %vm6256 = vcmp.eq.f32.partialorder %v6255, 8.507059e+37
    %v6257 = vand.u32 %v6228, 2147483648
    %v6258 = vor.u32 1.1754944e-38, %v6257
    %v6259 = vsel %vm6256, %v6258, %v6254
    %v6260 = vmul.f32 1.0, %v6259
    %v6261 = vrcp.pop %v6229
    %v6262 = vmul.f32 %v6229, %v6261
    %v6263 = vsub.f32 1.0, %v6262
    %v6264 = vmul.f32 %v6261, %v6263
    %v6265 = vadd.f32 %v6261, %v6264
    %vm6266 = vweird.f32 %v6229
    %vm6267 = vweird.f32 %v6261
    %vm6268 = vmor %vm6266, %vm6267
    %v6269 = vsel %vm6268, %v6261, %v6265
    %v6270 = vand.u32 2147483647, %v6229
    %vm6271 = vcmp.eq.f32.partialorder %v6270, 8.507059e+37
    %v6272 = vand.u32 %v6229, 2147483648
    %v6273 = vor.u32 1.1754944e-38, %v6272
    %v6274 = vsel %vm6271, %v6273, %v6269
    %v6275 = vmul.f32 1.0, %v6274
    %v6276 = vrcp.pop %v6230
    %v6277 = vmul.f32 %v6230, %v6276
    %v6278 = vsub.f32 1.0, %v6277
    %v6279 = vmul.f32 %v6276, %v6278
    %v6280 = vadd.f32 %v6276, %v6279
    %vm6281 = vweird.f32 %v6230
    %vm6282 = vweird.f32 %v6276
    %vm6283 = vmor %vm6281, %vm6282
    %v6284 = vsel %vm6283, %v6276, %v6280
    %v6285 = vand.u32 2147483647, %v6230
    %vm6286 = vcmp.eq.f32.partialorder %v6285, 8.507059e+37
    %v6287 = vand.u32 %v6230, 2147483648
    %v6288 = vor.u32 1.1754944e-38, %v6287
    %v6289 = vsel %vm6286, %v6288, %v6284
    %v6290 = vmul.f32 1.0, %v6289
    %v6291 = vtanh.pop %v6211
    %v6292 = vtanh.pop %v6212
    %v6293 = vtanh.pop %v6213
    %v6294 = vtanh.pop %v6214
    %v6296 = vrot.slane %v6155, 2
    %v6297 = vrot.slane %v6155, 3
    %v6298 = vrot.slane %v6155, 4
    %v6299 = vrot.slane %v6155, 5
    %6300 = vrot.lane.b32.xlu0 %v6296, 32
    %v6301 = vpop.permute.xlu0 %6300
    %6302 = vrot.lane.b32.xlu0 %v6297, 32
    %v6303 = vpop.permute.xlu0 %6302
    %6304 = vrot.lane.b32.xlu0 %v6298, 32
    %v6305 = vpop.permute.xlu0 %6304
    %6306 = vrot.lane.b32.xlu0 %v6299, 32
    %v6307 = vpop.permute.xlu0 %6306
    %v6312 = vmul.f32 %v6245, %v6301
    %v6313 = vmul.f32 %v6260, %v6303
    %v6314 = vmul.f32 %v6275, %v6305
    %v6315 = vmul.f32 %v6290, %v6307
    %6320 = vrot.lane.b32.xlu0 %v6291, 64
    %v6321 = vpop.permute.xlu0 %6320
    %6322 = vrot.lane.b32.xlu0 %v6292, 64
    %v6323 = vpop.permute.xlu0 %6322
    %6324 = vrot.lane.b32.xlu0 %v6293, 64
    %v6325 = vpop.permute.xlu0 %6324
    %6326 = vrot.lane.b32.xlu0 %v6294, 64
    %v6327 = vpop.permute.xlu0 %6326
    %v6332 = vmul.f32 %v6245, %v6321
    %v6333 = vmul.f32 %v6260, %v6323
    %v6334 = vmul.f32 %v6275, %v6325
    %v6335 = vmul.f32 %v6290, %v6327
    %6340 = vrot.lane.b32.xlu0 %v6332, 32
    %v6341 = vpop.permute.xlu0 %6340
    %6342 = vrot.lane.b32.xlu0 %v6333, 32
    %v6343 = vpop.permute.xlu0 %6342
    %6344 = vrot.lane.b32.xlu0 %v6334, 32
    %v6345 = vpop.permute.xlu0 %6344
    %6346 = vrot.lane.b32.xlu0 %v6335, 32
    %v6347 = vpop.permute.xlu0 %6346
    %v6352 = vadd.f32 %v6312, %v6341
    %v6353 = vadd.f32 %v6313, %v6343
    %v6354 = vadd.f32 %v6314, %v6345
    %v6355 = vadd.f32 %v6315, %v6347
    %v6356 = vtanh.pop %v6352
    %v6357 = vtanh.pop %v6353
    %v6358 = vtanh.pop %v6354
    %v6359 = vtanh.pop %v6355
    %6364 = vrot.lane.b32.xlu0 %v6356, 64
    %v6365 = vpop.permute.xlu0 %6364
    %6366 = vrot.lane.b32.xlu0 %v6357, 64
    %v6367 = vpop.permute.xlu0 %6366
    %6368 = vrot.lane.b32.xlu0 %v6358, 64
    %v6369 = vpop.permute.xlu0 %6368
    %6370 = vrot.lane.b32.xlu0 %v6359, 64
    %v6371 = vpop.permute.xlu0 %6370
    %v6376 = vmul.f32 %v6245, %v6365
    %v6377 = vmul.f32 %v6260, %v6367
    %v6378 = vmul.f32 %v6275, %v6369
    %v6379 = vmul.f32 %v6290, %v6371
    %v6384 = vrot.slane %v6376, 6
    %v6385 = vrot.slane %v6377, 5
    %v6386 = vsel %vm484, %v6385, %v6384
    %v6387 = vrot.slane %v6378, 4
    %v6388 = vsel %vm487, %v6387, %v6386
    %v6389 = vrot.slane %v6379, 3
    %v6390 = vsel %vm490, %v6389, %v6388
    %6391 = vrot.lane.b32.xlu0 %v6390, 32
    %v6392 = vpop.permute.xlu0 %6391
    %v6394 = vsel %vm2502, %v6392, %v6140
    %v6399 = vrot.slane %v6352, 6
    %v6400 = vrot.slane %v6353, 5
    %v6401 = vsel %vm484, %v6400, %v6399
    %v6402 = vrot.slane %v6354, 4
    %v6403 = vsel %vm487, %v6402, %v6401
    %v6404 = vrot.slane %v6355, 3
    %v6405 = vsel %vm490, %v6404, %v6403
    %6406 = vrot.lane.b32.xlu0 %v6405, 96
    %v6407 = vpop.permute.xlu0 %6406
    %v6409 = vsel %vm2502, %v6407, %v6155
    %v6411 = vrot.slane %v6394, 1
    %v6412 = vrot.slane %v6394, 2
    %v6413 = vrot.slane %v6394, 3
    %v6414 = vperm.slane %v6394, 0
    %v6415 = vperm.slane %v6411, 0
    %v6416 = vperm.slane %v6412, 0
    %v6417 = vperm.slane %v6413, 0
    %6418 = vrot.lane.b32.xlu0 %v6414, 32
    %v6419 = vpop.permute.xlu0 %6418
    %6420 = vrot.lane.b32.xlu0 %v6415, 32
    %v6421 = vpop.permute.xlu0 %6420
    %6422 = vrot.lane.b32.xlu0 %v6416, 32
    %v6423 = vpop.permute.xlu0 %6422
    %6424 = vrot.lane.b32.xlu0 %v6417, 32
    %v6425 = vpop.permute.xlu0 %6424
    %6430 = vst.msk [vmem:[#allocation3 + $0x6] sm:$0x1] %vm2294, %v6419
    %6431 = vst.msk [vmem:[#allocation3 + $0xe] sm:$0x1] %vm2294, %v6421
    %6432 = vst.msk [vmem:[#allocation3 + $0x16] sm:$0x1] %vm2294, %v6423
    %6433 = vst.msk [vmem:[#allocation3 + $0x1e] sm:$0x1] %vm2294, %v6425
    %v6434 = vsel %vm204, %v6394, 0
    %6436 = vmatpush.msra.mxu0 0.0
    %6437 = vmatpush.msra.mxu0 0.0
    %6438 = vmatpush.msra.mxu0 0.0
    %6439 = vmatpush.msra.mxu0 0.0
    %6440 = vmatpush.msra.mxu0 0.0
    %6441 = vmatpush.msra.mxu0 0.0
    %6442 = vmatpush.msra.mxu0 0.0
    %6443 = vmatpush.msra.mxu0 0.0
    %6444 = vmatpush.msra.mxu0 0.0
    %6445 = vmatpush.msra.mxu0 0.0
    %6446 = vmatpush.msra.mxu0 0.0
    %6447 = vmatpush.msra.mxu0 0.0
    %6448 = vmatpush.msra.mxu0 %v5944
    %6449 = vmatpush.msra.mxu0 %v5943
    %6450 = vmatpush.msra.mxu0 %v5942
    %6451 = vmatpush.msra.mxu0 %v5941
    %6452 = vmatmul.f32.gmra.mxu0 %v6434
    %v6453 = vpop.f32.mrf.mxu0
    %v6454 = vadd.f32 0.0, %v6453
    %6455 = vdwg.mxu0
    %v6457 = vrot.slane %v6454, 3
    %v6458 = vrot.slane %v6454, 4
    %v6459 = vrot.slane %v6454, 5
    %v6460 = vrot.slane %v6454, 6
    %v6465 = vadd.f32 %v4165, %v6457
    %v6466 = vadd.f32 %v4168, %v6458
    %v6467 = vadd.f32 %v4171, %v6459
    %v6468 = vadd.f32 %v4174, %v6460
    %v6469 = vxor.u32 %v6465, 2147483648
    %v6470 = vxor.u32 %v6466, 2147483648
    %v6471 = vxor.u32 %v6467, 2147483648
    %v6472 = vxor.u32 %v6468, 2147483648
    %v6473 = vmul.f32 %v6469, 1.442695
    %v6474 = vpow.pop %v6473
    %v6475 = vmul.f32 %v6470, 1.442695
    %v6476 = vpow.pop %v6475
    %v6477 = vmul.f32 %v6471, 1.442695
    %v6478 = vpow.pop %v6477
    %v6479 = vmul.f32 %v6472, 1.442695
    %v6480 = vpow.pop %v6479
    %v6481 = vadd.f32 %v6474, 1.0
    %v6482 = vadd.f32 %v6476, 1.0
    %v6483 = vadd.f32 %v6478, 1.0
    %v6484 = vadd.f32 %v6480, 1.0
    %v6485 = vrcp.pop %v6481
    %v6486 = vmul.f32 %v6481, %v6485
    %v6487 = vsub.f32 1.0, %v6486
    %v6488 = vmul.f32 %v6485, %v6487
    %v6489 = vadd.f32 %v6485, %v6488
    %vm6490 = vweird.f32 %v6481
    %vm6491 = vweird.f32 %v6485
    %vm6492 = vmor %vm6490, %vm6491
    %v6493 = vsel %vm6492, %v6485, %v6489
    %v6494 = vand.u32 2147483647, %v6481
    %vm6495 = vcmp.eq.f32.partialorder %v6494, 8.507059e+37
    %v6496 = vand.u32 %v6481, 2147483648
    %v6497 = vor.u32 1.1754944e-38, %v6496
    %v6498 = vsel %vm6495, %v6497, %v6493
    %v6499 = vmul.f32 1.0, %v6498
    %v6500 = vrcp.pop %v6482
    %v6501 = vmul.f32 %v6482, %v6500
    %v6502 = vsub.f32 1.0, %v6501
    %v6503 = vmul.f32 %v6500, %v6502
    %v6504 = vadd.f32 %v6500, %v6503
    %vm6505 = vweird.f32 %v6482
    %vm6506 = vweird.f32 %v6500
    %vm6507 = vmor %vm6505, %vm6506
    %v6508 = vsel %vm6507, %v6500, %v6504
    %v6509 = vand.u32 2147483647, %v6482
    %vm6510 = vcmp.eq.f32.partialorder %v6509, 8.507059e+37
    %v6511 = vand.u32 %v6482, 2147483648
    %v6512 = vor.u32 1.1754944e-38, %v6511
    %v6513 = vsel %vm6510, %v6512, %v6508
    %v6514 = vmul.f32 1.0, %v6513
    %v6515 = vrcp.pop %v6483
    %v6516 = vmul.f32 %v6483, %v6515
    %v6517 = vsub.f32 1.0, %v6516
    %v6518 = vmul.f32 %v6515, %v6517
    %v6519 = vadd.f32 %v6515, %v6518
    %vm6520 = vweird.f32 %v6483
    %vm6521 = vweird.f32 %v6515
    %vm6522 = vmor %vm6520, %vm6521
    %v6523 = vsel %vm6522, %v6515, %v6519
    %v6524 = vand.u32 2147483647, %v6483
    %vm6525 = vcmp.eq.f32.partialorder %v6524, 8.507059e+37
    %v6526 = vand.u32 %v6483, 2147483648
    %v6527 = vor.u32 1.1754944e-38, %v6526
    %v6528 = vsel %vm6525, %v6527, %v6523
    %v6529 = vmul.f32 1.0, %v6528
    %v6530 = vrcp.pop %v6484
    %v6531 = vmul.f32 %v6484, %v6530
    %v6532 = vsub.f32 1.0, %v6531
    %v6533 = vmul.f32 %v6530, %v6532
    %v6534 = vadd.f32 %v6530, %v6533
    %vm6535 = vweird.f32 %v6484
    %vm6536 = vweird.f32 %v6530
    %vm6537 = vmor %vm6535, %vm6536
    %v6538 = vsel %vm6537, %v6530, %v6534
    %v6539 = vand.u32 2147483647, %v6484
    %vm6540 = vcmp.eq.f32.partialorder %v6539, 8.507059e+37
    %v6541 = vand.u32 %v6484, 2147483648
    %v6542 = vor.u32 1.1754944e-38, %v6541
    %v6543 = vsel %vm6540, %v6542, %v6538
    %v6544 = vmul.f32 1.0, %v6543
    %v6545 = vtanh.pop %v6465
    %v6546 = vtanh.pop %v6466
    %v6547 = vtanh.pop %v6467
    %v6548 = vtanh.pop %v6468
    %v6550 = vrot.slane %v6409, 3
    %v6551 = vrot.slane %v6409, 4
    %v6552 = vrot.slane %v6409, 5
    %v6553 = vrot.slane %v6409, 6
    %6554 = vrot.lane.b32.xlu0 %v6550, 32
    %v6555 = vpop.permute.xlu0 %6554
    %6556 = vrot.lane.b32.xlu0 %v6551, 32
    %v6557 = vpop.permute.xlu0 %6556
    %6558 = vrot.lane.b32.xlu0 %v6552, 32
    %v6559 = vpop.permute.xlu0 %6558
    %6560 = vrot.lane.b32.xlu0 %v6553, 32
    %v6561 = vpop.permute.xlu0 %6560
    %v6566 = vmul.f32 %v6499, %v6555
    %v6567 = vmul.f32 %v6514, %v6557
    %v6568 = vmul.f32 %v6529, %v6559
    %v6569 = vmul.f32 %v6544, %v6561
    %6574 = vrot.lane.b32.xlu0 %v6545, 64
    %v6575 = vpop.permute.xlu0 %6574
    %6576 = vrot.lane.b32.xlu0 %v6546, 64
    %v6577 = vpop.permute.xlu0 %6576
    %6578 = vrot.lane.b32.xlu0 %v6547, 64
    %v6579 = vpop.permute.xlu0 %6578
    %6580 = vrot.lane.b32.xlu0 %v6548, 64
    %v6581 = vpop.permute.xlu0 %6580
    %v6586 = vmul.f32 %v6499, %v6575
    %v6587 = vmul.f32 %v6514, %v6577
    %v6588 = vmul.f32 %v6529, %v6579
    %v6589 = vmul.f32 %v6544, %v6581
    %6594 = vrot.lane.b32.xlu0 %v6586, 32
    %v6595 = vpop.permute.xlu0 %6594
    %6596 = vrot.lane.b32.xlu0 %v6587, 32
    %v6597 = vpop.permute.xlu0 %6596
    %6598 = vrot.lane.b32.xlu0 %v6588, 32
    %v6599 = vpop.permute.xlu0 %6598
    %6600 = vrot.lane.b32.xlu0 %v6589, 32
    %v6601 = vpop.permute.xlu0 %6600
    %v6606 = vadd.f32 %v6566, %v6595
    %v6607 = vadd.f32 %v6567, %v6597
    %v6608 = vadd.f32 %v6568, %v6599
    %v6609 = vadd.f32 %v6569, %v6601
    %v6610 = vtanh.pop %v6606
    %v6611 = vtanh.pop %v6607
    %v6612 = vtanh.pop %v6608
    %v6613 = vtanh.pop %v6609
    %6618 = vrot.lane.b32.xlu0 %v6610, 64
    %v6619 = vpop.permute.xlu0 %6618
    %6620 = vrot.lane.b32.xlu0 %v6611, 64
    %v6621 = vpop.permute.xlu0 %6620
    %6622 = vrot.lane.b32.xlu0 %v6612, 64
    %v6623 = vpop.permute.xlu0 %6622
    %6624 = vrot.lane.b32.xlu0 %v6613, 64
    %v6625 = vpop.permute.xlu0 %6624
    %v6630 = vmul.f32 %v6499, %v6619
    %v6631 = vmul.f32 %v6514, %v6621
    %v6632 = vmul.f32 %v6529, %v6623
    %v6633 = vmul.f32 %v6544, %v6625
    %v6638 = vrot.slane %v6630, 5
    %v6639 = vrot.slane %v6631, 4
    %v6640 = vsel %vm484, %v6639, %v6638
    %v6641 = vrot.slane %v6632, 3
    %v6642 = vsel %vm487, %v6641, %v6640
    %v6643 = vrot.slane %v6633, 2
    %v6644 = vsel %vm490, %v6643, %v6642
    %6645 = vrot.lane.b32.xlu0 %v6644, 32
    %v6646 = vpop.permute.xlu0 %6645
    %v6648 = vsel %vm2760, %v6646, %v6394
    %v6653 = vrot.slane %v6606, 5
    %v6654 = vrot.slane %v6607, 4
    %v6655 = vsel %vm484, %v6654, %v6653
    %v6656 = vrot.slane %v6608, 3
    %v6657 = vsel %vm487, %v6656, %v6655
    %v6658 = vrot.slane %v6609, 2
    %v6659 = vsel %vm490, %v6658, %v6657
    %6660 = vrot.lane.b32.xlu0 %v6659, 96
    %v6661 = vpop.permute.xlu0 %6660
    %v6663 = vsel %vm2760, %v6661, %v6409
    %v6665 = vrot.slane %v6648, 1
    %v6666 = vrot.slane %v6648, 2
    %v6667 = vrot.slane %v6648, 3
    %v6668 = vperm.slane %v6648, 0
    %v6669 = vperm.slane %v6665, 0
    %v6670 = vperm.slane %v6666, 0
    %v6671 = vperm.slane %v6667, 0
    %6672 = vrot.lane.b32.xlu0 %v6668, 32
    %v6673 = vpop.permute.xlu0 %6672
    %6674 = vrot.lane.b32.xlu0 %v6669, 32
    %v6675 = vpop.permute.xlu0 %6674
    %6676 = vrot.lane.b32.xlu0 %v6670, 32
    %v6677 = vpop.permute.xlu0 %6676
    %6678 = vrot.lane.b32.xlu0 %v6671, 32
    %v6679 = vpop.permute.xlu0 %6678
    %6684 = vst.msk [vmem:[#allocation3 + $0x5] sm:$0x1] %vm2294, %v6673
    %6685 = vst.msk [vmem:[#allocation3 + $0xd] sm:$0x1] %vm2294, %v6675
    %6686 = vst.msk [vmem:[#allocation3 + $0x15] sm:$0x1] %vm2294, %v6677
    %6687 = vst.msk [vmem:[#allocation3 + $0x1d] sm:$0x1] %vm2294, %v6679
    %v6688 = vsel %vm204, %v6648, 0
    %6690 = vmatpush.msra.mxu0 0.0
    %6691 = vmatpush.msra.mxu0 0.0
    %6692 = vmatpush.msra.mxu0 0.0
    %6693 = vmatpush.msra.mxu0 0.0
    %6694 = vmatpush.msra.mxu0 0.0
    %6695 = vmatpush.msra.mxu0 0.0
    %6696 = vmatpush.msra.mxu0 0.0
    %6697 = vmatpush.msra.mxu0 0.0
    %6698 = vmatpush.msra.mxu0 0.0
    %6699 = vmatpush.msra.mxu0 0.0
    %6700 = vmatpush.msra.mxu0 0.0
    %6701 = vmatpush.msra.mxu0 0.0
    %6702 = vmatpush.msra.mxu0 %v5944
    %6703 = vmatpush.msra.mxu0 %v5943
    %6704 = vmatpush.msra.mxu0 %v5942
    %6705 = vmatpush.msra.mxu0 %v5941
    %6706 = vmatmul.f32.gmra.mxu0 %v6688
    %v6707 = vpop.f32.mrf.mxu0
    %v6708 = vadd.f32 0.0, %v6707
    %6709 = vdwg.mxu0
    %v6711 = vrot.slane %v6708, 4
    %v6712 = vrot.slane %v6708, 5
    %v6713 = vrot.slane %v6708, 6
    %v6714 = vrot.slane %v6708, 7
    %v6719 = vadd.f32 %v4165, %v6711
    %v6720 = vadd.f32 %v4168, %v6712
    %v6721 = vadd.f32 %v4171, %v6713
    %v6722 = vadd.f32 %v4174, %v6714
    %v6723 = vxor.u32 %v6719, 2147483648
    %v6724 = vxor.u32 %v6720, 2147483648
    %v6725 = vxor.u32 %v6721, 2147483648
    %v6726 = vxor.u32 %v6722, 2147483648
    %v6727 = vmul.f32 %v6723, 1.442695
    %v6728 = vpow.pop %v6727
    %v6729 = vmul.f32 %v6724, 1.442695
    %v6730 = vpow.pop %v6729
    %v6731 = vmul.f32 %v6725, 1.442695
    %v6732 = vpow.pop %v6731
    %v6733 = vmul.f32 %v6726, 1.442695
    %v6734 = vpow.pop %v6733
    %v6735 = vadd.f32 %v6728, 1.0
    %v6736 = vadd.f32 %v6730, 1.0
    %v6737 = vadd.f32 %v6732, 1.0
    %v6738 = vadd.f32 %v6734, 1.0
    %v6739 = vrcp.pop %v6735
    %v6740 = vmul.f32 %v6735, %v6739
    %v6741 = vsub.f32 1.0, %v6740
    %v6742 = vmul.f32 %v6739, %v6741
    %v6743 = vadd.f32 %v6739, %v6742
    %vm6744 = vweird.f32 %v6735
    %vm6745 = vweird.f32 %v6739
    %vm6746 = vmor %vm6744, %vm6745
    %v6747 = vsel %vm6746, %v6739, %v6743
    %v6748 = vand.u32 2147483647, %v6735
    %vm6749 = vcmp.eq.f32.partialorder %v6748, 8.507059e+37
    %v6750 = vand.u32 %v6735, 2147483648
    %v6751 = vor.u32 1.1754944e-38, %v6750
    %v6752 = vsel %vm6749, %v6751, %v6747
    %v6753 = vmul.f32 1.0, %v6752
    %v6754 = vrcp.pop %v6736
    %v6755 = vmul.f32 %v6736, %v6754
    %v6756 = vsub.f32 1.0, %v6755
    %v6757 = vmul.f32 %v6754, %v6756
    %v6758 = vadd.f32 %v6754, %v6757
    %vm6759 = vweird.f32 %v6736
    %vm6760 = vweird.f32 %v6754
    %vm6761 = vmor %vm6759, %vm6760
    %v6762 = vsel %vm6761, %v6754, %v6758
    %v6763 = vand.u32 2147483647, %v6736
    %vm6764 = vcmp.eq.f32.partialorder %v6763, 8.507059e+37
    %v6765 = vand.u32 %v6736, 2147483648
    %v6766 = vor.u32 1.1754944e-38, %v6765
    %v6767 = vsel %vm6764, %v6766, %v6762
    %v6768 = vmul.f32 1.0, %v6767
    %v6769 = vrcp.pop %v6737
    %v6770 = vmul.f32 %v6737, %v6769
    %v6771 = vsub.f32 1.0, %v6770
    %v6772 = vmul.f32 %v6769, %v6771
    %v6773 = vadd.f32 %v6769, %v6772
    %vm6774 = vweird.f32 %v6737
    %vm6775 = vweird.f32 %v6769
    %vm6776 = vmor %vm6774, %vm6775
    %v6777 = vsel %vm6776, %v6769, %v6773
    %v6778 = vand.u32 2147483647, %v6737
    %vm6779 = vcmp.eq.f32.partialorder %v6778, 8.507059e+37
    %v6780 = vand.u32 %v6737, 2147483648
    %v6781 = vor.u32 1.1754944e-38, %v6780
    %v6782 = vsel %vm6779, %v6781, %v6777
    %v6783 = vmul.f32 1.0, %v6782
    %v6784 = vrcp.pop %v6738
    %v6785 = vmul.f32 %v6738, %v6784
    %v6786 = vsub.f32 1.0, %v6785
    %v6787 = vmul.f32 %v6784, %v6786
    %v6788 = vadd.f32 %v6784, %v6787
    %vm6789 = vweird.f32 %v6738
    %vm6790 = vweird.f32 %v6784
    %vm6791 = vmor %vm6789, %vm6790
    %v6792 = vsel %vm6791, %v6784, %v6788
    %v6793 = vand.u32 2147483647, %v6738
    %vm6794 = vcmp.eq.f32.partialorder %v6793, 8.507059e+37
    %v6795 = vand.u32 %v6738, 2147483648
    %v6796 = vor.u32 1.1754944e-38, %v6795
    %v6797 = vsel %vm6794, %v6796, %v6792
    %v6798 = vmul.f32 1.0, %v6797
    %v6799 = vtanh.pop %v6719
    %v6800 = vtanh.pop %v6720
    %v6801 = vtanh.pop %v6721
    %v6802 = vtanh.pop %v6722
    %v6804 = vrot.slane %v6663, 4
    %v6805 = vrot.slane %v6663, 5
    %v6806 = vrot.slane %v6663, 6
    %v6807 = vrot.slane %v6663, 7
    %6808 = vrot.lane.b32.xlu0 %v6804, 32
    %v6809 = vpop.permute.xlu0 %6808
    %6810 = vrot.lane.b32.xlu0 %v6805, 32
    %v6811 = vpop.permute.xlu0 %6810
    %6812 = vrot.lane.b32.xlu0 %v6806, 32
    %v6813 = vpop.permute.xlu0 %6812
    %6814 = vrot.lane.b32.xlu0 %v6807, 32
    %v6815 = vpop.permute.xlu0 %6814
    %v6820 = vmul.f32 %v6753, %v6809
    %v6821 = vmul.f32 %v6768, %v6811
    %v6822 = vmul.f32 %v6783, %v6813
    %v6823 = vmul.f32 %v6798, %v6815
    %6828 = vrot.lane.b32.xlu0 %v6799, 64
    %v6829 = vpop.permute.xlu0 %6828
    %6830 = vrot.lane.b32.xlu0 %v6800, 64
    %v6831 = vpop.permute.xlu0 %6830
    %6832 = vrot.lane.b32.xlu0 %v6801, 64
    %v6833 = vpop.permute.xlu0 %6832
    %6834 = vrot.lane.b32.xlu0 %v6802, 64
    %v6835 = vpop.permute.xlu0 %6834
    %v6840 = vmul.f32 %v6753, %v6829
    %v6841 = vmul.f32 %v6768, %v6831
    %v6842 = vmul.f32 %v6783, %v6833
    %v6843 = vmul.f32 %v6798, %v6835
    %6848 = vrot.lane.b32.xlu0 %v6840, 32
    %v6849 = vpop.permute.xlu0 %6848
    %6850 = vrot.lane.b32.xlu0 %v6841, 32
    %v6851 = vpop.permute.xlu0 %6850
    %6852 = vrot.lane.b32.xlu0 %v6842, 32
    %v6853 = vpop.permute.xlu0 %6852
    %6854 = vrot.lane.b32.xlu0 %v6843, 32
    %v6855 = vpop.permute.xlu0 %6854
    %v6860 = vadd.f32 %v6820, %v6849
    %v6861 = vadd.f32 %v6821, %v6851
    %v6862 = vadd.f32 %v6822, %v6853
    %v6863 = vadd.f32 %v6823, %v6855
    %v6864 = vtanh.pop %v6860
    %v6865 = vtanh.pop %v6861
    %v6866 = vtanh.pop %v6862
    %v6867 = vtanh.pop %v6863
    %6872 = vrot.lane.b32.xlu0 %v6864, 64
    %v6873 = vpop.permute.xlu0 %6872
    %6874 = vrot.lane.b32.xlu0 %v6865, 64
    %v6875 = vpop.permute.xlu0 %6874
    %6876 = vrot.lane.b32.xlu0 %v6866, 64
    %v6877 = vpop.permute.xlu0 %6876
    %6878 = vrot.lane.b32.xlu0 %v6867, 64
    %v6879 = vpop.permute.xlu0 %6878
    %v6884 = vmul.f32 %v6753, %v6873
    %v6885 = vmul.f32 %v6768, %v6875
    %v6886 = vmul.f32 %v6783, %v6877
    %v6887 = vmul.f32 %v6798, %v6879
    %v6892 = vrot.slane %v6884, 4
    %v6893 = vrot.slane %v6885, 3
    %v6894 = vsel %vm484, %v6893, %v6892
    %v6895 = vrot.slane %v6886, 2
    %v6896 = vsel %vm487, %v6895, %v6894
    %v6897 = vrot.slane %v6887, 1
    %v6898 = vsel %vm490, %v6897, %v6896
    %6899 = vrot.lane.b32.xlu0 %v6898, 32
    %v6900 = vpop.permute.xlu0 %6899
    %v6902 = vsel %vm3018, %v6900, %v6648
    %v6907 = vrot.slane %v6860, 4
    %v6908 = vrot.slane %v6861, 3
    %v6909 = vsel %vm484, %v6908, %v6907
    %v6910 = vrot.slane %v6862, 2
    %v6911 = vsel %vm487, %v6910, %v6909
    %v6912 = vrot.slane %v6863, 1
    %v6913 = vsel %vm490, %v6912, %v6911
    %6914 = vrot.lane.b32.xlu0 %v6913, 96
    %v6915 = vpop.permute.xlu0 %6914
    %v6917 = vsel %vm3018, %v6915, %v6663
    %v6919 = vrot.slane %v6902, 1
    %v6920 = vrot.slane %v6902, 2
    %v6921 = vrot.slane %v6902, 3
    %v6922 = vperm.slane %v6902, 0
    %v6923 = vperm.slane %v6919, 0
    %v6924 = vperm.slane %v6920, 0
    %v6925 = vperm.slane %v6921, 0
    %6926 = vrot.lane.b32.xlu0 %v6922, 32
    %v6927 = vpop.permute.xlu0 %6926
    %6928 = vrot.lane.b32.xlu0 %v6923, 32
    %v6929 = vpop.permute.xlu0 %6928
    %6930 = vrot.lane.b32.xlu0 %v6924, 32
    %v6931 = vpop.permute.xlu0 %6930
    %6932 = vrot.lane.b32.xlu0 %v6925, 32
    %v6933 = vpop.permute.xlu0 %6932
    %6938 = vst.msk [vmem:[#allocation3 + $0x4] sm:$0x1] %vm2294, %v6927
    %6939 = vst.msk [vmem:[#allocation3 + $0xc] sm:$0x1] %vm2294, %v6929
    %6940 = vst.msk [vmem:[#allocation3 + $0x14] sm:$0x1] %vm2294, %v6931
    %6941 = vst.msk [vmem:[#allocation3 + $0x1c] sm:$0x1] %vm2294, %v6933
    %v6942 = vsel %vm204, %v6902, 0
    %6944 = vmatpush.msra.mxu0 0.0
    %6945 = vmatpush.msra.mxu0 0.0
    %6946 = vmatpush.msra.mxu0 0.0
    %6947 = vmatpush.msra.mxu0 0.0
    %6948 = vmatpush.msra.mxu0 0.0
    %6949 = vmatpush.msra.mxu0 0.0
    %6950 = vmatpush.msra.mxu0 0.0
    %6951 = vmatpush.msra.mxu0 0.0
    %6952 = vmatpush.msra.mxu0 0.0
    %6953 = vmatpush.msra.mxu0 0.0
    %6954 = vmatpush.msra.mxu0 0.0
    %6955 = vmatpush.msra.mxu0 0.0
    %6956 = vmatpush.msra.mxu0 %v5944
    %6957 = vmatpush.msra.mxu0 %v5943
    %6958 = vmatpush.msra.mxu0 %v5942
    %6959 = vmatpush.msra.mxu0 %v5941
    %6960 = vmatmul.f32.gmra.mxu0 %v6942
    %v6961 = vpop.f32.mrf.mxu0
    %v6962 = vadd.f32 0.0, %v6961
    %6963 = vdwg.mxu0
    %v6965 = vrot.slane %v6962, 5
    %v6966 = vrot.slane %v6962, 6
    %v6967 = vrot.slane %v6962, 7
    %v6972 = vadd.f32 %v4165, %v6965
    %v6973 = vadd.f32 %v4168, %v6966
    %v6974 = vadd.f32 %v4171, %v6967
    %v6975 = vadd.f32 %v4174, %v6962
    %v6976 = vxor.u32 %v6972, 2147483648
    %v6977 = vxor.u32 %v6973, 2147483648
    %v6978 = vxor.u32 %v6974, 2147483648
    %v6979 = vxor.u32 %v6975, 2147483648
    %v6980 = vmul.f32 %v6976, 1.442695
    %v6981 = vpow.pop %v6980
    %v6982 = vmul.f32 %v6977, 1.442695
    %v6983 = vpow.pop %v6982
    %v6984 = vmul.f32 %v6978, 1.442695
    %v6985 = vpow.pop %v6984
    %v6986 = vmul.f32 %v6979, 1.442695
    %v6987 = vpow.pop %v6986
    %v6988 = vadd.f32 %v6981, 1.0
    %v6989 = vadd.f32 %v6983, 1.0
    %v6990 = vadd.f32 %v6985, 1.0
    %v6991 = vadd.f32 %v6987, 1.0
    %v6992 = vrcp.pop %v6988
    %v6993 = vmul.f32 %v6988, %v6992
    %v6994 = vsub.f32 1.0, %v6993
    %v6995 = vmul.f32 %v6992, %v6994
    %v6996 = vadd.f32 %v6992, %v6995
    %vm6997 = vweird.f32 %v6988
    %vm6998 = vweird.f32 %v6992
    %vm6999 = vmor %vm6997, %vm6998
    %v7000 = vsel %vm6999, %v6992, %v6996
    %v7001 = vand.u32 2147483647, %v6988
    %vm7002 = vcmp.eq.f32.partialorder %v7001, 8.507059e+37
    %v7003 = vand.u32 %v6988, 2147483648
    %v7004 = vor.u32 1.1754944e-38, %v7003
    %v7005 = vsel %vm7002, %v7004, %v7000
    %v7006 = vmul.f32 1.0, %v7005
    %v7007 = vrcp.pop %v6989
    %v7008 = vmul.f32 %v6989, %v7007
    %v7009 = vsub.f32 1.0, %v7008
    %v7010 = vmul.f32 %v7007, %v7009
    %v7011 = vadd.f32 %v7007, %v7010
    %vm7012 = vweird.f32 %v6989
    %vm7013 = vweird.f32 %v7007
    %vm7014 = vmor %vm7012, %vm7013
    %v7015 = vsel %vm7014, %v7007, %v7011
    %v7016 = vand.u32 2147483647, %v6989
    %vm7017 = vcmp.eq.f32.partialorder %v7016, 8.507059e+37
    %v7018 = vand.u32 %v6989, 2147483648
    %v7019 = vor.u32 1.1754944e-38, %v7018
    %v7020 = vsel %vm7017, %v7019, %v7015
    %v7021 = vmul.f32 1.0, %v7020
    %v7022 = vrcp.pop %v6990
    %v7023 = vmul.f32 %v6990, %v7022
    %v7024 = vsub.f32 1.0, %v7023
    %v7025 = vmul.f32 %v7022, %v7024
    %v7026 = vadd.f32 %v7022, %v7025
    %vm7027 = vweird.f32 %v6990
    %vm7028 = vweird.f32 %v7022
    %vm7029 = vmor %vm7027, %vm7028
    %v7030 = vsel %vm7029, %v7022, %v7026
    %v7031 = vand.u32 2147483647, %v6990
    %vm7032 = vcmp.eq.f32.partialorder %v7031, 8.507059e+37
    %v7033 = vand.u32 %v6990, 2147483648
    %v7034 = vor.u32 1.1754944e-38, %v7033
    %v7035 = vsel %vm7032, %v7034, %v7030
    %v7036 = vmul.f32 1.0, %v7035
    %v7037 = vrcp.pop %v6991
    %v7038 = vmul.f32 %v6991, %v7037
    %v7039 = vsub.f32 1.0, %v7038
    %v7040 = vmul.f32 %v7037, %v7039
    %v7041 = vadd.f32 %v7037, %v7040
    %vm7042 = vweird.f32 %v6991
    %vm7043 = vweird.f32 %v7037
    %vm7044 = vmor %vm7042, %vm7043
    %v7045 = vsel %vm7044, %v7037, %v7041
    %v7046 = vand.u32 2147483647, %v6991
    %vm7047 = vcmp.eq.f32.partialorder %v7046, 8.507059e+37
    %v7048 = vand.u32 %v6991, 2147483648
    %v7049 = vor.u32 1.1754944e-38, %v7048
    %v7050 = vsel %vm7047, %v7049, %v7045
    %v7051 = vmul.f32 1.0, %v7050
    %v7052 = vtanh.pop %v6972
    %v7053 = vtanh.pop %v6973
    %v7054 = vtanh.pop %v6974
    %v7055 = vtanh.pop %v6975
    %v7057 = vrot.slane %v6917, 5
    %v7058 = vrot.slane %v6917, 6
    %v7059 = vrot.slane %v6917, 7
    %7060 = vrot.lane.b32.xlu0 %v7057, 32
    %v7061 = vpop.permute.xlu0 %7060
    %7062 = vrot.lane.b32.xlu0 %v7058, 32
    %v7063 = vpop.permute.xlu0 %7062
    %7064 = vrot.lane.b32.xlu0 %v7059, 32
    %v7065 = vpop.permute.xlu0 %7064
    %7066 = vrot.lane.b32.xlu0 %v6917, 32
    %v7067 = vpop.permute.xlu0 %7066
    %v7072 = vmul.f32 %v7006, %v7061
    %v7073 = vmul.f32 %v7021, %v7063
    %v7074 = vmul.f32 %v7036, %v7065
    %v7075 = vmul.f32 %v7051, %v7067
    %7080 = vrot.lane.b32.xlu0 %v7052, 64
    %v7081 = vpop.permute.xlu0 %7080
    %7082 = vrot.lane.b32.xlu0 %v7053, 64
    %v7083 = vpop.permute.xlu0 %7082
    %7084 = vrot.lane.b32.xlu0 %v7054, 64
    %v7085 = vpop.permute.xlu0 %7084
    %7086 = vrot.lane.b32.xlu0 %v7055, 64
    %v7087 = vpop.permute.xlu0 %7086
    %v7092 = vmul.f32 %v7006, %v7081
    %v7093 = vmul.f32 %v7021, %v7083
    %v7094 = vmul.f32 %v7036, %v7085
    %v7095 = vmul.f32 %v7051, %v7087
    %7100 = vrot.lane.b32.xlu0 %v7092, 32
    %v7101 = vpop.permute.xlu0 %7100
    %7102 = vrot.lane.b32.xlu0 %v7093, 32
    %v7103 = vpop.permute.xlu0 %7102
    %7104 = vrot.lane.b32.xlu0 %v7094, 32
    %v7105 = vpop.permute.xlu0 %7104
    %7106 = vrot.lane.b32.xlu0 %v7095, 32
    %v7107 = vpop.permute.xlu0 %7106
    %v7112 = vadd.f32 %v7072, %v7101
    %v7113 = vadd.f32 %v7073, %v7103
    %v7114 = vadd.f32 %v7074, %v7105
    %v7115 = vadd.f32 %v7075, %v7107
    %v7116 = vtanh.pop %v7112
    %v7117 = vtanh.pop %v7113
    %v7118 = vtanh.pop %v7114
    %v7119 = vtanh.pop %v7115
    %7124 = vrot.lane.b32.xlu0 %v7116, 64
    %v7125 = vpop.permute.xlu0 %7124
    %7126 = vrot.lane.b32.xlu0 %v7117, 64
    %v7127 = vpop.permute.xlu0 %7126
    %7128 = vrot.lane.b32.xlu0 %v7118, 64
    %v7129 = vpop.permute.xlu0 %7128
    %7130 = vrot.lane.b32.xlu0 %v7119, 64
    %v7131 = vpop.permute.xlu0 %7130
    %v7136 = vmul.f32 %v7006, %v7125
    %v7137 = vmul.f32 %v7021, %v7127
    %v7138 = vmul.f32 %v7036, %v7129
    %v7139 = vmul.f32 %v7051, %v7131
    %v7144 = vrot.slane %v7136, 3
    %v7145 = vrot.slane %v7137, 2
    %v7146 = vsel %vm484, %v7145, %v7144
    %v7147 = vrot.slane %v7138, 1
    %v7148 = vsel %vm487, %v7147, %v7146
    %v7149 = vsel %vm490, %v7139, %v7148
    %7150 = vrot.lane.b32.xlu0 %v7149, 32
    %v7151 = vpop.permute.xlu0 %7150
    %v7153 = vsel %vm3274, %v7151, %v6902
    %v7158 = vrot.slane %v7112, 3
    %v7159 = vrot.slane %v7113, 2
    %v7160 = vsel %vm484, %v7159, %v7158
    %v7161 = vrot.slane %v7114, 1
    %v7162 = vsel %vm487, %v7161, %v7160
    %v7163 = vsel %vm490, %v7115, %v7162
    %7164 = vrot.lane.b32.xlu0 %v7163, 96
    %v7165 = vpop.permute.xlu0 %7164
    %v7167 = vsel %vm3274, %v7165, %v6917
    %v7169 = vrot.slane %v7153, 1
    %v7170 = vrot.slane %v7153, 2
    %v7171 = vrot.slane %v7153, 3
    %v7172 = vperm.slane %v7153, 0
    %v7173 = vperm.slane %v7169, 0
    %v7174 = vperm.slane %v7170, 0
    %v7175 = vperm.slane %v7171, 0
    %7176 = vrot.lane.b32.xlu0 %v7172, 32
    %v7177 = vpop.permute.xlu0 %7176
    %7178 = vrot.lane.b32.xlu0 %v7173, 32
    %v7179 = vpop.permute.xlu0 %7178
    %7180 = vrot.lane.b32.xlu0 %v7174, 32
    %v7181 = vpop.permute.xlu0 %7180
    %7182 = vrot.lane.b32.xlu0 %v7175, 32
    %v7183 = vpop.permute.xlu0 %7182
    %7188 = vst.msk [vmem:[#allocation3 + $0x3] sm:$0x1] %vm2294, %v7177
    %7189 = vst.msk [vmem:[#allocation3 + $0xb] sm:$0x1] %vm2294, %v7179
    %7190 = vst.msk [vmem:[#allocation3 + $0x13] sm:$0x1] %vm2294, %v7181
    %7191 = vst.msk [vmem:[#allocation3 + $0x1b] sm:$0x1] %vm2294, %v7183
    %v7192 = vsel %vm204, %v7153, 0
    %7194 = vmatpush.msra.mxu0 0.0
    %7195 = vmatpush.msra.mxu0 0.0
    %7196 = vmatpush.msra.mxu0 0.0
    %7197 = vmatpush.msra.mxu0 0.0
    %7198 = vmatpush.msra.mxu0 0.0
    %7199 = vmatpush.msra.mxu0 0.0
    %7200 = vmatpush.msra.mxu0 0.0
    %7201 = vmatpush.msra.mxu0 0.0
    %7202 = vmatpush.msra.mxu0 0.0
    %7203 = vmatpush.msra.mxu0 0.0
    %7204 = vmatpush.msra.mxu0 0.0
    %7205 = vmatpush.msra.mxu0 0.0
    %7206 = vmatpush.msra.mxu0 %v5944
    %7207 = vmatpush.msra.mxu0 %v5943
    %7208 = vmatpush.msra.mxu0 %v5942
    %7209 = vmatpush.msra.mxu0 %v5941
    %7210 = vmatmul.f32.gmra.mxu0 %v7192
    %v7211 = vpop.f32.mrf.mxu0
    %v7212 = vadd.f32 0.0, %v7211
    %7213 = vdwg.mxu0
    %v7215 = vrot.slane %v7212, 6
    %v7216 = vrot.slane %v7212, 7
    %v7217 = vrot.slane %v7212, 1
    %v7222 = vadd.f32 %v4165, %v7215
    %v7223 = vadd.f32 %v4168, %v7216
    %v7224 = vadd.f32 %v4171, %v7212
    %v7225 = vadd.f32 %v4174, %v7217
    %v7226 = vxor.u32 %v7222, 2147483648
    %v7227 = vxor.u32 %v7223, 2147483648
    %v7228 = vxor.u32 %v7224, 2147483648
    %v7229 = vxor.u32 %v7225, 2147483648
    %v7230 = vmul.f32 %v7226, 1.442695
    %v7231 = vpow.pop %v7230
    %v7232 = vmul.f32 %v7227, 1.442695
    %v7233 = vpow.pop %v7232
    %v7234 = vmul.f32 %v7228, 1.442695
    %v7235 = vpow.pop %v7234
    %v7236 = vmul.f32 %v7229, 1.442695
    %v7237 = vpow.pop %v7236
    %v7238 = vadd.f32 %v7231, 1.0
    %v7239 = vadd.f32 %v7233, 1.0
    %v7240 = vadd.f32 %v7235, 1.0
    %v7241 = vadd.f32 %v7237, 1.0
    %v7242 = vrcp.pop %v7238
    %v7243 = vmul.f32 %v7238, %v7242
    %v7244 = vsub.f32 1.0, %v7243
    %v7245 = vmul.f32 %v7242, %v7244
    %v7246 = vadd.f32 %v7242, %v7245
    %vm7247 = vweird.f32 %v7238
    %vm7248 = vweird.f32 %v7242
    %vm7249 = vmor %vm7247, %vm7248
    %v7250 = vsel %vm7249, %v7242, %v7246
    %v7251 = vand.u32 2147483647, %v7238
    %vm7252 = vcmp.eq.f32.partialorder %v7251, 8.507059e+37
    %v7253 = vand.u32 %v7238, 2147483648
    %v7254 = vor.u32 1.1754944e-38, %v7253
    %v7255 = vsel %vm7252, %v7254, %v7250
    %v7256 = vmul.f32 1.0, %v7255
    %v7257 = vrcp.pop %v7239
    %v7258 = vmul.f32 %v7239, %v7257
    %v7259 = vsub.f32 1.0, %v7258
    %v7260 = vmul.f32 %v7257, %v7259
    %v7261 = vadd.f32 %v7257, %v7260
    %vm7262 = vweird.f32 %v7239
    %vm7263 = vweird.f32 %v7257
    %vm7264 = vmor %vm7262, %vm7263
    %v7265 = vsel %vm7264, %v7257, %v7261
    %v7266 = vand.u32 2147483647, %v7239
    %vm7267 = vcmp.eq.f32.partialorder %v7266, 8.507059e+37
    %v7268 = vand.u32 %v7239, 2147483648
    %v7269 = vor.u32 1.1754944e-38, %v7268
    %v7270 = vsel %vm7267, %v7269, %v7265
    %v7271 = vmul.f32 1.0, %v7270
    %v7272 = vrcp.pop %v7240
    %v7273 = vmul.f32 %v7240, %v7272
    %v7274 = vsub.f32 1.0, %v7273
    %v7275 = vmul.f32 %v7272, %v7274
    %v7276 = vadd.f32 %v7272, %v7275
    %vm7277 = vweird.f32 %v7240
    %vm7278 = vweird.f32 %v7272
    %vm7279 = vmor %vm7277, %vm7278
    %v7280 = vsel %vm7279, %v7272, %v7276
    %v7281 = vand.u32 2147483647, %v7240
    %vm7282 = vcmp.eq.f32.partialorder %v7281, 8.507059e+37
    %v7283 = vand.u32 %v7240, 2147483648
    %v7284 = vor.u32 1.1754944e-38, %v7283
    %v7285 = vsel %vm7282, %v7284, %v7280
    %v7286 = vmul.f32 1.0, %v7285
    %v7287 = vrcp.pop %v7241
    %v7288 = vmul.f32 %v7241, %v7287
    %v7289 = vsub.f32 1.0, %v7288
    %v7290 = vmul.f32 %v7287, %v7289
    %v7291 = vadd.f32 %v7287, %v7290
    %vm7292 = vweird.f32 %v7241
    %vm7293 = vweird.f32 %v7287
    %vm7294 = vmor %vm7292, %vm7293
    %v7295 = vsel %vm7294, %v7287, %v7291
    %v7296 = vand.u32 2147483647, %v7241
    %vm7297 = vcmp.eq.f32.partialorder %v7296, 8.507059e+37
    %v7298 = vand.u32 %v7241, 2147483648
    %v7299 = vor.u32 1.1754944e-38, %v7298
    %v7300 = vsel %vm7297, %v7299, %v7295
    %v7301 = vmul.f32 1.0, %v7300
    %v7302 = vtanh.pop %v7222
    %v7303 = vtanh.pop %v7223
    %v7304 = vtanh.pop %v7224
    %v7305 = vtanh.pop %v7225
    %v7307 = vrot.slane %v7167, 6
    %v7308 = vrot.slane %v7167, 7
    %v7309 = vrot.slane %v7167, 1
    %7310 = vrot.lane.b32.xlu0 %v7307, 32
    %v7311 = vpop.permute.xlu0 %7310
    %7312 = vrot.lane.b32.xlu0 %v7308, 32
    %v7313 = vpop.permute.xlu0 %7312
    %7314 = vrot.lane.b32.xlu0 %v7167, 32
    %v7315 = vpop.permute.xlu0 %7314
    %7316 = vrot.lane.b32.xlu0 %v7309, 32
    %v7317 = vpop.permute.xlu0 %7316
    %v7322 = vmul.f32 %v7256, %v7311
    %v7323 = vmul.f32 %v7271, %v7313
    %v7324 = vmul.f32 %v7286, %v7315
    %v7325 = vmul.f32 %v7301, %v7317
    %7330 = vrot.lane.b32.xlu0 %v7302, 64
    %v7331 = vpop.permute.xlu0 %7330
    %7332 = vrot.lane.b32.xlu0 %v7303, 64
    %v7333 = vpop.permute.xlu0 %7332
    %7334 = vrot.lane.b32.xlu0 %v7304, 64
    %v7335 = vpop.permute.xlu0 %7334
    %7336 = vrot.lane.b32.xlu0 %v7305, 64
    %v7337 = vpop.permute.xlu0 %7336
    %v7342 = vmul.f32 %v7256, %v7331
    %v7343 = vmul.f32 %v7271, %v7333
    %v7344 = vmul.f32 %v7286, %v7335
    %v7345 = vmul.f32 %v7301, %v7337
    %7350 = vrot.lane.b32.xlu0 %v7342, 32
    %v7351 = vpop.permute.xlu0 %7350
    %7352 = vrot.lane.b32.xlu0 %v7343, 32
    %v7353 = vpop.permute.xlu0 %7352
    %7354 = vrot.lane.b32.xlu0 %v7344, 32
    %v7355 = vpop.permute.xlu0 %7354
    %7356 = vrot.lane.b32.xlu0 %v7345, 32
    %v7357 = vpop.permute.xlu0 %7356
    %v7362 = vadd.f32 %v7322, %v7351
    %v7363 = vadd.f32 %v7323, %v7353
    %v7364 = vadd.f32 %v7324, %v7355
    %v7365 = vadd.f32 %v7325, %v7357
    %v7366 = vtanh.pop %v7362
    %v7367 = vtanh.pop %v7363
    %v7368 = vtanh.pop %v7364
    %v7369 = vtanh.pop %v7365
    %7374 = vrot.lane.b32.xlu0 %v7366, 64
    %v7375 = vpop.permute.xlu0 %7374
    %7376 = vrot.lane.b32.xlu0 %v7367, 64
    %v7377 = vpop.permute.xlu0 %7376
    %7378 = vrot.lane.b32.xlu0 %v7368, 64
    %v7379 = vpop.permute.xlu0 %7378
    %7380 = vrot.lane.b32.xlu0 %v7369, 64
    %v7381 = vpop.permute.xlu0 %7380
    %v7386 = vmul.f32 %v7256, %v7375
    %v7387 = vmul.f32 %v7271, %v7377
    %v7388 = vmul.f32 %v7286, %v7379
    %v7389 = vmul.f32 %v7301, %v7381
    %v7394 = vrot.slane %v7386, 2
    %v7395 = vrot.slane %v7387, 1
    %v7396 = vsel %vm484, %v7395, %v7394
    %v7397 = vsel %vm487, %v7388, %v7396
    %v7398 = vrot.slane %v7389, 7
    %v7399 = vsel %vm490, %v7398, %v7397
    %7400 = vrot.lane.b32.xlu0 %v7399, 32
    %v7401 = vpop.permute.xlu0 %7400
    %v7403 = vsel %vm3528, %v7401, %v7153
    %v7408 = vrot.slane %v7362, 2
    %v7409 = vrot.slane %v7363, 1
    %v7410 = vsel %vm484, %v7409, %v7408
    %v7411 = vsel %vm487, %v7364, %v7410
    %v7412 = vrot.slane %v7365, 7
    %v7413 = vsel %vm490, %v7412, %v7411
    %7414 = vrot.lane.b32.xlu0 %v7413, 96
    %v7415 = vpop.permute.xlu0 %7414
    %v7417 = vsel %vm3528, %v7415, %v7167
    %v7419 = vrot.slane %v7403, 1
    %v7420 = vrot.slane %v7403, 2
    %v7421 = vrot.slane %v7403, 3
    %v7422 = vperm.slane %v7403, 0
    %v7423 = vperm.slane %v7419, 0
    %v7424 = vperm.slane %v7420, 0
    %v7425 = vperm.slane %v7421, 0
    %7426 = vrot.lane.b32.xlu0 %v7422, 32
    %v7427 = vpop.permute.xlu0 %7426
    %7428 = vrot.lane.b32.xlu0 %v7423, 32
    %v7429 = vpop.permute.xlu0 %7428
    %7430 = vrot.lane.b32.xlu0 %v7424, 32
    %v7431 = vpop.permute.xlu0 %7430
    %7432 = vrot.lane.b32.xlu0 %v7425, 32
    %v7433 = vpop.permute.xlu0 %7432
    %7438 = vst.msk [vmem:[#allocation3 + $0x2] sm:$0x1] %vm2294, %v7427
    %7439 = vst.msk [vmem:[#allocation3 + $0xa] sm:$0x1] %vm2294, %v7429
    %7440 = vst.msk [vmem:[#allocation3 + $0x12] sm:$0x1] %vm2294, %v7431
    %7441 = vst.msk [vmem:[#allocation3 + $0x1a] sm:$0x1] %vm2294, %v7433
    %v7442 = vsel %vm204, %v7403, 0
    %7444 = vmatpush.msra.mxu0 0.0
    %7445 = vmatpush.msra.mxu0 0.0
    %7446 = vmatpush.msra.mxu0 0.0
    %7447 = vmatpush.msra.mxu0 0.0
    %7448 = vmatpush.msra.mxu0 0.0
    %7449 = vmatpush.msra.mxu0 0.0
    %7450 = vmatpush.msra.mxu0 0.0
    %7451 = vmatpush.msra.mxu0 0.0
    %7452 = vmatpush.msra.mxu0 0.0
    %7453 = vmatpush.msra.mxu0 0.0
    %7454 = vmatpush.msra.mxu0 0.0
    %7455 = vmatpush.msra.mxu0 0.0
    %7456 = vmatpush.msra.mxu0 %v5944
    %7457 = vmatpush.msra.mxu0 %v5943
    %7458 = vmatpush.msra.mxu0 %v5942
    %7459 = vmatpush.msra.mxu0 %v5941
    %7460 = vmatmul.f32.gmra.mxu0 %v7442
    %v7461 = vpop.f32.mrf.mxu0
    %v7462 = vadd.f32 0.0, %v7461
    %7463 = vdwg.mxu0
    %v7465 = vrot.slane %v7462, 7
    %v7466 = vrot.slane %v7462, 1
    %v7467 = vrot.slane %v7462, 2
    %v7472 = vadd.f32 %v4165, %v7465
    %v7473 = vadd.f32 %v4168, %v7462
    %v7474 = vadd.f32 %v4171, %v7466
    %v7475 = vadd.f32 %v4174, %v7467
    %v7476 = vxor.u32 %v7472, 2147483648
    %v7477 = vxor.u32 %v7473, 2147483648
    %v7478 = vxor.u32 %v7474, 2147483648
    %v7479 = vxor.u32 %v7475, 2147483648
    %v7480 = vmul.f32 %v7476, 1.442695
    %v7481 = vpow.pop %v7480
    %v7482 = vmul.f32 %v7477, 1.442695
    %v7483 = vpow.pop %v7482
    %v7484 = vmul.f32 %v7478, 1.442695
    %v7485 = vpow.pop %v7484
    %v7486 = vmul.f32 %v7479, 1.442695
    %v7487 = vpow.pop %v7486
    %v7488 = vadd.f32 %v7481, 1.0
    %v7489 = vadd.f32 %v7483, 1.0
    %v7490 = vadd.f32 %v7485, 1.0
    %v7491 = vadd.f32 %v7487, 1.0
    %v7492 = vrcp.pop %v7488
    %v7493 = vmul.f32 %v7488, %v7492
    %v7494 = vsub.f32 1.0, %v7493
    %v7495 = vmul.f32 %v7492, %v7494
    %v7496 = vadd.f32 %v7492, %v7495
    %vm7497 = vweird.f32 %v7488
    %vm7498 = vweird.f32 %v7492
    %vm7499 = vmor %vm7497, %vm7498
    %v7500 = vsel %vm7499, %v7492, %v7496
    %v7501 = vand.u32 2147483647, %v7488
    %vm7502 = vcmp.eq.f32.partialorder %v7501, 8.507059e+37
    %v7503 = vand.u32 %v7488, 2147483648
    %v7504 = vor.u32 1.1754944e-38, %v7503
    %v7505 = vsel %vm7502, %v7504, %v7500
    %v7506 = vmul.f32 1.0, %v7505
    %v7507 = vrcp.pop %v7489
    %v7508 = vmul.f32 %v7489, %v7507
    %v7509 = vsub.f32 1.0, %v7508
    %v7510 = vmul.f32 %v7507, %v7509
    %v7511 = vadd.f32 %v7507, %v7510
    %vm7512 = vweird.f32 %v7489
    %vm7513 = vweird.f32 %v7507
    %vm7514 = vmor %vm7512, %vm7513
    %v7515 = vsel %vm7514, %v7507, %v7511
    %v7516 = vand.u32 2147483647, %v7489
    %vm7517 = vcmp.eq.f32.partialorder %v7516, 8.507059e+37
    %v7518 = vand.u32 %v7489, 2147483648
    %v7519 = vor.u32 1.1754944e-38, %v7518
    %v7520 = vsel %vm7517, %v7519, %v7515
    %v7521 = vmul.f32 1.0, %v7520
    %v7522 = vrcp.pop %v7490
    %v7523 = vmul.f32 %v7490, %v7522
    %v7524 = vsub.f32 1.0, %v7523
    %v7525 = vmul.f32 %v7522, %v7524
    %v7526 = vadd.f32 %v7522, %v7525
    %vm7527 = vweird.f32 %v7490
    %vm7528 = vweird.f32 %v7522
    %vm7529 = vmor %vm7527, %vm7528
    %v7530 = vsel %vm7529, %v7522, %v7526
    %v7531 = vand.u32 2147483647, %v7490
    %vm7532 = vcmp.eq.f32.partialorder %v7531, 8.507059e+37
    %v7533 = vand.u32 %v7490, 2147483648
    %v7534 = vor.u32 1.1754944e-38, %v7533
    %v7535 = vsel %vm7532, %v7534, %v7530
    %v7536 = vmul.f32 1.0, %v7535
    %v7537 = vrcp.pop %v7491
    %v7538 = vmul.f32 %v7491, %v7537
    %v7539 = vsub.f32 1.0, %v7538
    %v7540 = vmul.f32 %v7537, %v7539
    %v7541 = vadd.f32 %v7537, %v7540
    %vm7542 = vweird.f32 %v7491
    %vm7543 = vweird.f32 %v7537
    %vm7544 = vmor %vm7542, %vm7543
    %v7545 = vsel %vm7544, %v7537, %v7541
    %v7546 = vand.u32 2147483647, %v7491
    %vm7547 = vcmp.eq.f32.partialorder %v7546, 8.507059e+37
    %v7548 = vand.u32 %v7491, 2147483648
    %v7549 = vor.u32 1.1754944e-38, %v7548
    %v7550 = vsel %vm7547, %v7549, %v7545
    %v7551 = vmul.f32 1.0, %v7550
    %v7552 = vtanh.pop %v7472
    %v7553 = vtanh.pop %v7473
    %v7554 = vtanh.pop %v7474
    %v7555 = vtanh.pop %v7475
    %v7557 = vrot.slane %v7417, 7
    %v7558 = vrot.slane %v7417, 1
    %v7559 = vrot.slane %v7417, 2
    %7560 = vrot.lane.b32.xlu0 %v7557, 32
    %v7561 = vpop.permute.xlu0 %7560
    %7562 = vrot.lane.b32.xlu0 %v7417, 32
    %v7563 = vpop.permute.xlu0 %7562
    %7564 = vrot.lane.b32.xlu0 %v7558, 32
    %v7565 = vpop.permute.xlu0 %7564
    %7566 = vrot.lane.b32.xlu0 %v7559, 32
    %v7567 = vpop.permute.xlu0 %7566
    %v7572 = vmul.f32 %v7506, %v7561
    %v7573 = vmul.f32 %v7521, %v7563
    %v7574 = vmul.f32 %v7536, %v7565
    %v7575 = vmul.f32 %v7551, %v7567
    %7580 = vrot.lane.b32.xlu0 %v7552, 64
    %v7581 = vpop.permute.xlu0 %7580
    %7582 = vrot.lane.b32.xlu0 %v7553, 64
    %v7583 = vpop.permute.xlu0 %7582
    %7584 = vrot.lane.b32.xlu0 %v7554, 64
    %v7585 = vpop.permute.xlu0 %7584
    %7586 = vrot.lane.b32.xlu0 %v7555, 64
    %v7587 = vpop.permute.xlu0 %7586
    %v7592 = vmul.f32 %v7506, %v7581
    %v7593 = vmul.f32 %v7521, %v7583
    %v7594 = vmul.f32 %v7536, %v7585
    %v7595 = vmul.f32 %v7551, %v7587
    %7600 = vrot.lane.b32.xlu0 %v7592, 32
    %v7601 = vpop.permute.xlu0 %7600
    %7602 = vrot.lane.b32.xlu0 %v7593, 32
    %v7603 = vpop.permute.xlu0 %7602
    %7604 = vrot.lane.b32.xlu0 %v7594, 32
    %v7605 = vpop.permute.xlu0 %7604
    %7606 = vrot.lane.b32.xlu0 %v7595, 32
    %v7607 = vpop.permute.xlu0 %7606
    %v7612 = vadd.f32 %v7572, %v7601
    %v7613 = vadd.f32 %v7573, %v7603
    %v7614 = vadd.f32 %v7574, %v7605
    %v7615 = vadd.f32 %v7575, %v7607
    %v7616 = vtanh.pop %v7612
    %v7617 = vtanh.pop %v7613
    %v7618 = vtanh.pop %v7614
    %v7619 = vtanh.pop %v7615
    %7624 = vrot.lane.b32.xlu0 %v7616, 64
    %v7625 = vpop.permute.xlu0 %7624
    %7626 = vrot.lane.b32.xlu0 %v7617, 64
    %v7627 = vpop.permute.xlu0 %7626
    %7628 = vrot.lane.b32.xlu0 %v7618, 64
    %v7629 = vpop.permute.xlu0 %7628
    %7630 = vrot.lane.b32.xlu0 %v7619, 64
    %v7631 = vpop.permute.xlu0 %7630
    %v7636 = vmul.f32 %v7506, %v7625
    %v7637 = vmul.f32 %v7521, %v7627
    %v7638 = vmul.f32 %v7536, %v7629
    %v7639 = vmul.f32 %v7551, %v7631
    %v7644 = vrot.slane %v7636, 1
    %v7645 = vsel %vm484, %v7637, %v7644
    %v7646 = vrot.slane %v7638, 7
    %v7647 = vsel %vm487, %v7646, %v7645
    %v7648 = vrot.slane %v7639, 6
    %v7649 = vsel %vm490, %v7648, %v7647
    %7650 = vrot.lane.b32.xlu0 %v7649, 32
    %v7651 = vpop.permute.xlu0 %7650
    %v7653 = vsel %vm3782, %v7651, %v7403
    %v7658 = vrot.slane %v7612, 1
    %v7659 = vsel %vm484, %v7613, %v7658
    %v7660 = vrot.slane %v7614, 7
    %v7661 = vsel %vm487, %v7660, %v7659
    %v7662 = vrot.slane %v7615, 6
    %v7663 = vsel %vm490, %v7662, %v7661
    %7664 = vrot.lane.b32.xlu0 %v7663, 96
    %v7665 = vpop.permute.xlu0 %7664
    %v7667 = vsel %vm3782, %v7665, %v7417
    %v7669 = vrot.slane %v7653, 1
    %v7670 = vrot.slane %v7653, 2
    %v7671 = vrot.slane %v7653, 3
    %v7672 = vperm.slane %v7653, 0
    %v7673 = vperm.slane %v7669, 0
    %v7674 = vperm.slane %v7670, 0
    %v7675 = vperm.slane %v7671, 0
    %7676 = vrot.lane.b32.xlu0 %v7672, 32
    %v7677 = vpop.permute.xlu0 %7676
    %7678 = vrot.lane.b32.xlu0 %v7673, 32
    %v7679 = vpop.permute.xlu0 %7678
    %7680 = vrot.lane.b32.xlu0 %v7674, 32
    %v7681 = vpop.permute.xlu0 %7680
    %7682 = vrot.lane.b32.xlu0 %v7675, 32
    %v7683 = vpop.permute.xlu0 %7682
    %7688 = vst.msk [vmem:[#allocation3 + $0x1] sm:$0x1] %vm2294, %v7677
    %7689 = vst.msk [vmem:[#allocation3 + $0x9] sm:$0x1] %vm2294, %v7679
    %7690 = vst.msk [vmem:[#allocation3 + $0x11] sm:$0x1] %vm2294, %v7681
    %7691 = vst.msk [vmem:[#allocation3 + $0x19] sm:$0x1] %vm2294, %v7683
    %v7692 = vsel %vm204, %v7653, 0
    %7694 = vmatpush.msra.mxu0 0.0
    %7695 = vmatpush.msra.mxu0 0.0
    %7696 = vmatpush.msra.mxu0 0.0
    %7697 = vmatpush.msra.mxu0 0.0
    %7698 = vmatpush.msra.mxu0 0.0
    %7699 = vmatpush.msra.mxu0 0.0
    %7700 = vmatpush.msra.mxu0 0.0
    %7701 = vmatpush.msra.mxu0 0.0
    %7702 = vmatpush.msra.mxu0 0.0
    %7703 = vmatpush.msra.mxu0 0.0
    %7704 = vmatpush.msra.mxu0 0.0
    %7705 = vmatpush.msra.mxu0 0.0
    %7706 = vmatpush.msra.mxu0 %v5944
    %7707 = vmatpush.msra.mxu0 %v5943
    %7708 = vmatpush.msra.mxu0 %v5942
    %7709 = vmatpush.msra.mxu0 %v5941
    %7710 = vmatmul.f32.gmra.mxu0 %v7692
    %v7711 = vpop.f32.mrf.mxu0
    %v7712 = vadd.f32 0.0, %v7711
    %7713 = vdwg.mxu0
    %v7715 = vrot.slane %v7712, 1
    %v7716 = vrot.slane %v7712, 2
    %v7717 = vrot.slane %v7712, 3
    %v7722 = vadd.f32 %v4165, %v7712
    %v7723 = vadd.f32 %v4168, %v7715
    %v7724 = vadd.f32 %v4171, %v7716
    %v7725 = vadd.f32 %v4174, %v7717
    %v7726 = vxor.u32 %v7722, 2147483648
    %v7727 = vxor.u32 %v7723, 2147483648
    %v7728 = vxor.u32 %v7724, 2147483648
    %v7729 = vxor.u32 %v7725, 2147483648
    %v7730 = vmul.f32 %v7726, 1.442695
    %v7731 = vpow.pop %v7730
    %v7732 = vmul.f32 %v7727, 1.442695
    %v7733 = vpow.pop %v7732
    %v7734 = vmul.f32 %v7728, 1.442695
    %v7735 = vpow.pop %v7734
    %v7736 = vmul.f32 %v7729, 1.442695
    %v7737 = vpow.pop %v7736
    %v7738 = vadd.f32 %v7731, 1.0
    %v7739 = vadd.f32 %v7733, 1.0
    %v7740 = vadd.f32 %v7735, 1.0
    %v7741 = vadd.f32 %v7737, 1.0
    %v7742 = vrcp.pop %v7738
    %v7743 = vmul.f32 %v7738, %v7742
    %v7744 = vsub.f32 1.0, %v7743
    %v7745 = vmul.f32 %v7742, %v7744
    %v7746 = vadd.f32 %v7742, %v7745
    %vm7747 = vweird.f32 %v7738
    %vm7748 = vweird.f32 %v7742
    %vm7749 = vmor %vm7747, %vm7748
    %v7750 = vsel %vm7749, %v7742, %v7746
    %v7751 = vand.u32 2147483647, %v7738
    %vm7752 = vcmp.eq.f32.partialorder %v7751, 8.507059e+37
    %v7753 = vand.u32 %v7738, 2147483648
    %v7754 = vor.u32 1.1754944e-38, %v7753
    %v7755 = vsel %vm7752, %v7754, %v7750
    %v7756 = vmul.f32 1.0, %v7755
    %v7757 = vrcp.pop %v7739
    %v7758 = vmul.f32 %v7739, %v7757
    %v7759 = vsub.f32 1.0, %v7758
    %v7760 = vmul.f32 %v7757, %v7759
    %v7761 = vadd.f32 %v7757, %v7760
    %vm7762 = vweird.f32 %v7739
    %vm7763 = vweird.f32 %v7757
    %vm7764 = vmor %vm7762, %vm7763
    %v7765 = vsel %vm7764, %v7757, %v7761
    %v7766 = vand.u32 2147483647, %v7739
    %vm7767 = vcmp.eq.f32.partialorder %v7766, 8.507059e+37
    %v7768 = vand.u32 %v7739, 2147483648
    %v7769 = vor.u32 1.1754944e-38, %v7768
    %v7770 = vsel %vm7767, %v7769, %v7765
    %v7771 = vmul.f32 1.0, %v7770
    %v7772 = vrcp.pop %v7740
    %v7773 = vmul.f32 %v7740, %v7772
    %v7774 = vsub.f32 1.0, %v7773
    %v7775 = vmul.f32 %v7772, %v7774
    %v7776 = vadd.f32 %v7772, %v7775
    %vm7777 = vweird.f32 %v7740
    %vm7778 = vweird.f32 %v7772
    %vm7779 = vmor %vm7777, %vm7778
    %v7780 = vsel %vm7779, %v7772, %v7776
    %v7781 = vand.u32 2147483647, %v7740
    %vm7782 = vcmp.eq.f32.partialorder %v7781, 8.507059e+37
    %v7783 = vand.u32 %v7740, 2147483648
    %v7784 = vor.u32 1.1754944e-38, %v7783
    %v7785 = vsel %vm7782, %v7784, %v7780
    %v7786 = vmul.f32 1.0, %v7785
    %v7787 = vrcp.pop %v7741
    %v7788 = vmul.f32 %v7741, %v7787
    %v7789 = vsub.f32 1.0, %v7788
    %v7790 = vmul.f32 %v7787, %v7789
    %v7791 = vadd.f32 %v7787, %v7790
    %vm7792 = vweird.f32 %v7741
    %vm7793 = vweird.f32 %v7787
    %vm7794 = vmor %vm7792, %vm7793
    %v7795 = vsel %vm7794, %v7787, %v7791
    %v7796 = vand.u32 2147483647, %v7741
    %vm7797 = vcmp.eq.f32.partialorder %v7796, 8.507059e+37
    %v7798 = vand.u32 %v7741, 2147483648
    %v7799 = vor.u32 1.1754944e-38, %v7798
    %v7800 = vsel %vm7797, %v7799, %v7795
    %v7801 = vmul.f32 1.0, %v7800
    %v7802 = vtanh.pop %v7722
    %v7803 = vtanh.pop %v7723
    %v7804 = vtanh.pop %v7724
    %v7805 = vtanh.pop %v7725
    %v7807 = vrot.slane %v7667, 1
    %v7808 = vrot.slane %v7667, 2
    %v7809 = vrot.slane %v7667, 3
    %7810 = vrot.lane.b32.xlu0 %v7667, 32
    %v7811 = vpop.permute.xlu0 %7810
    %7812 = vrot.lane.b32.xlu0 %v7807, 32
    %v7813 = vpop.permute.xlu0 %7812
    %7814 = vrot.lane.b32.xlu0 %v7808, 32
    %v7815 = vpop.permute.xlu0 %7814
    %7816 = vrot.lane.b32.xlu0 %v7809, 32
    %v7817 = vpop.permute.xlu0 %7816
    %v7822 = vmul.f32 %v7756, %v7811
    %v7823 = vmul.f32 %v7771, %v7813
    %v7824 = vmul.f32 %v7786, %v7815
    %v7825 = vmul.f32 %v7801, %v7817
    %7830 = vrot.lane.b32.xlu0 %v7802, 64
    %v7831 = vpop.permute.xlu0 %7830
    %7832 = vrot.lane.b32.xlu0 %v7803, 64
    %v7833 = vpop.permute.xlu0 %7832
    %7834 = vrot.lane.b32.xlu0 %v7804, 64
    %v7835 = vpop.permute.xlu0 %7834
    %7836 = vrot.lane.b32.xlu0 %v7805, 64
    %v7837 = vpop.permute.xlu0 %7836
    %v7842 = vmul.f32 %v7756, %v7831
    %v7843 = vmul.f32 %v7771, %v7833
    %v7844 = vmul.f32 %v7786, %v7835
    %v7845 = vmul.f32 %v7801, %v7837
    %7850 = vrot.lane.b32.xlu0 %v7842, 32
    %v7851 = vpop.permute.xlu0 %7850
    %7852 = vrot.lane.b32.xlu0 %v7843, 32
    %v7853 = vpop.permute.xlu0 %7852
    %7854 = vrot.lane.b32.xlu0 %v7844, 32
    %v7855 = vpop.permute.xlu0 %7854
    %7856 = vrot.lane.b32.xlu0 %v7845, 32
    %v7857 = vpop.permute.xlu0 %7856
    %v7862 = vadd.f32 %v7822, %v7851
    %v7863 = vadd.f32 %v7823, %v7853
    %v7864 = vadd.f32 %v7824, %v7855
    %v7865 = vadd.f32 %v7825, %v7857
    %v7866 = vtanh.pop %v7862
    %v7867 = vtanh.pop %v7863
    %v7868 = vtanh.pop %v7864
    %v7869 = vtanh.pop %v7865
    %7874 = vrot.lane.b32.xlu0 %v7866, 64
    %v7875 = vpop.permute.xlu0 %7874
    %7876 = vrot.lane.b32.xlu0 %v7867, 64
    %v7877 = vpop.permute.xlu0 %7876
    %7878 = vrot.lane.b32.xlu0 %v7868, 64
    %v7879 = vpop.permute.xlu0 %7878
    %7880 = vrot.lane.b32.xlu0 %v7869, 64
    %v7881 = vpop.permute.xlu0 %7880
    %v7886 = vmul.f32 %v7756, %v7875
    %v7887 = vmul.f32 %v7771, %v7877
    %v7888 = vmul.f32 %v7786, %v7879
    %v7889 = vmul.f32 %v7801, %v7881
    %v7894 = vrot.slane %v7887, 7
    %v7895 = vsel %vm484, %v7894, %v7886
    %v7896 = vrot.slane %v7888, 6
    %v7897 = vsel %vm487, %v7896, %v7895
    %v7898 = vrot.slane %v7889, 5
    %v7899 = vsel %vm490, %v7898, %v7897
    %7900 = vrot.lane.b32.xlu0 %v7899, 32
    %v7901 = vpop.permute.xlu0 %7900
    %v7903 = vsel %vm4036, %v7901, %v7653
    %v7905 = vrot.slane %v7903, 1
    %v7906 = vrot.slane %v7903, 2
    %v7907 = vrot.slane %v7903, 3
    %v7908 = vperm.slane %v7903, 0
    %v7909 = vperm.slane %v7905, 0
    %v7910 = vperm.slane %v7906, 0
    %v7911 = vperm.slane %v7907, 0
    %7912 = vrot.lane.b32.xlu0 %v7908, 32
    %v7913 = vpop.permute.xlu0 %7912
    %7914 = vrot.lane.b32.xlu0 %v7909, 32
    %v7915 = vpop.permute.xlu0 %7914
    %7916 = vrot.lane.b32.xlu0 %v7910, 32
    %v7917 = vpop.permute.xlu0 %7916
    %7918 = vrot.lane.b32.xlu0 %v7911, 32
    %v7919 = vpop.permute.xlu0 %7918
    %7924 = vst.msk [vmem:[#allocation3] sm:$0x1] %vm2294, %v7913
    %7925 = vst.msk [vmem:[#allocation3 + $0x8] sm:$0x1] %vm2294, %v7915
    %7926 = vst.msk [vmem:[#allocation3 + $0x10] sm:$0x1] %vm2294, %v7917
    %7927 = vst.msk [vmem:[#allocation3 + $0x18] sm:$0x1] %vm2294, %v7919
    %v7928 = vld [vmem:[#allocation3] sm:$0xff]
    %v7929 = vld [vmem:[#allocation3 + $0x8] sm:$0xff]
    %v7930 = vld [vmem:[#allocation3 + $0x10] sm:$0xff]
    %v7931 = vld [vmem:[#allocation3 + $0x18] sm:$0xff]
    %v7932 = vmul.f32 %v7928, %v164
    %v7933 = vmul.f32 %v7929, %v171
    %v7934 = vmul.f32 %v7930, %v178
    %v7935 = vmul.f32 %v7931, %v185
    %v7936 = vld [vmem:[%s11] sm:$0xff]
    %v7937 = vld [vmem:[%s11 + $0x8] sm:$0xff]
    %v7938 = vld [vmem:[%s11 + $0x10] sm:$0xff]
    %v7939 = vld [vmem:[%s11 + $0x18] sm:$0xff]
    %v7940 = vld [vmem:[%s11 + $0x20] sm:$0xff]
    %v7941 = vld [vmem:[%s11 + $0x28] sm:$0xff]
    %v7942 = vld [vmem:[%s11 + $0x30] sm:$0xff]
    %v7943 = vld [vmem:[%s11 + $0x38] sm:$0xff]
    %v7944 = vld [vmem:[%s12] sm:$0x1]
    %v7946 = vperm.slane %v7944, 0
    %v7949 = vsel %vm4105, %v7932, 0
    %v7952 = vsel %vm4105, %v7933, 0
    %v7955 = vsel %vm4105, %v7934, 0
    %v7958 = vsel %vm4105, %v7935, 0
    %7960 = vmatpush.msra.mxu0 0.0
    %7961 = vmatpush.msra.mxu0 0.0
    %7962 = vmatpush.msra.mxu0 0.0
    %7963 = vmatpush.msra.mxu0 0.0
    %7964 = vmatpush.msra.mxu0 0.0
    %7965 = vmatpush.msra.mxu0 0.0
    %7966 = vmatpush.msra.mxu0 0.0
    %7967 = vmatpush.msra.mxu0 0.0
    %7968 = vmatpush.msra.mxu0 %v7943
    %7969 = vmatpush.msra.mxu0 %v7942
    %7970 = vmatpush.msra.mxu0 %v7941
    %7971 = vmatpush.msra.mxu0 %v7940
    %7972 = vmatpush.msra.mxu0 %v7939
    %7973 = vmatpush.msra.mxu0 %v7938
    %7974 = vmatpush.msra.mxu0 %v7937
    %7975 = vmatpush.msra.mxu0 %v7936
    %7976 = vmatmul.f32.gmra.mxu0 %v7949
    %v7977 = vpop.f32.mrf.mxu0
    %v7978 = vadd.f32 %v7946, %v7977
    %7979 = vmatmul.f32.gmra.mxu0 %v7952
    %v7980 = vpop.f32.mrf.mxu0
    %v7981 = vadd.f32 %v7946, %v7980
    %7982 = vmatmul.f32.gmra.mxu0 %v7955
    %v7983 = vpop.f32.mrf.mxu0
    %v7984 = vadd.f32 %v7946, %v7983
    %7985 = vmatmul.f32.gmra.mxu0 %v7958
    %v7986 = vpop.f32.mrf.mxu0
    %v7987 = vadd.f32 %v7946, %v7986
    %7988 = vdwg.mxu0
    %v7989 = vld [vmem:[#allocation7] sm:$0xff]
    %v7990 = vadd.f32 %v7978, %v7989
    %v7991 = vadd.f32 %v7981, %v7989
    %v7992 = vadd.f32 %v7984, %v7989
    %v7993 = vadd.f32 %v7987, %v7989
    %v7994 = vsel %vm204, %v7990, 0.0
    %7995 = vadd.xlane.f32.xlu0 %v7994
    %v7996 = vpop.xlane.xlu0 %7995
    %v7997 = vsel %vm204, %v7991, 0.0
    %7998 = vadd.xlane.f32.xlu0 %v7997
    %v7999 = vpop.xlane.xlu0 %7998
    %v8000 = vsel %vm204, %v7992, 0.0
    %8001 = vadd.xlane.f32.xlu0 %v8000
    %v8002 = vpop.xlane.xlu0 %8001
    %v8003 = vsel %vm204, %v7993, 0.0
    %8004 = vadd.xlane.f32.xlu0 %v8003
    %v8005 = vpop.xlane.xlu0 %8004
    %v8006 = vrcp.pop 32.0
    %v8007 = vmul.f32 32.0, %v8006
    %v8008 = vsub.f32 1.0, %v8007
    %v8009 = vmul.f32 %v8006, %v8008
    %v8010 = vadd.f32 %v8006, %v8009
    %vm8011 = vweird.f32 %v8006
    %v8012 = vsel %vm8011, %v8006, %v8010
    %v8013 = vmul.f32 %v7996, %v8012
    %v8014 = vmul.f32 %v7999, %v8012
    %v8015 = vmul.f32 %v8002, %v8012
    %v8016 = vmul.f32 %v8005, %v8012
    %v8017 = vsub.f32 %v7990, %v8013
    %v8018 = vsub.f32 %v7991, %v8014
    %v8019 = vsub.f32 %v7992, %v8015
    %v8020 = vsub.f32 %v7993, %v8016
    %v8021 = vmul.f32 %v8017, %v8017
    %v8022 = vmul.f32 %v8018, %v8018
    %v8023 = vmul.f32 %v8019, %v8019
    %v8024 = vmul.f32 %v8020, %v8020
    %v8025 = vsel %vm204, %v8021, 0.0
    %8026 = vadd.xlane.f32.xlu0 %v8025
    %v8027 = vpop.xlane.xlu0 %8026
    %v8028 = vsel %vm204, %v8022, 0.0
    %8029 = vadd.xlane.f32.xlu0 %v8028
    %v8030 = vpop.xlane.xlu0 %8029
    %v8031 = vsel %vm204, %v8023, 0.0
    %8032 = vadd.xlane.f32.xlu0 %v8031
    %v8033 = vpop.xlane.xlu0 %8032
    %v8034 = vsel %vm204, %v8024, 0.0
    %8035 = vadd.xlane.f32.xlu0 %v8034
    %v8036 = vpop.xlane.xlu0 %8035
    %v8037 = vmul.f32 %v8027, %v8012
    %v8038 = vmul.f32 %v8030, %v8012
    %v8039 = vmul.f32 %v8033, %v8012
    %v8040 = vmul.f32 %v8036, %v8012
    %v8041 = vadd.f32 %v8037, 1e-05
    %v8042 = vadd.f32 %v8038, 1e-05
    %v8043 = vadd.f32 %v8039, 1e-05
    %v8044 = vadd.f32 %v8040, 1e-05
    %v8045 = vrsqrt.pop %v8041
    %v8046 = vmul.f32 %v8045, %v8041
    %v8047 = vmul.f32 %v8046, %v8045
    %v8048 = vmul.f32 0.5, %v8047
    %v8049 = vsub.f32 1.5, %v8048
    %v8050 = vmul.f32 %v8045, %v8049
    %vm8051 = vweird.f32 %v8041
    %vm8052 = vweird.f32 %v8045
    %vm8053 = vmor %vm8051, %vm8052
    %v8054 = vsel %vm8053, %v8045, %v8050
    %v8055 = vrsqrt.pop %v8042
    %v8056 = vmul.f32 %v8055, %v8042
    %v8057 = vmul.f32 %v8056, %v8055
    %v8058 = vmul.f32 0.5, %v8057
    %v8059 = vsub.f32 1.5, %v8058
    %v8060 = vmul.f32 %v8055, %v8059
    %vm8061 = vweird.f32 %v8042
    %vm8062 = vweird.f32 %v8055
    %vm8063 = vmor %vm8061, %vm8062
    %v8064 = vsel %vm8063, %v8055, %v8060
    %v8065 = vrsqrt.pop %v8043
    %v8066 = vmul.f32 %v8065, %v8043
    %v8067 = vmul.f32 %v8066, %v8065
    %v8068 = vmul.f32 0.5, %v8067
    %v8069 = vsub.f32 1.5, %v8068
    %v8070 = vmul.f32 %v8065, %v8069
    %vm8071 = vweird.f32 %v8043
    %vm8072 = vweird.f32 %v8065
    %vm8073 = vmor %vm8071, %vm8072
    %v8074 = vsel %vm8073, %v8065, %v8070
    %v8075 = vrsqrt.pop %v8044
    %v8076 = vmul.f32 %v8075, %v8044
    %v8077 = vmul.f32 %v8076, %v8075
    %v8078 = vmul.f32 0.5, %v8077
    %v8079 = vsub.f32 1.5, %v8078
    %v8080 = vmul.f32 %v8075, %v8079
    %vm8081 = vweird.f32 %v8044
    %vm8082 = vweird.f32 %v8075
    %vm8083 = vmor %vm8081, %vm8082
    %v8084 = vsel %vm8083, %v8075, %v8080
    %v8085 = vmul.f32 %v8017, %v8054
    %v8086 = vmul.f32 %v8018, %v8064
    %v8087 = vmul.f32 %v8019, %v8074
    %v8088 = vmul.f32 %v8020, %v8084
    %v8089 = vld [vmem:[%s13] sm:$0x1]
    %v8091 = vperm.slane %v8089, 0
    %v8093 = vmul.f32 %v8085, %v8091
    %v8094 = vmul.f32 %v8086, %v8091
    %v8095 = vmul.f32 %v8087, %v8091
    %v8096 = vmul.f32 %v8088, %v8091
    %v8097 = vld [vmem:[%s14] sm:$0x1]
    %v8099 = vperm.slane %v8097, 0
    %v8101 = vadd.f32 %v8093, %v8099
    %v8102 = vadd.f32 %v8094, %v8099
    %v8103 = vadd.f32 %v8095, %v8099
    %v8104 = vadd.f32 %v8096, %v8099
    %8105 = vst.msk [vmem:[#allocation16] sm:$0xff] %vm204, %v8101
    %8106 = vst.msk [vmem:[#allocation16 + $0x8] sm:$0xff] %vm204, %v8102
    %8107 = vst.msk [vmem:[#allocation16 + $0x10] sm:$0xff] %vm204, %v8103
    %8108 = vst.msk [vmem:[#allocation16 + $0x18] sm:$0xff] %vm204, %v8104
    // Predicated region
    $region90: #{tpu_custom_call.1} parent=1 // pred_check
      _
    $region91: #{tpu_custom_call.1} parent=1 // pred_check_branch
      %8110 = sbr.rel (0) target = $region93
    $region92: #{tpu_custom_call.1} parent=1 // pred_region
      %8112 = vsyncadd [#allocation6], 0
      %s8113 = sshll.u32 [#allocation16], 4
      %s8114 = int_to_ptr.vmem [resolvable:$true] %s8113
      %s8115 = sshll.u32 %s15, 4
      %s8116 = int_to_ptr.hbm [resolvable:$true] %s8115
      %8121 = dma.vmem_to_hbm [thread:$0]  %s8114, 512, %s8116, [#allocation6], 128, 128, 8
    $region93: #{tpu_custom_call.1} parent=1 // pred_fallthru
      _
    // Predicated region
    $region94: #{tpu_custom_call.1} parent=1 // pred_check
      _
    $region95: #{tpu_custom_call.1} parent=1 // pred_check_branch
      %8123 = sbr.rel (0) target = $region97
    $region96: #{tpu_custom_call.1} parent=1 // pred_region
      %8125 = dma.done [#allocation6], 512
    $region97: #{tpu_custom_call.1} parent=1 // pred_fallthru
      _
    %8126 = vsyncpa [#allocation5], 1
    %8127 = vsyncpa [#allocation8], 1
    %8128 = vsyncpa [#allocation11], 1
    %8129 = vsyncpa [#allocation14], 1
    %8130 = vsyncpa [#allocation6], 1

</llo_original>
